<compile_context>
chip_gen: v7x
topology: tpu7x:2x2x1
jax: 0.10.0
libtpu: 0.0.40
codegen_flags: <defaults>
</compile_context>

<pallas_src>
import functools

import jax
import jax.numpy as jnp
from jax.experimental import pallas as pl
from jax.experimental.pallas import tpu as pltpu


# ----------------------------------------------------------------------------
# Fused Pallas kernel: stem conv -> BasicBlock -> GAP -> Linear head.
# One batch element per grid step; everything stays in VMEM.
# ----------------------------------------------------------------------------
def _fused_forward_kernel(x_ref, ws_ref, ss_ref, bs_ref,
                          w1_ref, s1_ref, b1_ref,
                          w2_ref, s2_ref, b2_ref,
                          wh_ref, bh_ref,
                          o_ref, pad_ref, *, H, W, C):
    def conv3x3(src_ref, w_ref):
        """3x3 / stride-1 conv of a zero-padded (H+2, W+2, cin) VMEM ref.

        Fused im2col: 9 shifted-tap matmuls accumulated in f32; taps are cast
        to bf16 so the MXU runs at native bf16 rate.
        """
        cin = src_ref.shape[-1]
        acc = jnp.zeros((H * W, C), jnp.float32)
        for t in range(9):
            dy, dx = t // 3, t % 3
            tap = src_ref[dy:dy + H, dx:dx + W, :]
            tap = tap.reshape(H * W, cin).astype(jnp.bfloat16)
            acc = acc + jnp.dot(tap, w_ref[t],
                                preferred_element_type=jnp.float32)
        return acc

    def repad(act):
        """Write a (H*W, C) activation into the zero-padded VMEM scratch."""
        pad_ref[...] = jnp.zeros_like(pad_ref)
        pad_ref[1:H + 1, 1:W + 1, :] = act.reshape(H, W, C)

    # ---- stem: conv3x3 + BN + ReLU ----------------------------------------
    h = conv3x3(x_ref, ws_ref)
    h = jnp.maximum(h * ss_ref[...] + bs_ref[...], 0.0)          # (H*W, C) f32

    # ---- BasicBlock: conv+BN+ReLU, conv+BN, +skip, ReLU (skip resident) ----
    repad(h)
    y = conv3x3(pad_ref, w1_ref)
    y = jnp.maximum(y * s1_ref[...] + b1_ref[...], 0.0)

    repad(y)
    z = conv3x3(pad_ref, w2_ref)
    z = jnp.maximum(z * s2_ref[...] + b2_ref[...] + h, 0.0)

    # ---- global average pool + Linear(C -> 1): VPU/XLU reductions ---------
    pooled = jnp.mean(z, axis=0, keepdims=True)                  # (1, C)
    val = jnp.sum(pooled * wh_ref[...], axis=1, keepdims=True) + bh_ref[...]
    o_ref[...] = jnp.broadcast_to(val, o_ref.shape)              # lane-dense


# ----------------------------------------------------------------------------
# Wrapper (plain-JAX glue: layout, padding, BN folding, weight re-layout)
# ----------------------------------------------------------------------------
def _fold_bn(gamma, beta, mean, var, eps=1e-5):
    scale = gamma / jnp.sqrt(var + eps)
    shift = beta - mean * scale
    return scale, shift


def resnet_regression_head_forward(params, x_nchw):
    """Pallas forward.  x: (N, Cin, H, W) float32 -> (N, 1) float32."""
    N, Cin, H, W = x_nchw.shape
    C = params["w_stem"].shape[0]
    assert params["w_head"].shape == (C, 1)

    # NCHW -> NHWC and zero-pad H/W by 1 ("SAME" for 3x3, stride 1).
    xp = jnp.transpose(x_nchw, (0, 2, 3, 1)).astype(jnp.float32)
    xp = jnp.pad(xp, ((0, 0), (1, 1), (1, 1), (0, 0)))
    Hp, Wp = H + 2, W + 2

    def tap_major(w_oihw):
        # (Cout, Cin, 3, 3) -> (9, Cin, Cout) bf16, tap index t = ky*3 + kx.
        cout, cin = w_oihw.shape[0], w_oihw.shape[1]
        return (jnp.transpose(w_oihw, (2, 3, 1, 0))
                .reshape(9, cin, cout).astype(jnp.bfloat16))

    def bn2(bnp):
        s, b = _fold_bn(*bnp)
        return (s.reshape(1, C).astype(jnp.float32),
                b.reshape(1, C).astype(jnp.float32))

    ss, bs = bn2(params["bn_stem"])
    s1, b1 = bn2(params["bn_b1"])
    s2, b2 = bn2(params["bn_b2"])
    wh = params["w_head"][:, 0].reshape(1, C).astype(jnp.float32)
    bh = params["b_head"].reshape(1, 1).astype(jnp.float32)

    def full(shape):                       # whole-array block, never re-fetched
        return pl.BlockSpec(shape, lambda *_: (0,) * len(shape))

    out = pl.pallas_call(
        functools.partial(_fused_forward_kernel, H=H, W=W, C=C),
        out_shape=jax.ShapeDtypeStruct((N, 1, 128), jnp.float32),
        grid=(N,),
        in_specs=[
            pl.BlockSpec((None, Hp, Wp, Cin), lambda b: (b, 0, 0, 0)),  # x (per-image)
            full((9, Cin, C)), full((1, C)), full((1, C)),              # stem
            full((9, C, C)),   full((1, C)), full((1, C)),              # block conv1
            full((9, C, C)),   full((1, C)), full((1, C)),              # block conv2
            full((1, C)),      full((1, 1)),                            # head
        ],
        out_specs=pl.BlockSpec((None, 1, 128), lambda b: (b, 0, 0)),
        scratch_shapes=[pltpu.VMEM((Hp, Wp, C), jnp.float32)],
        compiler_params=pltpu.CompilerParams(
            dimension_semantics=("parallel",),
            vmem_limit_bytes=64 * 1024 * 1024),
    )(xp,
      tap_major(params["w_stem"]), ss, bs,
      tap_major(params["w_b1"]), s1, b1,
      tap_major(params["w_b2"]), s2, b2,
      wh, bh)
    return out[:, 0, :1]                                         # (N, 1)


# ----------------------------------------------------------------------------
# Parameters
# ----------------------------------------------------------------------------
def init_params(key, cin=4, c=32, out_dim=1):
    ks = jax.random.split(key, 16)

    def bn(k, n):
        k1, k2, k3, k4 = jax.random.split(k, 4)
        gamma = jax.random.uniform(k1, (n,), jnp.float32, 0.5, 1.5)
        beta = jax.random.normal(k2, (n,), jnp.float32) * 0.1
        mean = jax.random.normal(k3, (n,), jnp.float32) * 0.1
        var = jax.random.uniform(k4, (n,), jnp.float32, 0.5, 1.5)
        return gamma, beta, mean, var

    return {
        "w_stem": jax.random.normal(ks[0], (c, cin, 3, 3), jnp.float32) * 0.1,
        "bn_stem": bn(ks[1], c),
        "w_b1": jax.random.normal(ks[2], (c, c, 3, 3), jnp.float32) * 0.05,
        "bn_b1": bn(ks[3], c),
        "w_b2": jax.random.normal(ks[4], (c, c, 3, 3), jnp.float32) * 0.05,
        "bn_b2": bn(ks[5], c),
        "w_head": jax.random.normal(ks[6], (c, out_dim), jnp.float32) * 0.1,
        "b_head": jax.random.normal(ks[7], (out_dim,), jnp.float32) * 0.1,
    }


# ----------------------------------------------------------------------------
# Pure-JAX (XLA, f32) reference in NCHW like the PyTorch module
# ----------------------------------------------------------------------------
def _ref_conv_bn(x, w, bnp, relu=True, residual=None):
    y = jax.lax.conv_general_dilated(
        x, w, (1, 1), "SAME", dimension_numbers=("NCHW", "OIHW", "NCHW"))
    s, b = _fold_bn(*bnp)
    y = y * s[None, :, None, None] + b[None, :, None, None]
    if residual is not None:
        y = y + residual
    if relu:
        y = jnp.maximum(y, 0.0)
    return y


def reference_forward(params, x_nchw):
    h = _ref_conv_bn(x_nchw, params["w_stem"], params["bn_stem"], relu=True)
    y = _ref_conv_bn(h, params["w_b1"], params["bn_b1"], relu=True)
    h = _ref_conv_bn(y, params["w_b2"], params["bn_b2"], relu=True, residual=h)
    pooled = jnp.mean(h, axis=(2, 3))                      # (N, C)
    return pooled @ params["w_head"] + params["b_head"]


# ----------------------------------------------------------------------------
if __name__ == "__main__":
    key = jax.random.PRNGKey(0)
    k_param, k_x = jax.random.split(key)

    N, Cin, H, W = 2, 4, 16, 16
    x = jax.random.normal(k_x, (N, Cin, H, W), jnp.float32)
    params = init_params(k_param, cin=Cin, c=32, out_dim=1)

    out = jax.jit(resnet_regression_head_forward)(params, x)
    out = jax.block_until_ready(out)

    ref = reference_forward(params, x)
    assert out.shape == (N, 1)
    # bf16 MXU operands with f32 accumulation -> relaxed tolerance vs f32 ref.
    assert jnp.allclose(out, ref, atol=3e-2, rtol=3e-2), (out, ref)

    print("KERNEL_OK")
</pallas_src>

<mosaic_0001>
module attributes {stable_mosaic.version = 11 : i64} {
  func.func @_fused_forward_kernel(%arg0: i32, %arg1: memref<1x18x18x4xf32, #tpu.memory_space<vmem>>, %arg2: memref<9x4x32xbf16, #tpu.memory_space<vmem>>, %arg3: memref<1x32xf32, #tpu.memory_space<vmem>>, %arg4: memref<1x32xf32, #tpu.memory_space<vmem>>, %arg5: memref<9x32x32xbf16, #tpu.memory_space<vmem>>, %arg6: memref<1x32xf32, #tpu.memory_space<vmem>>, %arg7: memref<1x32xf32, #tpu.memory_space<vmem>>, %arg8: memref<9x32x32xbf16, #tpu.memory_space<vmem>>, %arg9: memref<1x32xf32, #tpu.memory_space<vmem>>, %arg10: memref<1x32xf32, #tpu.memory_space<vmem>>, %arg11: memref<1x32xf32, #tpu.memory_space<vmem>>, %arg12: memref<1x1xf32, #tpu.memory_space<vmem>>, %arg13: memref<1x1x128xf32, #tpu.memory_space<vmem>>, %arg14: memref<18x18x32xf32, #tpu.memory_space<vmem>>) attributes {dimension_semantics = [#tpu.dimension_semantics<parallel>], iteration_bounds = array<i64: 2>, scalar_prefetch = 0 : i64, scratch_operands = 1 : i64, tpu.core_type = #tpu.core_type<tc>, window_params = [{transform_indices = @transform_0, window_bounds = array<i64: 1, 18, 18, 4>}, {pipeline_mode = #tpu.pipeline_mode<synchronous>, transform_indices = @transform_1, window_bounds = array<i64: 9, 4, 32>}, {pipeline_mode = #tpu.pipeline_mode<synchronous>, transform_indices = @transform_2, window_bounds = array<i64: 1, 32>}, {pipeline_mode = #tpu.pipeline_mode<synchronous>, transform_indices = @transform_3, window_bounds = array<i64: 1, 32>}, {pipeline_mode = #tpu.pipeline_mode<synchronous>, transform_indices = @transform_4, window_bounds = array<i64: 9, 32, 32>}, {pipeline_mode = #tpu.pipeline_mode<synchronous>, transform_indices = @transform_5, window_bounds = array<i64: 1, 32>}, {pipeline_mode = #tpu.pipeline_mode<synchronous>, transform_indices = @transform_6, window_bounds = array<i64: 1, 32>}, {pipeline_mode = #tpu.pipeline_mode<synchronous>, transform_indices = @transform_7, window_bounds = array<i64: 9, 32, 32>}, {pipeline_mode = #tpu.pipeline_mode<synchronous>, transform_indices = @transform_8, window_bounds = array<i64: 1, 32>}, {pipeline_mode = #tpu.pipeline_mode<synchronous>, transform_indices = @transform_9, window_bounds = array<i64: 1, 32>}, {pipeline_mode = #tpu.pipeline_mode<synchronous>, transform_indices = @transform_10, window_bounds = array<i64: 1, 32>}, {pipeline_mode = #tpu.pipeline_mode<synchronous>, transform_indices = @transform_11, window_bounds = array<i64: 1, 1>}, {transform_indices = @transform_12, window_bounds = array<i64: 1, 1, 128>}]} {
    %cst = arith.constant 0.000000e+00 : f32
    %0 = vector.broadcast %cst : f32 to vector<256x32xf32>
    %c0 = arith.constant 0 : index
    %c0_0 = arith.constant 0 : index
    %c0_1 = arith.constant 0 : index
    %c0_2 = arith.constant 0 : index
    %1 = vector.load %arg1[%c0, %c0_0, %c0_1, %c0_2] : memref<1x18x18x4xf32, #tpu.memory_space<vmem>>, vector<1x16x16x4xf32>
    %2 = vector.shape_cast %1 : vector<1x16x16x4xf32> to vector<16x16x4xf32>
    %3 = vector.shape_cast %2 : vector<16x16x4xf32> to vector<256x4xf32>
    %4 = arith.truncf %3 : vector<256x4xf32> to vector<256x4xbf16>
    %c0_3 = arith.constant 0 : index
    %c0_4 = arith.constant 0 : index
    %c0_5 = arith.constant 0 : index
    %5 = vector.load %arg2[%c0_3, %c0_4, %c0_5] : memref<9x4x32xbf16, #tpu.memory_space<vmem>>, vector<1x4x32xbf16>
    %6 = vector.shape_cast %5 : vector<1x4x32xbf16> to vector<4x32xbf16>
    %cst_6 = arith.constant dense<0.000000e+00> : vector<256x32xf32>
    %7 = tpu.matmul %4, %6, %cst_6 {dimension_numbers = #tpu.dot_dimension_numbers<[1], [0], [0], [1], [0, 0, 1, 1], [], []>} : vector<256x4xbf16>, vector<4x32xbf16>, vector<256x32xf32> -> vector<256x32xf32>
    %8 = arith.addf %0, %7 : vector<256x32xf32>
    %c0_7 = arith.constant 0 : index
    %c0_8 = arith.constant 0 : index
    %c1 = arith.constant 1 : index
    %c0_9 = arith.constant 0 : index
    %9 = vector.load %arg1[%c0_7, %c0_8, %c1, %c0_9] : memref<1x18x18x4xf32, #tpu.memory_space<vmem>>, vector<1x16x16x4xf32>
    %10 = vector.shape_cast %9 : vector<1x16x16x4xf32> to vector<16x16x4xf32>
    %11 = vector.shape_cast %10 : vector<16x16x4xf32> to vector<256x4xf32>
    %12 = arith.truncf %11 : vector<256x4xf32> to vector<256x4xbf16>
    %c1_10 = arith.constant 1 : index
    %c0_11 = arith.constant 0 : index
    %c0_12 = arith.constant 0 : index
    %13 = vector.load %arg2[%c1_10, %c0_11, %c0_12] : memref<9x4x32xbf16, #tpu.memory_space<vmem>>, vector<1x4x32xbf16>
    %14 = vector.shape_cast %13 : vector<1x4x32xbf16> to vector<4x32xbf16>
    %cst_13 = arith.constant dense<0.000000e+00> : vector<256x32xf32>
    %15 = tpu.matmul %12, %14, %cst_13 {dimension_numbers = #tpu.dot_dimension_numbers<[1], [0], [0], [1], [0, 0, 1, 1], [], []>} : vector<256x4xbf16>, vector<4x32xbf16>, vector<256x32xf32> -> vector<256x32xf32>
    %16 = arith.addf %8, %15 : vector<256x32xf32>
    %c0_14 = arith.constant 0 : index
    %c0_15 = arith.constant 0 : index
    %c2 = arith.constant 2 : index
    %c0_16 = arith.constant 0 : index
    %17 = vector.load %arg1[%c0_14, %c0_15, %c2, %c0_16] : memref<1x18x18x4xf32, #tpu.memory_space<vmem>>, vector<1x16x16x4xf32>
    %18 = vector.shape_cast %17 : vector<1x16x16x4xf32> to vector<16x16x4xf32>
    %19 = vector.shape_cast %18 : vector<16x16x4xf32> to vector<256x4xf32>
    %20 = arith.truncf %19 : vector<256x4xf32> to vector<256x4xbf16>
    %c2_17 = arith.constant 2 : index
    %c0_18 = arith.constant 0 : index
    %c0_19 = arith.constant 0 : index
    %21 = vector.load %arg2[%c2_17, %c0_18, %c0_19] : memref<9x4x32xbf16, #tpu.memory_space<vmem>>, vector<1x4x32xbf16>
    %22 = vector.shape_cast %21 : vector<1x4x32xbf16> to vector<4x32xbf16>
    %cst_20 = arith.constant dense<0.000000e+00> : vector<256x32xf32>
    %23 = tpu.matmul %20, %22, %cst_20 {dimension_numbers = #tpu.dot_dimension_numbers<[1], [0], [0], [1], [0, 0, 1, 1], [], []>} : vector<256x4xbf16>, vector<4x32xbf16>, vector<256x32xf32> -> vector<256x32xf32>
    %24 = arith.addf %16, %23 : vector<256x32xf32>
    %c0_21 = arith.constant 0 : index
    %c1_22 = arith.constant 1 : index
    %c0_23 = arith.constant 0 : index
    %c0_24 = arith.constant 0 : index
    %25 = vector.load %arg1[%c0_21, %c1_22, %c0_23, %c0_24] : memref<1x18x18x4xf32, #tpu.memory_space<vmem>>, vector<1x16x16x4xf32>
    %26 = vector.shape_cast %25 : vector<1x16x16x4xf32> to vector<16x16x4xf32>
    %27 = vector.shape_cast %26 : vector<16x16x4xf32> to vector<256x4xf32>
    %28 = arith.truncf %27 : vector<256x4xf32> to vector<256x4xbf16>
    %c3 = arith.constant 3 : index
    %c0_25 = arith.constant 0 : index
    %c0_26 = arith.constant 0 : index
    %29 = vector.load %arg2[%c3, %c0_25, %c0_26] : memref<9x4x32xbf16, #tpu.memory_space<vmem>>, vector<1x4x32xbf16>
    %30 = vector.shape_cast %29 : vector<1x4x32xbf16> to vector<4x32xbf16>
    %cst_27 = arith.constant dense<0.000000e+00> : vector<256x32xf32>
    %31 = tpu.matmul %28, %30, %cst_27 {dimension_numbers = #tpu.dot_dimension_numbers<[1], [0], [0], [1], [0, 0, 1, 1], [], []>} : vector<256x4xbf16>, vector<4x32xbf16>, vector<256x32xf32> -> vector<256x32xf32>
    %32 = arith.addf %24, %31 : vector<256x32xf32>
    %c0_28 = arith.constant 0 : index
    %c1_29 = arith.constant 1 : index
    %c1_30 = arith.constant 1 : index
    %c0_31 = arith.constant 0 : index
    %33 = vector.load %arg1[%c0_28, %c1_29, %c1_30, %c0_31] : memref<1x18x18x4xf32, #tpu.memory_space<vmem>>, vector<1x16x16x4xf32>
    %34 = vector.shape_cast %33 : vector<1x16x16x4xf32> to vector<16x16x4xf32>
    %35 = vector.shape_cast %34 : vector<16x16x4xf32> to vector<256x4xf32>
    %36 = arith.truncf %35 : vector<256x4xf32> to vector<256x4xbf16>
    %c4 = arith.constant 4 : index
    %c0_32 = arith.constant 0 : index
    %c0_33 = arith.constant 0 : index
    %37 = vector.load %arg2[%c4, %c0_32, %c0_33] : memref<9x4x32xbf16, #tpu.memory_space<vmem>>, vector<1x4x32xbf16>
    %38 = vector.shape_cast %37 : vector<1x4x32xbf16> to vector<4x32xbf16>
    %cst_34 = arith.constant dense<0.000000e+00> : vector<256x32xf32>
    %39 = tpu.matmul %36, %38, %cst_34 {dimension_numbers = #tpu.dot_dimension_numbers<[1], [0], [0], [1], [0, 0, 1, 1], [], []>} : vector<256x4xbf16>, vector<4x32xbf16>, vector<256x32xf32> -> vector<256x32xf32>
    %40 = arith.addf %32, %39 : vector<256x32xf32>
    %c0_35 = arith.constant 0 : index
    %c1_36 = arith.constant 1 : index
    %c2_37 = arith.constant 2 : index
    %c0_38 = arith.constant 0 : index
    %41 = vector.load %arg1[%c0_35, %c1_36, %c2_37, %c0_38] : memref<1x18x18x4xf32, #tpu.memory_space<vmem>>, vector<1x16x16x4xf32>
    %42 = vector.shape_cast %41 : vector<1x16x16x4xf32> to vector<16x16x4xf32>
    %43 = vector.shape_cast %42 : vector<16x16x4xf32> to vector<256x4xf32>
    %44 = arith.truncf %43 : vector<256x4xf32> to vector<256x4xbf16>
    %c5 = arith.constant 5 : index
    %c0_39 = arith.constant 0 : index
    %c0_40 = arith.constant 0 : index
    %45 = vector.load %arg2[%c5, %c0_39, %c0_40] : memref<9x4x32xbf16, #tpu.memory_space<vmem>>, vector<1x4x32xbf16>
    %46 = vector.shape_cast %45 : vector<1x4x32xbf16> to vector<4x32xbf16>
    %cst_41 = arith.constant dense<0.000000e+00> : vector<256x32xf32>
    %47 = tpu.matmul %44, %46, %cst_41 {dimension_numbers = #tpu.dot_dimension_numbers<[1], [0], [0], [1], [0, 0, 1, 1], [], []>} : vector<256x4xbf16>, vector<4x32xbf16>, vector<256x32xf32> -> vector<256x32xf32>
    %48 = arith.addf %40, %47 : vector<256x32xf32>
    %c0_42 = arith.constant 0 : index
    %c2_43 = arith.constant 2 : index
    %c0_44 = arith.constant 0 : index
    %c0_45 = arith.constant 0 : index
    %49 = vector.load %arg1[%c0_42, %c2_43, %c0_44, %c0_45] : memref<1x18x18x4xf32, #tpu.memory_space<vmem>>, vector<1x16x16x4xf32>
    %50 = vector.shape_cast %49 : vector<1x16x16x4xf32> to vector<16x16x4xf32>
    %51 = vector.shape_cast %50 : vector<16x16x4xf32> to vector<256x4xf32>
    %52 = arith.truncf %51 : vector<256x4xf32> to vector<256x4xbf16>
    %c6 = arith.constant 6 : index
    %c0_46 = arith.constant 0 : index
    %c0_47 = arith.constant 0 : index
    %53 = vector.load %arg2[%c6, %c0_46, %c0_47] : memref<9x4x32xbf16, #tpu.memory_space<vmem>>, vector<1x4x32xbf16>
    %54 = vector.shape_cast %53 : vector<1x4x32xbf16> to vector<4x32xbf16>
    %cst_48 = arith.constant dense<0.000000e+00> : vector<256x32xf32>
    %55 = tpu.matmul %52, %54, %cst_48 {dimension_numbers = #tpu.dot_dimension_numbers<[1], [0], [0], [1], [0, 0, 1, 1], [], []>} : vector<256x4xbf16>, vector<4x32xbf16>, vector<256x32xf32> -> vector<256x32xf32>
    %56 = arith.addf %48, %55 : vector<256x32xf32>
    %c0_49 = arith.constant 0 : index
    %c2_50 = arith.constant 2 : index
    %c1_51 = arith.constant 1 : index
    %c0_52 = arith.constant 0 : index
    %57 = vector.load %arg1[%c0_49, %c2_50, %c1_51, %c0_52] : memref<1x18x18x4xf32, #tpu.memory_space<vmem>>, vector<1x16x16x4xf32>
    %58 = vector.shape_cast %57 : vector<1x16x16x4xf32> to vector<16x16x4xf32>
    %59 = vector.shape_cast %58 : vector<16x16x4xf32> to vector<256x4xf32>
    %60 = arith.truncf %59 : vector<256x4xf32> to vector<256x4xbf16>
    %c7 = arith.constant 7 : index
    %c0_53 = arith.constant 0 : index
    %c0_54 = arith.constant 0 : index
    %61 = vector.load %arg2[%c7, %c0_53, %c0_54] : memref<9x4x32xbf16, #tpu.memory_space<vmem>>, vector<1x4x32xbf16>
    %62 = vector.shape_cast %61 : vector<1x4x32xbf16> to vector<4x32xbf16>
    %cst_55 = arith.constant dense<0.000000e+00> : vector<256x32xf32>
    %63 = tpu.matmul %60, %62, %cst_55 {dimension_numbers = #tpu.dot_dimension_numbers<[1], [0], [0], [1], [0, 0, 1, 1], [], []>} : vector<256x4xbf16>, vector<4x32xbf16>, vector<256x32xf32> -> vector<256x32xf32>
    %64 = arith.addf %56, %63 : vector<256x32xf32>
    %c0_56 = arith.constant 0 : index
    %c2_57 = arith.constant 2 : index
    %c2_58 = arith.constant 2 : index
    %c0_59 = arith.constant 0 : index
    %65 = vector.load %arg1[%c0_56, %c2_57, %c2_58, %c0_59] : memref<1x18x18x4xf32, #tpu.memory_space<vmem>>, vector<1x16x16x4xf32>
    %66 = vector.shape_cast %65 : vector<1x16x16x4xf32> to vector<16x16x4xf32>
    %67 = vector.shape_cast %66 : vector<16x16x4xf32> to vector<256x4xf32>
    %68 = arith.truncf %67 : vector<256x4xf32> to vector<256x4xbf16>
    %c8 = arith.constant 8 : index
    %c0_60 = arith.constant 0 : index
    %c0_61 = arith.constant 0 : index
    %69 = vector.load %arg2[%c8, %c0_60, %c0_61] : memref<9x4x32xbf16, #tpu.memory_space<vmem>>, vector<1x4x32xbf16>
    %70 = vector.shape_cast %69 : vector<1x4x32xbf16> to vector<4x32xbf16>
    %cst_62 = arith.constant dense<0.000000e+00> : vector<256x32xf32>
    %71 = tpu.matmul %68, %70, %cst_62 {dimension_numbers = #tpu.dot_dimension_numbers<[1], [0], [0], [1], [0, 0, 1, 1], [], []>} : vector<256x4xbf16>, vector<4x32xbf16>, vector<256x32xf32> -> vector<256x32xf32>
    %72 = arith.addf %64, %71 : vector<256x32xf32>
    %c0_63 = arith.constant 0 : index
    %c0_64 = arith.constant 0 : index
    %73 = vector.load %arg3[%c0_63, %c0_64] : memref<1x32xf32, #tpu.memory_space<vmem>>, vector<1x32xf32>
    %74 = vector.broadcast %73 : vector<1x32xf32> to vector<256x32xf32>
    %75 = arith.mulf %72, %74 : vector<256x32xf32>
    %c0_65 = arith.constant 0 : index
    %c0_66 = arith.constant 0 : index
    %76 = vector.load %arg4[%c0_65, %c0_66] : memref<1x32xf32, #tpu.memory_space<vmem>>, vector<1x32xf32>
    %77 = vector.broadcast %76 : vector<1x32xf32> to vector<256x32xf32>
    %78 = arith.addf %75, %77 : vector<256x32xf32>
    %cst_67 = arith.constant 0.000000e+00 : f32
    %79 = vector.broadcast %cst_67 : f32 to vector<256x32xf32>
    %80 = arith.maximumf %78, %79 : vector<256x32xf32>
    %cst_68 = arith.constant 0.000000e+00 : f32
    %81 = vector.broadcast %cst_68 : f32 to vector<18x18x32xf32>
    %c0_69 = arith.constant 0 : index
    %c0_70 = arith.constant 0 : index
    %c0_71 = arith.constant 0 : index
    %82 = vector.load %arg14[%c0_69, %c0_70, %c0_71] : memref<18x18x32xf32, #tpu.memory_space<vmem>>, vector<18x18x32xf32>
    tpu.vector_store %arg14[%c0_69, %c0_70, %c0_71], %81 {strides = array<i32>} : memref<18x18x32xf32, #tpu.memory_space<vmem>>, vector<18x18x32xf32>,
    %83 = vector.shape_cast %80 : vector<256x32xf32> to vector<16x16x32xf32>
    %c1_72 = arith.constant 1 : index
    %c1_73 = arith.constant 1 : index
    %c0_74 = arith.constant 0 : index
    %84 = vector.load %arg14[%c1_72, %c1_73, %c0_74] : memref<18x18x32xf32, #tpu.memory_space<vmem>>, vector<16x16x32xf32>
    tpu.vector_store %arg14[%c1_72, %c1_73, %c0_74], %83 {strides = array<i32>} : memref<18x18x32xf32, #tpu.memory_space<vmem>>, vector<16x16x32xf32>,
    %cst_75 = arith.constant 0.000000e+00 : f32
    %85 = vector.broadcast %cst_75 : f32 to vector<256x32xf32>
    %c0_76 = arith.constant 0 : index
    %c0_77 = arith.constant 0 : index
    %c0_78 = arith.constant 0 : index
    %86 = vector.load %arg14[%c0_76, %c0_77, %c0_78] : memref<18x18x32xf32, #tpu.memory_space<vmem>>, vector<16x16x32xf32>
    %87 = vector.shape_cast %86 : vector<16x16x32xf32> to vector<256x32xf32>
    %88 = arith.truncf %87 : vector<256x32xf32> to vector<256x32xbf16>
    %c0_79 = arith.constant 0 : index
    %c0_80 = arith.constant 0 : index
    %c0_81 = arith.constant 0 : index
    %89 = vector.load %arg5[%c0_79, %c0_80, %c0_81] : memref<9x32x32xbf16, #tpu.memory_space<vmem>>, vector<1x32x32xbf16>
    %90 = vector.shape_cast %89 : vector<1x32x32xbf16> to vector<32x32xbf16>
    %cst_82 = arith.constant dense<0.000000e+00> : vector<256x32xf32>
    %91 = tpu.matmul %88, %90, %cst_82 {dimension_numbers = #tpu.dot_dimension_numbers<[1], [0], [0], [1], [0, 0, 1, 1], [], []>} : vector<256x32xbf16>, vector<32x32xbf16>, vector<256x32xf32> -> vector<256x32xf32>
    %92 = arith.addf %85, %91 : vector<256x32xf32>
    %c0_83 = arith.constant 0 : index
    %c1_84 = arith.constant 1 : index
    %c0_85 = arith.constant 0 : index
    %93 = vector.load %arg14[%c0_83, %c1_84, %c0_85] : memref<18x18x32xf32, #tpu.memory_space<vmem>>, vector<16x16x32xf32>
    %94 = vector.shape_cast %93 : vector<16x16x32xf32> to vector<256x32xf32>
    %95 = arith.truncf %94 : vector<256x32xf32> to vector<256x32xbf16>
    %c1_86 = arith.constant 1 : index
    %c0_87 = arith.constant 0 : index
    %c0_88 = arith.constant 0 : index
    %96 = vector.load %arg5[%c1_86, %c0_87, %c0_88] : memref<9x32x32xbf16, #tpu.memory_space<vmem>>, vector<1x32x32xbf16>
    %97 = vector.shape_cast %96 : vector<1x32x32xbf16> to vector<32x32xbf16>
    %cst_89 = arith.constant dense<0.000000e+00> : vector<256x32xf32>
    %98 = tpu.matmul %95, %97, %cst_89 {dimension_numbers = #tpu.dot_dimension_numbers<[1], [0], [0], [1], [0, 0, 1, 1], [], []>} : vector<256x32xbf16>, vector<32x32xbf16>, vector<256x32xf32> -> vector<256x32xf32>
    %99 = arith.addf %92, %98 : vector<256x32xf32>
    %c0_90 = arith.constant 0 : index
    %c2_91 = arith.constant 2 : index
    %c0_92 = arith.constant 0 : index
    %100 = vector.load %arg14[%c0_90, %c2_91, %c0_92] : memref<18x18x32xf32, #tpu.memory_space<vmem>>, vector<16x16x32xf32>
    %101 = vector.shape_cast %100 : vector<16x16x32xf32> to vector<256x32xf32>
    %102 = arith.truncf %101 : vector<256x32xf32> to vector<256x32xbf16>
    %c2_93 = arith.constant 2 : index
    %c0_94 = arith.constant 0 : index
    %c0_95 = arith.constant 0 : index
    %103 = vector.load %arg5[%c2_93, %c0_94, %c0_95] : memref<9x32x32xbf16, #tpu.memory_space<vmem>>, vector<1x32x32xbf16>
    %104 = vector.shape_cast %103 : vector<1x32x32xbf16> to vector<32x32xbf16>
    %cst_96 = arith.constant dense<0.000000e+00> : vector<256x32xf32>
    %105 = tpu.matmul %102, %104, %cst_96 {dimension_numbers = #tpu.dot_dimension_numbers<[1], [0], [0], [1], [0, 0, 1, 1], [], []>} : vector<256x32xbf16>, vector<32x32xbf16>, vector<256x32xf32> -> vector<256x32xf32>
    %106 = arith.addf %99, %105 : vector<256x32xf32>
    %c1_97 = arith.constant 1 : index
    %c0_98 = arith.constant 0 : index
    %c0_99 = arith.constant 0 : index
    %107 = vector.load %arg14[%c1_97, %c0_98, %c0_99] : memref<18x18x32xf32, #tpu.memory_space<vmem>>, vector<16x16x32xf32>
    %108 = vector.shape_cast %107 : vector<16x16x32xf32> to vector<256x32xf32>
    %109 = arith.truncf %108 : vector<256x32xf32> to vector<256x32xbf16>
    %c3_100 = arith.constant 3 : index
    %c0_101 = arith.constant 0 : index
    %c0_102 = arith.constant 0 : index
    %110 = vector.load %arg5[%c3_100, %c0_101, %c0_102] : memref<9x32x32xbf16, #tpu.memory_space<vmem>>, vector<1x32x32xbf16>
    %111 = vector.shape_cast %110 : vector<1x32x32xbf16> to vector<32x32xbf16>
    %cst_103 = arith.constant dense<0.000000e+00> : vector<256x32xf32>
    %112 = tpu.matmul %109, %111, %cst_103 {dimension_numbers = #tpu.dot_dimension_numbers<[1], [0], [0], [1], [0, 0, 1, 1], [], []>} : vector<256x32xbf16>, vector<32x32xbf16>, vector<256x32xf32> -> vector<256x32xf32>
    %113 = arith.addf %106, %112 : vector<256x32xf32>
    %c1_104 = arith.constant 1 : index
    %c1_105 = arith.constant 1 : index
    %c0_106 = arith.constant 0 : index
    %114 = vector.load %arg14[%c1_104, %c1_105, %c0_106] : memref<18x18x32xf32, #tpu.memory_space<vmem>>, vector<16x16x32xf32>
    %115 = vector.shape_cast %114 : vector<16x16x32xf32> to vector<256x32xf32>
    %116 = arith.truncf %115 : vector<256x32xf32> to vector<256x32xbf16>
    %c4_107 = arith.constant 4 : index
    %c0_108 = arith.constant 0 : index
    %c0_109 = arith.constant 0 : index
    %117 = vector.load %arg5[%c4_107, %c0_108, %c0_109] : memref<9x32x32xbf16, #tpu.memory_space<vmem>>, vector<1x32x32xbf16>
    %118 = vector.shape_cast %117 : vector<1x32x32xbf16> to vector<32x32xbf16>
    %cst_110 = arith.constant dense<0.000000e+00> : vector<256x32xf32>
    %119 = tpu.matmul %116, %118, %cst_110 {dimension_numbers = #tpu.dot_dimension_numbers<[1], [0], [0], [1], [0, 0, 1, 1], [], []>} : vector<256x32xbf16>, vector<32x32xbf16>, vector<256x32xf32> -> vector<256x32xf32>
    %120 = arith.addf %113, %119 : vector<256x32xf32>
    %c1_111 = arith.constant 1 : index
    %c2_112 = arith.constant 2 : index
    %c0_113 = arith.constant 0 : index
    %121 = vector.load %arg14[%c1_111, %c2_112, %c0_113] : memref<18x18x32xf32, #tpu.memory_space<vmem>>, vector<16x16x32xf32>
    %122 = vector.shape_cast %121 : vector<16x16x32xf32> to vector<256x32xf32>
    %123 = arith.truncf %122 : vector<256x32xf32> to vector<256x32xbf16>
    %c5_114 = arith.constant 5 : index
    %c0_115 = arith.constant 0 : index
    %c0_116 = arith.constant 0 : index
    %124 = vector.load %arg5[%c5_114, %c0_115, %c0_116] : memref<9x32x32xbf16, #tpu.memory_space<vmem>>, vector<1x32x32xbf16>
    %125 = vector.shape_cast %124 : vector<1x32x32xbf16> to vector<32x32xbf16>
    %cst_117 = arith.constant dense<0.000000e+00> : vector<256x32xf32>
    %126 = tpu.matmul %123, %125, %cst_117 {dimension_numbers = #tpu.dot_dimension_numbers<[1], [0], [0], [1], [0, 0, 1, 1], [], []>} : vector<256x32xbf16>, vector<32x32xbf16>, vector<256x32xf32> -> vector<256x32xf32>
    %127 = arith.addf %120, %126 : vector<256x32xf32>
    %c2_118 = arith.constant 2 : index
    %c0_119 = arith.constant 0 : index
    %c0_120 = arith.constant 0 : index
    %128 = vector.load %arg14[%c2_118, %c0_119, %c0_120] : memref<18x18x32xf32, #tpu.memory_space<vmem>>, vector<16x16x32xf32>
    %129 = vector.shape_cast %128 : vector<16x16x32xf32> to vector<256x32xf32>
    %130 = arith.truncf %129 : vector<256x32xf32> to vector<256x32xbf16>
    %c6_121 = arith.constant 6 : index
    %c0_122 = arith.constant 0 : index
    %c0_123 = arith.constant 0 : index
    %131 = vector.load %arg5[%c6_121, %c0_122, %c0_123] : memref<9x32x32xbf16, #tpu.memory_space<vmem>>, vector<1x32x32xbf16>
    %132 = vector.shape_cast %131 : vector<1x32x32xbf16> to vector<32x32xbf16>
    %cst_124 = arith.constant dense<0.000000e+00> : vector<256x32xf32>
    %133 = tpu.matmul %130, %132, %cst_124 {dimension_numbers = #tpu.dot_dimension_numbers<[1], [0], [0], [1], [0, 0, 1, 1], [], []>} : vector<256x32xbf16>, vector<32x32xbf16>, vector<256x32xf32> -> vector<256x32xf32>
    %134 = arith.addf %127, %133 : vector<256x32xf32>
    %c2_125 = arith.constant 2 : index
    %c1_126 = arith.constant 1 : index
    %c0_127 = arith.constant 0 : index
    %135 = vector.load %arg14[%c2_125, %c1_126, %c0_127] : memref<18x18x32xf32, #tpu.memory_space<vmem>>, vector<16x16x32xf32>
    %136 = vector.shape_cast %135 : vector<16x16x32xf32> to vector<256x32xf32>
    %137 = arith.truncf %136 : vector<256x32xf32> to vector<256x32xbf16>
    %c7_128 = arith.constant 7 : index
    %c0_129 = arith.constant 0 : index
    %c0_130 = arith.constant 0 : index
    %138 = vector.load %arg5[%c7_128, %c0_129, %c0_130] : memref<9x32x32xbf16, #tpu.memory_space<vmem>>, vector<1x32x32xbf16>
    %139 = vector.shape_cast %138 : vector<1x32x32xbf16> to vector<32x32xbf16>
    %cst_131 = arith.constant dense<0.000000e+00> : vector<256x32xf32>
    %140 = tpu.matmul %137, %139, %cst_131 {dimension_numbers = #tpu.dot_dimension_numbers<[1], [0], [0], [1], [0, 0, 1, 1], [], []>} : vector<256x32xbf16>, vector<32x32xbf16>, vector<256x32xf32> -> vector<256x32xf32>
    %141 = arith.addf %134, %140 : vector<256x32xf32>
    %c2_132 = arith.constant 2 : index
    %c2_133 = arith.constant 2 : index
    %c0_134 = arith.constant 0 : index
    %142 = vector.load %arg14[%c2_132, %c2_133, %c0_134] : memref<18x18x32xf32, #tpu.memory_space<vmem>>, vector<16x16x32xf32>
    %143 = vector.shape_cast %142 : vector<16x16x32xf32> to vector<256x32xf32>
    %144 = arith.truncf %143 : vector<256x32xf32> to vector<256x32xbf16>
    %c8_135 = arith.constant 8 : index
    %c0_136 = arith.constant 0 : index
    %c0_137 = arith.constant 0 : index
    %145 = vector.load %arg5[%c8_135, %c0_136, %c0_137] : memref<9x32x32xbf16, #tpu.memory_space<vmem>>, vector<1x32x32xbf16>
    %146 = vector.shape_cast %145 : vector<1x32x32xbf16> to vector<32x32xbf16>
    %cst_138 = arith.constant dense<0.000000e+00> : vector<256x32xf32>
    %147 = tpu.matmul %144, %146, %cst_138 {dimension_numbers = #tpu.dot_dimension_numbers<[1], [0], [0], [1], [0, 0, 1, 1], [], []>} : vector<256x32xbf16>, vector<32x32xbf16>, vector<256x32xf32> -> vector<256x32xf32>
    %148 = arith.addf %141, %147 : vector<256x32xf32>
    %c0_139 = arith.constant 0 : index
    %c0_140 = arith.constant 0 : index
    %149 = vector.load %arg6[%c0_139, %c0_140] : memref<1x32xf32, #tpu.memory_space<vmem>>, vector<1x32xf32>
    %150 = vector.broadcast %149 : vector<1x32xf32> to vector<256x32xf32>
    %151 = arith.mulf %148, %150 : vector<256x32xf32>
    %c0_141 = arith.constant 0 : index
    %c0_142 = arith.constant 0 : index
    %152 = vector.load %arg7[%c0_141, %c0_142] : memref<1x32xf32, #tpu.memory_space<vmem>>, vector<1x32xf32>
    %153 = vector.broadcast %152 : vector<1x32xf32> to vector<256x32xf32>
    %154 = arith.addf %151, %153 : vector<256x32xf32>
    %cst_143 = arith.constant 0.000000e+00 : f32
    %155 = vector.broadcast %cst_143 : f32 to vector<256x32xf32>
    %156 = arith.maximumf %154, %155 : vector<256x32xf32>
    %cst_144 = arith.constant 0.000000e+00 : f32
    %157 = vector.broadcast %cst_144 : f32 to vector<18x18x32xf32>
    %c0_145 = arith.constant 0 : index
    %c0_146 = arith.constant 0 : index
    %c0_147 = arith.constant 0 : index
    %158 = vector.load %arg14[%c0_145, %c0_146, %c0_147] : memref<18x18x32xf32, #tpu.memory_space<vmem>>, vector<18x18x32xf32>
    tpu.vector_store %arg14[%c0_145, %c0_146, %c0_147], %157 {strides = array<i32>} : memref<18x18x32xf32, #tpu.memory_space<vmem>>, vector<18x18x32xf32>,
    %159 = vector.shape_cast %156 : vector<256x32xf32> to vector<16x16x32xf32>
    %c1_148 = arith.constant 1 : index
    %c1_149 = arith.constant 1 : index
    %c0_150 = arith.constant 0 : index
    %160 = vector.load %arg14[%c1_148, %c1_149, %c0_150] : memref<18x18x32xf32, #tpu.memory_space<vmem>>, vector<16x16x32xf32>
    tpu.vector_store %arg14[%c1_148, %c1_149, %c0_150], %159 {strides = array<i32>} : memref<18x18x32xf32, #tpu.memory_space<vmem>>, vector<16x16x32xf32>,
    %cst_151 = arith.constant 0.000000e+00 : f32
    %161 = vector.broadcast %cst_151 : f32 to vector<256x32xf32>
    %c0_152 = arith.constant 0 : index
    %c0_153 = arith.constant 0 : index
    %c0_154 = arith.constant 0 : index
    %162 = vector.load %arg14[%c0_152, %c0_153, %c0_154] : memref<18x18x32xf32, #tpu.memory_space<vmem>>, vector<16x16x32xf32>
    %163 = vector.shape_cast %162 : vector<16x16x32xf32> to vector<256x32xf32>
    %164 = arith.truncf %163 : vector<256x32xf32> to vector<256x32xbf16>
    %c0_155 = arith.constant 0 : index
    %c0_156 = arith.constant 0 : index
    %c0_157 = arith.constant 0 : index
    %165 = vector.load %arg8[%c0_155, %c0_156, %c0_157] : memref<9x32x32xbf16, #tpu.memory_space<vmem>>, vector<1x32x32xbf16>
    %166 = vector.shape_cast %165 : vector<1x32x32xbf16> to vector<32x32xbf16>
    %cst_158 = arith.constant dense<0.000000e+00> : vector<256x32xf32>
    %167 = tpu.matmul %164, %166, %cst_158 {dimension_numbers = #tpu.dot_dimension_numbers<[1], [0], [0], [1], [0, 0, 1, 1], [], []>} : vector<256x32xbf16>, vector<32x32xbf16>, vector<256x32xf32> -> vector<256x32xf32>
    %168 = arith.addf %161, %167 : vector<256x32xf32>
    %c0_159 = arith.constant 0 : index
    %c1_160 = arith.constant 1 : index
    %c0_161 = arith.constant 0 : index
    %169 = vector.load %arg14[%c0_159, %c1_160, %c0_161] : memref<18x18x32xf32, #tpu.memory_space<vmem>>, vector<16x16x32xf32>
    %170 = vector.shape_cast %169 : vector<16x16x32xf32> to vector<256x32xf32>
    %171 = arith.truncf %170 : vector<256x32xf32> to vector<256x32xbf16>
    %c1_162 = arith.constant 1 : index
    %c0_163 = arith.constant 0 : index
    %c0_164 = arith.constant 0 : index
    %172 = vector.load %arg8[%c1_162, %c0_163, %c0_164] : memref<9x32x32xbf16, #tpu.memory_space<vmem>>, vector<1x32x32xbf16>
    %173 = vector.shape_cast %172 : vector<1x32x32xbf16> to vector<32x32xbf16>
    %cst_165 = arith.constant dense<0.000000e+00> : vector<256x32xf32>
    %174 = tpu.matmul %171, %173, %cst_165 {dimension_numbers = #tpu.dot_dimension_numbers<[1], [0], [0], [1], [0, 0, 1, 1], [], []>} : vector<256x32xbf16>, vector<32x32xbf16>, vector<256x32xf32> -> vector<256x32xf32>
    %175 = arith.addf %168, %174 : vector<256x32xf32>
    %c0_166 = arith.constant 0 : index
    %c2_167 = arith.constant 2 : index
    %c0_168 = arith.constant 0 : index
    %176 = vector.load %arg14[%c0_166, %c2_167, %c0_168] : memref<18x18x32xf32, #tpu.memory_space<vmem>>, vector<16x16x32xf32>
    %177 = vector.shape_cast %176 : vector<16x16x32xf32> to vector<256x32xf32>
    %178 = arith.truncf %177 : vector<256x32xf32> to vector<256x32xbf16>
    %c2_169 = arith.constant 2 : index
    %c0_170 = arith.constant 0 : index
    %c0_171 = arith.constant 0 : index
    %179 = vector.load %arg8[%c2_169, %c0_170, %c0_171] : memref<9x32x32xbf16, #tpu.memory_space<vmem>>, vector<1x32x32xbf16>
    %180 = vector.shape_cast %179 : vector<1x32x32xbf16> to vector<32x32xbf16>
    %cst_172 = arith.constant dense<0.000000e+00> : vector<256x32xf32>
    %181 = tpu.matmul %178, %180, %cst_172 {dimension_numbers = #tpu.dot_dimension_numbers<[1], [0], [0], [1], [0, 0, 1, 1], [], []>} : vector<256x32xbf16>, vector<32x32xbf16>, vector<256x32xf32> -> vector<256x32xf32>
    %182 = arith.addf %175, %181 : vector<256x32xf32>
    %c1_173 = arith.constant 1 : index
    %c0_174 = arith.constant 0 : index
    %c0_175 = arith.constant 0 : index
    %183 = vector.load %arg14[%c1_173, %c0_174, %c0_175] : memref<18x18x32xf32, #tpu.memory_space<vmem>>, vector<16x16x32xf32>
    %184 = vector.shape_cast %183 : vector<16x16x32xf32> to vector<256x32xf32>
    %185 = arith.truncf %184 : vector<256x32xf32> to vector<256x32xbf16>
    %c3_176 = arith.constant 3 : index
    %c0_177 = arith.constant 0 : index
    %c0_178 = arith.constant 0 : index
    %186 = vector.load %arg8[%c3_176, %c0_177, %c0_178] : memref<9x32x32xbf16, #tpu.memory_space<vmem>>, vector<1x32x32xbf16>
    %187 = vector.shape_cast %186 : vector<1x32x32xbf16> to vector<32x32xbf16>
    %cst_179 = arith.constant dense<0.000000e+00> : vector<256x32xf32>
    %188 = tpu.matmul %185, %187, %cst_179 {dimension_numbers = #tpu.dot_dimension_numbers<[1], [0], [0], [1], [0, 0, 1, 1], [], []>} : vector<256x32xbf16>, vector<32x32xbf16>, vector<256x32xf32> -> vector<256x32xf32>
    %189 = arith.addf %182, %188 : vector<256x32xf32>
    %c1_180 = arith.constant 1 : index
    %c1_181 = arith.constant 1 : index
    %c0_182 = arith.constant 0 : index
    %190 = vector.load %arg14[%c1_180, %c1_181, %c0_182] : memref<18x18x32xf32, #tpu.memory_space<vmem>>, vector<16x16x32xf32>
    %191 = vector.shape_cast %190 : vector<16x16x32xf32> to vector<256x32xf32>
    %192 = arith.truncf %191 : vector<256x32xf32> to vector<256x32xbf16>
    %c4_183 = arith.constant 4 : index
    %c0_184 = arith.constant 0 : index
    %c0_185 = arith.constant 0 : index
    %193 = vector.load %arg8[%c4_183, %c0_184, %c0_185] : memref<9x32x32xbf16, #tpu.memory_space<vmem>>, vector<1x32x32xbf16>
    %194 = vector.shape_cast %193 : vector<1x32x32xbf16> to vector<32x32xbf16>
    %cst_186 = arith.constant dense<0.000000e+00> : vector<256x32xf32>
    %195 = tpu.matmul %192, %194, %cst_186 {dimension_numbers = #tpu.dot_dimension_numbers<[1], [0], [0], [1], [0, 0, 1, 1], [], []>} : vector<256x32xbf16>, vector<32x32xbf16>, vector<256x32xf32> -> vector<256x32xf32>
    %196 = arith.addf %189, %195 : vector<256x32xf32>
    %c1_187 = arith.constant 1 : index
    %c2_188 = arith.constant 2 : index
    %c0_189 = arith.constant 0 : index
    %197 = vector.load %arg14[%c1_187, %c2_188, %c0_189] : memref<18x18x32xf32, #tpu.memory_space<vmem>>, vector<16x16x32xf32>
    %198 = vector.shape_cast %197 : vector<16x16x32xf32> to vector<256x32xf32>
    %199 = arith.truncf %198 : vector<256x32xf32> to vector<256x32xbf16>
    %c5_190 = arith.constant 5 : index
    %c0_191 = arith.constant 0 : index
    %c0_192 = arith.constant 0 : index
    %200 = vector.load %arg8[%c5_190, %c0_191, %c0_192] : memref<9x32x32xbf16, #tpu.memory_space<vmem>>, vector<1x32x32xbf16>
    %201 = vector.shape_cast %200 : vector<1x32x32xbf16> to vector<32x32xbf16>
    %cst_193 = arith.constant dense<0.000000e+00> : vector<256x32xf32>
    %202 = tpu.matmul %199, %201, %cst_193 {dimension_numbers = #tpu.dot_dimension_numbers<[1], [0], [0], [1], [0, 0, 1, 1], [], []>} : vector<256x32xbf16>, vector<32x32xbf16>, vector<256x32xf32> -> vector<256x32xf32>
    %203 = arith.addf %196, %202 : vector<256x32xf32>
    %c2_194 = arith.constant 2 : index
    %c0_195 = arith.constant 0 : index
    %c0_196 = arith.constant 0 : index
    %204 = vector.load %arg14[%c2_194, %c0_195, %c0_196] : memref<18x18x32xf32, #tpu.memory_space<vmem>>, vector<16x16x32xf32>
    %205 = vector.shape_cast %204 : vector<16x16x32xf32> to vector<256x32xf32>
    %206 = arith.truncf %205 : vector<256x32xf32> to vector<256x32xbf16>
    %c6_197 = arith.constant 6 : index
    %c0_198 = arith.constant 0 : index
    %c0_199 = arith.constant 0 : index
    %207 = vector.load %arg8[%c6_197, %c0_198, %c0_199] : memref<9x32x32xbf16, #tpu.memory_space<vmem>>, vector<1x32x32xbf16>
    %208 = vector.shape_cast %207 : vector<1x32x32xbf16> to vector<32x32xbf16>
    %cst_200 = arith.constant dense<0.000000e+00> : vector<256x32xf32>
    %209 = tpu.matmul %206, %208, %cst_200 {dimension_numbers = #tpu.dot_dimension_numbers<[1], [0], [0], [1], [0, 0, 1, 1], [], []>} : vector<256x32xbf16>, vector<32x32xbf16>, vector<256x32xf32> -> vector<256x32xf32>
    %210 = arith.addf %203, %209 : vector<256x32xf32>
    %c2_201 = arith.constant 2 : index
    %c1_202 = arith.constant 1 : index
    %c0_203 = arith.constant 0 : index
    %211 = vector.load %arg14[%c2_201, %c1_202, %c0_203] : memref<18x18x32xf32, #tpu.memory_space<vmem>>, vector<16x16x32xf32>
    %212 = vector.shape_cast %211 : vector<16x16x32xf32> to vector<256x32xf32>
    %213 = arith.truncf %212 : vector<256x32xf32> to vector<256x32xbf16>
    %c7_204 = arith.constant 7 : index
    %c0_205 = arith.constant 0 : index
    %c0_206 = arith.constant 0 : index
    %214 = vector.load %arg8[%c7_204, %c0_205, %c0_206] : memref<9x32x32xbf16, #tpu.memory_space<vmem>>, vector<1x32x32xbf16>
    %215 = vector.shape_cast %214 : vector<1x32x32xbf16> to vector<32x32xbf16>
    %cst_207 = arith.constant dense<0.000000e+00> : vector<256x32xf32>
    %216 = tpu.matmul %213, %215, %cst_207 {dimension_numbers = #tpu.dot_dimension_numbers<[1], [0], [0], [1], [0, 0, 1, 1], [], []>} : vector<256x32xbf16>, vector<32x32xbf16>, vector<256x32xf32> -> vector<256x32xf32>
    %217 = arith.addf %210, %216 : vector<256x32xf32>
    %c2_208 = arith.constant 2 : index
    %c2_209 = arith.constant 2 : index
    %c0_210 = arith.constant 0 : index
    %218 = vector.load %arg14[%c2_208, %c2_209, %c0_210] : memref<18x18x32xf32, #tpu.memory_space<vmem>>, vector<16x16x32xf32>
    %219 = vector.shape_cast %218 : vector<16x16x32xf32> to vector<256x32xf32>
    %220 = arith.truncf %219 : vector<256x32xf32> to vector<256x32xbf16>
    %c8_211 = arith.constant 8 : index
    %c0_212 = arith.constant 0 : index
    %c0_213 = arith.constant 0 : index
    %221 = vector.load %arg8[%c8_211, %c0_212, %c0_213] : memref<9x32x32xbf16, #tpu.memory_space<vmem>>, vector<1x32x32xbf16>
    %222 = vector.shape_cast %221 : vector<1x32x32xbf16> to vector<32x32xbf16>
    %cst_214 = arith.constant dense<0.000000e+00> : vector<256x32xf32>
    %223 = tpu.matmul %220, %222, %cst_214 {dimension_numbers = #tpu.dot_dimension_numbers<[1], [0], [0], [1], [0, 0, 1, 1], [], []>} : vector<256x32xbf16>, vector<32x32xbf16>, vector<256x32xf32> -> vector<256x32xf32>
    %224 = arith.addf %217, %223 : vector<256x32xf32>
    %c0_215 = arith.constant 0 : index
    %c0_216 = arith.constant 0 : index
    %225 = vector.load %arg9[%c0_215, %c0_216] : memref<1x32xf32, #tpu.memory_space<vmem>>, vector<1x32xf32>
    %226 = vector.broadcast %225 : vector<1x32xf32> to vector<256x32xf32>
    %227 = arith.mulf %224, %226 : vector<256x32xf32>
    %c0_217 = arith.constant 0 : index
    %c0_218 = arith.constant 0 : index
    %228 = vector.load %arg10[%c0_217, %c0_218] : memref<1x32xf32, #tpu.memory_space<vmem>>, vector<1x32xf32>
    %229 = vector.broadcast %228 : vector<1x32xf32> to vector<256x32xf32>
    %230 = arith.addf %227, %229 : vector<256x32xf32>
    %231 = arith.addf %230, %80 : vector<256x32xf32>
    %cst_219 = arith.constant 0.000000e+00 : f32
    %232 = vector.broadcast %cst_219 : f32 to vector<256x32xf32>
    %233 = arith.maximumf %231, %232 : vector<256x32xf32>
    %cst_220 = arith.constant dense<0.000000e+00> : vector<32xf32>
    %234 = vector.multi_reduction <add>, %233, %cst_220 [0] : vector<256x32xf32> to vector<32xf32>
    %235 = vector.shape_cast %234 : vector<32xf32> to vector<1x32xf32>
    %cst_221 = arith.constant 2.560000e+02 : f32
    %236 = vector.broadcast %cst_221 : f32 to vector<1x32xf32>
    %237 = arith.divf %235, %236 : vector<1x32xf32>
    %c0_222 = arith.constant 0 : index
    %c0_223 = arith.constant 0 : index
    %238 = vector.load %arg11[%c0_222, %c0_223] : memref<1x32xf32, #tpu.memory_space<vmem>>, vector<1x32xf32>
    %239 = arith.mulf %237, %238 : vector<1x32xf32>
    %cst_224 = arith.constant dense<0.000000e+00> : vector<1xf32>
    %240 = vector.multi_reduction <add>, %239, %cst_224 [1] : vector<1x32xf32> to vector<1xf32>
    %241 = vector.shape_cast %240 : vector<1xf32> to vector<1x1xf32>
    %c0_225 = arith.constant 0 : index
    %c0_226 = arith.constant 0 : index
    %242 = vector.load %arg12[%c0_225, %c0_226] : memref<1x1xf32, #tpu.memory_space<vmem>>, vector<1x1xf32>
    %243 = arith.addf %241, %242 : vector<1x1xf32>
    %244 = vector.shape_cast %243 : vector<1x1xf32> to vector<1x1xf32>
    %245 = vector.broadcast %244 : vector<1x1xf32> to vector<1x128xf32>
    %c0_227 = arith.constant 0 : index
    %c0_228 = arith.constant 0 : index
    %c0_229 = arith.constant 0 : index
    %246 = vector.load %arg13[%c0_227, %c0_228, %c0_229] : memref<1x1x128xf32, #tpu.memory_space<vmem>>, vector<1x1x128xf32>
    %247 = vector.shape_cast %246 : vector<1x1x128xf32> to vector<1x128xf32>
    %248 = vector.shape_cast %245 : vector<1x128xf32> to vector<1x1x128xf32>
    tpu.vector_store %arg13[%c0_227, %c0_228, %c0_229], %248 {strides = array<i32>} : memref<1x1x128xf32, #tpu.memory_space<vmem>>, vector<1x1x128xf32>,
    return
  }
  func.func @transform_0(%arg0: i32) -> (i32, i32, i32, i32) {
    %c0_i32 = arith.constant 0 : i32
    %c0_i32_0 = arith.constant 0 : i32
    %c0_i32_1 = arith.constant 0 : i32
    %c0_i32_2 = arith.constant 0 : i32
    return %arg0, %c0_i32, %c0_i32_0, %c0_i32_1 : i32, i32, i32, i32
  }
  func.func @transform_1(%arg0: i32) -> (i32, i32, i32) {
    %c0_i32 = arith.constant 0 : i32
    %c0_i32_0 = arith.constant 0 : i32
    %c0_i32_1 = arith.constant 0 : i32
    %c0_i32_2 = arith.constant 0 : i32
    return %c0_i32, %c0_i32_0, %c0_i32_1 : i32, i32, i32
  }
  func.func @transform_2(%arg0: i32) -> (i32, i32) {
    %c0_i32 = arith.constant 0 : i32
    %c0_i32_0 = arith.constant 0 : i32
    %c0_i32_1 = arith.constant 0 : i32
    return %c0_i32, %c0_i32_0 : i32, i32
  }
  func.func @transform_3(%arg0: i32) -> (i32, i32) {
    %c0_i32 = arith.constant 0 : i32
    %c0_i32_0 = arith.constant 0 : i32
    %c0_i32_1 = arith.constant 0 : i32
    return %c0_i32, %c0_i32_0 : i32, i32
  }
  func.func @transform_4(%arg0: i32) -> (i32, i32, i32) {
    %c0_i32 = arith.constant 0 : i32
    %c0_i32_0 = arith.constant 0 : i32
    %c0_i32_1 = arith.constant 0 : i32
    %c0_i32_2 = arith.constant 0 : i32
    return %c0_i32, %c0_i32_0, %c0_i32_1 : i32, i32, i32
  }
  func.func @transform_5(%arg0: i32) -> (i32, i32) {
    %c0_i32 = arith.constant 0 : i32
    %c0_i32_0 = arith.constant 0 : i32
    %c0_i32_1 = arith.constant 0 : i32
    return %c0_i32, %c0_i32_0 : i32, i32
  }
  func.func @transform_6(%arg0: i32) -> (i32, i32) {
    %c0_i32 = arith.constant 0 : i32
    %c0_i32_0 = arith.constant 0 : i32
    %c0_i32_1 = arith.constant 0 : i32
    return %c0_i32, %c0_i32_0 : i32, i32
  }
  func.func @transform_7(%arg0: i32) -> (i32, i32, i32) {
    %c0_i32 = arith.constant 0 : i32
    %c0_i32_0 = arith.constant 0 : i32
    %c0_i32_1 = arith.constant 0 : i32
    %c0_i32_2 = arith.constant 0 : i32
    return %c0_i32, %c0_i32_0, %c0_i32_1 : i32, i32, i32
  }
  func.func @transform_8(%arg0: i32) -> (i32, i32) {
    %c0_i32 = arith.constant 0 : i32
    %c0_i32_0 = arith.constant 0 : i32
    %c0_i32_1 = arith.constant 0 : i32
    return %c0_i32, %c0_i32_0 : i32, i32
  }
  func.func @transform_9(%arg0: i32) -> (i32, i32) {
    %c0_i32 = arith.constant 0 : i32
    %c0_i32_0 = arith.constant 0 : i32
    %c0_i32_1 = arith.constant 0 : i32
    return %c0_i32, %c0_i32_0 : i32, i32
  }
  func.func @transform_10(%arg0: i32) -> (i32, i32) {
    %c0_i32 = arith.constant 0 : i32
    %c0_i32_0 = arith.constant 0 : i32
    %c0_i32_1 = arith.constant 0 : i32
    return %c0_i32, %c0_i32_0 : i32, i32
  }
  func.func @transform_11(%arg0: i32) -> (i32, i32) {
    %c0_i32 = arith.constant 0 : i32
    %c0_i32_0 = arith.constant 0 : i32
    %c0_i32_1 = arith.constant 0 : i32
    return %c0_i32, %c0_i32_0 : i32, i32
  }
  func.func @transform_12(%arg0: i32) -> (i32, i32, i32) {
    %c0_i32 = arith.constant 0 : i32
    %c0_i32_0 = arith.constant 0 : i32
    %c0_i32_1 = arith.constant 0 : i32
    return %arg0, %c0_i32, %c0_i32_0 : i32, i32, i32
  }
}

</mosaic_0001>

<llo_original>
// kernel: resnet_regression_head_forward.1
$region0: #{resnet_regression_head_forward.1}
  #allocation0 [shape = 'u32[]', space=smem, size = 0x4, offset = 0x4, fixed_abs, tag = 'smem constant byte address 0x4 - core index']
  #allocation1 [shape = 'u32[144,128]{1,0:T(1,128)}', space=vmem, size = 0x12000, scoped, tag = 'internal scratch']
  #allocation2 [shape = 'f32[18,18,32]{2,1,0:T(8,128)}', space=vmem, size = 0x36000, scoped, tag = 'scratch operand']
  #allocation3 [shape = 'f32[1,1]{1,0:T(1,128)S(1)}', space=vmem, size = 0x200, scoped, tag = 'scoped memory for resnet_regression_head_forward.1']
  %s0 = inlined_call_operand.hbm [shape: f32[2,18,18,4], index: 0, kind: input, shape index: {}]
  %s1 = inlined_call_operand.hbm [shape: bf16[9,4,32], index: 1, kind: input, shape index: {}]
  %s2 = inlined_call_operand.hbm [shape: f32[1,32], index: 2, kind: input, shape index: {}]
  %s3 = inlined_call_operand.hbm [shape: f32[1,32], index: 3, kind: input, shape index: {}]
  %s4 = inlined_call_operand.hbm [shape: bf16[9,32,32], index: 4, kind: input, shape index: {}]
  %s5 = inlined_call_operand.hbm [shape: f32[1,32], index: 5, kind: input, shape index: {}]
  %s6 = inlined_call_operand.hbm [shape: f32[1,32], index: 6, kind: input, shape index: {}]
  %s7 = inlined_call_operand.hbm [shape: bf16[9,32,32], index: 7, kind: input, shape index: {}]
  %s8 = inlined_call_operand.hbm [shape: f32[1,32], index: 8, kind: input, shape index: {}]
  %s9 = inlined_call_operand.hbm [shape: f32[1,32], index: 9, kind: input, shape index: {}]
  %s10 = inlined_call_operand.hbm [shape: f32[1,32], index: 10, kind: input, shape index: {}]
  %s11 = inlined_call_operand.<no memory space> [shape: f32[1,1], index: 11, kind: input, shape index: {}]
  %s12 = inlined_call_operand.hbm [shape: f32[2,1,128], index: 12, kind: output, shape index: {}]
  %s13 = sld [smem:[#allocation0]]
  $region125: #{resnet_regression_head_forward.1} parent=0
    _
  %s15 = ssub.s32 1, %s13
  %s16 = scalar_select 0, %s15, %s13
  %v17 = vstv %s11
  %18 = vst [vmem:[#allocation3] sm:$0x1] %v17
  $region1: #{resnet_regression_head_forward.1} parent=0
    #allocation4 [shape = 'u8[442368]{0}', space=vmem, size = 0x6c000, scoped, tag = 'input window, operand 0']
    #allocation5 [shape = 's32[2]{0}', space=sflag, size = 0x8, scoped, tag = 'scoped memory for resnet_regression_head_forward.1']
    #allocation6 [shape = 's32[2]{0}', space=sflag, size = 0x8, scoped, tag = 'scoped memory for resnet_regression_head_forward.1']
    #allocation7 [shape = 'u8[9216]{0}', space=vmem, size = 0x2400, scoped, tag = 'input window, operand 1, single buffered']
    #allocation8 [shape = 's32[1]{0}', space=sflag, size = 0x4, scoped, tag = 'scoped memory for resnet_regression_head_forward.1']
    #allocation9 [shape = 'u8[512]{0}', space=vmem, size = 0x400, scoped, tag = 'input window, operand 2, single buffered']
    #allocation10 [shape = 'u8[512]{0}', space=vmem, size = 0x400, scoped, tag = 'input window, operand 3, single buffered']
    #allocation11 [shape = 's32[1]{0}', space=sflag, size = 0x4, scoped, tag = 'scoped memory for resnet_regression_head_forward.1']
    #allocation12 [shape = 'u8[73728]{0}', space=vmem, size = 0x12000, scoped, tag = 'input window, operand 4, single buffered']
    #allocation13 [shape = 'u8[512]{0}', space=vmem, size = 0x400, scoped, tag = 'input window, operand 5, single buffered']
    #allocation14 [shape = 's32[1]{0}', space=sflag, size = 0x4, scoped, tag = 'scoped memory for resnet_regression_head_forward.1']
    #allocation15 [shape = 'u8[512]{0}', space=vmem, size = 0x400, scoped, tag = 'input window, operand 6, single buffered']
    #allocation16 [shape = 'u8[73728]{0}', space=vmem, size = 0x12000, scoped, tag = 'input window, operand 7, single buffered']
    #allocation17 [shape = 's32[1]{0}', space=sflag, size = 0x4, scoped, tag = 'scoped memory for resnet_regression_head_forward.1']
    #allocation18 [shape = 'u8[512]{0}', space=vmem, size = 0x400, scoped, tag = 'input window, operand 8, single buffered']
    #allocation19 [shape = 'u8[512]{0}', space=vmem, size = 0x400, scoped, tag = 'input window, operand 9, single buffered']
    #allocation20 [shape = 's32[1]{0}', space=sflag, size = 0x4, scoped, tag = 'scoped memory for resnet_regression_head_forward.1']
    #allocation21 [shape = 'u8[512]{0}', space=vmem, size = 0x400, scoped, tag = 'input window, operand 10, single buffered']
    #allocation22 [shape = 'u8[1024]{0}', space=vmem, size = 0x400, scoped, tag = 'output window, operand 0']
    %19 = vsyncpa [#allocation5], 0
    %s20 = scalar_lea.sflag [#allocation5], 1
    %21 = vsyncpa %s20, 0
    %22 = vsyncpa [#allocation8], 0
    %23 = vsyncpa [#allocation11], 0
    %24 = vsyncpa [#allocation14], 0
    %25 = vsyncpa [#allocation17], 0
    %26 = vsyncpa [#allocation20], 0
    %27 = vsyncpa [#allocation6], 0
    %s28 = scalar_lea.sflag [#allocation6], 1
    %29 = vsyncpa %s28, 0
    loop: start=0, step=1, limit=4
    $region2: #{resnet_regression_head_forward.1} parent=1 // loop_pre_header
      _
    $region3: #{resnet_regression_head_forward.1} parent=1 // loop_header
      %s31 = sphi 0, %s35
      %p32 = scmp.ge.s32.totalorder %s31, 4
      %s41 = sphi 0, %s43
      %s44 = sphi 0, %s41
      %s45 = sphi 0, %s44
      %s61 = sphi 0, %s45
      %s65 = sphi 0, %s65
      %s67 = sphi 0, %s65
      %s68 = sphi 0, %s67
      %s82 = sphi 0, %s68
      %s86 = sphi 0, %s86
      %s88 = sphi 0, %s86
      %s89 = sphi 0, %s88
      %s103 = sphi 0, %s89
      %s107 = sphi 0, %s107
      %s109 = sphi 0, %s107
      %s110 = sphi 0, %s109
      %s124 = sphi 0, %s110
      %s128 = sphi 0, %s128
      %s130 = sphi 0, %s128
      %s131 = sphi 0, %s130
      %s145 = sphi 0, %s131
      %s149 = sphi 0, %s149
      %s151 = sphi 0, %s149
      %s152 = sphi 0, %s151
      %s166 = sphi 0, %s152
      %s170 = sphi 0, %s170
      %s172 = sphi 0, %s170
      %s173 = sphi 0, %s172
      %s187 = sphi 0, %s173
      %s191 = sphi 0, %s191
      %s193 = sphi 0, %s191
      %s194 = sphi 0, %s193
      %s208 = sphi 0, %s194
      %s212 = sphi 0, %s212
      %s214 = sphi 0, %s212
      %s215 = sphi 0, %s214
      %s229 = sphi 0, %s215
      %s233 = sphi 0, %s233
      %s235 = sphi 0, %s233
      %s236 = sphi 0, %s235
      %s250 = sphi 0, %s236
      %s254 = sphi 0, %s254
      %s256 = sphi 0, %s254
      %s257 = sphi 0, %s256
      %s271 = sphi 0, %s257
      %s275 = sphi 0, %s275
      %s277 = sphi 0, %s275
      %s278 = sphi 0, %s277
      %s292 = sphi 0, %s278
      %s298 = sphi 0, %s300
      %s301 = sphi 0, %s298
      %s302 = sphi 0, %s301
      %s318 = sphi 0, %s302
    $region4: #{resnet_regression_head_forward.1} parent=1 // loop_header_branch
      %34 = sbr.rel (%p32) target = $region8
    $region5: #{resnet_regression_head_forward.1} parent=1 // loop_body
      %s36 = ssub.s32 %s31, 1
      %s37 = ssub.s32 %s31, 2
      %s38 = sadd.s32 %s31, 1
      %s39 = ssub.s32 %s31, %s38
      %p40 = scmp.eq.s32.totalorder %s39, 0
      %s42 = sadd.s32 %s41, 1
      %s43 = scalar_select %p40, %s41, %s42
      %p46 = pneg %p40
      %p47 = scmp.eq.s32.totalorder %s31, 1
      %p48 = por %p46, %p47
      %p49 = scmp.ne.s32.totalorder %s41, %s44
      %p50 = scmp.eq.s32.totalorder %s31, 0
      %p51 = por %p49, %p50
      %p52 = scmp.ne.s32.totalorder %s41, %s44
      %p53 = scmp.eq.s32.totalorder %s36, 1
      %p54 = por %p52, %p53
      %p55 = scmp.ne.s32.totalorder %s44, %s45
      %p56 = scmp.eq.s32.totalorder %s36, 0
      %p57 = por %p55, %p56
      %p58 = scmp.ne.s32.totalorder %s44, %s45
      %p59 = scmp.eq.s32.totalorder %s37, 1
      %p60 = por %p58, %p59
      %p62 = scmp.ne.s32.totalorder %s45, %s61
      %p63 = scmp.eq.s32.totalorder %s37, 0
      %p64 = por %p62, %p63
      %s66 = sadd.s32 %s65, 1
      %p69 = scmp.eq.s32.totalorder %s31, 1
      %p70 = scmp.ne.s32.totalorder %s65, %s67
      %p71 = scmp.eq.s32.totalorder %s31, 0
      %p72 = por %p70, %p71
      %p73 = scmp.ne.s32.totalorder %s65, %s67
      %p74 = scmp.eq.s32.totalorder %s36, 1
      %p75 = por %p73, %p74
      %p76 = scmp.ne.s32.totalorder %s67, %s68
      %p77 = scmp.eq.s32.totalorder %s36, 0
      %p78 = por %p76, %p77
      %p79 = scmp.ne.s32.totalorder %s67, %s68
      %p80 = scmp.eq.s32.totalorder %s37, 1
      %p81 = por %p79, %p80
      %p83 = scmp.ne.s32.totalorder %s68, %s82
      %p84 = scmp.eq.s32.totalorder %s37, 0
      %p85 = por %p83, %p84
      %s87 = sadd.s32 %s86, 1
      %p90 = scmp.eq.s32.totalorder %s31, 1
      %p91 = scmp.ne.s32.totalorder %s86, %s88
      %p92 = scmp.eq.s32.totalorder %s31, 0
      %p93 = por %p91, %p92
      %p94 = scmp.ne.s32.totalorder %s86, %s88
      %p95 = scmp.eq.s32.totalorder %s36, 1
      %p96 = por %p94, %p95
      %p97 = scmp.ne.s32.totalorder %s88, %s89
      %p98 = scmp.eq.s32.totalorder %s36, 0
      %p99 = por %p97, %p98
      %p100 = scmp.ne.s32.totalorder %s88, %s89
      %p101 = scmp.eq.s32.totalorder %s37, 1
      %p102 = por %p100, %p101
      %p104 = scmp.ne.s32.totalorder %s89, %s103
      %p105 = scmp.eq.s32.totalorder %s37, 0
      %p106 = por %p104, %p105
      %s108 = sadd.s32 %s107, 1
      %p111 = scmp.eq.s32.totalorder %s31, 1
      %p112 = scmp.ne.s32.totalorder %s107, %s109
      %p113 = scmp.eq.s32.totalorder %s31, 0
      %p114 = por %p112, %p113
      %p115 = scmp.ne.s32.totalorder %s107, %s109
      %p116 = scmp.eq.s32.totalorder %s36, 1
      %p117 = por %p115, %p116
      %p118 = scmp.ne.s32.totalorder %s109, %s110
      %p119 = scmp.eq.s32.totalorder %s36, 0
      %p120 = por %p118, %p119
      %p121 = scmp.ne.s32.totalorder %s109, %s110
      %p122 = scmp.eq.s32.totalorder %s37, 1
      %p123 = por %p121, %p122
      %p125 = scmp.ne.s32.totalorder %s110, %s124
      %p126 = scmp.eq.s32.totalorder %s37, 0
      %p127 = por %p125, %p126
      %s129 = sadd.s32 %s128, 1
      %p132 = scmp.eq.s32.totalorder %s31, 1
      %p133 = scmp.ne.s32.totalorder %s128, %s130
      %p134 = scmp.eq.s32.totalorder %s31, 0
      %p135 = por %p133, %p134
      %p136 = scmp.ne.s32.totalorder %s128, %s130
      %p137 = scmp.eq.s32.totalorder %s36, 1
      %p138 = por %p136, %p137
      %p139 = scmp.ne.s32.totalorder %s130, %s131
      %p140 = scmp.eq.s32.totalorder %s36, 0
      %p141 = por %p139, %p140
      %p142 = scmp.ne.s32.totalorder %s130, %s131
      %p143 = scmp.eq.s32.totalorder %s37, 1
      %p144 = por %p142, %p143
      %p146 = scmp.ne.s32.totalorder %s131, %s145
      %p147 = scmp.eq.s32.totalorder %s37, 0
      %p148 = por %p146, %p147
      %s150 = sadd.s32 %s149, 1
      %p153 = scmp.eq.s32.totalorder %s31, 1
      %p154 = scmp.ne.s32.totalorder %s149, %s151
      %p155 = scmp.eq.s32.totalorder %s31, 0
      %p156 = por %p154, %p155
      %p157 = scmp.ne.s32.totalorder %s149, %s151
      %p158 = scmp.eq.s32.totalorder %s36, 1
      %p159 = por %p157, %p158
      %p160 = scmp.ne.s32.totalorder %s151, %s152
      %p161 = scmp.eq.s32.totalorder %s36, 0
      %p162 = por %p160, %p161
      %p163 = scmp.ne.s32.totalorder %s151, %s152
      %p164 = scmp.eq.s32.totalorder %s37, 1
      %p165 = por %p163, %p164
      %p167 = scmp.ne.s32.totalorder %s152, %s166
      %p168 = scmp.eq.s32.totalorder %s37, 0
      %p169 = por %p167, %p168
      %s171 = sadd.s32 %s170, 1
      %p174 = scmp.eq.s32.totalorder %s31, 1
      %p175 = scmp.ne.s32.totalorder %s170, %s172
      %p176 = scmp.eq.s32.totalorder %s31, 0
      %p177 = por %p175, %p176
      %p178 = scmp.ne.s32.totalorder %s170, %s172
      %p179 = scmp.eq.s32.totalorder %s36, 1
      %p180 = por %p178, %p179
      %p181 = scmp.ne.s32.totalorder %s172, %s173
      %p182 = scmp.eq.s32.totalorder %s36, 0
      %p183 = por %p181, %p182
      %p184 = scmp.ne.s32.totalorder %s172, %s173
      %p185 = scmp.eq.s32.totalorder %s37, 1
      %p186 = por %p184, %p185
      %p188 = scmp.ne.s32.totalorder %s173, %s187
      %p189 = scmp.eq.s32.totalorder %s37, 0
      %p190 = por %p188, %p189
      %s192 = sadd.s32 %s191, 1
      %p195 = scmp.eq.s32.totalorder %s31, 1
      %p196 = scmp.ne.s32.totalorder %s191, %s193
      %p197 = scmp.eq.s32.totalorder %s31, 0
      %p198 = por %p196, %p197
      %p199 = scmp.ne.s32.totalorder %s191, %s193
      %p200 = scmp.eq.s32.totalorder %s36, 1
      %p201 = por %p199, %p200
      %p202 = scmp.ne.s32.totalorder %s193, %s194
      %p203 = scmp.eq.s32.totalorder %s36, 0
      %p204 = por %p202, %p203
      %p205 = scmp.ne.s32.totalorder %s193, %s194
      %p206 = scmp.eq.s32.totalorder %s37, 1
      %p207 = por %p205, %p206
      %p209 = scmp.ne.s32.totalorder %s194, %s208
      %p210 = scmp.eq.s32.totalorder %s37, 0
      %p211 = por %p209, %p210
      %s213 = sadd.s32 %s212, 1
      %p216 = scmp.eq.s32.totalorder %s31, 1
      %p217 = scmp.ne.s32.totalorder %s212, %s214
      %p218 = scmp.eq.s32.totalorder %s31, 0
      %p219 = por %p217, %p218
      %p220 = scmp.ne.s32.totalorder %s212, %s214
      %p221 = scmp.eq.s32.totalorder %s36, 1
      %p222 = por %p220, %p221
      %p223 = scmp.ne.s32.totalorder %s214, %s215
      %p224 = scmp.eq.s32.totalorder %s36, 0
      %p225 = por %p223, %p224
      %p226 = scmp.ne.s32.totalorder %s214, %s215
      %p227 = scmp.eq.s32.totalorder %s37, 1
      %p228 = por %p226, %p227
      %p230 = scmp.ne.s32.totalorder %s215, %s229
      %p231 = scmp.eq.s32.totalorder %s37, 0
      %p232 = por %p230, %p231
      %s234 = sadd.s32 %s233, 1
      %p237 = scmp.eq.s32.totalorder %s31, 1
      %p238 = scmp.ne.s32.totalorder %s233, %s235
      %p239 = scmp.eq.s32.totalorder %s31, 0
      %p240 = por %p238, %p239
      %p241 = scmp.ne.s32.totalorder %s233, %s235
      %p242 = scmp.eq.s32.totalorder %s36, 1
      %p243 = por %p241, %p242
      %p244 = scmp.ne.s32.totalorder %s235, %s236
      %p245 = scmp.eq.s32.totalorder %s36, 0
      %p246 = por %p244, %p245
      %p247 = scmp.ne.s32.totalorder %s235, %s236
      %p248 = scmp.eq.s32.totalorder %s37, 1
      %p249 = por %p247, %p248
      %p251 = scmp.ne.s32.totalorder %s236, %s250
      %p252 = scmp.eq.s32.totalorder %s37, 0
      %p253 = por %p251, %p252
      %s255 = sadd.s32 %s254, 1
      %p258 = scmp.eq.s32.totalorder %s31, 1
      %p259 = scmp.ne.s32.totalorder %s254, %s256
      %p260 = scmp.eq.s32.totalorder %s31, 0
      %p261 = por %p259, %p260
      %p262 = scmp.ne.s32.totalorder %s254, %s256
      %p263 = scmp.eq.s32.totalorder %s36, 1
      %p264 = por %p262, %p263
      %p265 = scmp.ne.s32.totalorder %s256, %s257
      %p266 = scmp.eq.s32.totalorder %s36, 0
      %p267 = por %p265, %p266
      %p268 = scmp.ne.s32.totalorder %s256, %s257
      %p269 = scmp.eq.s32.totalorder %s37, 1
      %p270 = por %p268, %p269
      %p272 = scmp.ne.s32.totalorder %s257, %s271
      %p273 = scmp.eq.s32.totalorder %s37, 0
      %p274 = por %p272, %p273
      %s276 = sadd.s32 %s275, 1
      %p279 = scmp.eq.s32.totalorder %s31, 1
      %p280 = scmp.ne.s32.totalorder %s275, %s277
      %p281 = scmp.eq.s32.totalorder %s31, 0
      %p282 = por %p280, %p281
      %p283 = scmp.ne.s32.totalorder %s275, %s277
      %p284 = scmp.eq.s32.totalorder %s36, 1
      %p285 = por %p283, %p284
      %p286 = scmp.ne.s32.totalorder %s277, %s278
      %p287 = scmp.eq.s32.totalorder %s36, 0
      %p288 = por %p286, %p287
      %p289 = scmp.ne.s32.totalorder %s277, %s278
      %p290 = scmp.eq.s32.totalorder %s37, 1
      %p291 = por %p289, %p290
      %p293 = scmp.ne.s32.totalorder %s278, %s292
      %p294 = scmp.eq.s32.totalorder %s37, 0
      %p295 = por %p293, %p294
      %s296 = ssub.s32 %s31, %s38
      %p297 = scmp.eq.s32.totalorder %s296, 0
      %s299 = sadd.s32 %s298, 1
      %s300 = scalar_select %p297, %s298, %s299
      %p303 = pneg %p297
      %p304 = scmp.eq.s32.totalorder %s31, 1
      %p305 = por %p303, %p304
      %p306 = scmp.ne.s32.totalorder %s298, %s301
      %p307 = scmp.eq.s32.totalorder %s31, 0
      %p308 = por %p306, %p307
      %p309 = scmp.ne.s32.totalorder %s298, %s301
      %p310 = scmp.eq.s32.totalorder %s36, 1
      %p311 = por %p309, %p310
      %p312 = scmp.ne.s32.totalorder %s301, %s302
      %p313 = scmp.eq.s32.totalorder %s36, 0
      %p314 = por %p312, %p313
      %p315 = scmp.ne.s32.totalorder %s301, %s302
      %p316 = scmp.eq.s32.totalorder %s37, 1
      %p317 = por %p315, %p316
      %p319 = scmp.ne.s32.totalorder %s302, %s318
      %p320 = scmp.eq.s32.totalorder %s37, 0
      %p321 = por %p319, %p320
      %p322 = scmp.le.s32.totalorder 1, %s31
      %p323 = scmp.lt.s32.totalorder %s31, 3
      %p324 = pnand %p322, %p323
      %p325 = pneg %p324
      // Predicated region
      $region9: #{resnet_regression_head_forward.1} parent=5 // pred_check
        _
      $region10: #{resnet_regression_head_forward.1} parent=5 // pred_check_branch
        %327 = sbr.rel (%p324) target = $region12
      $region11: #{resnet_regression_head_forward.1} parent=5 // pred_region
        %s328 = ssub.s32 %s31, 1
        // Predicated region
        $region13: #{resnet_regression_head_forward.1} parent=11 // pred_check
          %p329 = pneg %p78
        $region14: #{resnet_regression_head_forward.1} parent=11 // pred_check_branch
          %331 = sbr.rel (%p329) target = $region16
        $region15: #{resnet_regression_head_forward.1} parent=11 // pred_region
          %s333 = ssub.s32 288, 288
          %334 = vsyncadd [#allocation8], %s333
          %s335 = sshll.u32 [#allocation7], 4
          %s336 = int_to_ptr.vmem [resolvable:$true] %s335
          %341 = dma.hbm_to_vmem [thread:$0]  %s1, 288, %s336, [#allocation8], 32, 32, 2
        $region16: #{resnet_regression_head_forward.1} parent=11 // pred_fallthru
          _
        // Predicated region
        $region17: #{resnet_regression_head_forward.1} parent=11 // pred_check
          %p342 = pneg %p99
        $region18: #{resnet_regression_head_forward.1} parent=11 // pred_check_branch
          %344 = sbr.rel (%p342) target = $region20
        $region19: #{resnet_regression_head_forward.1} parent=11 // pred_region
          %s346 = ssub.s32 16, 16
          %347 = vsyncadd [#allocation8], %s346
          %s349 = sshll.u32 [#allocation9], 4
          %s350 = int_to_ptr.vmem [resolvable:$true] %s349
          %352 = dma.hbm_to_vmem [thread:$0]  %s2, 16, %s350, [#allocation8]
        $region20: #{resnet_regression_head_forward.1} parent=11 // pred_fallthru
          _
        // Predicated region
        $region21: #{resnet_regression_head_forward.1} parent=11 // pred_check
          %p353 = pneg %p120
        $region22: #{resnet_regression_head_forward.1} parent=11 // pred_check_branch
          %355 = sbr.rel (%p353) target = $region24
        $region23: #{resnet_regression_head_forward.1} parent=11 // pred_region
          %s357 = ssub.s32 16, 16
          %358 = vsyncadd [#allocation11], %s357
          %s360 = sshll.u32 [#allocation10], 4
          %s361 = int_to_ptr.vmem [resolvable:$true] %s360
          %363 = dma.hbm_to_vmem [thread:$0]  %s3, 16, %s361, [#allocation11]
        $region24: #{resnet_regression_head_forward.1} parent=11 // pred_fallthru
          _
        // Predicated region
        $region25: #{resnet_regression_head_forward.1} parent=11 // pred_check
          %p364 = pneg %p141
        $region26: #{resnet_regression_head_forward.1} parent=11 // pred_check_branch
          %366 = sbr.rel (%p364) target = $region28
        $region27: #{resnet_regression_head_forward.1} parent=11 // pred_region
          %s368 = ssub.s32 2304, 2304
          %369 = vsyncadd [#allocation11], %s368
          %s370 = sshll.u32 [#allocation12], 4
          %s371 = int_to_ptr.vmem [resolvable:$true] %s370
          %376 = dma.hbm_to_vmem [thread:$0]  %s4, 2304, %s371, [#allocation11], 64, 64, 4
        $region28: #{resnet_regression_head_forward.1} parent=11 // pred_fallthru
          _
        // Predicated region
        $region29: #{resnet_regression_head_forward.1} parent=11 // pred_check
          %p377 = pneg %p162
        $region30: #{resnet_regression_head_forward.1} parent=11 // pred_check_branch
          %379 = sbr.rel (%p377) target = $region32
        $region31: #{resnet_regression_head_forward.1} parent=11 // pred_region
          %s381 = ssub.s32 16, 16
          %382 = vsyncadd [#allocation14], %s381
          %s384 = sshll.u32 [#allocation13], 4
          %s385 = int_to_ptr.vmem [resolvable:$true] %s384
          %387 = dma.hbm_to_vmem [thread:$0]  %s5, 16, %s385, [#allocation14]
        $region32: #{resnet_regression_head_forward.1} parent=11 // pred_fallthru
          _
        // Predicated region
        $region33: #{resnet_regression_head_forward.1} parent=11 // pred_check
          %p388 = pneg %p183
        $region34: #{resnet_regression_head_forward.1} parent=11 // pred_check_branch
          %390 = sbr.rel (%p388) target = $region36
        $region35: #{resnet_regression_head_forward.1} parent=11 // pred_region
          %s392 = ssub.s32 16, 16
          %393 = vsyncadd [#allocation14], %s392
          %s395 = sshll.u32 [#allocation15], 4
          %s396 = int_to_ptr.vmem [resolvable:$true] %s395
          %398 = dma.hbm_to_vmem [thread:$0]  %s6, 16, %s396, [#allocation14]
        $region36: #{resnet_regression_head_forward.1} parent=11 // pred_fallthru
          _
        // Predicated region
        $region37: #{resnet_regression_head_forward.1} parent=11 // pred_check
          %p399 = pneg %p204
        $region38: #{resnet_regression_head_forward.1} parent=11 // pred_check_branch
          %401 = sbr.rel (%p399) target = $region40
        $region39: #{resnet_regression_head_forward.1} parent=11 // pred_region
          %s403 = ssub.s32 2304, 2304
          %404 = vsyncadd [#allocation17], %s403
          %s405 = sshll.u32 [#allocation16], 4
          %s406 = int_to_ptr.vmem [resolvable:$true] %s405
          %411 = dma.hbm_to_vmem [thread:$0]  %s7, 2304, %s406, [#allocation17], 64, 64, 4
        $region40: #{resnet_regression_head_forward.1} parent=11 // pred_fallthru
          _
        // Predicated region
        $region41: #{resnet_regression_head_forward.1} parent=11 // pred_check
          %p412 = pneg %p225
        $region42: #{resnet_regression_head_forward.1} parent=11 // pred_check_branch
          %414 = sbr.rel (%p412) target = $region44
        $region43: #{resnet_regression_head_forward.1} parent=11 // pred_region
          %s416 = ssub.s32 16, 16
          %417 = vsyncadd [#allocation17], %s416
          %s419 = sshll.u32 [#allocation18], 4
          %s420 = int_to_ptr.vmem [resolvable:$true] %s419
          %422 = dma.hbm_to_vmem [thread:$0]  %s8, 16, %s420, [#allocation17]
        $region44: #{resnet_regression_head_forward.1} parent=11 // pred_fallthru
          _
        // Predicated region
        $region45: #{resnet_regression_head_forward.1} parent=11 // pred_check
          %p423 = pneg %p246
        $region46: #{resnet_regression_head_forward.1} parent=11 // pred_check_branch
          %425 = sbr.rel (%p423) target = $region48
        $region47: #{resnet_regression_head_forward.1} parent=11 // pred_region
          %s427 = ssub.s32 16, 16
          %428 = vsyncadd [#allocation20], %s427
          %s430 = sshll.u32 [#allocation19], 4
          %s431 = int_to_ptr.vmem [resolvable:$true] %s430
          %433 = dma.hbm_to_vmem [thread:$0]  %s9, 16, %s431, [#allocation20]
        $region48: #{resnet_regression_head_forward.1} parent=11 // pred_fallthru
          _
        // Predicated region
        $region49: #{resnet_regression_head_forward.1} parent=11 // pred_check
          %p434 = pneg %p267
        $region50: #{resnet_regression_head_forward.1} parent=11 // pred_check_branch
          %436 = sbr.rel (%p434) target = $region52
        $region51: #{resnet_regression_head_forward.1} parent=11 // pred_region
          %s438 = ssub.s32 16, 16
          %439 = vsyncadd [#allocation20], %s438
          %s441 = sshll.u32 [#allocation21], 4
          %s442 = int_to_ptr.vmem [resolvable:$true] %s441
          %444 = dma.hbm_to_vmem [thread:$0]  %s10, 16, %s442, [#allocation20]
        $region52: #{resnet_regression_head_forward.1} parent=11 // pred_fallthru
          _
        // Predicated region
        $region53: #{resnet_regression_head_forward.1} parent=11 // pred_check
          %p445 = pneg %p288
        $region54: #{resnet_regression_head_forward.1} parent=11 // pred_check_branch
          %447 = sbr.rel (%p445) target = $region56
        $region55: #{resnet_regression_head_forward.1} parent=11 // pred_region
          _
        $region56: #{resnet_regression_head_forward.1} parent=11 // pred_fallthru
          _
      $region12: #{resnet_regression_head_forward.1} parent=5 // pred_fallthru
        _
      %p448 = scmp.lt.s32.totalorder %s31, 2
      // Predicated region
      $region57: #{resnet_regression_head_forward.1} parent=5 // pred_check
        %p449 = pneg %p448
      $region58: #{resnet_regression_head_forward.1} parent=5 // pred_check_branch
        %451 = sbr.rel (%p449) target = $region60
      $region59: #{resnet_regression_head_forward.1} parent=5 // pred_region
        // Predicated region
        $region61: #{resnet_regression_head_forward.1} parent=59 // pred_check
          %p452 = pneg %p51
        $region62: #{resnet_regression_head_forward.1} parent=59 // pred_check_branch
          %454 = sbr.rel (%p452) target = $region64
        $region63: #{resnet_regression_head_forward.1} parent=59 // pred_region
          %s455 = sand.u32 %s41, 1
          %s456 = scalar_lea.sflag [#allocation5], %s455
          %s457 = sand.u32 %s41, 1
          %s458 = smul.addr %s457, 432
          %s459 = scalar_lea.vmem [#allocation4], %s458
          %s461 = ssub.s32 6912, 6912
          %462 = vsyncadd %s456, %s461
          %s463 = smul.addr %s31, 54
          %s464 = smul.addr %s463, 128
          %s465 = scalar_lea.hbm %s0, %s464
          %s466 = sshll.u32 %s459, 4
          %s467 = int_to_ptr.vmem [resolvable:$true] %s466
          %472 = dma.hbm_to_vmem [thread:$0]  %s465, 6912, %s467, %s456, 128, 128, 8
        $region64: #{resnet_regression_head_forward.1} parent=59 // pred_fallthru
          _
      $region60: #{resnet_regression_head_forward.1} parent=5 // pred_fallthru
        _
      %p473 = scmp.le.s32.totalorder 1, %s31
      %p474 = scmp.lt.s32.totalorder %s31, 3
      %p475 = pnand %p473, %p474
      %p476 = pneg %p475
      // Predicated region
      $region65: #{resnet_regression_head_forward.1} parent=5 // pred_check
        _
      $region66: #{resnet_regression_head_forward.1} parent=5 // pred_check_branch
        %478 = sbr.rel (%p475) target = $region68
      $region67: #{resnet_regression_head_forward.1} parent=5 // pred_region
        %s479 = ssub.s32 %s31, 1
        %s480 = sand.u32 %s44, 1
        %s481 = scalar_lea.sflag [#allocation5], %s480
        %s482 = sand.u32 %s44, 1
        %s483 = smul.addr %s482, 432
        %s484 = scalar_lea.vmem [#allocation4], %s483
        // Predicated region
        $region69: #{resnet_regression_head_forward.1} parent=67 // pred_check
          %p485 = pneg %p57
        $region70: #{resnet_regression_head_forward.1} parent=67 // pred_check_branch
          %487 = sbr.rel (%p485) target = $region72
        $region71: #{resnet_regression_head_forward.1} parent=67 // pred_region
          %488 = dma.done %s481, 6912
        $region72: #{resnet_regression_head_forward.1} parent=67 // pred_fallthru
          _
        // Predicated region
        $region73: #{resnet_regression_head_forward.1} parent=67 // pred_check
          %p489 = pneg %p78
        $region74: #{resnet_regression_head_forward.1} parent=67 // pred_check_branch
          %491 = sbr.rel (%p489) target = $region76
        $region75: #{resnet_regression_head_forward.1} parent=67 // pred_region
          %492 = dma.done [#allocation8], 288
        $region76: #{resnet_regression_head_forward.1} parent=67 // pred_fallthru
          _
        // Predicated region
        $region77: #{resnet_regression_head_forward.1} parent=67 // pred_check
          %p493 = pneg %p99
        $region78: #{resnet_regression_head_forward.1} parent=67 // pred_check_branch
          %495 = sbr.rel (%p493) target = $region80
        $region79: #{resnet_regression_head_forward.1} parent=67 // pred_region
          %496 = dma.done [#allocation8], 16
        $region80: #{resnet_regression_head_forward.1} parent=67 // pred_fallthru
          _
        // Predicated region
        $region81: #{resnet_regression_head_forward.1} parent=67 // pred_check
          %p497 = pneg %p120
        $region82: #{resnet_regression_head_forward.1} parent=67 // pred_check_branch
          %499 = sbr.rel (%p497) target = $region84
        $region83: #{resnet_regression_head_forward.1} parent=67 // pred_region
          %500 = dma.done [#allocation11], 16
        $region84: #{resnet_regression_head_forward.1} parent=67 // pred_fallthru
          _
        // Predicated region
        $region85: #{resnet_regression_head_forward.1} parent=67 // pred_check
          %p501 = pneg %p141
        $region86: #{resnet_regression_head_forward.1} parent=67 // pred_check_branch
          %503 = sbr.rel (%p501) target = $region88
        $region87: #{resnet_regression_head_forward.1} parent=67 // pred_region
          %504 = dma.done [#allocation11], 2304
        $region88: #{resnet_regression_head_forward.1} parent=67 // pred_fallthru
          _
        // Predicated region
        $region89: #{resnet_regression_head_forward.1} parent=67 // pred_check
          %p505 = pneg %p162
        $region90: #{resnet_regression_head_forward.1} parent=67 // pred_check_branch
          %507 = sbr.rel (%p505) target = $region92
        $region91: #{resnet_regression_head_forward.1} parent=67 // pred_region
          %508 = dma.done [#allocation14], 16
        $region92: #{resnet_regression_head_forward.1} parent=67 // pred_fallthru
          _
        // Predicated region
        $region93: #{resnet_regression_head_forward.1} parent=67 // pred_check
          %p509 = pneg %p183
        $region94: #{resnet_regression_head_forward.1} parent=67 // pred_check_branch
          %511 = sbr.rel (%p509) target = $region96
        $region95: #{resnet_regression_head_forward.1} parent=67 // pred_region
          %512 = dma.done [#allocation14], 16
        $region96: #{resnet_regression_head_forward.1} parent=67 // pred_fallthru
          _
        // Predicated region
        $region97: #{resnet_regression_head_forward.1} parent=67 // pred_check
          %p513 = pneg %p204
        $region98: #{resnet_regression_head_forward.1} parent=67 // pred_check_branch
          %515 = sbr.rel (%p513) target = $region100
        $region99: #{resnet_regression_head_forward.1} parent=67 // pred_region
          %516 = dma.done [#allocation17], 2304
        $region100: #{resnet_regression_head_forward.1} parent=67 // pred_fallthru
          _
        // Predicated region
        $region101: #{resnet_regression_head_forward.1} parent=67 // pred_check
          %p517 = pneg %p225
        $region102: #{resnet_regression_head_forward.1} parent=67 // pred_check_branch
          %519 = sbr.rel (%p517) target = $region104
        $region103: #{resnet_regression_head_forward.1} parent=67 // pred_region
          %520 = dma.done [#allocation17], 16
        $region104: #{resnet_regression_head_forward.1} parent=67 // pred_fallthru
          _
        // Predicated region
        $region105: #{resnet_regression_head_forward.1} parent=67 // pred_check
          %p521 = pneg %p246
        $region106: #{resnet_regression_head_forward.1} parent=67 // pred_check_branch
          %523 = sbr.rel (%p521) target = $region108
        $region107: #{resnet_regression_head_forward.1} parent=67 // pred_region
          %524 = dma.done [#allocation20], 16
        $region108: #{resnet_regression_head_forward.1} parent=67 // pred_fallthru
          _
        // Predicated region
        $region109: #{resnet_regression_head_forward.1} parent=67 // pred_check
          %p525 = pneg %p267
        $region110: #{resnet_regression_head_forward.1} parent=67 // pred_check_branch
          %527 = sbr.rel (%p525) target = $region112
        $region111: #{resnet_regression_head_forward.1} parent=67 // pred_region
          %528 = dma.done [#allocation20], 16
        $region112: #{resnet_regression_head_forward.1} parent=67 // pred_fallthru
          _
        %s529 = sand.u32 %s44, 1
        %s530 = scalar_lea.sflag [#allocation5], %s529
        %s531 = sand.u32 %s44, 1
        %s532 = smul.addr %s531, 432
        %s533 = scalar_lea.vmem [#allocation4], %s532
        %p534 = pneg %p57
        %p535 = pneg %p54
        %p536 = pneg %p78
        %p537 = pneg %p75
        %p538 = pneg %p99
        %p539 = pneg %p96
        %p540 = pneg %p120
        %p541 = pneg %p117
        %p542 = pneg %p141
        %p543 = pneg %p138
        %p544 = pneg %p162
        %p545 = pneg %p159
        %p546 = pneg %p183
        %p547 = pneg %p180
        %p548 = pneg %p204
        %p549 = pneg %p201
        %p550 = pneg %p225
        %p551 = pneg %p222
        %p552 = pneg %p246
        %p553 = pneg %p243
        %p554 = pneg %p267
        %p555 = pneg %p264
        %p556 = pneg %p288
        %p557 = pneg %p285
        %p558 = pneg %p314
        %p559 = pneg %p311
        %s560 = sand.u32 %s301, 1
        %s561 = scalar_lea.sflag [#allocation6], %s560
        %s562 = sand.u32 %s301, 1
        %s563 = scalar_lea.vmem [#allocation22], %s562
        %v565 = vld [vmem:[%s484] sm:$0xff]
        %v566 = vld [vmem:[%s484 + $0x8] sm:$0xff]
        %v567 = vld [vmem:[%s484 + $0x18] sm:$0xff]
        %v568 = vld [vmem:[%s484 + $0x20] sm:$0xff]
        %v569 = vld [vmem:[%s484 + $0x30] sm:$0xff]
        %v570 = vld [vmem:[%s484 + $0x38] sm:$0xff]
        %v571 = vld [vmem:[%s484 + $0x48] sm:$0xff]
        %v572 = vld [vmem:[%s484 + $0x50] sm:$0xff]
        %v573 = vld [vmem:[%s484 + $0x60] sm:$0xff]
        %v574 = vld [vmem:[%s484 + $0x68] sm:$0xff]
        %v575 = vld [vmem:[%s484 + $0x78] sm:$0xff]
        %v576 = vld [vmem:[%s484 + $0x80] sm:$0xff]
        %v577 = vld [vmem:[%s484 + $0x90] sm:$0xff]
        %v578 = vld [vmem:[%s484 + $0x98] sm:$0xff]
        %v579 = vld [vmem:[%s484 + $0xa8] sm:$0xff]
        %v580 = vld [vmem:[%s484 + $0xb0] sm:$0xff]
        %v581 = vld [vmem:[%s484 + $0xc0] sm:$0xff]
        %v582 = vld [vmem:[%s484 + $0xc8] sm:$0xff]
        %v583 = vld [vmem:[%s484 + $0xd8] sm:$0xff]
        %v584 = vld [vmem:[%s484 + $0xe0] sm:$0xff]
        %v585 = vld [vmem:[%s484 + $0xf0] sm:$0xff]
        %v586 = vld [vmem:[%s484 + $0xf8] sm:$0xff]
        %v587 = vld [vmem:[%s484 + $0x108] sm:$0xff]
        %v588 = vld [vmem:[%s484 + $0x110] sm:$0xff]
        %v589 = vld [vmem:[%s484 + $0x120] sm:$0xff]
        %v590 = vld [vmem:[%s484 + $0x128] sm:$0xff]
        %v591 = vld [vmem:[%s484 + $0x138] sm:$0xff]
        %v592 = vld [vmem:[%s484 + $0x140] sm:$0xff]
        %v593 = vld [vmem:[%s484 + $0x150] sm:$0xff]
        %v594 = vld [vmem:[%s484 + $0x158] sm:$0xff]
        %v595 = vld [vmem:[%s484 + $0x168] sm:$0xff]
        %v596 = vld [vmem:[%s484 + $0x170] sm:$0xff]
        %v597 = vpack.c.bf16 %v566, %v565
        %v598 = vpack.c.bf16 %v568, %v567
        %v599 = vpack.c.bf16 %v570, %v569
        %v600 = vpack.c.bf16 %v572, %v571
        %v601 = vpack.c.bf16 %v574, %v573
        %v602 = vpack.c.bf16 %v576, %v575
        %v603 = vpack.c.bf16 %v578, %v577
        %v604 = vpack.c.bf16 %v580, %v579
        %v605 = vpack.c.bf16 %v582, %v581
        %v606 = vpack.c.bf16 %v584, %v583
        %v607 = vpack.c.bf16 %v586, %v585
        %v608 = vpack.c.bf16 %v588, %v587
        %v609 = vpack.c.bf16 %v590, %v589
        %v610 = vpack.c.bf16 %v592, %v591
        %v611 = vpack.c.bf16 %v594, %v593
        %v612 = vpack.c.bf16 %v596, %v595
        %v613 = vld [vmem:[#allocation7] sm:$0x3]
        %v614 = vld [vmem:[%s484 + $0x1] sm:$0xff]
        %v615 = vld [vmem:[%s484 + $0x9] sm:$0xff]
        %v616 = vld [vmem:[%s484 + $0x19] sm:$0xff]
        %v617 = vld [vmem:[%s484 + $0x21] sm:$0xff]
        %v618 = vld [vmem:[%s484 + $0x31] sm:$0xff]
        %v619 = vld [vmem:[%s484 + $0x39] sm:$0xff]
        %v620 = vld [vmem:[%s484 + $0x49] sm:$0xff]
        %v621 = vld [vmem:[%s484 + $0x51] sm:$0xff]
        %v622 = vld [vmem:[%s484 + $0x61] sm:$0xff]
        %v623 = vld [vmem:[%s484 + $0x69] sm:$0xff]
        %v624 = vld [vmem:[%s484 + $0x79] sm:$0xff]
        %v625 = vld [vmem:[%s484 + $0x81] sm:$0xff]
        %v626 = vld [vmem:[%s484 + $0x91] sm:$0xff]
        %v627 = vld [vmem:[%s484 + $0x99] sm:$0xff]
        %v628 = vld [vmem:[%s484 + $0xa9] sm:$0xff]
        %v629 = vld [vmem:[%s484 + $0xb1] sm:$0xff]
        %v630 = vld [vmem:[%s484 + $0xc1] sm:$0xff]
        %v631 = vld [vmem:[%s484 + $0xc9] sm:$0xff]
        %v632 = vld [vmem:[%s484 + $0xd9] sm:$0xff]
        %v633 = vld [vmem:[%s484 + $0xe1] sm:$0xff]
        %v634 = vld [vmem:[%s484 + $0xf1] sm:$0xff]
        %v635 = vld [vmem:[%s484 + $0xf9] sm:$0xff]
        %v636 = vld [vmem:[%s484 + $0x109] sm:$0xff]
        %v637 = vld [vmem:[%s484 + $0x111] sm:$0xff]
        %v638 = vld [vmem:[%s484 + $0x121] sm:$0xff]
        %v639 = vld [vmem:[%s484 + $0x129] sm:$0xff]
        %v640 = vld [vmem:[%s484 + $0x139] sm:$0xff]
        %v641 = vld [vmem:[%s484 + $0x141] sm:$0xff]
        %v642 = vld [vmem:[%s484 + $0x151] sm:$0xff]
        %v643 = vld [vmem:[%s484 + $0x159] sm:$0xff]
        %v644 = vld [vmem:[%s484 + $0x169] sm:$0xff]
        %v645 = vld [vmem:[%s484 + $0x171] sm:$0xff]
        %v646 = vpack.c.bf16 %v615, %v614
        %v647 = vpack.c.bf16 %v617, %v616
        %v648 = vpack.c.bf16 %v619, %v618
        %v649 = vpack.c.bf16 %v621, %v620
        %v650 = vpack.c.bf16 %v623, %v622
        %v651 = vpack.c.bf16 %v625, %v624
        %v652 = vpack.c.bf16 %v627, %v626
        %v653 = vpack.c.bf16 %v629, %v628
        %v654 = vpack.c.bf16 %v631, %v630
        %v655 = vpack.c.bf16 %v633, %v632
        %v656 = vpack.c.bf16 %v635, %v634
        %v657 = vpack.c.bf16 %v637, %v636
        %v658 = vpack.c.bf16 %v639, %v638
        %v659 = vpack.c.bf16 %v641, %v640
        %v660 = vpack.c.bf16 %v643, %v642
        %v661 = vpack.c.bf16 %v645, %v644
        %s662 = scalar_lea.vmem [#allocation7], 2
        %v663 = vld [vmem:[%s662] sm:$0x3]
        %vm664 = vcmask 31744
        %v666 = vsel %vm664, %v646, 0
        %v669 = vsel %vm664, %v647, 0
        %v672 = vsel %vm664, %v648, 0
        %v675 = vsel %vm664, %v649, 0
        %v678 = vsel %vm664, %v650, 0
        %v681 = vsel %vm664, %v651, 0
        %v684 = vsel %vm664, %v652, 0
        %v687 = vsel %vm664, %v653, 0
        %v690 = vsel %vm664, %v654, 0
        %v693 = vsel %vm664, %v655, 0
        %v696 = vsel %vm664, %v656, 0
        %v699 = vsel %vm664, %v657, 0
        %v702 = vsel %vm664, %v658, 0
        %v705 = vsel %vm664, %v659, 0
        %v708 = vsel %vm664, %v660, 0
        %v711 = vsel %vm664, %v661, 0
        %vm713 = vcmask 1041408
        %v715 = vsel %vm713, %v663, 0
        %717 = vmatprep.subr.bf16.mxu0 0
        %718 = vmatpush1.bf16.msra.mxu0 %v715
        %719 = vmatprep.subr.bf16.mxu0 0
        %720 = vmatpush1.bf16.msra.mxu0 0
        %721 = vmatprep.subr.bf16.mxu0 0
        %722 = vmatpush1.bf16.msra.mxu0 0
        %723 = vmatprep.subr.bf16.mxu0 0
        %724 = vmatpush1.bf16.msra.mxu0 0
        %725 = vmatprep.subr.bf16.mxu0 0
        %726 = vmatpush1.bf16.msra.mxu0 0
        %727 = vmatprep.subr.bf16.mxu0 0
        %728 = vmatpush1.bf16.msra.mxu0 0
        %729 = vmatprep.subr.bf16.mxu0 0
        %730 = vmatpush1.bf16.msra.mxu0 0
        %731 = vmatprep.subr.bf16.mxu0 0
        %732 = vmatpush1.bf16.msra.mxu0 0
        %733 = vmatprep.subr.bf16.mxu0 0
        %734 = vmatpush1.bf16.msra.mxu0 0
        %735 = vmatprep.subr.bf16.mxu0 0
        %736 = vmatpush1.bf16.msra.mxu0 0
        %737 = vmatprep.subr.bf16.mxu0 0
        %738 = vmatpush1.bf16.msra.mxu0 0
        %739 = vmatprep.subr.bf16.mxu0 0
        %740 = vmatpush1.bf16.msra.mxu0 0
        %741 = vmatprep.subr.bf16.mxu0 0
        %742 = vmatpush1.bf16.msra.mxu0 0
        %743 = vmatprep.subr.bf16.mxu0 0
        %744 = vmatpush1.bf16.msra.mxu0 0
        %745 = vmatprep.subr.bf16.mxu0 0
        %746 = vmatpush1.bf16.msra.mxu0 0
        %747 = vmatprep.subr.bf16.mxu0 0
        %748 = vmatpush1.bf16.msra.mxu0 0
        %749 = vmatprep.mubr.bf16.mxu0 0
        %750 = vmatmul.mubr.bf16.gmra.mrb[0].mxu0 %v666
        %v751 = vpop.f32.mrb[0].mxu0
        %v752 = vadd.f32 0.0, %v751
        %v753 = vpop.f32.mrb[0].mxu0
        %v754 = vpop.f32.mrb[0].mxu0
        %v755 = vadd.f32 0.0, %v754
        %v756 = vpop.f32.mrb[0].mxu0
        %757 = vmatprep.mubr.bf16.mxu0 0
        %758 = vmatmul.mubr.bf16.gmra.mrb[0].mxu0 %v669
        %v759 = vpop.f32.mrb[0].mxu0
        %v760 = vadd.f32 0.0, %v759
        %v761 = vpop.f32.mrb[0].mxu0
        %v762 = vpop.f32.mrb[0].mxu0
        %v763 = vadd.f32 0.0, %v762
        %v764 = vpop.f32.mrb[0].mxu0
        %765 = vmatprep.mubr.bf16.mxu0 0
        %766 = vmatmul.mubr.bf16.gmra.mrb[0].mxu0 %v672
        %v767 = vpop.f32.mrb[0].mxu0
        %v768 = vadd.f32 0.0, %v767
        %v769 = vpop.f32.mrb[0].mxu0
        %v770 = vpop.f32.mrb[0].mxu0
        %v771 = vadd.f32 0.0, %v770
        %v772 = vpop.f32.mrb[0].mxu0
        %773 = vmatprep.mubr.bf16.mxu0 0
        %774 = vmatmul.mubr.bf16.gmra.mrb[0].mxu0 %v675
        %v775 = vpop.f32.mrb[0].mxu0
        %v776 = vadd.f32 0.0, %v775
        %v777 = vpop.f32.mrb[0].mxu0
        %v778 = vpop.f32.mrb[0].mxu0
        %v779 = vadd.f32 0.0, %v778
        %v780 = vpop.f32.mrb[0].mxu0
        %781 = vmatprep.mubr.bf16.mxu0 0
        %782 = vmatmul.mubr.bf16.gmra.mrb[0].mxu0 %v678
        %v783 = vpop.f32.mrb[0].mxu0
        %v784 = vadd.f32 0.0, %v783
        %v785 = vpop.f32.mrb[0].mxu0
        %v786 = vpop.f32.mrb[0].mxu0
        %v787 = vadd.f32 0.0, %v786
        %v788 = vpop.f32.mrb[0].mxu0
        %789 = vmatprep.mubr.bf16.mxu0 0
        %790 = vmatmul.mubr.bf16.gmra.mrb[0].mxu0 %v681
        %v791 = vpop.f32.mrb[0].mxu0
        %v792 = vadd.f32 0.0, %v791
        %v793 = vpop.f32.mrb[0].mxu0
        %v794 = vpop.f32.mrb[0].mxu0
        %v795 = vadd.f32 0.0, %v794
        %v796 = vpop.f32.mrb[0].mxu0
        %797 = vmatprep.mubr.bf16.mxu0 0
        %798 = vmatmul.mubr.bf16.gmra.mrb[0].mxu0 %v684
        %v799 = vpop.f32.mrb[0].mxu0
        %v800 = vadd.f32 0.0, %v799
        %v801 = vpop.f32.mrb[0].mxu0
        %v802 = vpop.f32.mrb[0].mxu0
        %v803 = vadd.f32 0.0, %v802
        %v804 = vpop.f32.mrb[0].mxu0
        %805 = vmatprep.mubr.bf16.mxu0 0
        %806 = vmatmul.mubr.bf16.gmra.mrb[0].mxu0 %v687
        %v807 = vpop.f32.mrb[0].mxu0
        %v808 = vadd.f32 0.0, %v807
        %v809 = vpop.f32.mrb[0].mxu0
        %v810 = vpop.f32.mrb[0].mxu0
        %v811 = vadd.f32 0.0, %v810
        %v812 = vpop.f32.mrb[0].mxu0
        %813 = vmatprep.mubr.bf16.mxu0 0
        %814 = vmatmul.mubr.bf16.gmra.mrb[0].mxu0 %v690
        %v815 = vpop.f32.mrb[0].mxu0
        %v816 = vadd.f32 0.0, %v815
        %v817 = vpop.f32.mrb[0].mxu0
        %v818 = vpop.f32.mrb[0].mxu0
        %v819 = vadd.f32 0.0, %v818
        %v820 = vpop.f32.mrb[0].mxu0
        %821 = vmatprep.mubr.bf16.mxu0 0
        %822 = vmatmul.mubr.bf16.gmra.mrb[0].mxu0 %v693
        %v823 = vpop.f32.mrb[0].mxu0
        %v824 = vadd.f32 0.0, %v823
        %v825 = vpop.f32.mrb[0].mxu0
        %v826 = vpop.f32.mrb[0].mxu0
        %v827 = vadd.f32 0.0, %v826
        %v828 = vpop.f32.mrb[0].mxu0
        %829 = vmatprep.mubr.bf16.mxu0 0
        %830 = vmatmul.mubr.bf16.gmra.mrb[0].mxu0 %v696
        %v831 = vpop.f32.mrb[0].mxu0
        %v832 = vadd.f32 0.0, %v831
        %v833 = vpop.f32.mrb[0].mxu0
        %v834 = vpop.f32.mrb[0].mxu0
        %v835 = vadd.f32 0.0, %v834
        %v836 = vpop.f32.mrb[0].mxu0
        %837 = vmatprep.mubr.bf16.mxu0 0
        %838 = vmatmul.mubr.bf16.gmra.mrb[0].mxu0 %v699
        %v839 = vpop.f32.mrb[0].mxu0
        %v840 = vadd.f32 0.0, %v839
        %v841 = vpop.f32.mrb[0].mxu0
        %v842 = vpop.f32.mrb[0].mxu0
        %v843 = vadd.f32 0.0, %v842
        %v844 = vpop.f32.mrb[0].mxu0
        %845 = vmatprep.mubr.bf16.mxu0 0
        %846 = vmatmul.mubr.bf16.gmra.mrb[0].mxu0 %v702
        %v847 = vpop.f32.mrb[0].mxu0
        %v848 = vadd.f32 0.0, %v847
        %v849 = vpop.f32.mrb[0].mxu0
        %v850 = vpop.f32.mrb[0].mxu0
        %v851 = vadd.f32 0.0, %v850
        %v852 = vpop.f32.mrb[0].mxu0
        %853 = vmatprep.mubr.bf16.mxu0 0
        %854 = vmatmul.mubr.bf16.gmra.mrb[0].mxu0 %v705
        %v855 = vpop.f32.mrb[0].mxu0
        %v856 = vadd.f32 0.0, %v855
        %v857 = vpop.f32.mrb[0].mxu0
        %v858 = vpop.f32.mrb[0].mxu0
        %v859 = vadd.f32 0.0, %v858
        %v860 = vpop.f32.mrb[0].mxu0
        %861 = vmatprep.mubr.bf16.mxu0 0
        %862 = vmatmul.mubr.bf16.gmra.mrb[0].mxu0 %v708
        %v863 = vpop.f32.mrb[0].mxu0
        %v864 = vadd.f32 0.0, %v863
        %v865 = vpop.f32.mrb[0].mxu0
        %v866 = vpop.f32.mrb[0].mxu0
        %v867 = vadd.f32 0.0, %v866
        %v868 = vpop.f32.mrb[0].mxu0
        %869 = vmatprep.mubr.bf16.mxu0 0
        %870 = vmatmul.mubr.bf16.gmra.mrb[0].mxu0 %v711
        %v871 = vpop.f32.mrb[0].mxu0
        %v872 = vadd.f32 0.0, %v871
        %v873 = vpop.f32.mrb[0].mxu0
        %v874 = vpop.f32.mrb[0].mxu0
        %v875 = vadd.f32 0.0, %v874
        %v876 = vpop.f32.mrb[0].mxu0
        %877 = vdwg.mxu0
        %v879 = vsel %vm664, %v597, 0
        %v882 = vsel %vm664, %v598, 0
        %v885 = vsel %vm664, %v599, 0
        %v888 = vsel %vm664, %v600, 0
        %v891 = vsel %vm664, %v601, 0
        %v894 = vsel %vm664, %v602, 0
        %v897 = vsel %vm664, %v603, 0
        %v900 = vsel %vm664, %v604, 0
        %v903 = vsel %vm664, %v605, 0
        %v906 = vsel %vm664, %v606, 0
        %v909 = vsel %vm664, %v607, 0
        %v912 = vsel %vm664, %v608, 0
        %v915 = vsel %vm664, %v609, 0
        %v918 = vsel %vm664, %v610, 0
        %v921 = vsel %vm664, %v611, 0
        %v924 = vsel %vm664, %v612, 0
        %v927 = vsel %vm713, %v613, 0
        %929 = vmatprep.subr.bf16.mxu0 0
        %930 = vmatpush1.bf16.msra.mxu0 %v927
        %931 = vmatprep.subr.bf16.mxu0 0
        %932 = vmatpush1.bf16.msra.mxu0 0
        %933 = vmatprep.subr.bf16.mxu0 0
        %934 = vmatpush1.bf16.msra.mxu0 0
        %935 = vmatprep.subr.bf16.mxu0 0
        %936 = vmatpush1.bf16.msra.mxu0 0
        %937 = vmatprep.subr.bf16.mxu0 0
        %938 = vmatpush1.bf16.msra.mxu0 0
        %939 = vmatprep.subr.bf16.mxu0 0
        %940 = vmatpush1.bf16.msra.mxu0 0
        %941 = vmatprep.subr.bf16.mxu0 0
        %942 = vmatpush1.bf16.msra.mxu0 0
        %943 = vmatprep.subr.bf16.mxu0 0
        %944 = vmatpush1.bf16.msra.mxu0 0
        %945 = vmatprep.subr.bf16.mxu0 0
        %946 = vmatpush1.bf16.msra.mxu0 0
        %947 = vmatprep.subr.bf16.mxu0 0
        %948 = vmatpush1.bf16.msra.mxu0 0
        %949 = vmatprep.subr.bf16.mxu0 0
        %950 = vmatpush1.bf16.msra.mxu0 0
        %951 = vmatprep.subr.bf16.mxu0 0
        %952 = vmatpush1.bf16.msra.mxu0 0
        %953 = vmatprep.subr.bf16.mxu0 0
        %954 = vmatpush1.bf16.msra.mxu0 0
        %955 = vmatprep.subr.bf16.mxu0 0
        %956 = vmatpush1.bf16.msra.mxu0 0
        %957 = vmatprep.subr.bf16.mxu0 0
        %958 = vmatpush1.bf16.msra.mxu0 0
        %959 = vmatprep.subr.bf16.mxu0 0
        %960 = vmatpush1.bf16.msra.mxu0 0
        %961 = vmatprep.mubr.bf16.mxu0 0
        %962 = vmatmul.mubr.bf16.gmra.mrb[0].mxu0 %v879
        %v963 = vpop.f32.mrb[0].mxu0
        %v964 = vadd.f32 %v752, %v963
        %v965 = vpop.f32.mrb[0].mxu0
        %v966 = vpop.f32.mrb[0].mxu0
        %v967 = vadd.f32 %v755, %v966
        %v968 = vpop.f32.mrb[0].mxu0
        %969 = vmatprep.mubr.bf16.mxu0 0
        %970 = vmatmul.mubr.bf16.gmra.mrb[0].mxu0 %v882
        %v971 = vpop.f32.mrb[0].mxu0
        %v972 = vadd.f32 %v760, %v971
        %v973 = vpop.f32.mrb[0].mxu0
        %v974 = vpop.f32.mrb[0].mxu0
        %v975 = vadd.f32 %v763, %v974
        %v976 = vpop.f32.mrb[0].mxu0
        %977 = vmatprep.mubr.bf16.mxu0 0
        %978 = vmatmul.mubr.bf16.gmra.mrb[0].mxu0 %v885
        %v979 = vpop.f32.mrb[0].mxu0
        %v980 = vadd.f32 %v768, %v979
        %v981 = vpop.f32.mrb[0].mxu0
        %v982 = vpop.f32.mrb[0].mxu0
        %v983 = vadd.f32 %v771, %v982
        %v984 = vpop.f32.mrb[0].mxu0
        %985 = vmatprep.mubr.bf16.mxu0 0
        %986 = vmatmul.mubr.bf16.gmra.mrb[0].mxu0 %v888
        %v987 = vpop.f32.mrb[0].mxu0
        %v988 = vadd.f32 %v776, %v987
        %v989 = vpop.f32.mrb[0].mxu0
        %v990 = vpop.f32.mrb[0].mxu0
        %v991 = vadd.f32 %v779, %v990
        %v992 = vpop.f32.mrb[0].mxu0
        %993 = vmatprep.mubr.bf16.mxu0 0
        %994 = vmatmul.mubr.bf16.gmra.mrb[0].mxu0 %v891
        %v995 = vpop.f32.mrb[0].mxu0
        %v996 = vadd.f32 %v784, %v995
        %v997 = vpop.f32.mrb[0].mxu0
        %v998 = vpop.f32.mrb[0].mxu0
        %v999 = vadd.f32 %v787, %v998
        %v1000 = vpop.f32.mrb[0].mxu0
        %1001 = vmatprep.mubr.bf16.mxu0 0
        %1002 = vmatmul.mubr.bf16.gmra.mrb[0].mxu0 %v894
        %v1003 = vpop.f32.mrb[0].mxu0
        %v1004 = vadd.f32 %v792, %v1003
        %v1005 = vpop.f32.mrb[0].mxu0
        %v1006 = vpop.f32.mrb[0].mxu0
        %v1007 = vadd.f32 %v795, %v1006
        %v1008 = vpop.f32.mrb[0].mxu0
        %1009 = vmatprep.mubr.bf16.mxu0 0
        %1010 = vmatmul.mubr.bf16.gmra.mrb[0].mxu0 %v897
        %v1011 = vpop.f32.mrb[0].mxu0
        %v1012 = vadd.f32 %v800, %v1011
        %v1013 = vpop.f32.mrb[0].mxu0
        %v1014 = vpop.f32.mrb[0].mxu0
        %v1015 = vadd.f32 %v803, %v1014
        %v1016 = vpop.f32.mrb[0].mxu0
        %1017 = vmatprep.mubr.bf16.mxu0 0
        %1018 = vmatmul.mubr.bf16.gmra.mrb[0].mxu0 %v900
        %v1019 = vpop.f32.mrb[0].mxu0
        %v1020 = vadd.f32 %v808, %v1019
        %v1021 = vpop.f32.mrb[0].mxu0
        %v1022 = vpop.f32.mrb[0].mxu0
        %v1023 = vadd.f32 %v811, %v1022
        %v1024 = vpop.f32.mrb[0].mxu0
        %1025 = vmatprep.mubr.bf16.mxu0 0
        %1026 = vmatmul.mubr.bf16.gmra.mrb[0].mxu0 %v903
        %v1027 = vpop.f32.mrb[0].mxu0
        %v1028 = vadd.f32 %v816, %v1027
        %v1029 = vpop.f32.mrb[0].mxu0
        %v1030 = vpop.f32.mrb[0].mxu0
        %v1031 = vadd.f32 %v819, %v1030
        %v1032 = vpop.f32.mrb[0].mxu0
        %1033 = vmatprep.mubr.bf16.mxu0 0
        %1034 = vmatmul.mubr.bf16.gmra.mrb[0].mxu0 %v906
        %v1035 = vpop.f32.mrb[0].mxu0
        %v1036 = vadd.f32 %v824, %v1035
        %v1037 = vpop.f32.mrb[0].mxu0
        %v1038 = vpop.f32.mrb[0].mxu0
        %v1039 = vadd.f32 %v827, %v1038
        %v1040 = vpop.f32.mrb[0].mxu0
        %1041 = vmatprep.mubr.bf16.mxu0 0
        %1042 = vmatmul.mubr.bf16.gmra.mrb[0].mxu0 %v909
        %v1043 = vpop.f32.mrb[0].mxu0
        %v1044 = vadd.f32 %v832, %v1043
        %v1045 = vpop.f32.mrb[0].mxu0
        %v1046 = vpop.f32.mrb[0].mxu0
        %v1047 = vadd.f32 %v835, %v1046
        %v1048 = vpop.f32.mrb[0].mxu0
        %1049 = vmatprep.mubr.bf16.mxu0 0
        %1050 = vmatmul.mubr.bf16.gmra.mrb[0].mxu0 %v912
        %v1051 = vpop.f32.mrb[0].mxu0
        %v1052 = vadd.f32 %v840, %v1051
        %v1053 = vpop.f32.mrb[0].mxu0
        %v1054 = vpop.f32.mrb[0].mxu0
        %v1055 = vadd.f32 %v843, %v1054
        %v1056 = vpop.f32.mrb[0].mxu0
        %1057 = vmatprep.mubr.bf16.mxu0 0
        %1058 = vmatmul.mubr.bf16.gmra.mrb[0].mxu0 %v915
        %v1059 = vpop.f32.mrb[0].mxu0
        %v1060 = vadd.f32 %v848, %v1059
        %v1061 = vpop.f32.mrb[0].mxu0
        %v1062 = vpop.f32.mrb[0].mxu0
        %v1063 = vadd.f32 %v851, %v1062
        %v1064 = vpop.f32.mrb[0].mxu0
        %1065 = vmatprep.mubr.bf16.mxu0 0
        %1066 = vmatmul.mubr.bf16.gmra.mrb[0].mxu0 %v918
        %v1067 = vpop.f32.mrb[0].mxu0
        %v1068 = vadd.f32 %v856, %v1067
        %v1069 = vpop.f32.mrb[0].mxu0
        %v1070 = vpop.f32.mrb[0].mxu0
        %v1071 = vadd.f32 %v859, %v1070
        %v1072 = vpop.f32.mrb[0].mxu0
        %1073 = vmatprep.mubr.bf16.mxu0 0
        %1074 = vmatmul.mubr.bf16.gmra.mrb[0].mxu0 %v921
        %v1075 = vpop.f32.mrb[0].mxu0
        %v1076 = vadd.f32 %v864, %v1075
        %v1077 = vpop.f32.mrb[0].mxu0
        %v1078 = vpop.f32.mrb[0].mxu0
        %v1079 = vadd.f32 %v867, %v1078
        %v1080 = vpop.f32.mrb[0].mxu0
        %1081 = vmatprep.mubr.bf16.mxu0 0
        %1082 = vmatmul.mubr.bf16.gmra.mrb[0].mxu0 %v924
        %v1083 = vpop.f32.mrb[0].mxu0
        %v1084 = vadd.f32 %v872, %v1083
        %v1085 = vpop.f32.mrb[0].mxu0
        %v1086 = vpop.f32.mrb[0].mxu0
        %v1087 = vadd.f32 %v875, %v1086
        %v1088 = vpop.f32.mrb[0].mxu0
        %1089 = vdwg.mxu0
        %v1090 = vld [vmem:[%s484 + $0x2] sm:$0xff]
        %v1091 = vld [vmem:[%s484 + $0xa] sm:$0xff]
        %v1092 = vld [vmem:[%s484 + $0x1a] sm:$0xff]
        %v1093 = vld [vmem:[%s484 + $0x22] sm:$0xff]
        %v1094 = vld [vmem:[%s484 + $0x32] sm:$0xff]
        %v1095 = vld [vmem:[%s484 + $0x3a] sm:$0xff]
        %v1096 = vld [vmem:[%s484 + $0x4a] sm:$0xff]
        %v1097 = vld [vmem:[%s484 + $0x52] sm:$0xff]
        %v1098 = vld [vmem:[%s484 + $0x62] sm:$0xff]
        %v1099 = vld [vmem:[%s484 + $0x6a] sm:$0xff]
        %v1100 = vld [vmem:[%s484 + $0x7a] sm:$0xff]
        %v1101 = vld [vmem:[%s484 + $0x82] sm:$0xff]
        %v1102 = vld [vmem:[%s484 + $0x92] sm:$0xff]
        %v1103 = vld [vmem:[%s484 + $0x9a] sm:$0xff]
        %v1104 = vld [vmem:[%s484 + $0xaa] sm:$0xff]
        %v1105 = vld [vmem:[%s484 + $0xb2] sm:$0xff]
        %v1106 = vld [vmem:[%s484 + $0xc2] sm:$0xff]
        %v1107 = vld [vmem:[%s484 + $0xca] sm:$0xff]
        %v1108 = vld [vmem:[%s484 + $0xda] sm:$0xff]
        %v1109 = vld [vmem:[%s484 + $0xe2] sm:$0xff]
        %v1110 = vld [vmem:[%s484 + $0xf2] sm:$0xff]
        %v1111 = vld [vmem:[%s484 + $0xfa] sm:$0xff]
        %v1112 = vld [vmem:[%s484 + $0x10a] sm:$0xff]
        %v1113 = vld [vmem:[%s484 + $0x112] sm:$0xff]
        %v1114 = vld [vmem:[%s484 + $0x122] sm:$0xff]
        %v1115 = vld [vmem:[%s484 + $0x12a] sm:$0xff]
        %v1116 = vld [vmem:[%s484 + $0x13a] sm:$0xff]
        %v1117 = vld [vmem:[%s484 + $0x142] sm:$0xff]
        %v1118 = vld [vmem:[%s484 + $0x152] sm:$0xff]
        %v1119 = vld [vmem:[%s484 + $0x15a] sm:$0xff]
        %v1120 = vld [vmem:[%s484 + $0x16a] sm:$0xff]
        %v1121 = vld [vmem:[%s484 + $0x172] sm:$0xff]
        %v1122 = vpack.c.bf16 %v1091, %v1090
        %v1123 = vpack.c.bf16 %v1093, %v1092
        %v1124 = vpack.c.bf16 %v1095, %v1094
        %v1125 = vpack.c.bf16 %v1097, %v1096
        %v1126 = vpack.c.bf16 %v1099, %v1098
        %v1127 = vpack.c.bf16 %v1101, %v1100
        %v1128 = vpack.c.bf16 %v1103, %v1102
        %v1129 = vpack.c.bf16 %v1105, %v1104
        %v1130 = vpack.c.bf16 %v1107, %v1106
        %v1131 = vpack.c.bf16 %v1109, %v1108
        %v1132 = vpack.c.bf16 %v1111, %v1110
        %v1133 = vpack.c.bf16 %v1113, %v1112
        %v1134 = vpack.c.bf16 %v1115, %v1114
        %v1135 = vpack.c.bf16 %v1117, %v1116
        %v1136 = vpack.c.bf16 %v1119, %v1118
        %v1137 = vpack.c.bf16 %v1121, %v1120
        %s1138 = scalar_lea.vmem [#allocation7], 4
        %v1139 = vld [vmem:[%s1138] sm:$0x3]
        %v1141 = vsel %vm664, %v1122, 0
        %v1144 = vsel %vm664, %v1123, 0
        %v1147 = vsel %vm664, %v1124, 0
        %v1150 = vsel %vm664, %v1125, 0
        %v1153 = vsel %vm664, %v1126, 0
        %v1156 = vsel %vm664, %v1127, 0
        %v1159 = vsel %vm664, %v1128, 0
        %v1162 = vsel %vm664, %v1129, 0
        %v1165 = vsel %vm664, %v1130, 0
        %v1168 = vsel %vm664, %v1131, 0
        %v1171 = vsel %vm664, %v1132, 0
        %v1174 = vsel %vm664, %v1133, 0
        %v1177 = vsel %vm664, %v1134, 0
        %v1180 = vsel %vm664, %v1135, 0
        %v1183 = vsel %vm664, %v1136, 0
        %v1186 = vsel %vm664, %v1137, 0
        %v1189 = vsel %vm713, %v1139, 0
        %1191 = vmatprep.subr.bf16.mxu0 0
        %1192 = vmatpush1.bf16.msra.mxu0 %v1189
        %1193 = vmatprep.subr.bf16.mxu0 0
        %1194 = vmatpush1.bf16.msra.mxu0 0
        %1195 = vmatprep.subr.bf16.mxu0 0
        %1196 = vmatpush1.bf16.msra.mxu0 0
        %1197 = vmatprep.subr.bf16.mxu0 0
        %1198 = vmatpush1.bf16.msra.mxu0 0
        %1199 = vmatprep.subr.bf16.mxu0 0
        %1200 = vmatpush1.bf16.msra.mxu0 0
        %1201 = vmatprep.subr.bf16.mxu0 0
        %1202 = vmatpush1.bf16.msra.mxu0 0
        %1203 = vmatprep.subr.bf16.mxu0 0
        %1204 = vmatpush1.bf16.msra.mxu0 0
        %1205 = vmatprep.subr.bf16.mxu0 0
        %1206 = vmatpush1.bf16.msra.mxu0 0
        %1207 = vmatprep.subr.bf16.mxu0 0
        %1208 = vmatpush1.bf16.msra.mxu0 0
        %1209 = vmatprep.subr.bf16.mxu0 0
        %1210 = vmatpush1.bf16.msra.mxu0 0
        %1211 = vmatprep.subr.bf16.mxu0 0
        %1212 = vmatpush1.bf16.msra.mxu0 0
        %1213 = vmatprep.subr.bf16.mxu0 0
        %1214 = vmatpush1.bf16.msra.mxu0 0
        %1215 = vmatprep.subr.bf16.mxu0 0
        %1216 = vmatpush1.bf16.msra.mxu0 0
        %1217 = vmatprep.subr.bf16.mxu0 0
        %1218 = vmatpush1.bf16.msra.mxu0 0
        %1219 = vmatprep.subr.bf16.mxu0 0
        %1220 = vmatpush1.bf16.msra.mxu0 0
        %1221 = vmatprep.subr.bf16.mxu0 0
        %1222 = vmatpush1.bf16.msra.mxu0 0
        %1223 = vmatprep.mubr.bf16.mxu0 0
        %1224 = vmatmul.mubr.bf16.gmra.mrb[0].mxu0 %v1141
        %v1225 = vpop.f32.mrb[0].mxu0
        %v1226 = vadd.f32 0.0, %v1225
        %v1227 = vpop.f32.mrb[0].mxu0
        %v1228 = vpop.f32.mrb[0].mxu0
        %v1229 = vadd.f32 0.0, %v1228
        %v1230 = vpop.f32.mrb[0].mxu0
        %1231 = vmatprep.mubr.bf16.mxu0 0
        %1232 = vmatmul.mubr.bf16.gmra.mrb[0].mxu0 %v1144
        %v1233 = vpop.f32.mrb[0].mxu0
        %v1234 = vadd.f32 0.0, %v1233
        %v1235 = vpop.f32.mrb[0].mxu0
        %v1236 = vpop.f32.mrb[0].mxu0
        %v1237 = vadd.f32 0.0, %v1236
        %v1238 = vpop.f32.mrb[0].mxu0
        %1239 = vmatprep.mubr.bf16.mxu0 0
        %1240 = vmatmul.mubr.bf16.gmra.mrb[0].mxu0 %v1147
        %v1241 = vpop.f32.mrb[0].mxu0
        %v1242 = vadd.f32 0.0, %v1241
        %v1243 = vpop.f32.mrb[0].mxu0
        %v1244 = vpop.f32.mrb[0].mxu0
        %v1245 = vadd.f32 0.0, %v1244
        %v1246 = vpop.f32.mrb[0].mxu0
        %1247 = vmatprep.mubr.bf16.mxu0 0
        %1248 = vmatmul.mubr.bf16.gmra.mrb[0].mxu0 %v1150
        %v1249 = vpop.f32.mrb[0].mxu0
        %v1250 = vadd.f32 0.0, %v1249
        %v1251 = vpop.f32.mrb[0].mxu0
        %v1252 = vpop.f32.mrb[0].mxu0
        %v1253 = vadd.f32 0.0, %v1252
        %v1254 = vpop.f32.mrb[0].mxu0
        %1255 = vmatprep.mubr.bf16.mxu0 0
        %1256 = vmatmul.mubr.bf16.gmra.mrb[0].mxu0 %v1153
        %v1257 = vpop.f32.mrb[0].mxu0
        %v1258 = vadd.f32 0.0, %v1257
        %v1259 = vpop.f32.mrb[0].mxu0
        %v1260 = vpop.f32.mrb[0].mxu0
        %v1261 = vadd.f32 0.0, %v1260
        %v1262 = vpop.f32.mrb[0].mxu0
        %1263 = vmatprep.mubr.bf16.mxu0 0
        %1264 = vmatmul.mubr.bf16.gmra.mrb[0].mxu0 %v1156
        %v1265 = vpop.f32.mrb[0].mxu0
        %v1266 = vadd.f32 0.0, %v1265
        %v1267 = vpop.f32.mrb[0].mxu0
        %v1268 = vpop.f32.mrb[0].mxu0
        %v1269 = vadd.f32 0.0, %v1268
        %v1270 = vpop.f32.mrb[0].mxu0
        %1271 = vmatprep.mubr.bf16.mxu0 0
        %1272 = vmatmul.mubr.bf16.gmra.mrb[0].mxu0 %v1159
        %v1273 = vpop.f32.mrb[0].mxu0
        %v1274 = vadd.f32 0.0, %v1273
        %v1275 = vpop.f32.mrb[0].mxu0
        %v1276 = vpop.f32.mrb[0].mxu0
        %v1277 = vadd.f32 0.0, %v1276
        %v1278 = vpop.f32.mrb[0].mxu0
        %1279 = vmatprep.mubr.bf16.mxu0 0
        %1280 = vmatmul.mubr.bf16.gmra.mrb[0].mxu0 %v1162
        %v1281 = vpop.f32.mrb[0].mxu0
        %v1282 = vadd.f32 0.0, %v1281
        %v1283 = vpop.f32.mrb[0].mxu0
        %v1284 = vpop.f32.mrb[0].mxu0
        %v1285 = vadd.f32 0.0, %v1284
        %v1286 = vpop.f32.mrb[0].mxu0
        %1287 = vmatprep.mubr.bf16.mxu0 0
        %1288 = vmatmul.mubr.bf16.gmra.mrb[0].mxu0 %v1165
        %v1289 = vpop.f32.mrb[0].mxu0
        %v1290 = vadd.f32 0.0, %v1289
        %v1291 = vpop.f32.mrb[0].mxu0
        %v1292 = vpop.f32.mrb[0].mxu0
        %v1293 = vadd.f32 0.0, %v1292
        %v1294 = vpop.f32.mrb[0].mxu0
        %1295 = vmatprep.mubr.bf16.mxu0 0
        %1296 = vmatmul.mubr.bf16.gmra.mrb[0].mxu0 %v1168
        %v1297 = vpop.f32.mrb[0].mxu0
        %v1298 = vadd.f32 0.0, %v1297
        %v1299 = vpop.f32.mrb[0].mxu0
        %v1300 = vpop.f32.mrb[0].mxu0
        %v1301 = vadd.f32 0.0, %v1300
        %v1302 = vpop.f32.mrb[0].mxu0
        %1303 = vmatprep.mubr.bf16.mxu0 0
        %1304 = vmatmul.mubr.bf16.gmra.mrb[0].mxu0 %v1171
        %v1305 = vpop.f32.mrb[0].mxu0
        %v1306 = vadd.f32 0.0, %v1305
        %v1307 = vpop.f32.mrb[0].mxu0
        %v1308 = vpop.f32.mrb[0].mxu0
        %v1309 = vadd.f32 0.0, %v1308
        %v1310 = vpop.f32.mrb[0].mxu0
        %1311 = vmatprep.mubr.bf16.mxu0 0
        %1312 = vmatmul.mubr.bf16.gmra.mrb[0].mxu0 %v1174
        %v1313 = vpop.f32.mrb[0].mxu0
        %v1314 = vadd.f32 0.0, %v1313
        %v1315 = vpop.f32.mrb[0].mxu0
        %v1316 = vpop.f32.mrb[0].mxu0
        %v1317 = vadd.f32 0.0, %v1316
        %v1318 = vpop.f32.mrb[0].mxu0
        %1319 = vmatprep.mubr.bf16.mxu0 0
        %1320 = vmatmul.mubr.bf16.gmra.mrb[0].mxu0 %v1177
        %v1321 = vpop.f32.mrb[0].mxu0
        %v1322 = vadd.f32 0.0, %v1321
        %v1323 = vpop.f32.mrb[0].mxu0
        %v1324 = vpop.f32.mrb[0].mxu0
        %v1325 = vadd.f32 0.0, %v1324
        %v1326 = vpop.f32.mrb[0].mxu0
        %1327 = vmatprep.mubr.bf16.mxu0 0
        %1328 = vmatmul.mubr.bf16.gmra.mrb[0].mxu0 %v1180
        %v1329 = vpop.f32.mrb[0].mxu0
        %v1330 = vadd.f32 0.0, %v1329
        %v1331 = vpop.f32.mrb[0].mxu0
        %v1332 = vpop.f32.mrb[0].mxu0
        %v1333 = vadd.f32 0.0, %v1332
        %v1334 = vpop.f32.mrb[0].mxu0
        %1335 = vmatprep.mubr.bf16.mxu0 0
        %1336 = vmatmul.mubr.bf16.gmra.mrb[0].mxu0 %v1183
        %v1337 = vpop.f32.mrb[0].mxu0
        %v1338 = vadd.f32 0.0, %v1337
        %v1339 = vpop.f32.mrb[0].mxu0
        %v1340 = vpop.f32.mrb[0].mxu0
        %v1341 = vadd.f32 0.0, %v1340
        %v1342 = vpop.f32.mrb[0].mxu0
        %1343 = vmatprep.mubr.bf16.mxu0 0
        %1344 = vmatmul.mubr.bf16.gmra.mrb[0].mxu0 %v1186
        %v1345 = vpop.f32.mrb[0].mxu0
        %v1346 = vadd.f32 0.0, %v1345
        %v1347 = vpop.f32.mrb[0].mxu0
        %v1348 = vpop.f32.mrb[0].mxu0
        %v1349 = vadd.f32 0.0, %v1348
        %v1350 = vpop.f32.mrb[0].mxu0
        %1351 = vdwg.mxu0
        %v1352 = vadd.f32 %v964, %v1226
        %v1353 = vadd.f32 %v967, %v1229
        %v1354 = vadd.f32 %v972, %v1234
        %v1355 = vadd.f32 %v975, %v1237
        %v1356 = vadd.f32 %v980, %v1242
        %v1357 = vadd.f32 %v983, %v1245
        %v1358 = vadd.f32 %v988, %v1250
        %v1359 = vadd.f32 %v991, %v1253
        %v1360 = vadd.f32 %v996, %v1258
        %v1361 = vadd.f32 %v999, %v1261
        %v1362 = vadd.f32 %v1004, %v1266
        %v1363 = vadd.f32 %v1007, %v1269
        %v1364 = vadd.f32 %v1012, %v1274
        %v1365 = vadd.f32 %v1015, %v1277
        %v1366 = vadd.f32 %v1020, %v1282
        %v1367 = vadd.f32 %v1023, %v1285
        %v1368 = vadd.f32 %v1028, %v1290
        %v1369 = vadd.f32 %v1031, %v1293
        %v1370 = vadd.f32 %v1036, %v1298
        %v1371 = vadd.f32 %v1039, %v1301
        %v1372 = vadd.f32 %v1044, %v1306
        %v1373 = vadd.f32 %v1047, %v1309
        %v1374 = vadd.f32 %v1052, %v1314
        %v1375 = vadd.f32 %v1055, %v1317
        %v1376 = vadd.f32 %v1060, %v1322
        %v1377 = vadd.f32 %v1063, %v1325
        %v1378 = vadd.f32 %v1068, %v1330
        %v1379 = vadd.f32 %v1071, %v1333
        %v1380 = vadd.f32 %v1076, %v1338
        %v1381 = vadd.f32 %v1079, %v1341
        %v1382 = vadd.f32 %v1084, %v1346
        %v1383 = vadd.f32 %v1087, %v1349
        %s1384 = scalar_lea.vmem %s484, 24 [#allocation4]
        %v1385 = vld [vmem:[%s1384] sm:$0xff]
        %v1386 = vld [vmem:[%s1384 + $0x8] sm:$0xff]
        %v1387 = vld [vmem:[%s1384 + $0x18] sm:$0xff]
        %v1388 = vld [vmem:[%s1384 + $0x20] sm:$0xff]
        %v1389 = vld [vmem:[%s1384 + $0x30] sm:$0xff]
        %v1390 = vld [vmem:[%s1384 + $0x38] sm:$0xff]
        %v1391 = vld [vmem:[%s1384 + $0x48] sm:$0xff]
        %v1392 = vld [vmem:[%s1384 + $0x50] sm:$0xff]
        %v1393 = vld [vmem:[%s1384 + $0x60] sm:$0xff]
        %v1394 = vld [vmem:[%s1384 + $0x68] sm:$0xff]
        %v1395 = vld [vmem:[%s1384 + $0x78] sm:$0xff]
        %v1396 = vld [vmem:[%s1384 + $0x80] sm:$0xff]
        %v1397 = vld [vmem:[%s1384 + $0x90] sm:$0xff]
        %v1398 = vld [vmem:[%s1384 + $0x98] sm:$0xff]
        %v1399 = vld [vmem:[%s1384 + $0xa8] sm:$0xff]
        %v1400 = vld [vmem:[%s1384 + $0xb0] sm:$0xff]
        %v1401 = vld [vmem:[%s1384 + $0xc0] sm:$0xff]
        %v1402 = vld [vmem:[%s1384 + $0xc8] sm:$0xff]
        %v1403 = vld [vmem:[%s1384 + $0xd8] sm:$0xff]
        %v1404 = vld [vmem:[%s1384 + $0xe0] sm:$0xff]
        %v1405 = vld [vmem:[%s1384 + $0xf0] sm:$0xff]
        %v1406 = vld [vmem:[%s1384 + $0xf8] sm:$0xff]
        %v1407 = vld [vmem:[%s1384 + $0x108] sm:$0xff]
        %v1408 = vld [vmem:[%s1384 + $0x110] sm:$0xff]
        %v1409 = vld [vmem:[%s1384 + $0x120] sm:$0xff]
        %v1410 = vld [vmem:[%s1384 + $0x128] sm:$0xff]
        %v1411 = vld [vmem:[%s1384 + $0x138] sm:$0xff]
        %v1412 = vld [vmem:[%s1384 + $0x140] sm:$0xff]
        %v1413 = vld [vmem:[%s1384 + $0x150] sm:$0xff]
        %v1414 = vld [vmem:[%s1384 + $0x158] sm:$0xff]
        %v1415 = vld [vmem:[%s1384 + $0x168] sm:$0xff]
        %v1416 = vld [vmem:[%s1384 + $0x170] sm:$0xff]
        %v1417 = vpack.c.bf16 %v1386, %v1385
        %v1418 = vpack.c.bf16 %v1388, %v1387
        %v1419 = vpack.c.bf16 %v1390, %v1389
        %v1420 = vpack.c.bf16 %v1392, %v1391
        %v1421 = vpack.c.bf16 %v1394, %v1393
        %v1422 = vpack.c.bf16 %v1396, %v1395
        %v1423 = vpack.c.bf16 %v1398, %v1397
        %v1424 = vpack.c.bf16 %v1400, %v1399
        %v1425 = vpack.c.bf16 %v1402, %v1401
        %v1426 = vpack.c.bf16 %v1404, %v1403
        %v1427 = vpack.c.bf16 %v1406, %v1405
        %v1428 = vpack.c.bf16 %v1408, %v1407
        %v1429 = vpack.c.bf16 %v1410, %v1409
        %v1430 = vpack.c.bf16 %v1412, %v1411
        %v1431 = vpack.c.bf16 %v1414, %v1413
        %v1432 = vpack.c.bf16 %v1416, %v1415
        %s1433 = scalar_lea.vmem [#allocation7], 6
        %v1434 = vld [vmem:[%s1433] sm:$0x3]
        %v1436 = vsel %vm664, %v1417, 0
        %v1439 = vsel %vm664, %v1418, 0
        %v1442 = vsel %vm664, %v1419, 0
        %v1445 = vsel %vm664, %v1420, 0
        %v1448 = vsel %vm664, %v1421, 0
        %v1451 = vsel %vm664, %v1422, 0
        %v1454 = vsel %vm664, %v1423, 0
        %v1457 = vsel %vm664, %v1424, 0
        %v1460 = vsel %vm664, %v1425, 0
        %v1463 = vsel %vm664, %v1426, 0
        %v1466 = vsel %vm664, %v1427, 0
        %v1469 = vsel %vm664, %v1428, 0
        %v1472 = vsel %vm664, %v1429, 0
        %v1475 = vsel %vm664, %v1430, 0
        %v1478 = vsel %vm664, %v1431, 0
        %v1481 = vsel %vm664, %v1432, 0
        %v1484 = vsel %vm713, %v1434, 0
        %1486 = vmatprep.subr.bf16.mxu0 0
        %1487 = vmatpush1.bf16.msra.mxu0 %v1484
        %1488 = vmatprep.subr.bf16.mxu0 0
        %1489 = vmatpush1.bf16.msra.mxu0 0
        %1490 = vmatprep.subr.bf16.mxu0 0
        %1491 = vmatpush1.bf16.msra.mxu0 0
        %1492 = vmatprep.subr.bf16.mxu0 0
        %1493 = vmatpush1.bf16.msra.mxu0 0
        %1494 = vmatprep.subr.bf16.mxu0 0
        %1495 = vmatpush1.bf16.msra.mxu0 0
        %1496 = vmatprep.subr.bf16.mxu0 0
        %1497 = vmatpush1.bf16.msra.mxu0 0
        %1498 = vmatprep.subr.bf16.mxu0 0
        %1499 = vmatpush1.bf16.msra.mxu0 0
        %1500 = vmatprep.subr.bf16.mxu0 0
        %1501 = vmatpush1.bf16.msra.mxu0 0
        %1502 = vmatprep.subr.bf16.mxu0 0
        %1503 = vmatpush1.bf16.msra.mxu0 0
        %1504 = vmatprep.subr.bf16.mxu0 0
        %1505 = vmatpush1.bf16.msra.mxu0 0
        %1506 = vmatprep.subr.bf16.mxu0 0
        %1507 = vmatpush1.bf16.msra.mxu0 0
        %1508 = vmatprep.subr.bf16.mxu0 0
        %1509 = vmatpush1.bf16.msra.mxu0 0
        %1510 = vmatprep.subr.bf16.mxu0 0
        %1511 = vmatpush1.bf16.msra.mxu0 0
        %1512 = vmatprep.subr.bf16.mxu0 0
        %1513 = vmatpush1.bf16.msra.mxu0 0
        %1514 = vmatprep.subr.bf16.mxu0 0
        %1515 = vmatpush1.bf16.msra.mxu0 0
        %1516 = vmatprep.subr.bf16.mxu0 0
        %1517 = vmatpush1.bf16.msra.mxu0 0
        %1518 = vmatprep.mubr.bf16.mxu0 0
        %1519 = vmatmul.mubr.bf16.gmra.mrb[0].mxu0 %v1436
        %v1520 = vpop.f32.mrb[0].mxu0
        %v1521 = vadd.f32 0.0, %v1520
        %v1522 = vpop.f32.mrb[0].mxu0
        %v1523 = vpop.f32.mrb[0].mxu0
        %v1524 = vadd.f32 0.0, %v1523
        %v1525 = vpop.f32.mrb[0].mxu0
        %1526 = vmatprep.mubr.bf16.mxu0 0
        %1527 = vmatmul.mubr.bf16.gmra.mrb[0].mxu0 %v1439
        %v1528 = vpop.f32.mrb[0].mxu0
        %v1529 = vadd.f32 0.0, %v1528
        %v1530 = vpop.f32.mrb[0].mxu0
        %v1531 = vpop.f32.mrb[0].mxu0
        %v1532 = vadd.f32 0.0, %v1531
        %v1533 = vpop.f32.mrb[0].mxu0
        %1534 = vmatprep.mubr.bf16.mxu0 0
        %1535 = vmatmul.mubr.bf16.gmra.mrb[0].mxu0 %v1442
        %v1536 = vpop.f32.mrb[0].mxu0
        %v1537 = vadd.f32 0.0, %v1536
        %v1538 = vpop.f32.mrb[0].mxu0
        %v1539 = vpop.f32.mrb[0].mxu0
        %v1540 = vadd.f32 0.0, %v1539
        %v1541 = vpop.f32.mrb[0].mxu0
        %1542 = vmatprep.mubr.bf16.mxu0 0
        %1543 = vmatmul.mubr.bf16.gmra.mrb[0].mxu0 %v1445
        %v1544 = vpop.f32.mrb[0].mxu0
        %v1545 = vadd.f32 0.0, %v1544
        %v1546 = vpop.f32.mrb[0].mxu0
        %v1547 = vpop.f32.mrb[0].mxu0
        %v1548 = vadd.f32 0.0, %v1547
        %v1549 = vpop.f32.mrb[0].mxu0
        %1550 = vmatprep.mubr.bf16.mxu0 0
        %1551 = vmatmul.mubr.bf16.gmra.mrb[0].mxu0 %v1448
        %v1552 = vpop.f32.mrb[0].mxu0
        %v1553 = vadd.f32 0.0, %v1552
        %v1554 = vpop.f32.mrb[0].mxu0
        %v1555 = vpop.f32.mrb[0].mxu0
        %v1556 = vadd.f32 0.0, %v1555
        %v1557 = vpop.f32.mrb[0].mxu0
        %1558 = vmatprep.mubr.bf16.mxu0 0
        %1559 = vmatmul.mubr.bf16.gmra.mrb[0].mxu0 %v1451
        %v1560 = vpop.f32.mrb[0].mxu0
        %v1561 = vadd.f32 0.0, %v1560
        %v1562 = vpop.f32.mrb[0].mxu0
        %v1563 = vpop.f32.mrb[0].mxu0
        %v1564 = vadd.f32 0.0, %v1563
        %v1565 = vpop.f32.mrb[0].mxu0
        %1566 = vmatprep.mubr.bf16.mxu0 0
        %1567 = vmatmul.mubr.bf16.gmra.mrb[0].mxu0 %v1454
        %v1568 = vpop.f32.mrb[0].mxu0
        %v1569 = vadd.f32 0.0, %v1568
        %v1570 = vpop.f32.mrb[0].mxu0
        %v1571 = vpop.f32.mrb[0].mxu0
        %v1572 = vadd.f32 0.0, %v1571
        %v1573 = vpop.f32.mrb[0].mxu0
        %1574 = vmatprep.mubr.bf16.mxu0 0
        %1575 = vmatmul.mubr.bf16.gmra.mrb[0].mxu0 %v1457
        %v1576 = vpop.f32.mrb[0].mxu0
        %v1577 = vadd.f32 0.0, %v1576
        %v1578 = vpop.f32.mrb[0].mxu0
        %v1579 = vpop.f32.mrb[0].mxu0
        %v1580 = vadd.f32 0.0, %v1579
        %v1581 = vpop.f32.mrb[0].mxu0
        %1582 = vmatprep.mubr.bf16.mxu0 0
        %1583 = vmatmul.mubr.bf16.gmra.mrb[0].mxu0 %v1460
        %v1584 = vpop.f32.mrb[0].mxu0
        %v1585 = vadd.f32 0.0, %v1584
        %v1586 = vpop.f32.mrb[0].mxu0
        %v1587 = vpop.f32.mrb[0].mxu0
        %v1588 = vadd.f32 0.0, %v1587
        %v1589 = vpop.f32.mrb[0].mxu0
        %1590 = vmatprep.mubr.bf16.mxu0 0
        %1591 = vmatmul.mubr.bf16.gmra.mrb[0].mxu0 %v1463
        %v1592 = vpop.f32.mrb[0].mxu0
        %v1593 = vadd.f32 0.0, %v1592
        %v1594 = vpop.f32.mrb[0].mxu0
        %v1595 = vpop.f32.mrb[0].mxu0
        %v1596 = vadd.f32 0.0, %v1595
        %v1597 = vpop.f32.mrb[0].mxu0
        %1598 = vmatprep.mubr.bf16.mxu0 0
        %1599 = vmatmul.mubr.bf16.gmra.mrb[0].mxu0 %v1466
        %v1600 = vpop.f32.mrb[0].mxu0
        %v1601 = vadd.f32 0.0, %v1600
        %v1602 = vpop.f32.mrb[0].mxu0
        %v1603 = vpop.f32.mrb[0].mxu0
        %v1604 = vadd.f32 0.0, %v1603
        %v1605 = vpop.f32.mrb[0].mxu0
        %1606 = vmatprep.mubr.bf16.mxu0 0
        %1607 = vmatmul.mubr.bf16.gmra.mrb[0].mxu0 %v1469
        %v1608 = vpop.f32.mrb[0].mxu0
        %v1609 = vadd.f32 0.0, %v1608
        %v1610 = vpop.f32.mrb[0].mxu0
        %v1611 = vpop.f32.mrb[0].mxu0
        %v1612 = vadd.f32 0.0, %v1611
        %v1613 = vpop.f32.mrb[0].mxu0
        %1614 = vmatprep.mubr.bf16.mxu0 0
        %1615 = vmatmul.mubr.bf16.gmra.mrb[0].mxu0 %v1472
        %v1616 = vpop.f32.mrb[0].mxu0
        %v1617 = vadd.f32 0.0, %v1616
        %v1618 = vpop.f32.mrb[0].mxu0
        %v1619 = vpop.f32.mrb[0].mxu0
        %v1620 = vadd.f32 0.0, %v1619
        %v1621 = vpop.f32.mrb[0].mxu0
        %1622 = vmatprep.mubr.bf16.mxu0 0
        %1623 = vmatmul.mubr.bf16.gmra.mrb[0].mxu0 %v1475
        %v1624 = vpop.f32.mrb[0].mxu0
        %v1625 = vadd.f32 0.0, %v1624
        %v1626 = vpop.f32.mrb[0].mxu0
        %v1627 = vpop.f32.mrb[0].mxu0
        %v1628 = vadd.f32 0.0, %v1627
        %v1629 = vpop.f32.mrb[0].mxu0
        %1630 = vmatprep.mubr.bf16.mxu0 0
        %1631 = vmatmul.mubr.bf16.gmra.mrb[0].mxu0 %v1478
        %v1632 = vpop.f32.mrb[0].mxu0
        %v1633 = vadd.f32 0.0, %v1632
        %v1634 = vpop.f32.mrb[0].mxu0
        %v1635 = vpop.f32.mrb[0].mxu0
        %v1636 = vadd.f32 0.0, %v1635
        %v1637 = vpop.f32.mrb[0].mxu0
        %1638 = vmatprep.mubr.bf16.mxu0 0
        %1639 = vmatmul.mubr.bf16.gmra.mrb[0].mxu0 %v1481
        %v1640 = vpop.f32.mrb[0].mxu0
        %v1641 = vadd.f32 0.0, %v1640
        %v1642 = vpop.f32.mrb[0].mxu0
        %v1643 = vpop.f32.mrb[0].mxu0
        %v1644 = vadd.f32 0.0, %v1643
        %v1645 = vpop.f32.mrb[0].mxu0
        %1646 = vdwg.mxu0
        %v1647 = vadd.f32 %v1352, %v1521
        %v1648 = vadd.f32 %v1353, %v1524
        %v1649 = vadd.f32 %v1354, %v1529
        %v1650 = vadd.f32 %v1355, %v1532
        %v1651 = vadd.f32 %v1356, %v1537
        %v1652 = vadd.f32 %v1357, %v1540
        %v1653 = vadd.f32 %v1358, %v1545
        %v1654 = vadd.f32 %v1359, %v1548
        %v1655 = vadd.f32 %v1360, %v1553
        %v1656 = vadd.f32 %v1361, %v1556
        %v1657 = vadd.f32 %v1362, %v1561
        %v1658 = vadd.f32 %v1363, %v1564
        %v1659 = vadd.f32 %v1364, %v1569
        %v1660 = vadd.f32 %v1365, %v1572
        %v1661 = vadd.f32 %v1366, %v1577
        %v1662 = vadd.f32 %v1367, %v1580
        %v1663 = vadd.f32 %v1368, %v1585
        %v1664 = vadd.f32 %v1369, %v1588
        %v1665 = vadd.f32 %v1370, %v1593
        %v1666 = vadd.f32 %v1371, %v1596
        %v1667 = vadd.f32 %v1372, %v1601
        %v1668 = vadd.f32 %v1373, %v1604
        %v1669 = vadd.f32 %v1374, %v1609
        %v1670 = vadd.f32 %v1375, %v1612
        %v1671 = vadd.f32 %v1376, %v1617
        %v1672 = vadd.f32 %v1377, %v1620
        %v1673 = vadd.f32 %v1378, %v1625
        %v1674 = vadd.f32 %v1379, %v1628
        %v1675 = vadd.f32 %v1380, %v1633
        %v1676 = vadd.f32 %v1381, %v1636
        %v1677 = vadd.f32 %v1382, %v1641
        %v1678 = vadd.f32 %v1383, %v1644
        %v1679 = vld [vmem:[%s1384 + $0x1] sm:$0xff]
        %v1680 = vld [vmem:[%s1384 + $0x9] sm:$0xff]
        %v1681 = vld [vmem:[%s1384 + $0x19] sm:$0xff]
        %v1682 = vld [vmem:[%s1384 + $0x21] sm:$0xff]
        %v1683 = vld [vmem:[%s1384 + $0x31] sm:$0xff]
        %v1684 = vld [vmem:[%s1384 + $0x39] sm:$0xff]
        %v1685 = vld [vmem:[%s1384 + $0x49] sm:$0xff]
        %v1686 = vld [vmem:[%s1384 + $0x51] sm:$0xff]
        %v1687 = vld [vmem:[%s1384 + $0x61] sm:$0xff]
        %v1688 = vld [vmem:[%s1384 + $0x69] sm:$0xff]
        %v1689 = vld [vmem:[%s1384 + $0x79] sm:$0xff]
        %v1690 = vld [vmem:[%s1384 + $0x81] sm:$0xff]
        %v1691 = vld [vmem:[%s1384 + $0x91] sm:$0xff]
        %v1692 = vld [vmem:[%s1384 + $0x99] sm:$0xff]
        %v1693 = vld [vmem:[%s1384 + $0xa9] sm:$0xff]
        %v1694 = vld [vmem:[%s1384 + $0xb1] sm:$0xff]
        %v1695 = vld [vmem:[%s1384 + $0xc1] sm:$0xff]
        %v1696 = vld [vmem:[%s1384 + $0xc9] sm:$0xff]
        %v1697 = vld [vmem:[%s1384 + $0xd9] sm:$0xff]
        %v1698 = vld [vmem:[%s1384 + $0xe1] sm:$0xff]
        %v1699 = vld [vmem:[%s1384 + $0xf1] sm:$0xff]
        %v1700 = vld [vmem:[%s1384 + $0xf9] sm:$0xff]
        %v1701 = vld [vmem:[%s1384 + $0x109] sm:$0xff]
        %v1702 = vld [vmem:[%s1384 + $0x111] sm:$0xff]
        %v1703 = vld [vmem:[%s1384 + $0x121] sm:$0xff]
        %v1704 = vld [vmem:[%s1384 + $0x129] sm:$0xff]
        %v1705 = vld [vmem:[%s1384 + $0x139] sm:$0xff]
        %v1706 = vld [vmem:[%s1384 + $0x141] sm:$0xff]
        %v1707 = vld [vmem:[%s1384 + $0x151] sm:$0xff]
        %v1708 = vld [vmem:[%s1384 + $0x159] sm:$0xff]
        %v1709 = vld [vmem:[%s1384 + $0x169] sm:$0xff]
        %v1710 = vld [vmem:[%s1384 + $0x171] sm:$0xff]
        %v1711 = vpack.c.bf16 %v1680, %v1679
        %v1712 = vpack.c.bf16 %v1682, %v1681
        %v1713 = vpack.c.bf16 %v1684, %v1683
        %v1714 = vpack.c.bf16 %v1686, %v1685
        %v1715 = vpack.c.bf16 %v1688, %v1687
        %v1716 = vpack.c.bf16 %v1690, %v1689
        %v1717 = vpack.c.bf16 %v1692, %v1691
        %v1718 = vpack.c.bf16 %v1694, %v1693
        %v1719 = vpack.c.bf16 %v1696, %v1695
        %v1720 = vpack.c.bf16 %v1698, %v1697
        %v1721 = vpack.c.bf16 %v1700, %v1699
        %v1722 = vpack.c.bf16 %v1702, %v1701
        %v1723 = vpack.c.bf16 %v1704, %v1703
        %v1724 = vpack.c.bf16 %v1706, %v1705
        %v1725 = vpack.c.bf16 %v1708, %v1707
        %v1726 = vpack.c.bf16 %v1710, %v1709
        %s1727 = scalar_lea.vmem [#allocation7], 8
        %v1728 = vld [vmem:[%s1727] sm:$0x3]
        %v1730 = vsel %vm664, %v1711, 0
        %v1733 = vsel %vm664, %v1712, 0
        %v1736 = vsel %vm664, %v1713, 0
        %v1739 = vsel %vm664, %v1714, 0
        %v1742 = vsel %vm664, %v1715, 0
        %v1745 = vsel %vm664, %v1716, 0
        %v1748 = vsel %vm664, %v1717, 0
        %v1751 = vsel %vm664, %v1718, 0
        %v1754 = vsel %vm664, %v1719, 0
        %v1757 = vsel %vm664, %v1720, 0
        %v1760 = vsel %vm664, %v1721, 0
        %v1763 = vsel %vm664, %v1722, 0
        %v1766 = vsel %vm664, %v1723, 0
        %v1769 = vsel %vm664, %v1724, 0
        %v1772 = vsel %vm664, %v1725, 0
        %v1775 = vsel %vm664, %v1726, 0
        %v1778 = vsel %vm713, %v1728, 0
        %1780 = vmatprep.subr.bf16.mxu0 0
        %1781 = vmatpush1.bf16.msra.mxu0 %v1778
        %1782 = vmatprep.subr.bf16.mxu0 0
        %1783 = vmatpush1.bf16.msra.mxu0 0
        %1784 = vmatprep.subr.bf16.mxu0 0
        %1785 = vmatpush1.bf16.msra.mxu0 0
        %1786 = vmatprep.subr.bf16.mxu0 0
        %1787 = vmatpush1.bf16.msra.mxu0 0
        %1788 = vmatprep.subr.bf16.mxu0 0
        %1789 = vmatpush1.bf16.msra.mxu0 0
        %1790 = vmatprep.subr.bf16.mxu0 0
        %1791 = vmatpush1.bf16.msra.mxu0 0
        %1792 = vmatprep.subr.bf16.mxu0 0
        %1793 = vmatpush1.bf16.msra.mxu0 0
        %1794 = vmatprep.subr.bf16.mxu0 0
        %1795 = vmatpush1.bf16.msra.mxu0 0
        %1796 = vmatprep.subr.bf16.mxu0 0
        %1797 = vmatpush1.bf16.msra.mxu0 0
        %1798 = vmatprep.subr.bf16.mxu0 0
        %1799 = vmatpush1.bf16.msra.mxu0 0
        %1800 = vmatprep.subr.bf16.mxu0 0
        %1801 = vmatpush1.bf16.msra.mxu0 0
        %1802 = vmatprep.subr.bf16.mxu0 0
        %1803 = vmatpush1.bf16.msra.mxu0 0
        %1804 = vmatprep.subr.bf16.mxu0 0
        %1805 = vmatpush1.bf16.msra.mxu0 0
        %1806 = vmatprep.subr.bf16.mxu0 0
        %1807 = vmatpush1.bf16.msra.mxu0 0
        %1808 = vmatprep.subr.bf16.mxu0 0
        %1809 = vmatpush1.bf16.msra.mxu0 0
        %1810 = vmatprep.subr.bf16.mxu0 0
        %1811 = vmatpush1.bf16.msra.mxu0 0
        %1812 = vmatprep.mubr.bf16.mxu0 0
        %1813 = vmatmul.mubr.bf16.gmra.mrb[0].mxu0 %v1730
        %v1814 = vpop.f32.mrb[0].mxu0
        %v1815 = vadd.f32 0.0, %v1814
        %v1816 = vpop.f32.mrb[0].mxu0
        %v1817 = vpop.f32.mrb[0].mxu0
        %v1818 = vadd.f32 0.0, %v1817
        %v1819 = vpop.f32.mrb[0].mxu0
        %1820 = vmatprep.mubr.bf16.mxu0 0
        %1821 = vmatmul.mubr.bf16.gmra.mrb[0].mxu0 %v1733
        %v1822 = vpop.f32.mrb[0].mxu0
        %v1823 = vadd.f32 0.0, %v1822
        %v1824 = vpop.f32.mrb[0].mxu0
        %v1825 = vpop.f32.mrb[0].mxu0
        %v1826 = vadd.f32 0.0, %v1825
        %v1827 = vpop.f32.mrb[0].mxu0
        %1828 = vmatprep.mubr.bf16.mxu0 0
        %1829 = vmatmul.mubr.bf16.gmra.mrb[0].mxu0 %v1736
        %v1830 = vpop.f32.mrb[0].mxu0
        %v1831 = vadd.f32 0.0, %v1830
        %v1832 = vpop.f32.mrb[0].mxu0
        %v1833 = vpop.f32.mrb[0].mxu0
        %v1834 = vadd.f32 0.0, %v1833
        %v1835 = vpop.f32.mrb[0].mxu0
        %1836 = vmatprep.mubr.bf16.mxu0 0
        %1837 = vmatmul.mubr.bf16.gmra.mrb[0].mxu0 %v1739
        %v1838 = vpop.f32.mrb[0].mxu0
        %v1839 = vadd.f32 0.0, %v1838
        %v1840 = vpop.f32.mrb[0].mxu0
        %v1841 = vpop.f32.mrb[0].mxu0
        %v1842 = vadd.f32 0.0, %v1841
        %v1843 = vpop.f32.mrb[0].mxu0
        %1844 = vmatprep.mubr.bf16.mxu0 0
        %1845 = vmatmul.mubr.bf16.gmra.mrb[0].mxu0 %v1742
        %v1846 = vpop.f32.mrb[0].mxu0
        %v1847 = vadd.f32 0.0, %v1846
        %v1848 = vpop.f32.mrb[0].mxu0
        %v1849 = vpop.f32.mrb[0].mxu0
        %v1850 = vadd.f32 0.0, %v1849
        %v1851 = vpop.f32.mrb[0].mxu0
        %1852 = vmatprep.mubr.bf16.mxu0 0
        %1853 = vmatmul.mubr.bf16.gmra.mrb[0].mxu0 %v1745
        %v1854 = vpop.f32.mrb[0].mxu0
        %v1855 = vadd.f32 0.0, %v1854
        %v1856 = vpop.f32.mrb[0].mxu0
        %v1857 = vpop.f32.mrb[0].mxu0
        %v1858 = vadd.f32 0.0, %v1857
        %v1859 = vpop.f32.mrb[0].mxu0
        %1860 = vmatprep.mubr.bf16.mxu0 0
        %1861 = vmatmul.mubr.bf16.gmra.mrb[0].mxu0 %v1748
        %v1862 = vpop.f32.mrb[0].mxu0
        %v1863 = vadd.f32 0.0, %v1862
        %v1864 = vpop.f32.mrb[0].mxu0
        %v1865 = vpop.f32.mrb[0].mxu0
        %v1866 = vadd.f32 0.0, %v1865
        %v1867 = vpop.f32.mrb[0].mxu0
        %1868 = vmatprep.mubr.bf16.mxu0 0
        %1869 = vmatmul.mubr.bf16.gmra.mrb[0].mxu0 %v1751
        %v1870 = vpop.f32.mrb[0].mxu0
        %v1871 = vadd.f32 0.0, %v1870
        %v1872 = vpop.f32.mrb[0].mxu0
        %v1873 = vpop.f32.mrb[0].mxu0
        %v1874 = vadd.f32 0.0, %v1873
        %v1875 = vpop.f32.mrb[0].mxu0
        %1876 = vmatprep.mubr.bf16.mxu0 0
        %1877 = vmatmul.mubr.bf16.gmra.mrb[0].mxu0 %v1754
        %v1878 = vpop.f32.mrb[0].mxu0
        %v1879 = vadd.f32 0.0, %v1878
        %v1880 = vpop.f32.mrb[0].mxu0
        %v1881 = vpop.f32.mrb[0].mxu0
        %v1882 = vadd.f32 0.0, %v1881
        %v1883 = vpop.f32.mrb[0].mxu0
        %1884 = vmatprep.mubr.bf16.mxu0 0
        %1885 = vmatmul.mubr.bf16.gmra.mrb[0].mxu0 %v1757
        %v1886 = vpop.f32.mrb[0].mxu0
        %v1887 = vadd.f32 0.0, %v1886
        %v1888 = vpop.f32.mrb[0].mxu0
        %v1889 = vpop.f32.mrb[0].mxu0
        %v1890 = vadd.f32 0.0, %v1889
        %v1891 = vpop.f32.mrb[0].mxu0
        %1892 = vmatprep.mubr.bf16.mxu0 0
        %1893 = vmatmul.mubr.bf16.gmra.mrb[0].mxu0 %v1760
        %v1894 = vpop.f32.mrb[0].mxu0
        %v1895 = vadd.f32 0.0, %v1894
        %v1896 = vpop.f32.mrb[0].mxu0
        %v1897 = vpop.f32.mrb[0].mxu0
        %v1898 = vadd.f32 0.0, %v1897
        %v1899 = vpop.f32.mrb[0].mxu0
        %1900 = vmatprep.mubr.bf16.mxu0 0
        %1901 = vmatmul.mubr.bf16.gmra.mrb[0].mxu0 %v1763
        %v1902 = vpop.f32.mrb[0].mxu0
        %v1903 = vadd.f32 0.0, %v1902
        %v1904 = vpop.f32.mrb[0].mxu0
        %v1905 = vpop.f32.mrb[0].mxu0
        %v1906 = vadd.f32 0.0, %v1905
        %v1907 = vpop.f32.mrb[0].mxu0
        %1908 = vmatprep.mubr.bf16.mxu0 0
        %1909 = vmatmul.mubr.bf16.gmra.mrb[0].mxu0 %v1766
        %v1910 = vpop.f32.mrb[0].mxu0
        %v1911 = vadd.f32 0.0, %v1910
        %v1912 = vpop.f32.mrb[0].mxu0
        %v1913 = vpop.f32.mrb[0].mxu0
        %v1914 = vadd.f32 0.0, %v1913
        %v1915 = vpop.f32.mrb[0].mxu0
        %1916 = vmatprep.mubr.bf16.mxu0 0
        %1917 = vmatmul.mubr.bf16.gmra.mrb[0].mxu0 %v1769
        %v1918 = vpop.f32.mrb[0].mxu0
        %v1919 = vadd.f32 0.0, %v1918
        %v1920 = vpop.f32.mrb[0].mxu0
        %v1921 = vpop.f32.mrb[0].mxu0
        %v1922 = vadd.f32 0.0, %v1921
        %v1923 = vpop.f32.mrb[0].mxu0
        %1924 = vmatprep.mubr.bf16.mxu0 0
        %1925 = vmatmul.mubr.bf16.gmra.mrb[0].mxu0 %v1772
        %v1926 = vpop.f32.mrb[0].mxu0
        %v1927 = vadd.f32 0.0, %v1926
        %v1928 = vpop.f32.mrb[0].mxu0
        %v1929 = vpop.f32.mrb[0].mxu0
        %v1930 = vadd.f32 0.0, %v1929
        %v1931 = vpop.f32.mrb[0].mxu0
        %1932 = vmatprep.mubr.bf16.mxu0 0
        %1933 = vmatmul.mubr.bf16.gmra.mrb[0].mxu0 %v1775
        %v1934 = vpop.f32.mrb[0].mxu0
        %v1935 = vadd.f32 0.0, %v1934
        %v1936 = vpop.f32.mrb[0].mxu0
        %v1937 = vpop.f32.mrb[0].mxu0
        %v1938 = vadd.f32 0.0, %v1937
        %v1939 = vpop.f32.mrb[0].mxu0
        %1940 = vdwg.mxu0
        %v1941 = vadd.f32 %v1647, %v1815
        %v1942 = vadd.f32 %v1648, %v1818
        %v1943 = vadd.f32 %v1649, %v1823
        %v1944 = vadd.f32 %v1650, %v1826
        %v1945 = vadd.f32 %v1651, %v1831
        %v1946 = vadd.f32 %v1652, %v1834
        %v1947 = vadd.f32 %v1653, %v1839
        %v1948 = vadd.f32 %v1654, %v1842
        %v1949 = vadd.f32 %v1655, %v1847
        %v1950 = vadd.f32 %v1656, %v1850
        %v1951 = vadd.f32 %v1657, %v1855
        %v1952 = vadd.f32 %v1658, %v1858
        %v1953 = vadd.f32 %v1659, %v1863
        %v1954 = vadd.f32 %v1660, %v1866
        %v1955 = vadd.f32 %v1661, %v1871
        %v1956 = vadd.f32 %v1662, %v1874
        %v1957 = vadd.f32 %v1663, %v1879
        %v1958 = vadd.f32 %v1664, %v1882
        %v1959 = vadd.f32 %v1665, %v1887
        %v1960 = vadd.f32 %v1666, %v1890
        %v1961 = vadd.f32 %v1667, %v1895
        %v1962 = vadd.f32 %v1668, %v1898
        %v1963 = vadd.f32 %v1669, %v1903
        %v1964 = vadd.f32 %v1670, %v1906
        %v1965 = vadd.f32 %v1671, %v1911
        %v1966 = vadd.f32 %v1672, %v1914
        %v1967 = vadd.f32 %v1673, %v1919
        %v1968 = vadd.f32 %v1674, %v1922
        %v1969 = vadd.f32 %v1675, %v1927
        %v1970 = vadd.f32 %v1676, %v1930
        %v1971 = vadd.f32 %v1677, %v1935
        %v1972 = vadd.f32 %v1678, %v1938
        %v1973 = vld [vmem:[%s1384 + $0x2] sm:$0xff]
        %v1974 = vld [vmem:[%s1384 + $0xa] sm:$0xff]
        %v1975 = vld [vmem:[%s1384 + $0x1a] sm:$0xff]
        %v1976 = vld [vmem:[%s1384 + $0x22] sm:$0xff]
        %v1977 = vld [vmem:[%s1384 + $0x32] sm:$0xff]
        %v1978 = vld [vmem:[%s1384 + $0x3a] sm:$0xff]
        %v1979 = vld [vmem:[%s1384 + $0x4a] sm:$0xff]
        %v1980 = vld [vmem:[%s1384 + $0x52] sm:$0xff]
        %v1981 = vld [vmem:[%s1384 + $0x62] sm:$0xff]
        %v1982 = vld [vmem:[%s1384 + $0x6a] sm:$0xff]
        %v1983 = vld [vmem:[%s1384 + $0x7a] sm:$0xff]
        %v1984 = vld [vmem:[%s1384 + $0x82] sm:$0xff]
        %v1985 = vld [vmem:[%s1384 + $0x92] sm:$0xff]
        %v1986 = vld [vmem:[%s1384 + $0x9a] sm:$0xff]
        %v1987 = vld [vmem:[%s1384 + $0xaa] sm:$0xff]
        %v1988 = vld [vmem:[%s1384 + $0xb2] sm:$0xff]
        %v1989 = vld [vmem:[%s1384 + $0xc2] sm:$0xff]
        %v1990 = vld [vmem:[%s1384 + $0xca] sm:$0xff]
        %v1991 = vld [vmem:[%s1384 + $0xda] sm:$0xff]
        %v1992 = vld [vmem:[%s1384 + $0xe2] sm:$0xff]
        %v1993 = vld [vmem:[%s1384 + $0xf2] sm:$0xff]
        %v1994 = vld [vmem:[%s1384 + $0xfa] sm:$0xff]
        %v1995 = vld [vmem:[%s1384 + $0x10a] sm:$0xff]
        %v1996 = vld [vmem:[%s1384 + $0x112] sm:$0xff]
        %v1997 = vld [vmem:[%s1384 + $0x122] sm:$0xff]
        %v1998 = vld [vmem:[%s1384 + $0x12a] sm:$0xff]
        %v1999 = vld [vmem:[%s1384 + $0x13a] sm:$0xff]
        %v2000 = vld [vmem:[%s1384 + $0x142] sm:$0xff]
        %v2001 = vld [vmem:[%s1384 + $0x152] sm:$0xff]
        %v2002 = vld [vmem:[%s1384 + $0x15a] sm:$0xff]
        %v2003 = vld [vmem:[%s1384 + $0x16a] sm:$0xff]
        %v2004 = vld [vmem:[%s1384 + $0x172] sm:$0xff]
        %v2005 = vpack.c.bf16 %v1974, %v1973
        %v2006 = vpack.c.bf16 %v1976, %v1975
        %v2007 = vpack.c.bf16 %v1978, %v1977
        %v2008 = vpack.c.bf16 %v1980, %v1979
        %v2009 = vpack.c.bf16 %v1982, %v1981
        %v2010 = vpack.c.bf16 %v1984, %v1983
        %v2011 = vpack.c.bf16 %v1986, %v1985
        %v2012 = vpack.c.bf16 %v1988, %v1987
        %v2013 = vpack.c.bf16 %v1990, %v1989
        %v2014 = vpack.c.bf16 %v1992, %v1991
        %v2015 = vpack.c.bf16 %v1994, %v1993
        %v2016 = vpack.c.bf16 %v1996, %v1995
        %v2017 = vpack.c.bf16 %v1998, %v1997
        %v2018 = vpack.c.bf16 %v2000, %v1999
        %v2019 = vpack.c.bf16 %v2002, %v2001
        %v2020 = vpack.c.bf16 %v2004, %v2003
        %s2021 = scalar_lea.vmem [#allocation7], 10
        %v2022 = vld [vmem:[%s2021] sm:$0x3]
        %v2024 = vsel %vm664, %v2005, 0
        %v2027 = vsel %vm664, %v2006, 0
        %v2030 = vsel %vm664, %v2007, 0
        %v2033 = vsel %vm664, %v2008, 0
        %v2036 = vsel %vm664, %v2009, 0
        %v2039 = vsel %vm664, %v2010, 0
        %v2042 = vsel %vm664, %v2011, 0
        %v2045 = vsel %vm664, %v2012, 0
        %v2048 = vsel %vm664, %v2013, 0
        %v2051 = vsel %vm664, %v2014, 0
        %v2054 = vsel %vm664, %v2015, 0
        %v2057 = vsel %vm664, %v2016, 0
        %v2060 = vsel %vm664, %v2017, 0
        %v2063 = vsel %vm664, %v2018, 0
        %v2066 = vsel %vm664, %v2019, 0
        %v2069 = vsel %vm664, %v2020, 0
        %v2072 = vsel %vm713, %v2022, 0
        %2074 = vmatprep.subr.bf16.mxu0 0
        %2075 = vmatpush1.bf16.msra.mxu0 %v2072
        %2076 = vmatprep.subr.bf16.mxu0 0
        %2077 = vmatpush1.bf16.msra.mxu0 0
        %2078 = vmatprep.subr.bf16.mxu0 0
        %2079 = vmatpush1.bf16.msra.mxu0 0
        %2080 = vmatprep.subr.bf16.mxu0 0
        %2081 = vmatpush1.bf16.msra.mxu0 0
        %2082 = vmatprep.subr.bf16.mxu0 0
        %2083 = vmatpush1.bf16.msra.mxu0 0
        %2084 = vmatprep.subr.bf16.mxu0 0
        %2085 = vmatpush1.bf16.msra.mxu0 0
        %2086 = vmatprep.subr.bf16.mxu0 0
        %2087 = vmatpush1.bf16.msra.mxu0 0
        %2088 = vmatprep.subr.bf16.mxu0 0
        %2089 = vmatpush1.bf16.msra.mxu0 0
        %2090 = vmatprep.subr.bf16.mxu0 0
        %2091 = vmatpush1.bf16.msra.mxu0 0
        %2092 = vmatprep.subr.bf16.mxu0 0
        %2093 = vmatpush1.bf16.msra.mxu0 0
        %2094 = vmatprep.subr.bf16.mxu0 0
        %2095 = vmatpush1.bf16.msra.mxu0 0
        %2096 = vmatprep.subr.bf16.mxu0 0
        %2097 = vmatpush1.bf16.msra.mxu0 0
        %2098 = vmatprep.subr.bf16.mxu0 0
        %2099 = vmatpush1.bf16.msra.mxu0 0
        %2100 = vmatprep.subr.bf16.mxu0 0
        %2101 = vmatpush1.bf16.msra.mxu0 0
        %2102 = vmatprep.subr.bf16.mxu0 0
        %2103 = vmatpush1.bf16.msra.mxu0 0
        %2104 = vmatprep.subr.bf16.mxu0 0
        %2105 = vmatpush1.bf16.msra.mxu0 0
        %2106 = vmatprep.mubr.bf16.mxu0 0
        %2107 = vmatmul.mubr.bf16.gmra.mrb[0].mxu0 %v2024
        %v2108 = vpop.f32.mrb[0].mxu0
        %v2109 = vadd.f32 0.0, %v2108
        %v2110 = vpop.f32.mrb[0].mxu0
        %v2111 = vpop.f32.mrb[0].mxu0
        %v2112 = vadd.f32 0.0, %v2111
        %v2113 = vpop.f32.mrb[0].mxu0
        %2114 = vmatprep.mubr.bf16.mxu0 0
        %2115 = vmatmul.mubr.bf16.gmra.mrb[0].mxu0 %v2027
        %v2116 = vpop.f32.mrb[0].mxu0
        %v2117 = vadd.f32 0.0, %v2116
        %v2118 = vpop.f32.mrb[0].mxu0
        %v2119 = vpop.f32.mrb[0].mxu0
        %v2120 = vadd.f32 0.0, %v2119
        %v2121 = vpop.f32.mrb[0].mxu0
        %2122 = vmatprep.mubr.bf16.mxu0 0
        %2123 = vmatmul.mubr.bf16.gmra.mrb[0].mxu0 %v2030
        %v2124 = vpop.f32.mrb[0].mxu0
        %v2125 = vadd.f32 0.0, %v2124
        %v2126 = vpop.f32.mrb[0].mxu0
        %v2127 = vpop.f32.mrb[0].mxu0
        %v2128 = vadd.f32 0.0, %v2127
        %v2129 = vpop.f32.mrb[0].mxu0
        %2130 = vmatprep.mubr.bf16.mxu0 0
        %2131 = vmatmul.mubr.bf16.gmra.mrb[0].mxu0 %v2033
        %v2132 = vpop.f32.mrb[0].mxu0
        %v2133 = vadd.f32 0.0, %v2132
        %v2134 = vpop.f32.mrb[0].mxu0
        %v2135 = vpop.f32.mrb[0].mxu0
        %v2136 = vadd.f32 0.0, %v2135
        %v2137 = vpop.f32.mrb[0].mxu0
        %2138 = vmatprep.mubr.bf16.mxu0 0
        %2139 = vmatmul.mubr.bf16.gmra.mrb[0].mxu0 %v2036
        %v2140 = vpop.f32.mrb[0].mxu0
        %v2141 = vadd.f32 0.0, %v2140
        %v2142 = vpop.f32.mrb[0].mxu0
        %v2143 = vpop.f32.mrb[0].mxu0
        %v2144 = vadd.f32 0.0, %v2143
        %v2145 = vpop.f32.mrb[0].mxu0
        %2146 = vmatprep.mubr.bf16.mxu0 0
        %2147 = vmatmul.mubr.bf16.gmra.mrb[0].mxu0 %v2039
        %v2148 = vpop.f32.mrb[0].mxu0
        %v2149 = vadd.f32 0.0, %v2148
        %v2150 = vpop.f32.mrb[0].mxu0
        %v2151 = vpop.f32.mrb[0].mxu0
        %v2152 = vadd.f32 0.0, %v2151
        %v2153 = vpop.f32.mrb[0].mxu0
        %2154 = vmatprep.mubr.bf16.mxu0 0
        %2155 = vmatmul.mubr.bf16.gmra.mrb[0].mxu0 %v2042
        %v2156 = vpop.f32.mrb[0].mxu0
        %v2157 = vadd.f32 0.0, %v2156
        %v2158 = vpop.f32.mrb[0].mxu0
        %v2159 = vpop.f32.mrb[0].mxu0
        %v2160 = vadd.f32 0.0, %v2159
        %v2161 = vpop.f32.mrb[0].mxu0
        %2162 = vmatprep.mubr.bf16.mxu0 0
        %2163 = vmatmul.mubr.bf16.gmra.mrb[0].mxu0 %v2045
        %v2164 = vpop.f32.mrb[0].mxu0
        %v2165 = vadd.f32 0.0, %v2164
        %v2166 = vpop.f32.mrb[0].mxu0
        %v2167 = vpop.f32.mrb[0].mxu0
        %v2168 = vadd.f32 0.0, %v2167
        %v2169 = vpop.f32.mrb[0].mxu0
        %2170 = vmatprep.mubr.bf16.mxu0 0
        %2171 = vmatmul.mubr.bf16.gmra.mrb[0].mxu0 %v2048
        %v2172 = vpop.f32.mrb[0].mxu0
        %v2173 = vadd.f32 0.0, %v2172
        %v2174 = vpop.f32.mrb[0].mxu0
        %v2175 = vpop.f32.mrb[0].mxu0
        %v2176 = vadd.f32 0.0, %v2175
        %v2177 = vpop.f32.mrb[0].mxu0
        %2178 = vmatprep.mubr.bf16.mxu0 0
        %2179 = vmatmul.mubr.bf16.gmra.mrb[0].mxu0 %v2051
        %v2180 = vpop.f32.mrb[0].mxu0
        %v2181 = vadd.f32 0.0, %v2180
        %v2182 = vpop.f32.mrb[0].mxu0
        %v2183 = vpop.f32.mrb[0].mxu0
        %v2184 = vadd.f32 0.0, %v2183
        %v2185 = vpop.f32.mrb[0].mxu0
        %2186 = vmatprep.mubr.bf16.mxu0 0
        %2187 = vmatmul.mubr.bf16.gmra.mrb[0].mxu0 %v2054
        %v2188 = vpop.f32.mrb[0].mxu0
        %v2189 = vadd.f32 0.0, %v2188
        %v2190 = vpop.f32.mrb[0].mxu0
        %v2191 = vpop.f32.mrb[0].mxu0
        %v2192 = vadd.f32 0.0, %v2191
        %v2193 = vpop.f32.mrb[0].mxu0
        %2194 = vmatprep.mubr.bf16.mxu0 0
        %2195 = vmatmul.mubr.bf16.gmra.mrb[0].mxu0 %v2057
        %v2196 = vpop.f32.mrb[0].mxu0
        %v2197 = vadd.f32 0.0, %v2196
        %v2198 = vpop.f32.mrb[0].mxu0
        %v2199 = vpop.f32.mrb[0].mxu0
        %v2200 = vadd.f32 0.0, %v2199
        %v2201 = vpop.f32.mrb[0].mxu0
        %2202 = vmatprep.mubr.bf16.mxu0 0
        %2203 = vmatmul.mubr.bf16.gmra.mrb[0].mxu0 %v2060
        %v2204 = vpop.f32.mrb[0].mxu0
        %v2205 = vadd.f32 0.0, %v2204
        %v2206 = vpop.f32.mrb[0].mxu0
        %v2207 = vpop.f32.mrb[0].mxu0
        %v2208 = vadd.f32 0.0, %v2207
        %v2209 = vpop.f32.mrb[0].mxu0
        %2210 = vmatprep.mubr.bf16.mxu0 0
        %2211 = vmatmul.mubr.bf16.gmra.mrb[0].mxu0 %v2063
        %v2212 = vpop.f32.mrb[0].mxu0
        %v2213 = vadd.f32 0.0, %v2212
        %v2214 = vpop.f32.mrb[0].mxu0
        %v2215 = vpop.f32.mrb[0].mxu0
        %v2216 = vadd.f32 0.0, %v2215
        %v2217 = vpop.f32.mrb[0].mxu0
        %2218 = vmatprep.mubr.bf16.mxu0 0
        %2219 = vmatmul.mubr.bf16.gmra.mrb[0].mxu0 %v2066
        %v2220 = vpop.f32.mrb[0].mxu0
        %v2221 = vadd.f32 0.0, %v2220
        %v2222 = vpop.f32.mrb[0].mxu0
        %v2223 = vpop.f32.mrb[0].mxu0
        %v2224 = vadd.f32 0.0, %v2223
        %v2225 = vpop.f32.mrb[0].mxu0
        %2226 = vmatprep.mubr.bf16.mxu0 0
        %2227 = vmatmul.mubr.bf16.gmra.mrb[0].mxu0 %v2069
        %v2228 = vpop.f32.mrb[0].mxu0
        %v2229 = vadd.f32 0.0, %v2228
        %v2230 = vpop.f32.mrb[0].mxu0
        %v2231 = vpop.f32.mrb[0].mxu0
        %v2232 = vadd.f32 0.0, %v2231
        %v2233 = vpop.f32.mrb[0].mxu0
        %2234 = vdwg.mxu0
        %v2235 = vadd.f32 %v1941, %v2109
        %v2236 = vadd.f32 %v1942, %v2112
        %v2237 = vadd.f32 %v1943, %v2117
        %v2238 = vadd.f32 %v1944, %v2120
        %v2239 = vadd.f32 %v1945, %v2125
        %v2240 = vadd.f32 %v1946, %v2128
        %v2241 = vadd.f32 %v1947, %v2133
        %v2242 = vadd.f32 %v1948, %v2136
        %v2243 = vadd.f32 %v1949, %v2141
        %v2244 = vadd.f32 %v1950, %v2144
        %v2245 = vadd.f32 %v1951, %v2149
        %v2246 = vadd.f32 %v1952, %v2152
        %v2247 = vadd.f32 %v1953, %v2157
        %v2248 = vadd.f32 %v1954, %v2160
        %v2249 = vadd.f32 %v1955, %v2165
        %v2250 = vadd.f32 %v1956, %v2168
        %v2251 = vadd.f32 %v1957, %v2173
        %v2252 = vadd.f32 %v1958, %v2176
        %v2253 = vadd.f32 %v1959, %v2181
        %v2254 = vadd.f32 %v1960, %v2184
        %v2255 = vadd.f32 %v1961, %v2189
        %v2256 = vadd.f32 %v1962, %v2192
        %v2257 = vadd.f32 %v1963, %v2197
        %v2258 = vadd.f32 %v1964, %v2200
        %v2259 = vadd.f32 %v1965, %v2205
        %v2260 = vadd.f32 %v1966, %v2208
        %v2261 = vadd.f32 %v1967, %v2213
        %v2262 = vadd.f32 %v1968, %v2216
        %v2263 = vadd.f32 %v1969, %v2221
        %v2264 = vadd.f32 %v1970, %v2224
        %v2265 = vadd.f32 %v1971, %v2229
        %v2266 = vadd.f32 %v1972, %v2232
        %s2267 = scalar_lea.vmem %s484, 48 [#allocation4]
        %v2268 = vld [vmem:[%s2267] sm:$0xff]
        %v2269 = vld [vmem:[%s2267 + $0x8] sm:$0xff]
        %v2270 = vld [vmem:[%s2267 + $0x18] sm:$0xff]
        %v2271 = vld [vmem:[%s2267 + $0x20] sm:$0xff]
        %v2272 = vld [vmem:[%s2267 + $0x30] sm:$0xff]
        %v2273 = vld [vmem:[%s2267 + $0x38] sm:$0xff]
        %v2274 = vld [vmem:[%s2267 + $0x48] sm:$0xff]
        %v2275 = vld [vmem:[%s2267 + $0x50] sm:$0xff]
        %v2276 = vld [vmem:[%s2267 + $0x60] sm:$0xff]
        %v2277 = vld [vmem:[%s2267 + $0x68] sm:$0xff]
        %v2278 = vld [vmem:[%s2267 + $0x78] sm:$0xff]
        %v2279 = vld [vmem:[%s2267 + $0x80] sm:$0xff]
        %v2280 = vld [vmem:[%s2267 + $0x90] sm:$0xff]
        %v2281 = vld [vmem:[%s2267 + $0x98] sm:$0xff]
        %v2282 = vld [vmem:[%s2267 + $0xa8] sm:$0xff]
        %v2283 = vld [vmem:[%s2267 + $0xb0] sm:$0xff]
        %v2284 = vld [vmem:[%s2267 + $0xc0] sm:$0xff]
        %v2285 = vld [vmem:[%s2267 + $0xc8] sm:$0xff]
        %v2286 = vld [vmem:[%s2267 + $0xd8] sm:$0xff]
        %v2287 = vld [vmem:[%s2267 + $0xe0] sm:$0xff]
        %v2288 = vld [vmem:[%s2267 + $0xf0] sm:$0xff]
        %v2289 = vld [vmem:[%s2267 + $0xf8] sm:$0xff]
        %v2290 = vld [vmem:[%s2267 + $0x108] sm:$0xff]
        %v2291 = vld [vmem:[%s2267 + $0x110] sm:$0xff]
        %v2292 = vld [vmem:[%s2267 + $0x120] sm:$0xff]
        %v2293 = vld [vmem:[%s2267 + $0x128] sm:$0xff]
        %v2294 = vld [vmem:[%s2267 + $0x138] sm:$0xff]
        %v2295 = vld [vmem:[%s2267 + $0x140] sm:$0xff]
        %v2296 = vld [vmem:[%s2267 + $0x150] sm:$0xff]
        %v2297 = vld [vmem:[%s2267 + $0x158] sm:$0xff]
        %v2298 = vld [vmem:[%s2267 + $0x168] sm:$0xff]
        %v2299 = vld [vmem:[%s2267 + $0x170] sm:$0xff]
        %v2300 = vpack.c.bf16 %v2269, %v2268
        %v2301 = vpack.c.bf16 %v2271, %v2270
        %v2302 = vpack.c.bf16 %v2273, %v2272
        %v2303 = vpack.c.bf16 %v2275, %v2274
        %v2304 = vpack.c.bf16 %v2277, %v2276
        %v2305 = vpack.c.bf16 %v2279, %v2278
        %v2306 = vpack.c.bf16 %v2281, %v2280
        %v2307 = vpack.c.bf16 %v2283, %v2282
        %v2308 = vpack.c.bf16 %v2285, %v2284
        %v2309 = vpack.c.bf16 %v2287, %v2286
        %v2310 = vpack.c.bf16 %v2289, %v2288
        %v2311 = vpack.c.bf16 %v2291, %v2290
        %v2312 = vpack.c.bf16 %v2293, %v2292
        %v2313 = vpack.c.bf16 %v2295, %v2294
        %v2314 = vpack.c.bf16 %v2297, %v2296
        %v2315 = vpack.c.bf16 %v2299, %v2298
        %s2316 = scalar_lea.vmem [#allocation7], 12
        %v2317 = vld [vmem:[%s2316] sm:$0x3]
        %v2319 = vsel %vm664, %v2300, 0
        %v2322 = vsel %vm664, %v2301, 0
        %v2325 = vsel %vm664, %v2302, 0
        %v2328 = vsel %vm664, %v2303, 0
        %v2331 = vsel %vm664, %v2304, 0
        %v2334 = vsel %vm664, %v2305, 0
        %v2337 = vsel %vm664, %v2306, 0
        %v2340 = vsel %vm664, %v2307, 0
        %v2343 = vsel %vm664, %v2308, 0
        %v2346 = vsel %vm664, %v2309, 0
        %v2349 = vsel %vm664, %v2310, 0
        %v2352 = vsel %vm664, %v2311, 0
        %v2355 = vsel %vm664, %v2312, 0
        %v2358 = vsel %vm664, %v2313, 0
        %v2361 = vsel %vm664, %v2314, 0
        %v2364 = vsel %vm664, %v2315, 0
        %v2367 = vsel %vm713, %v2317, 0
        %2369 = vmatprep.subr.bf16.mxu0 0
        %2370 = vmatpush1.bf16.msra.mxu0 %v2367
        %2371 = vmatprep.subr.bf16.mxu0 0
        %2372 = vmatpush1.bf16.msra.mxu0 0
        %2373 = vmatprep.subr.bf16.mxu0 0
        %2374 = vmatpush1.bf16.msra.mxu0 0
        %2375 = vmatprep.subr.bf16.mxu0 0
        %2376 = vmatpush1.bf16.msra.mxu0 0
        %2377 = vmatprep.subr.bf16.mxu0 0
        %2378 = vmatpush1.bf16.msra.mxu0 0
        %2379 = vmatprep.subr.bf16.mxu0 0
        %2380 = vmatpush1.bf16.msra.mxu0 0
        %2381 = vmatprep.subr.bf16.mxu0 0
        %2382 = vmatpush1.bf16.msra.mxu0 0
        %2383 = vmatprep.subr.bf16.mxu0 0
        %2384 = vmatpush1.bf16.msra.mxu0 0
        %2385 = vmatprep.subr.bf16.mxu0 0
        %2386 = vmatpush1.bf16.msra.mxu0 0
        %2387 = vmatprep.subr.bf16.mxu0 0
        %2388 = vmatpush1.bf16.msra.mxu0 0
        %2389 = vmatprep.subr.bf16.mxu0 0
        %2390 = vmatpush1.bf16.msra.mxu0 0
        %2391 = vmatprep.subr.bf16.mxu0 0
        %2392 = vmatpush1.bf16.msra.mxu0 0
        %2393 = vmatprep.subr.bf16.mxu0 0
        %2394 = vmatpush1.bf16.msra.mxu0 0
        %2395 = vmatprep.subr.bf16.mxu0 0
        %2396 = vmatpush1.bf16.msra.mxu0 0
        %2397 = vmatprep.subr.bf16.mxu0 0
        %2398 = vmatpush1.bf16.msra.mxu0 0
        %2399 = vmatprep.subr.bf16.mxu0 0
        %2400 = vmatpush1.bf16.msra.mxu0 0
        %2401 = vmatprep.mubr.bf16.mxu0 0
        %2402 = vmatmul.mubr.bf16.gmra.mrb[0].mxu0 %v2319
        %v2403 = vpop.f32.mrb[0].mxu0
        %v2404 = vadd.f32 0.0, %v2403
        %v2405 = vpop.f32.mrb[0].mxu0
        %v2406 = vpop.f32.mrb[0].mxu0
        %v2407 = vadd.f32 0.0, %v2406
        %v2408 = vpop.f32.mrb[0].mxu0
        %2409 = vmatprep.mubr.bf16.mxu0 0
        %2410 = vmatmul.mubr.bf16.gmra.mrb[0].mxu0 %v2322
        %v2411 = vpop.f32.mrb[0].mxu0
        %v2412 = vadd.f32 0.0, %v2411
        %v2413 = vpop.f32.mrb[0].mxu0
        %v2414 = vpop.f32.mrb[0].mxu0
        %v2415 = vadd.f32 0.0, %v2414
        %v2416 = vpop.f32.mrb[0].mxu0
        %2417 = vmatprep.mubr.bf16.mxu0 0
        %2418 = vmatmul.mubr.bf16.gmra.mrb[0].mxu0 %v2325
        %v2419 = vpop.f32.mrb[0].mxu0
        %v2420 = vadd.f32 0.0, %v2419
        %v2421 = vpop.f32.mrb[0].mxu0
        %v2422 = vpop.f32.mrb[0].mxu0
        %v2423 = vadd.f32 0.0, %v2422
        %v2424 = vpop.f32.mrb[0].mxu0
        %2425 = vmatprep.mubr.bf16.mxu0 0
        %2426 = vmatmul.mubr.bf16.gmra.mrb[0].mxu0 %v2328
        %v2427 = vpop.f32.mrb[0].mxu0
        %v2428 = vadd.f32 0.0, %v2427
        %v2429 = vpop.f32.mrb[0].mxu0
        %v2430 = vpop.f32.mrb[0].mxu0
        %v2431 = vadd.f32 0.0, %v2430
        %v2432 = vpop.f32.mrb[0].mxu0
        %2433 = vmatprep.mubr.bf16.mxu0 0
        %2434 = vmatmul.mubr.bf16.gmra.mrb[0].mxu0 %v2331
        %v2435 = vpop.f32.mrb[0].mxu0
        %v2436 = vadd.f32 0.0, %v2435
        %v2437 = vpop.f32.mrb[0].mxu0
        %v2438 = vpop.f32.mrb[0].mxu0
        %v2439 = vadd.f32 0.0, %v2438
        %v2440 = vpop.f32.mrb[0].mxu0
        %2441 = vmatprep.mubr.bf16.mxu0 0
        %2442 = vmatmul.mubr.bf16.gmra.mrb[0].mxu0 %v2334
        %v2443 = vpop.f32.mrb[0].mxu0
        %v2444 = vadd.f32 0.0, %v2443
        %v2445 = vpop.f32.mrb[0].mxu0
        %v2446 = vpop.f32.mrb[0].mxu0
        %v2447 = vadd.f32 0.0, %v2446
        %v2448 = vpop.f32.mrb[0].mxu0
        %2449 = vmatprep.mubr.bf16.mxu0 0
        %2450 = vmatmul.mubr.bf16.gmra.mrb[0].mxu0 %v2337
        %v2451 = vpop.f32.mrb[0].mxu0
        %v2452 = vadd.f32 0.0, %v2451
        %v2453 = vpop.f32.mrb[0].mxu0
        %v2454 = vpop.f32.mrb[0].mxu0
        %v2455 = vadd.f32 0.0, %v2454
        %v2456 = vpop.f32.mrb[0].mxu0
        %2457 = vmatprep.mubr.bf16.mxu0 0
        %2458 = vmatmul.mubr.bf16.gmra.mrb[0].mxu0 %v2340
        %v2459 = vpop.f32.mrb[0].mxu0
        %v2460 = vadd.f32 0.0, %v2459
        %v2461 = vpop.f32.mrb[0].mxu0
        %v2462 = vpop.f32.mrb[0].mxu0
        %v2463 = vadd.f32 0.0, %v2462
        %v2464 = vpop.f32.mrb[0].mxu0
        %2465 = vmatprep.mubr.bf16.mxu0 0
        %2466 = vmatmul.mubr.bf16.gmra.mrb[0].mxu0 %v2343
        %v2467 = vpop.f32.mrb[0].mxu0
        %v2468 = vadd.f32 0.0, %v2467
        %v2469 = vpop.f32.mrb[0].mxu0
        %v2470 = vpop.f32.mrb[0].mxu0
        %v2471 = vadd.f32 0.0, %v2470
        %v2472 = vpop.f32.mrb[0].mxu0
        %2473 = vmatprep.mubr.bf16.mxu0 0
        %2474 = vmatmul.mubr.bf16.gmra.mrb[0].mxu0 %v2346
        %v2475 = vpop.f32.mrb[0].mxu0
        %v2476 = vadd.f32 0.0, %v2475
        %v2477 = vpop.f32.mrb[0].mxu0
        %v2478 = vpop.f32.mrb[0].mxu0
        %v2479 = vadd.f32 0.0, %v2478
        %v2480 = vpop.f32.mrb[0].mxu0
        %2481 = vmatprep.mubr.bf16.mxu0 0
        %2482 = vmatmul.mubr.bf16.gmra.mrb[0].mxu0 %v2349
        %v2483 = vpop.f32.mrb[0].mxu0
        %v2484 = vadd.f32 0.0, %v2483
        %v2485 = vpop.f32.mrb[0].mxu0
        %v2486 = vpop.f32.mrb[0].mxu0
        %v2487 = vadd.f32 0.0, %v2486
        %v2488 = vpop.f32.mrb[0].mxu0
        %2489 = vmatprep.mubr.bf16.mxu0 0
        %2490 = vmatmul.mubr.bf16.gmra.mrb[0].mxu0 %v2352
        %v2491 = vpop.f32.mrb[0].mxu0
        %v2492 = vadd.f32 0.0, %v2491
        %v2493 = vpop.f32.mrb[0].mxu0
        %v2494 = vpop.f32.mrb[0].mxu0
        %v2495 = vadd.f32 0.0, %v2494
        %v2496 = vpop.f32.mrb[0].mxu0
        %2497 = vmatprep.mubr.bf16.mxu0 0
        %2498 = vmatmul.mubr.bf16.gmra.mrb[0].mxu0 %v2355
        %v2499 = vpop.f32.mrb[0].mxu0
        %v2500 = vadd.f32 0.0, %v2499
        %v2501 = vpop.f32.mrb[0].mxu0
        %v2502 = vpop.f32.mrb[0].mxu0
        %v2503 = vadd.f32 0.0, %v2502
        %v2504 = vpop.f32.mrb[0].mxu0
        %2505 = vmatprep.mubr.bf16.mxu0 0
        %2506 = vmatmul.mubr.bf16.gmra.mrb[0].mxu0 %v2358
        %v2507 = vpop.f32.mrb[0].mxu0
        %v2508 = vadd.f32 0.0, %v2507
        %v2509 = vpop.f32.mrb[0].mxu0
        %v2510 = vpop.f32.mrb[0].mxu0
        %v2511 = vadd.f32 0.0, %v2510
        %v2512 = vpop.f32.mrb[0].mxu0
        %2513 = vmatprep.mubr.bf16.mxu0 0
        %2514 = vmatmul.mubr.bf16.gmra.mrb[0].mxu0 %v2361
        %v2515 = vpop.f32.mrb[0].mxu0
        %v2516 = vadd.f32 0.0, %v2515
        %v2517 = vpop.f32.mrb[0].mxu0
        %v2518 = vpop.f32.mrb[0].mxu0
        %v2519 = vadd.f32 0.0, %v2518
        %v2520 = vpop.f32.mrb[0].mxu0
        %2521 = vmatprep.mubr.bf16.mxu0 0
        %2522 = vmatmul.mubr.bf16.gmra.mrb[0].mxu0 %v2364
        %v2523 = vpop.f32.mrb[0].mxu0
        %v2524 = vadd.f32 0.0, %v2523
        %v2525 = vpop.f32.mrb[0].mxu0
        %v2526 = vpop.f32.mrb[0].mxu0
        %v2527 = vadd.f32 0.0, %v2526
        %v2528 = vpop.f32.mrb[0].mxu0
        %2529 = vdwg.mxu0
        %v2530 = vadd.f32 %v2235, %v2404
        %v2531 = vadd.f32 %v2236, %v2407
        %v2532 = vadd.f32 %v2237, %v2412
        %v2533 = vadd.f32 %v2238, %v2415
        %v2534 = vadd.f32 %v2239, %v2420
        %v2535 = vadd.f32 %v2240, %v2423
        %v2536 = vadd.f32 %v2241, %v2428
        %v2537 = vadd.f32 %v2242, %v2431
        %v2538 = vadd.f32 %v2243, %v2436
        %v2539 = vadd.f32 %v2244, %v2439
        %v2540 = vadd.f32 %v2245, %v2444
        %v2541 = vadd.f32 %v2246, %v2447
        %v2542 = vadd.f32 %v2247, %v2452
        %v2543 = vadd.f32 %v2248, %v2455
        %v2544 = vadd.f32 %v2249, %v2460
        %v2545 = vadd.f32 %v2250, %v2463
        %v2546 = vadd.f32 %v2251, %v2468
        %v2547 = vadd.f32 %v2252, %v2471
        %v2548 = vadd.f32 %v2253, %v2476
        %v2549 = vadd.f32 %v2254, %v2479
        %v2550 = vadd.f32 %v2255, %v2484
        %v2551 = vadd.f32 %v2256, %v2487
        %v2552 = vadd.f32 %v2257, %v2492
        %v2553 = vadd.f32 %v2258, %v2495
        %v2554 = vadd.f32 %v2259, %v2500
        %v2555 = vadd.f32 %v2260, %v2503
        %v2556 = vadd.f32 %v2261, %v2508
        %v2557 = vadd.f32 %v2262, %v2511
        %v2558 = vadd.f32 %v2263, %v2516
        %v2559 = vadd.f32 %v2264, %v2519
        %v2560 = vadd.f32 %v2265, %v2524
        %v2561 = vadd.f32 %v2266, %v2527
        %v2562 = vld [vmem:[%s2267 + $0x1] sm:$0xff]
        %v2563 = vld [vmem:[%s2267 + $0x9] sm:$0xff]
        %v2564 = vld [vmem:[%s2267 + $0x19] sm:$0xff]
        %v2565 = vld [vmem:[%s2267 + $0x21] sm:$0xff]
        %v2566 = vld [vmem:[%s2267 + $0x31] sm:$0xff]
        %v2567 = vld [vmem:[%s2267 + $0x39] sm:$0xff]
        %v2568 = vld [vmem:[%s2267 + $0x49] sm:$0xff]
        %v2569 = vld [vmem:[%s2267 + $0x51] sm:$0xff]
        %v2570 = vld [vmem:[%s2267 + $0x61] sm:$0xff]
        %v2571 = vld [vmem:[%s2267 + $0x69] sm:$0xff]
        %v2572 = vld [vmem:[%s2267 + $0x79] sm:$0xff]
        %v2573 = vld [vmem:[%s2267 + $0x81] sm:$0xff]
        %v2574 = vld [vmem:[%s2267 + $0x91] sm:$0xff]
        %v2575 = vld [vmem:[%s2267 + $0x99] sm:$0xff]
        %v2576 = vld [vmem:[%s2267 + $0xa9] sm:$0xff]
        %v2577 = vld [vmem:[%s2267 + $0xb1] sm:$0xff]
        %v2578 = vld [vmem:[%s2267 + $0xc1] sm:$0xff]
        %v2579 = vld [vmem:[%s2267 + $0xc9] sm:$0xff]
        %v2580 = vld [vmem:[%s2267 + $0xd9] sm:$0xff]
        %v2581 = vld [vmem:[%s2267 + $0xe1] sm:$0xff]
        %v2582 = vld [vmem:[%s2267 + $0xf1] sm:$0xff]
        %v2583 = vld [vmem:[%s2267 + $0xf9] sm:$0xff]
        %v2584 = vld [vmem:[%s2267 + $0x109] sm:$0xff]
        %v2585 = vld [vmem:[%s2267 + $0x111] sm:$0xff]
        %v2586 = vld [vmem:[%s2267 + $0x121] sm:$0xff]
        %v2587 = vld [vmem:[%s2267 + $0x129] sm:$0xff]
        %v2588 = vld [vmem:[%s2267 + $0x139] sm:$0xff]
        %v2589 = vld [vmem:[%s2267 + $0x141] sm:$0xff]
        %v2590 = vld [vmem:[%s2267 + $0x151] sm:$0xff]
        %v2591 = vld [vmem:[%s2267 + $0x159] sm:$0xff]
        %v2592 = vld [vmem:[%s2267 + $0x169] sm:$0xff]
        %v2593 = vld [vmem:[%s2267 + $0x171] sm:$0xff]
        %v2594 = vpack.c.bf16 %v2563, %v2562
        %v2595 = vpack.c.bf16 %v2565, %v2564
        %v2596 = vpack.c.bf16 %v2567, %v2566
        %v2597 = vpack.c.bf16 %v2569, %v2568
        %v2598 = vpack.c.bf16 %v2571, %v2570
        %v2599 = vpack.c.bf16 %v2573, %v2572
        %v2600 = vpack.c.bf16 %v2575, %v2574
        %v2601 = vpack.c.bf16 %v2577, %v2576
        %v2602 = vpack.c.bf16 %v2579, %v2578
        %v2603 = vpack.c.bf16 %v2581, %v2580
        %v2604 = vpack.c.bf16 %v2583, %v2582
        %v2605 = vpack.c.bf16 %v2585, %v2584
        %v2606 = vpack.c.bf16 %v2587, %v2586
        %v2607 = vpack.c.bf16 %v2589, %v2588
        %v2608 = vpack.c.bf16 %v2591, %v2590
        %v2609 = vpack.c.bf16 %v2593, %v2592
        %s2610 = scalar_lea.vmem [#allocation7], 14
        %v2611 = vld [vmem:[%s2610] sm:$0x3]
        %v2613 = vsel %vm664, %v2594, 0
        %v2616 = vsel %vm664, %v2595, 0
        %v2619 = vsel %vm664, %v2596, 0
        %v2622 = vsel %vm664, %v2597, 0
        %v2625 = vsel %vm664, %v2598, 0
        %v2628 = vsel %vm664, %v2599, 0
        %v2631 = vsel %vm664, %v2600, 0
        %v2634 = vsel %vm664, %v2601, 0
        %v2637 = vsel %vm664, %v2602, 0
        %v2640 = vsel %vm664, %v2603, 0
        %v2643 = vsel %vm664, %v2604, 0
        %v2646 = vsel %vm664, %v2605, 0
        %v2649 = vsel %vm664, %v2606, 0
        %v2652 = vsel %vm664, %v2607, 0
        %v2655 = vsel %vm664, %v2608, 0
        %v2658 = vsel %vm664, %v2609, 0
        %v2661 = vsel %vm713, %v2611, 0
        %2663 = vmatprep.subr.bf16.mxu0 0
        %2664 = vmatpush1.bf16.msra.mxu0 %v2661
        %2665 = vmatprep.subr.bf16.mxu0 0
        %2666 = vmatpush1.bf16.msra.mxu0 0
        %2667 = vmatprep.subr.bf16.mxu0 0
        %2668 = vmatpush1.bf16.msra.mxu0 0
        %2669 = vmatprep.subr.bf16.mxu0 0
        %2670 = vmatpush1.bf16.msra.mxu0 0
        %2671 = vmatprep.subr.bf16.mxu0 0
        %2672 = vmatpush1.bf16.msra.mxu0 0
        %2673 = vmatprep.subr.bf16.mxu0 0
        %2674 = vmatpush1.bf16.msra.mxu0 0
        %2675 = vmatprep.subr.bf16.mxu0 0
        %2676 = vmatpush1.bf16.msra.mxu0 0
        %2677 = vmatprep.subr.bf16.mxu0 0
        %2678 = vmatpush1.bf16.msra.mxu0 0
        %2679 = vmatprep.subr.bf16.mxu0 0
        %2680 = vmatpush1.bf16.msra.mxu0 0
        %2681 = vmatprep.subr.bf16.mxu0 0
        %2682 = vmatpush1.bf16.msra.mxu0 0
        %2683 = vmatprep.subr.bf16.mxu0 0
        %2684 = vmatpush1.bf16.msra.mxu0 0
        %2685 = vmatprep.subr.bf16.mxu0 0
        %2686 = vmatpush1.bf16.msra.mxu0 0
        %2687 = vmatprep.subr.bf16.mxu0 0
        %2688 = vmatpush1.bf16.msra.mxu0 0
        %2689 = vmatprep.subr.bf16.mxu0 0
        %2690 = vmatpush1.bf16.msra.mxu0 0
        %2691 = vmatprep.subr.bf16.mxu0 0
        %2692 = vmatpush1.bf16.msra.mxu0 0
        %2693 = vmatprep.subr.bf16.mxu0 0
        %2694 = vmatpush1.bf16.msra.mxu0 0
        %2695 = vmatprep.mubr.bf16.mxu0 0
        %2696 = vmatmul.mubr.bf16.gmra.mrb[0].mxu0 %v2613
        %v2697 = vpop.f32.mrb[0].mxu0
        %v2698 = vadd.f32 0.0, %v2697
        %v2699 = vpop.f32.mrb[0].mxu0
        %v2700 = vpop.f32.mrb[0].mxu0
        %v2701 = vadd.f32 0.0, %v2700
        %v2702 = vpop.f32.mrb[0].mxu0
        %2703 = vmatprep.mubr.bf16.mxu0 0
        %2704 = vmatmul.mubr.bf16.gmra.mrb[0].mxu0 %v2616
        %v2705 = vpop.f32.mrb[0].mxu0
        %v2706 = vadd.f32 0.0, %v2705
        %v2707 = vpop.f32.mrb[0].mxu0
        %v2708 = vpop.f32.mrb[0].mxu0
        %v2709 = vadd.f32 0.0, %v2708
        %v2710 = vpop.f32.mrb[0].mxu0
        %2711 = vmatprep.mubr.bf16.mxu0 0
        %2712 = vmatmul.mubr.bf16.gmra.mrb[0].mxu0 %v2619
        %v2713 = vpop.f32.mrb[0].mxu0
        %v2714 = vadd.f32 0.0, %v2713
        %v2715 = vpop.f32.mrb[0].mxu0
        %v2716 = vpop.f32.mrb[0].mxu0
        %v2717 = vadd.f32 0.0, %v2716
        %v2718 = vpop.f32.mrb[0].mxu0
        %2719 = vmatprep.mubr.bf16.mxu0 0
        %2720 = vmatmul.mubr.bf16.gmra.mrb[0].mxu0 %v2622
        %v2721 = vpop.f32.mrb[0].mxu0
        %v2722 = vadd.f32 0.0, %v2721
        %v2723 = vpop.f32.mrb[0].mxu0
        %v2724 = vpop.f32.mrb[0].mxu0
        %v2725 = vadd.f32 0.0, %v2724
        %v2726 = vpop.f32.mrb[0].mxu0
        %2727 = vmatprep.mubr.bf16.mxu0 0
        %2728 = vmatmul.mubr.bf16.gmra.mrb[0].mxu0 %v2625
        %v2729 = vpop.f32.mrb[0].mxu0
        %v2730 = vadd.f32 0.0, %v2729
        %v2731 = vpop.f32.mrb[0].mxu0
        %v2732 = vpop.f32.mrb[0].mxu0
        %v2733 = vadd.f32 0.0, %v2732
        %v2734 = vpop.f32.mrb[0].mxu0
        %2735 = vmatprep.mubr.bf16.mxu0 0
        %2736 = vmatmul.mubr.bf16.gmra.mrb[0].mxu0 %v2628
        %v2737 = vpop.f32.mrb[0].mxu0
        %v2738 = vadd.f32 0.0, %v2737
        %v2739 = vpop.f32.mrb[0].mxu0
        %v2740 = vpop.f32.mrb[0].mxu0
        %v2741 = vadd.f32 0.0, %v2740
        %v2742 = vpop.f32.mrb[0].mxu0
        %2743 = vmatprep.mubr.bf16.mxu0 0
        %2744 = vmatmul.mubr.bf16.gmra.mrb[0].mxu0 %v2631
        %v2745 = vpop.f32.mrb[0].mxu0
        %v2746 = vadd.f32 0.0, %v2745
        %v2747 = vpop.f32.mrb[0].mxu0
        %v2748 = vpop.f32.mrb[0].mxu0
        %v2749 = vadd.f32 0.0, %v2748
        %v2750 = vpop.f32.mrb[0].mxu0
        %2751 = vmatprep.mubr.bf16.mxu0 0
        %2752 = vmatmul.mubr.bf16.gmra.mrb[0].mxu0 %v2634
        %v2753 = vpop.f32.mrb[0].mxu0
        %v2754 = vadd.f32 0.0, %v2753
        %v2755 = vpop.f32.mrb[0].mxu0
        %v2756 = vpop.f32.mrb[0].mxu0
        %v2757 = vadd.f32 0.0, %v2756
        %v2758 = vpop.f32.mrb[0].mxu0
        %2759 = vmatprep.mubr.bf16.mxu0 0
        %2760 = vmatmul.mubr.bf16.gmra.mrb[0].mxu0 %v2637
        %v2761 = vpop.f32.mrb[0].mxu0
        %v2762 = vadd.f32 0.0, %v2761
        %v2763 = vpop.f32.mrb[0].mxu0
        %v2764 = vpop.f32.mrb[0].mxu0
        %v2765 = vadd.f32 0.0, %v2764
        %v2766 = vpop.f32.mrb[0].mxu0
        %2767 = vmatprep.mubr.bf16.mxu0 0
        %2768 = vmatmul.mubr.bf16.gmra.mrb[0].mxu0 %v2640
        %v2769 = vpop.f32.mrb[0].mxu0
        %v2770 = vadd.f32 0.0, %v2769
        %v2771 = vpop.f32.mrb[0].mxu0
        %v2772 = vpop.f32.mrb[0].mxu0
        %v2773 = vadd.f32 0.0, %v2772
        %v2774 = vpop.f32.mrb[0].mxu0
        %2775 = vmatprep.mubr.bf16.mxu0 0
        %2776 = vmatmul.mubr.bf16.gmra.mrb[0].mxu0 %v2643
        %v2777 = vpop.f32.mrb[0].mxu0
        %v2778 = vadd.f32 0.0, %v2777
        %v2779 = vpop.f32.mrb[0].mxu0
        %v2780 = vpop.f32.mrb[0].mxu0
        %v2781 = vadd.f32 0.0, %v2780
        %v2782 = vpop.f32.mrb[0].mxu0
        %2783 = vmatprep.mubr.bf16.mxu0 0
        %2784 = vmatmul.mubr.bf16.gmra.mrb[0].mxu0 %v2646
        %v2785 = vpop.f32.mrb[0].mxu0
        %v2786 = vadd.f32 0.0, %v2785
        %v2787 = vpop.f32.mrb[0].mxu0
        %v2788 = vpop.f32.mrb[0].mxu0
        %v2789 = vadd.f32 0.0, %v2788
        %v2790 = vpop.f32.mrb[0].mxu0
        %2791 = vmatprep.mubr.bf16.mxu0 0
        %2792 = vmatmul.mubr.bf16.gmra.mrb[0].mxu0 %v2649
        %v2793 = vpop.f32.mrb[0].mxu0
        %v2794 = vadd.f32 0.0, %v2793
        %v2795 = vpop.f32.mrb[0].mxu0
        %v2796 = vpop.f32.mrb[0].mxu0
        %v2797 = vadd.f32 0.0, %v2796
        %v2798 = vpop.f32.mrb[0].mxu0
        %2799 = vmatprep.mubr.bf16.mxu0 0
        %2800 = vmatmul.mubr.bf16.gmra.mrb[0].mxu0 %v2652
        %v2801 = vpop.f32.mrb[0].mxu0
        %v2802 = vadd.f32 0.0, %v2801
        %v2803 = vpop.f32.mrb[0].mxu0
        %v2804 = vpop.f32.mrb[0].mxu0
        %v2805 = vadd.f32 0.0, %v2804
        %v2806 = vpop.f32.mrb[0].mxu0
        %2807 = vmatprep.mubr.bf16.mxu0 0
        %2808 = vmatmul.mubr.bf16.gmra.mrb[0].mxu0 %v2655
        %v2809 = vpop.f32.mrb[0].mxu0
        %v2810 = vadd.f32 0.0, %v2809
        %v2811 = vpop.f32.mrb[0].mxu0
        %v2812 = vpop.f32.mrb[0].mxu0
        %v2813 = vadd.f32 0.0, %v2812
        %v2814 = vpop.f32.mrb[0].mxu0
        %2815 = vmatprep.mubr.bf16.mxu0 0
        %2816 = vmatmul.mubr.bf16.gmra.mrb[0].mxu0 %v2658
        %v2817 = vpop.f32.mrb[0].mxu0
        %v2818 = vadd.f32 0.0, %v2817
        %v2819 = vpop.f32.mrb[0].mxu0
        %v2820 = vpop.f32.mrb[0].mxu0
        %v2821 = vadd.f32 0.0, %v2820
        %v2822 = vpop.f32.mrb[0].mxu0
        %2823 = vdwg.mxu0
        %v2824 = vadd.f32 %v2530, %v2698
        %v2825 = vadd.f32 %v2531, %v2701
        %v2826 = vadd.f32 %v2532, %v2706
        %v2827 = vadd.f32 %v2533, %v2709
        %v2828 = vadd.f32 %v2534, %v2714
        %v2829 = vadd.f32 %v2535, %v2717
        %v2830 = vadd.f32 %v2536, %v2722
        %v2831 = vadd.f32 %v2537, %v2725
        %v2832 = vadd.f32 %v2538, %v2730
        %v2833 = vadd.f32 %v2539, %v2733
        %v2834 = vadd.f32 %v2540, %v2738
        %v2835 = vadd.f32 %v2541, %v2741
        %v2836 = vadd.f32 %v2542, %v2746
        %v2837 = vadd.f32 %v2543, %v2749
        %v2838 = vadd.f32 %v2544, %v2754
        %v2839 = vadd.f32 %v2545, %v2757
        %v2840 = vadd.f32 %v2546, %v2762
        %v2841 = vadd.f32 %v2547, %v2765
        %v2842 = vadd.f32 %v2548, %v2770
        %v2843 = vadd.f32 %v2549, %v2773
        %v2844 = vadd.f32 %v2550, %v2778
        %v2845 = vadd.f32 %v2551, %v2781
        %v2846 = vadd.f32 %v2552, %v2786
        %v2847 = vadd.f32 %v2553, %v2789
        %v2848 = vadd.f32 %v2554, %v2794
        %v2849 = vadd.f32 %v2555, %v2797
        %v2850 = vadd.f32 %v2556, %v2802
        %v2851 = vadd.f32 %v2557, %v2805
        %v2852 = vadd.f32 %v2558, %v2810
        %v2853 = vadd.f32 %v2559, %v2813
        %v2854 = vadd.f32 %v2560, %v2818
        %v2855 = vadd.f32 %v2561, %v2821
        %v2856 = vld [vmem:[%s2267 + $0x2] sm:$0xff]
        %v2857 = vld [vmem:[%s2267 + $0xa] sm:$0xff]
        %v2858 = vld [vmem:[%s2267 + $0x1a] sm:$0xff]
        %v2859 = vld [vmem:[%s2267 + $0x22] sm:$0xff]
        %v2860 = vld [vmem:[%s2267 + $0x32] sm:$0xff]
        %v2861 = vld [vmem:[%s2267 + $0x3a] sm:$0xff]
        %v2862 = vld [vmem:[%s2267 + $0x4a] sm:$0xff]
        %v2863 = vld [vmem:[%s2267 + $0x52] sm:$0xff]
        %v2864 = vld [vmem:[%s2267 + $0x62] sm:$0xff]
        %v2865 = vld [vmem:[%s2267 + $0x6a] sm:$0xff]
        %v2866 = vld [vmem:[%s2267 + $0x7a] sm:$0xff]
        %v2867 = vld [vmem:[%s2267 + $0x82] sm:$0xff]
        %v2868 = vld [vmem:[%s2267 + $0x92] sm:$0xff]
        %v2869 = vld [vmem:[%s2267 + $0x9a] sm:$0xff]
        %v2870 = vld [vmem:[%s2267 + $0xaa] sm:$0xff]
        %v2871 = vld [vmem:[%s2267 + $0xb2] sm:$0xff]
        %v2872 = vld [vmem:[%s2267 + $0xc2] sm:$0xff]
        %v2873 = vld [vmem:[%s2267 + $0xca] sm:$0xff]
        %v2874 = vld [vmem:[%s2267 + $0xda] sm:$0xff]
        %v2875 = vld [vmem:[%s2267 + $0xe2] sm:$0xff]
        %v2876 = vld [vmem:[%s2267 + $0xf2] sm:$0xff]
        %v2877 = vld [vmem:[%s2267 + $0xfa] sm:$0xff]
        %v2878 = vld [vmem:[%s2267 + $0x10a] sm:$0xff]
        %v2879 = vld [vmem:[%s2267 + $0x112] sm:$0xff]
        %v2880 = vld [vmem:[%s2267 + $0x122] sm:$0xff]
        %v2881 = vld [vmem:[%s2267 + $0x12a] sm:$0xff]
        %v2882 = vld [vmem:[%s2267 + $0x13a] sm:$0xff]
        %v2883 = vld [vmem:[%s2267 + $0x142] sm:$0xff]
        %v2884 = vld [vmem:[%s2267 + $0x152] sm:$0xff]
        %v2885 = vld [vmem:[%s2267 + $0x15a] sm:$0xff]
        %v2886 = vld [vmem:[%s2267 + $0x16a] sm:$0xff]
        %v2887 = vld [vmem:[%s2267 + $0x172] sm:$0xff]
        %v2888 = vpack.c.bf16 %v2857, %v2856
        %v2889 = vpack.c.bf16 %v2859, %v2858
        %v2890 = vpack.c.bf16 %v2861, %v2860
        %v2891 = vpack.c.bf16 %v2863, %v2862
        %v2892 = vpack.c.bf16 %v2865, %v2864
        %v2893 = vpack.c.bf16 %v2867, %v2866
        %v2894 = vpack.c.bf16 %v2869, %v2868
        %v2895 = vpack.c.bf16 %v2871, %v2870
        %v2896 = vpack.c.bf16 %v2873, %v2872
        %v2897 = vpack.c.bf16 %v2875, %v2874
        %v2898 = vpack.c.bf16 %v2877, %v2876
        %v2899 = vpack.c.bf16 %v2879, %v2878
        %v2900 = vpack.c.bf16 %v2881, %v2880
        %v2901 = vpack.c.bf16 %v2883, %v2882
        %v2902 = vpack.c.bf16 %v2885, %v2884
        %v2903 = vpack.c.bf16 %v2887, %v2886
        %s2904 = scalar_lea.vmem [#allocation7], 16
        %v2905 = vld [vmem:[%s2904] sm:$0x3]
        %v2907 = vsel %vm664, %v2888, 0
        %v2910 = vsel %vm664, %v2889, 0
        %v2913 = vsel %vm664, %v2890, 0
        %v2916 = vsel %vm664, %v2891, 0
        %v2919 = vsel %vm664, %v2892, 0
        %v2922 = vsel %vm664, %v2893, 0
        %v2925 = vsel %vm664, %v2894, 0
        %v2928 = vsel %vm664, %v2895, 0
        %v2931 = vsel %vm664, %v2896, 0
        %v2934 = vsel %vm664, %v2897, 0
        %v2937 = vsel %vm664, %v2898, 0
        %v2940 = vsel %vm664, %v2899, 0
        %v2943 = vsel %vm664, %v2900, 0
        %v2946 = vsel %vm664, %v2901, 0
        %v2949 = vsel %vm664, %v2902, 0
        %v2952 = vsel %vm664, %v2903, 0
        %v2955 = vsel %vm713, %v2905, 0
        %2957 = vmatprep.subr.bf16.mxu0 0
        %2958 = vmatpush1.bf16.msra.mxu0 %v2955
        %2959 = vmatprep.subr.bf16.mxu0 0
        %2960 = vmatpush1.bf16.msra.mxu0 0
        %2961 = vmatprep.subr.bf16.mxu0 0
        %2962 = vmatpush1.bf16.msra.mxu0 0
        %2963 = vmatprep.subr.bf16.mxu0 0
        %2964 = vmatpush1.bf16.msra.mxu0 0
        %2965 = vmatprep.subr.bf16.mxu0 0
        %2966 = vmatpush1.bf16.msra.mxu0 0
        %2967 = vmatprep.subr.bf16.mxu0 0
        %2968 = vmatpush1.bf16.msra.mxu0 0
        %2969 = vmatprep.subr.bf16.mxu0 0
        %2970 = vmatpush1.bf16.msra.mxu0 0
        %2971 = vmatprep.subr.bf16.mxu0 0
        %2972 = vmatpush1.bf16.msra.mxu0 0
        %2973 = vmatprep.subr.bf16.mxu0 0
        %2974 = vmatpush1.bf16.msra.mxu0 0
        %2975 = vmatprep.subr.bf16.mxu0 0
        %2976 = vmatpush1.bf16.msra.mxu0 0
        %2977 = vmatprep.subr.bf16.mxu0 0
        %2978 = vmatpush1.bf16.msra.mxu0 0
        %2979 = vmatprep.subr.bf16.mxu0 0
        %2980 = vmatpush1.bf16.msra.mxu0 0
        %2981 = vmatprep.subr.bf16.mxu0 0
        %2982 = vmatpush1.bf16.msra.mxu0 0
        %2983 = vmatprep.subr.bf16.mxu0 0
        %2984 = vmatpush1.bf16.msra.mxu0 0
        %2985 = vmatprep.subr.bf16.mxu0 0
        %2986 = vmatpush1.bf16.msra.mxu0 0
        %2987 = vmatprep.subr.bf16.mxu0 0
        %2988 = vmatpush1.bf16.msra.mxu0 0
        %2989 = vmatprep.mubr.bf16.mxu0 0
        %2990 = vmatmul.mubr.bf16.gmra.mrb[0].mxu0 %v2907
        %v2991 = vpop.f32.mrb[0].mxu0
        %v2992 = vadd.f32 0.0, %v2991
        %v2993 = vpop.f32.mrb[0].mxu0
        %v2994 = vpop.f32.mrb[0].mxu0
        %v2995 = vadd.f32 0.0, %v2994
        %v2996 = vpop.f32.mrb[0].mxu0
        %2997 = vmatprep.mubr.bf16.mxu0 0
        %2998 = vmatmul.mubr.bf16.gmra.mrb[0].mxu0 %v2910
        %v2999 = vpop.f32.mrb[0].mxu0
        %v3000 = vadd.f32 0.0, %v2999
        %v3001 = vpop.f32.mrb[0].mxu0
        %v3002 = vpop.f32.mrb[0].mxu0
        %v3003 = vadd.f32 0.0, %v3002
        %v3004 = vpop.f32.mrb[0].mxu0
        %3005 = vmatprep.mubr.bf16.mxu0 0
        %3006 = vmatmul.mubr.bf16.gmra.mrb[0].mxu0 %v2913
        %v3007 = vpop.f32.mrb[0].mxu0
        %v3008 = vadd.f32 0.0, %v3007
        %v3009 = vpop.f32.mrb[0].mxu0
        %v3010 = vpop.f32.mrb[0].mxu0
        %v3011 = vadd.f32 0.0, %v3010
        %v3012 = vpop.f32.mrb[0].mxu0
        %3013 = vmatprep.mubr.bf16.mxu0 0
        %3014 = vmatmul.mubr.bf16.gmra.mrb[0].mxu0 %v2916
        %v3015 = vpop.f32.mrb[0].mxu0
        %v3016 = vadd.f32 0.0, %v3015
        %v3017 = vpop.f32.mrb[0].mxu0
        %v3018 = vpop.f32.mrb[0].mxu0
        %v3019 = vadd.f32 0.0, %v3018
        %v3020 = vpop.f32.mrb[0].mxu0
        %3021 = vmatprep.mubr.bf16.mxu0 0
        %3022 = vmatmul.mubr.bf16.gmra.mrb[0].mxu0 %v2919
        %v3023 = vpop.f32.mrb[0].mxu0
        %v3024 = vadd.f32 0.0, %v3023
        %v3025 = vpop.f32.mrb[0].mxu0
        %v3026 = vpop.f32.mrb[0].mxu0
        %v3027 = vadd.f32 0.0, %v3026
        %v3028 = vpop.f32.mrb[0].mxu0
        %3029 = vmatprep.mubr.bf16.mxu0 0
        %3030 = vmatmul.mubr.bf16.gmra.mrb[0].mxu0 %v2922
        %v3031 = vpop.f32.mrb[0].mxu0
        %v3032 = vadd.f32 0.0, %v3031
        %v3033 = vpop.f32.mrb[0].mxu0
        %v3034 = vpop.f32.mrb[0].mxu0
        %v3035 = vadd.f32 0.0, %v3034
        %v3036 = vpop.f32.mrb[0].mxu0
        %3037 = vmatprep.mubr.bf16.mxu0 0
        %3038 = vmatmul.mubr.bf16.gmra.mrb[0].mxu0 %v2925
        %v3039 = vpop.f32.mrb[0].mxu0
        %v3040 = vadd.f32 0.0, %v3039
        %v3041 = vpop.f32.mrb[0].mxu0
        %v3042 = vpop.f32.mrb[0].mxu0
        %v3043 = vadd.f32 0.0, %v3042
        %v3044 = vpop.f32.mrb[0].mxu0
        %3045 = vmatprep.mubr.bf16.mxu0 0
        %3046 = vmatmul.mubr.bf16.gmra.mrb[0].mxu0 %v2928
        %v3047 = vpop.f32.mrb[0].mxu0
        %v3048 = vadd.f32 0.0, %v3047
        %v3049 = vpop.f32.mrb[0].mxu0
        %v3050 = vpop.f32.mrb[0].mxu0
        %v3051 = vadd.f32 0.0, %v3050
        %v3052 = vpop.f32.mrb[0].mxu0
        %3053 = vmatprep.mubr.bf16.mxu0 0
        %3054 = vmatmul.mubr.bf16.gmra.mrb[0].mxu0 %v2931
        %v3055 = vpop.f32.mrb[0].mxu0
        %v3056 = vadd.f32 0.0, %v3055
        %v3057 = vpop.f32.mrb[0].mxu0
        %v3058 = vpop.f32.mrb[0].mxu0
        %v3059 = vadd.f32 0.0, %v3058
        %v3060 = vpop.f32.mrb[0].mxu0
        %3061 = vmatprep.mubr.bf16.mxu0 0
        %3062 = vmatmul.mubr.bf16.gmra.mrb[0].mxu0 %v2934
        %v3063 = vpop.f32.mrb[0].mxu0
        %v3064 = vadd.f32 0.0, %v3063
        %v3065 = vpop.f32.mrb[0].mxu0
        %v3066 = vpop.f32.mrb[0].mxu0
        %v3067 = vadd.f32 0.0, %v3066
        %v3068 = vpop.f32.mrb[0].mxu0
        %3069 = vmatprep.mubr.bf16.mxu0 0
        %3070 = vmatmul.mubr.bf16.gmra.mrb[0].mxu0 %v2937
        %v3071 = vpop.f32.mrb[0].mxu0
        %v3072 = vadd.f32 0.0, %v3071
        %v3073 = vpop.f32.mrb[0].mxu0
        %v3074 = vpop.f32.mrb[0].mxu0
        %v3075 = vadd.f32 0.0, %v3074
        %v3076 = vpop.f32.mrb[0].mxu0
        %3077 = vmatprep.mubr.bf16.mxu0 0
        %3078 = vmatmul.mubr.bf16.gmra.mrb[0].mxu0 %v2940
        %v3079 = vpop.f32.mrb[0].mxu0
        %v3080 = vadd.f32 0.0, %v3079
        %v3081 = vpop.f32.mrb[0].mxu0
        %v3082 = vpop.f32.mrb[0].mxu0
        %v3083 = vadd.f32 0.0, %v3082
        %v3084 = vpop.f32.mrb[0].mxu0
        %3085 = vmatprep.mubr.bf16.mxu0 0
        %3086 = vmatmul.mubr.bf16.gmra.mrb[0].mxu0 %v2943
        %v3087 = vpop.f32.mrb[0].mxu0
        %v3088 = vadd.f32 0.0, %v3087
        %v3089 = vpop.f32.mrb[0].mxu0
        %v3090 = vpop.f32.mrb[0].mxu0
        %v3091 = vadd.f32 0.0, %v3090
        %v3092 = vpop.f32.mrb[0].mxu0
        %3093 = vmatprep.mubr.bf16.mxu0 0
        %3094 = vmatmul.mubr.bf16.gmra.mrb[0].mxu0 %v2946
        %v3095 = vpop.f32.mrb[0].mxu0
        %v3096 = vadd.f32 0.0, %v3095
        %v3097 = vpop.f32.mrb[0].mxu0
        %v3098 = vpop.f32.mrb[0].mxu0
        %v3099 = vadd.f32 0.0, %v3098
        %v3100 = vpop.f32.mrb[0].mxu0
        %3101 = vmatprep.mubr.bf16.mxu0 0
        %3102 = vmatmul.mubr.bf16.gmra.mrb[0].mxu0 %v2949
        %v3103 = vpop.f32.mrb[0].mxu0
        %v3104 = vadd.f32 0.0, %v3103
        %v3105 = vpop.f32.mrb[0].mxu0
        %v3106 = vpop.f32.mrb[0].mxu0
        %v3107 = vadd.f32 0.0, %v3106
        %v3108 = vpop.f32.mrb[0].mxu0
        %3109 = vmatprep.mubr.bf16.mxu0 0
        %3110 = vmatmul.mubr.bf16.gmra.mrb[0].mxu0 %v2952
        %v3111 = vpop.f32.mrb[0].mxu0
        %v3112 = vadd.f32 0.0, %v3111
        %v3113 = vpop.f32.mrb[0].mxu0
        %v3114 = vpop.f32.mrb[0].mxu0
        %v3115 = vadd.f32 0.0, %v3114
        %v3116 = vpop.f32.mrb[0].mxu0
        %3117 = vdwg.mxu0
        %v3118 = vadd.f32 %v2824, %v2992
        %v3119 = vadd.f32 %v2825, %v2995
        %v3120 = vadd.f32 %v2826, %v3000
        %v3121 = vadd.f32 %v2827, %v3003
        %v3122 = vadd.f32 %v2828, %v3008
        %v3123 = vadd.f32 %v2829, %v3011
        %v3124 = vadd.f32 %v2830, %v3016
        %v3125 = vadd.f32 %v2831, %v3019
        %v3126 = vadd.f32 %v2832, %v3024
        %v3127 = vadd.f32 %v2833, %v3027
        %v3128 = vadd.f32 %v2834, %v3032
        %v3129 = vadd.f32 %v2835, %v3035
        %v3130 = vadd.f32 %v2836, %v3040
        %v3131 = vadd.f32 %v2837, %v3043
        %v3132 = vadd.f32 %v2838, %v3048
        %v3133 = vadd.f32 %v2839, %v3051
        %v3134 = vadd.f32 %v2840, %v3056
        %v3135 = vadd.f32 %v2841, %v3059
        %v3136 = vadd.f32 %v2842, %v3064
        %v3137 = vadd.f32 %v2843, %v3067
        %v3138 = vadd.f32 %v2844, %v3072
        %v3139 = vadd.f32 %v2845, %v3075
        %v3140 = vadd.f32 %v2846, %v3080
        %v3141 = vadd.f32 %v2847, %v3083
        %v3142 = vadd.f32 %v2848, %v3088
        %v3143 = vadd.f32 %v2849, %v3091
        %v3144 = vadd.f32 %v2850, %v3096
        %v3145 = vadd.f32 %v2851, %v3099
        %v3146 = vadd.f32 %v2852, %v3104
        %v3147 = vadd.f32 %v2853, %v3107
        %v3148 = vadd.f32 %v2854, %v3112
        %v3149 = vadd.f32 %v2855, %v3115
        %v3150 = vld [vmem:[#allocation9] sm:$0x1]
        %v3152 = vlaneseq
        %v3153 = vshrl.u32 %v3152, 7
        %v3154 = vsub.s32 0, %v3153
        %v3155 = vrot.slane %v3150, %v3154
        %v3157 = vmul.f32 %v3118, %v3155
        %v3158 = vmul.f32 %v3119, %v3155
        %v3159 = vmul.f32 %v3120, %v3155
        %v3160 = vmul.f32 %v3121, %v3155
        %v3161 = vmul.f32 %v3122, %v3155
        %v3162 = vmul.f32 %v3123, %v3155
        %v3163 = vmul.f32 %v3124, %v3155
        %v3164 = vmul.f32 %v3125, %v3155
        %v3165 = vmul.f32 %v3126, %v3155
        %v3166 = vmul.f32 %v3127, %v3155
        %v3167 = vmul.f32 %v3128, %v3155
        %v3168 = vmul.f32 %v3129, %v3155
        %v3169 = vmul.f32 %v3130, %v3155
        %v3170 = vmul.f32 %v3131, %v3155
        %v3171 = vmul.f32 %v3132, %v3155
        %v3172 = vmul.f32 %v3133, %v3155
        %v3173 = vmul.f32 %v3134, %v3155
        %v3174 = vmul.f32 %v3135, %v3155
        %v3175 = vmul.f32 %v3136, %v3155
        %v3176 = vmul.f32 %v3137, %v3155
        %v3177 = vmul.f32 %v3138, %v3155
        %v3178 = vmul.f32 %v3139, %v3155
        %v3179 = vmul.f32 %v3140, %v3155
        %v3180 = vmul.f32 %v3141, %v3155
        %v3181 = vmul.f32 %v3142, %v3155
        %v3182 = vmul.f32 %v3143, %v3155
        %v3183 = vmul.f32 %v3144, %v3155
        %v3184 = vmul.f32 %v3145, %v3155
        %v3185 = vmul.f32 %v3146, %v3155
        %v3186 = vmul.f32 %v3147, %v3155
        %v3187 = vmul.f32 %v3148, %v3155
        %v3188 = vmul.f32 %v3149, %v3155
        %v3189 = vld [vmem:[#allocation10] sm:$0x1]
        %v3191 = vlaneseq
        %v3192 = vshrl.u32 %v3191, 7
        %v3193 = vsub.s32 0, %v3192
        %v3194 = vrot.slane %v3189, %v3193
        %v3196 = vadd.f32 %v3157, %v3194
        %v3197 = vadd.f32 %v3158, %v3194
        %v3198 = vadd.f32 %v3159, %v3194
        %v3199 = vadd.f32 %v3160, %v3194
        %v3200 = vadd.f32 %v3161, %v3194
        %v3201 = vadd.f32 %v3162, %v3194
        %v3202 = vadd.f32 %v3163, %v3194
        %v3203 = vadd.f32 %v3164, %v3194
        %v3204 = vadd.f32 %v3165, %v3194
        %v3205 = vadd.f32 %v3166, %v3194
        %v3206 = vadd.f32 %v3167, %v3194
        %v3207 = vadd.f32 %v3168, %v3194
        %v3208 = vadd.f32 %v3169, %v3194
        %v3209 = vadd.f32 %v3170, %v3194
        %v3210 = vadd.f32 %v3171, %v3194
        %v3211 = vadd.f32 %v3172, %v3194
        %v3212 = vadd.f32 %v3173, %v3194
        %v3213 = vadd.f32 %v3174, %v3194
        %v3214 = vadd.f32 %v3175, %v3194
        %v3215 = vadd.f32 %v3176, %v3194
        %v3216 = vadd.f32 %v3177, %v3194
        %v3217 = vadd.f32 %v3178, %v3194
        %v3218 = vadd.f32 %v3179, %v3194
        %v3219 = vadd.f32 %v3180, %v3194
        %v3220 = vadd.f32 %v3181, %v3194
        %v3221 = vadd.f32 %v3182, %v3194
        %v3222 = vadd.f32 %v3183, %v3194
        %v3223 = vadd.f32 %v3184, %v3194
        %v3224 = vadd.f32 %v3185, %v3194
        %v3225 = vadd.f32 %v3186, %v3194
        %v3226 = vadd.f32 %v3187, %v3194
        %v3227 = vadd.f32 %v3188, %v3194
        %v3228 = vmax.f32 %v3196, 0.0
        %v3229 = vmax.f32 %v3197, 0.0
        %v3230 = vmax.f32 %v3198, 0.0
        %v3231 = vmax.f32 %v3199, 0.0
        %v3232 = vmax.f32 %v3200, 0.0
        %v3233 = vmax.f32 %v3201, 0.0
        %v3234 = vmax.f32 %v3202, 0.0
        %v3235 = vmax.f32 %v3203, 0.0
        %v3236 = vmax.f32 %v3204, 0.0
        %v3237 = vmax.f32 %v3205, 0.0
        %v3238 = vmax.f32 %v3206, 0.0
        %v3239 = vmax.f32 %v3207, 0.0
        %v3240 = vmax.f32 %v3208, 0.0
        %v3241 = vmax.f32 %v3209, 0.0
        %v3242 = vmax.f32 %v3210, 0.0
        %v3243 = vmax.f32 %v3211, 0.0
        %v3244 = vmax.f32 %v3212, 0.0
        %v3245 = vmax.f32 %v3213, 0.0
        %v3246 = vmax.f32 %v3214, 0.0
        %v3247 = vmax.f32 %v3215, 0.0
        %v3248 = vmax.f32 %v3216, 0.0
        %v3249 = vmax.f32 %v3217, 0.0
        %v3250 = vmax.f32 %v3218, 0.0
        %v3251 = vmax.f32 %v3219, 0.0
        %v3252 = vmax.f32 %v3220, 0.0
        %v3253 = vmax.f32 %v3221, 0.0
        %v3254 = vmax.f32 %v3222, 0.0
        %v3255 = vmax.f32 %v3223, 0.0
        %v3256 = vmax.f32 %v3224, 0.0
        %v3257 = vmax.f32 %v3225, 0.0
        %v3258 = vmax.f32 %v3226, 0.0
        %v3259 = vmax.f32 %v3227, 0.0
        %vm3260 = vcmask 261120
        %3261 = vst.msk [vmem:[#allocation2] sm:$0xff] %vm3260, 0.0
        %3262 = vst.msk [vmem:[#allocation2 + $0x8] sm:$0xff] %vm3260, 0.0
        %vm3263 = vcmask 254976
        %3264 = vst.msk [vmem:[#allocation2 + $0x10] sm:$0x3] %vm3263, 0.0
        %3265 = vst.msk [vmem:[#allocation2 + $0x18] sm:$0xff] %vm3260, 0.0
        %3266 = vst.msk [vmem:[#allocation2 + $0x20] sm:$0xff] %vm3260, 0.0
        %3267 = vst.msk [vmem:[#allocation2 + $0x28] sm:$0x3] %vm3263, 0.0
        %3268 = vst.msk [vmem:[#allocation2 + $0x30] sm:$0xff] %vm3260, 0.0
        %3269 = vst.msk [vmem:[#allocation2 + $0x38] sm:$0xff] %vm3260, 0.0
        %3270 = vst.msk [vmem:[#allocation2 + $0x40] sm:$0x3] %vm3263, 0.0
        %3271 = vst.msk [vmem:[#allocation2 + $0x48] sm:$0xff] %vm3260, 0.0
        %3272 = vst.msk [vmem:[#allocation2 + $0x50] sm:$0xff] %vm3260, 0.0
        %3273 = vst.msk [vmem:[#allocation2 + $0x58] sm:$0x3] %vm3263, 0.0
        %3274 = vst.msk [vmem:[#allocation2 + $0x60] sm:$0xff] %vm3260, 0.0
        %3275 = vst.msk [vmem:[#allocation2 + $0x68] sm:$0xff] %vm3260, 0.0
        %3276 = vst.msk [vmem:[#allocation2 + $0x70] sm:$0x3] %vm3263, 0.0
        %3277 = vst.msk [vmem:[#allocation2 + $0x78] sm:$0xff] %vm3260, 0.0
        %3278 = vst.msk [vmem:[#allocation2 + $0x80] sm:$0xff] %vm3260, 0.0
        %3279 = vst.msk [vmem:[#allocation2 + $0x88] sm:$0x3] %vm3263, 0.0
        %3280 = vst.msk [vmem:[#allocation2 + $0x90] sm:$0xff] %vm3260, 0.0
        %3281 = vst.msk [vmem:[#allocation2 + $0x98] sm:$0xff] %vm3260, 0.0
        %3282 = vst.msk [vmem:[#allocation2 + $0xa0] sm:$0x3] %vm3263, 0.0
        %3283 = vst.msk [vmem:[#allocation2 + $0xa8] sm:$0xff] %vm3260, 0.0
        %3284 = vst.msk [vmem:[#allocation2 + $0xb0] sm:$0xff] %vm3260, 0.0
        %3285 = vst.msk [vmem:[#allocation2 + $0xb8] sm:$0x3] %vm3263, 0.0
        %3286 = vst.msk [vmem:[#allocation2 + $0xc0] sm:$0xff] %vm3260, 0.0
        %3287 = vst.msk [vmem:[#allocation2 + $0xc8] sm:$0xff] %vm3260, 0.0
        %3288 = vst.msk [vmem:[#allocation2 + $0xd0] sm:$0x3] %vm3263, 0.0
        %3289 = vst.msk [vmem:[#allocation2 + $0xd8] sm:$0xff] %vm3260, 0.0
        %3290 = vst.msk [vmem:[#allocation2 + $0xe0] sm:$0xff] %vm3260, 0.0
        %3291 = vst.msk [vmem:[#allocation2 + $0xe8] sm:$0x3] %vm3263, 0.0
        %3292 = vst.msk [vmem:[#allocation2 + $0xf0] sm:$0xff] %vm3260, 0.0
        %3293 = vst.msk [vmem:[#allocation2 + $0xf8] sm:$0xff] %vm3260, 0.0
        %3294 = vst.msk [vmem:[#allocation2 + $0x100] sm:$0x3] %vm3263, 0.0
        %3295 = vst.msk [vmem:[#allocation2 + $0x108] sm:$0xff] %vm3260, 0.0
        %3296 = vst.msk [vmem:[#allocation2 + $0x110] sm:$0xff] %vm3260, 0.0
        %3297 = vst.msk [vmem:[#allocation2 + $0x118] sm:$0x3] %vm3263, 0.0
        %3298 = vst.msk [vmem:[#allocation2 + $0x120] sm:$0xff] %vm3260, 0.0
        %3299 = vst.msk [vmem:[#allocation2 + $0x128] sm:$0xff] %vm3260, 0.0
        %3300 = vst.msk [vmem:[#allocation2 + $0x130] sm:$0x3] %vm3263, 0.0
        %3301 = vst.msk [vmem:[#allocation2 + $0x138] sm:$0xff] %vm3260, 0.0
        %3302 = vst.msk [vmem:[#allocation2 + $0x140] sm:$0xff] %vm3260, 0.0
        %3303 = vst.msk [vmem:[#allocation2 + $0x148] sm:$0x3] %vm3263, 0.0
        %3304 = vst.msk [vmem:[#allocation2 + $0x150] sm:$0xff] %vm3260, 0.0
        %3305 = vst.msk [vmem:[#allocation2 + $0x158] sm:$0xff] %vm3260, 0.0
        %3306 = vst.msk [vmem:[#allocation2 + $0x160] sm:$0x3] %vm3263, 0.0
        %3307 = vst.msk [vmem:[#allocation2 + $0x168] sm:$0xff] %vm3260, 0.0
        %3308 = vst.msk [vmem:[#allocation2 + $0x170] sm:$0xff] %vm3260, 0.0
        %3309 = vst.msk [vmem:[#allocation2 + $0x178] sm:$0x3] %vm3263, 0.0
        %3310 = vst.msk [vmem:[#allocation2 + $0x180] sm:$0xff] %vm3260, 0.0
        %3311 = vst.msk [vmem:[#allocation2 + $0x188] sm:$0xff] %vm3260, 0.0
        %3312 = vst.msk [vmem:[#allocation2 + $0x190] sm:$0x3] %vm3263, 0.0
        %3313 = vst.msk [vmem:[#allocation2 + $0x198] sm:$0xff] %vm3260, 0.0
        %3314 = vst.msk [vmem:[#allocation2 + $0x1a0] sm:$0xff] %vm3260, 0.0
        %3315 = vst.msk [vmem:[#allocation2 + $0x1a8] sm:$0x3] %vm3263, 0.0
        %s3316 = scalar_lea.vmem [#allocation2], 24
        %3317 = vst.msk [vmem:[%s3316 + $0x1] sm:$0xff] %vm3260, %v3228
        %3318 = vst.msk [vmem:[%s3316 + $0x9] sm:$0xff] %vm3260, %v3229
        %3319 = vst.msk [vmem:[%s3316 + $0x19] sm:$0xff] %vm3260, %v3230
        %3320 = vst.msk [vmem:[%s3316 + $0x21] sm:$0xff] %vm3260, %v3231
        %3321 = vst.msk [vmem:[%s3316 + $0x31] sm:$0xff] %vm3260, %v3232
        %3322 = vst.msk [vmem:[%s3316 + $0x39] sm:$0xff] %vm3260, %v3233
        %3323 = vst.msk [vmem:[%s3316 + $0x49] sm:$0xff] %vm3260, %v3234
        %3324 = vst.msk [vmem:[%s3316 + $0x51] sm:$0xff] %vm3260, %v3235
        %3325 = vst.msk [vmem:[%s3316 + $0x61] sm:$0xff] %vm3260, %v3236
        %3326 = vst.msk [vmem:[%s3316 + $0x69] sm:$0xff] %vm3260, %v3237
        %3327 = vst.msk [vmem:[%s3316 + $0x79] sm:$0xff] %vm3260, %v3238
        %3328 = vst.msk [vmem:[%s3316 + $0x81] sm:$0xff] %vm3260, %v3239
        %3329 = vst.msk [vmem:[%s3316 + $0x91] sm:$0xff] %vm3260, %v3240
        %3330 = vst.msk [vmem:[%s3316 + $0x99] sm:$0xff] %vm3260, %v3241
        %3331 = vst.msk [vmem:[%s3316 + $0xa9] sm:$0xff] %vm3260, %v3242
        %3332 = vst.msk [vmem:[%s3316 + $0xb1] sm:$0xff] %vm3260, %v3243
        %3333 = vst.msk [vmem:[%s3316 + $0xc1] sm:$0xff] %vm3260, %v3244
        %3334 = vst.msk [vmem:[%s3316 + $0xc9] sm:$0xff] %vm3260, %v3245
        %3335 = vst.msk [vmem:[%s3316 + $0xd9] sm:$0xff] %vm3260, %v3246
        %3336 = vst.msk [vmem:[%s3316 + $0xe1] sm:$0xff] %vm3260, %v3247
        %3337 = vst.msk [vmem:[%s3316 + $0xf1] sm:$0xff] %vm3260, %v3248
        %3338 = vst.msk [vmem:[%s3316 + $0xf9] sm:$0xff] %vm3260, %v3249
        %3339 = vst.msk [vmem:[%s3316 + $0x109] sm:$0xff] %vm3260, %v3250
        %3340 = vst.msk [vmem:[%s3316 + $0x111] sm:$0xff] %vm3260, %v3251
        %3341 = vst.msk [vmem:[%s3316 + $0x121] sm:$0xff] %vm3260, %v3252
        %3342 = vst.msk [vmem:[%s3316 + $0x129] sm:$0xff] %vm3260, %v3253
        %3343 = vst.msk [vmem:[%s3316 + $0x139] sm:$0xff] %vm3260, %v3254
        %3344 = vst.msk [vmem:[%s3316 + $0x141] sm:$0xff] %vm3260, %v3255
        %3345 = vst.msk [vmem:[%s3316 + $0x151] sm:$0xff] %vm3260, %v3256
        %3346 = vst.msk [vmem:[%s3316 + $0x159] sm:$0xff] %vm3260, %v3257
        %3347 = vst.msk [vmem:[%s3316 + $0x169] sm:$0xff] %vm3260, %v3258
        %3348 = vst.msk [vmem:[%s3316 + $0x171] sm:$0xff] %vm3260, %v3259
        %v3349 = vld [vmem:[#allocation2] sm:$0xff]
        %v3350 = vld [vmem:[#allocation2 + $0x8] sm:$0xff]
        %v3351 = vld [vmem:[#allocation2 + $0x18] sm:$0xff]
        %v3352 = vld [vmem:[#allocation2 + $0x20] sm:$0xff]
        %v3353 = vld [vmem:[#allocation2 + $0x30] sm:$0xff]
        %v3354 = vld [vmem:[#allocation2 + $0x38] sm:$0xff]
        %v3355 = vld [vmem:[#allocation2 + $0x48] sm:$0xff]
        %v3356 = vld [vmem:[#allocation2 + $0x50] sm:$0xff]
        %v3357 = vld [vmem:[#allocation2 + $0x60] sm:$0xff]
        %v3358 = vld [vmem:[#allocation2 + $0x68] sm:$0xff]
        %v3359 = vld [vmem:[#allocation2 + $0x78] sm:$0xff]
        %v3360 = vld [vmem:[#allocation2 + $0x80] sm:$0xff]
        %v3361 = vld [vmem:[#allocation2 + $0x90] sm:$0xff]
        %v3362 = vld [vmem:[#allocation2 + $0x98] sm:$0xff]
        %v3363 = vld [vmem:[#allocation2 + $0xa8] sm:$0xff]
        %v3364 = vld [vmem:[#allocation2 + $0xb0] sm:$0xff]
        %v3365 = vld [vmem:[#allocation2 + $0xc0] sm:$0xff]
        %v3366 = vld [vmem:[#allocation2 + $0xc8] sm:$0xff]
        %v3367 = vld [vmem:[#allocation2 + $0xd8] sm:$0xff]
        %v3368 = vld [vmem:[#allocation2 + $0xe0] sm:$0xff]
        %v3369 = vld [vmem:[#allocation2 + $0xf0] sm:$0xff]
        %v3370 = vld [vmem:[#allocation2 + $0xf8] sm:$0xff]
        %v3371 = vld [vmem:[#allocation2 + $0x108] sm:$0xff]
        %v3372 = vld [vmem:[#allocation2 + $0x110] sm:$0xff]
        %v3373 = vld [vmem:[#allocation2 + $0x120] sm:$0xff]
        %v3374 = vld [vmem:[#allocation2 + $0x128] sm:$0xff]
        %v3375 = vld [vmem:[#allocation2 + $0x138] sm:$0xff]
        %v3376 = vld [vmem:[#allocation2 + $0x140] sm:$0xff]
        %v3377 = vld [vmem:[#allocation2 + $0x150] sm:$0xff]
        %v3378 = vld [vmem:[#allocation2 + $0x158] sm:$0xff]
        %v3379 = vld [vmem:[#allocation2 + $0x168] sm:$0xff]
        %v3380 = vld [vmem:[#allocation2 + $0x170] sm:$0xff]
        %v3381 = vpack.c.bf16 %v3350, %v3349
        %v3382 = vpack.c.bf16 %v3352, %v3351
        %v3383 = vpack.c.bf16 %v3354, %v3353
        %v3384 = vpack.c.bf16 %v3356, %v3355
        %v3385 = vpack.c.bf16 %v3358, %v3357
        %v3386 = vpack.c.bf16 %v3360, %v3359
        %v3387 = vpack.c.bf16 %v3362, %v3361
        %v3388 = vpack.c.bf16 %v3364, %v3363
        %v3389 = vpack.c.bf16 %v3366, %v3365
        %v3390 = vpack.c.bf16 %v3368, %v3367
        %v3391 = vpack.c.bf16 %v3370, %v3369
        %v3392 = vpack.c.bf16 %v3372, %v3371
        %v3393 = vpack.c.bf16 %v3374, %v3373
        %v3394 = vpack.c.bf16 %v3376, %v3375
        %v3395 = vpack.c.bf16 %v3378, %v3377
        %v3396 = vpack.c.bf16 %v3380, %v3379
        %v3397 = vld [vmem:[#allocation12] sm:$0xf]
        %v3398 = vld [vmem:[#allocation12 + $0x4] sm:$0xf]
        %v3399 = vld [vmem:[#allocation12 + $0x8] sm:$0xf]
        %v3400 = vld [vmem:[#allocation12 + $0xc] sm:$0xf]
        %v3401 = vld [vmem:[#allocation2 + $0x1] sm:$0xff]
        %v3402 = vld [vmem:[#allocation2 + $0x9] sm:$0xff]
        %v3403 = vld [vmem:[#allocation2 + $0x19] sm:$0xff]
        %v3404 = vld [vmem:[#allocation2 + $0x21] sm:$0xff]
        %v3405 = vld [vmem:[#allocation2 + $0x31] sm:$0xff]
        %v3406 = vld [vmem:[#allocation2 + $0x39] sm:$0xff]
        %v3407 = vld [vmem:[#allocation2 + $0x49] sm:$0xff]
        %v3408 = vld [vmem:[#allocation2 + $0x51] sm:$0xff]
        %v3409 = vld [vmem:[#allocation2 + $0x61] sm:$0xff]
        %v3410 = vld [vmem:[#allocation2 + $0x69] sm:$0xff]
        %v3411 = vld [vmem:[#allocation2 + $0x79] sm:$0xff]
        %v3412 = vld [vmem:[#allocation2 + $0x81] sm:$0xff]
        %v3413 = vld [vmem:[#allocation2 + $0x91] sm:$0xff]
        %v3414 = vld [vmem:[#allocation2 + $0x99] sm:$0xff]
        %v3415 = vld [vmem:[#allocation2 + $0xa9] sm:$0xff]
        %v3416 = vld [vmem:[#allocation2 + $0xb1] sm:$0xff]
        %v3417 = vld [vmem:[#allocation2 + $0xc1] sm:$0xff]
        %v3418 = vld [vmem:[#allocation2 + $0xc9] sm:$0xff]
        %v3419 = vld [vmem:[#allocation2 + $0xd9] sm:$0xff]
        %v3420 = vld [vmem:[#allocation2 + $0xe1] sm:$0xff]
        %v3421 = vld [vmem:[#allocation2 + $0xf1] sm:$0xff]
        %v3422 = vld [vmem:[#allocation2 + $0xf9] sm:$0xff]
        %v3423 = vld [vmem:[#allocation2 + $0x109] sm:$0xff]
        %v3424 = vld [vmem:[#allocation2 + $0x111] sm:$0xff]
        %v3425 = vld [vmem:[#allocation2 + $0x121] sm:$0xff]
        %v3426 = vld [vmem:[#allocation2 + $0x129] sm:$0xff]
        %v3427 = vld [vmem:[#allocation2 + $0x139] sm:$0xff]
        %v3428 = vld [vmem:[#allocation2 + $0x141] sm:$0xff]
        %v3429 = vld [vmem:[#allocation2 + $0x151] sm:$0xff]
        %v3430 = vld [vmem:[#allocation2 + $0x159] sm:$0xff]
        %v3431 = vld [vmem:[#allocation2 + $0x169] sm:$0xff]
        %v3432 = vld [vmem:[#allocation2 + $0x171] sm:$0xff]
        %v3433 = vpack.c.bf16 %v3402, %v3401
        %v3434 = vpack.c.bf16 %v3404, %v3403
        %v3435 = vpack.c.bf16 %v3406, %v3405
        %v3436 = vpack.c.bf16 %v3408, %v3407
        %v3437 = vpack.c.bf16 %v3410, %v3409
        %v3438 = vpack.c.bf16 %v3412, %v3411
        %v3439 = vpack.c.bf16 %v3414, %v3413
        %v3440 = vpack.c.bf16 %v3416, %v3415
        %v3441 = vpack.c.bf16 %v3418, %v3417
        %v3442 = vpack.c.bf16 %v3420, %v3419
        %v3443 = vpack.c.bf16 %v3422, %v3421
        %v3444 = vpack.c.bf16 %v3424, %v3423
        %v3445 = vpack.c.bf16 %v3426, %v3425
        %v3446 = vpack.c.bf16 %v3428, %v3427
        %v3447 = vpack.c.bf16 %v3430, %v3429
        %v3448 = vpack.c.bf16 %v3432, %v3431
        %s3449 = scalar_lea.vmem [#allocation12], 16
        %v3450 = vld [vmem:[%s3449] sm:$0xf]
        %v3451 = vld [vmem:[%s3449 + $0x4] sm:$0xf]
        %v3452 = vld [vmem:[%s3449 + $0x8] sm:$0xf]
        %v3453 = vld [vmem:[%s3449 + $0xc] sm:$0xf]
        %v3458 = vunpack.c.l.b16 %v3450
        %v3459 = vunpack.c.l.b16 %v3451
        %v3460 = vunpack.c.l.b16 %v3452
        %v3461 = vunpack.c.l.b16 %v3453
        %v3462 = vpack.c.b16 %v3459, %v3458
        %v3463 = vpack.c.b16 %v3461, %v3460
        %v3467 = vsel %vm3260, %v3433, 0
        %v3470 = vsel %vm3260, %v3434, 0
        %v3473 = vsel %vm3260, %v3435, 0
        %v3476 = vsel %vm3260, %v3436, 0
        %v3479 = vsel %vm3260, %v3437, 0
        %v3482 = vsel %vm3260, %v3438, 0
        %v3485 = vsel %vm3260, %v3439, 0
        %v3488 = vsel %vm3260, %v3440, 0
        %v3491 = vsel %vm3260, %v3441, 0
        %v3494 = vsel %vm3260, %v3442, 0
        %v3497 = vsel %vm3260, %v3443, 0
        %v3500 = vsel %vm3260, %v3444, 0
        %v3503 = vsel %vm3260, %v3445, 0
        %v3506 = vsel %vm3260, %v3446, 0
        %v3509 = vsel %vm3260, %v3447, 0
        %v3512 = vsel %vm3260, %v3448, 0
        %3514 = vmatprep.subr.bf16.mxu0 0
        %3515 = vmatpush1.bf16.msra.mxu0 %v3462
        %3516 = vmatprep.subr.bf16.mxu0 0
        %3517 = vmatpush1.bf16.msra.mxu0 %v3463
        %3518 = vmatprep.subr.bf16.mxu0 0
        %3519 = vmatpush1.bf16.msra.mxu0 0
        %3520 = vmatprep.subr.bf16.mxu0 0
        %3521 = vmatpush1.bf16.msra.mxu0 0
        %3522 = vmatprep.subr.bf16.mxu0 0
        %3523 = vmatpush1.bf16.msra.mxu0 0
        %3524 = vmatprep.subr.bf16.mxu0 0
        %3525 = vmatpush1.bf16.msra.mxu0 0
        %3526 = vmatprep.subr.bf16.mxu0 0
        %3527 = vmatpush1.bf16.msra.mxu0 0
        %3528 = vmatprep.subr.bf16.mxu0 0
        %3529 = vmatpush1.bf16.msra.mxu0 0
        %3530 = vmatprep.subr.bf16.mxu0 0
        %3531 = vmatpush1.bf16.msra.mxu0 0
        %3532 = vmatprep.subr.bf16.mxu0 0
        %3533 = vmatpush1.bf16.msra.mxu0 0
        %3534 = vmatprep.subr.bf16.mxu0 0
        %3535 = vmatpush1.bf16.msra.mxu0 0
        %3536 = vmatprep.subr.bf16.mxu0 0
        %3537 = vmatpush1.bf16.msra.mxu0 0
        %3538 = vmatprep.subr.bf16.mxu0 0
        %3539 = vmatpush1.bf16.msra.mxu0 0
        %3540 = vmatprep.subr.bf16.mxu0 0
        %3541 = vmatpush1.bf16.msra.mxu0 0
        %3542 = vmatprep.subr.bf16.mxu0 0
        %3543 = vmatpush1.bf16.msra.mxu0 0
        %3544 = vmatprep.subr.bf16.mxu0 0
        %3545 = vmatpush1.bf16.msra.mxu0 0
        %3546 = vmatprep.mubr.bf16.mxu0 0
        %3547 = vmatmul.mubr.bf16.gmra.mrb[0].mxu0 %v3467
        %v3548 = vpop.f32.mrb[0].mxu0
        %v3549 = vadd.f32 0.0, %v3548
        %v3550 = vpop.f32.mrb[0].mxu0
        %v3551 = vpop.f32.mrb[0].mxu0
        %v3552 = vadd.f32 0.0, %v3551
        %v3553 = vpop.f32.mrb[0].mxu0
        %3554 = vmatprep.mubr.bf16.mxu0 0
        %3555 = vmatmul.mubr.bf16.gmra.mrb[0].mxu0 %v3470
        %v3556 = vpop.f32.mrb[0].mxu0
        %v3557 = vadd.f32 0.0, %v3556
        %v3558 = vpop.f32.mrb[0].mxu0
        %v3559 = vpop.f32.mrb[0].mxu0
        %v3560 = vadd.f32 0.0, %v3559
        %v3561 = vpop.f32.mrb[0].mxu0
        %3562 = vmatprep.mubr.bf16.mxu0 0
        %3563 = vmatmul.mubr.bf16.gmra.mrb[0].mxu0 %v3473
        %v3564 = vpop.f32.mrb[0].mxu0
        %v3565 = vadd.f32 0.0, %v3564
        %v3566 = vpop.f32.mrb[0].mxu0
        %v3567 = vpop.f32.mrb[0].mxu0
        %v3568 = vadd.f32 0.0, %v3567
        %v3569 = vpop.f32.mrb[0].mxu0
        %3570 = vmatprep.mubr.bf16.mxu0 0
        %3571 = vmatmul.mubr.bf16.gmra.mrb[0].mxu0 %v3476
        %v3572 = vpop.f32.mrb[0].mxu0
        %v3573 = vadd.f32 0.0, %v3572
        %v3574 = vpop.f32.mrb[0].mxu0
        %v3575 = vpop.f32.mrb[0].mxu0
        %v3576 = vadd.f32 0.0, %v3575
        %v3577 = vpop.f32.mrb[0].mxu0
        %3578 = vmatprep.mubr.bf16.mxu0 0
        %3579 = vmatmul.mubr.bf16.gmra.mrb[0].mxu0 %v3479
        %v3580 = vpop.f32.mrb[0].mxu0
        %v3581 = vadd.f32 0.0, %v3580
        %v3582 = vpop.f32.mrb[0].mxu0
        %v3583 = vpop.f32.mrb[0].mxu0
        %v3584 = vadd.f32 0.0, %v3583
        %v3585 = vpop.f32.mrb[0].mxu0
        %3586 = vmatprep.mubr.bf16.mxu0 0
        %3587 = vmatmul.mubr.bf16.gmra.mrb[0].mxu0 %v3482
        %v3588 = vpop.f32.mrb[0].mxu0
        %v3589 = vadd.f32 0.0, %v3588
        %v3590 = vpop.f32.mrb[0].mxu0
        %v3591 = vpop.f32.mrb[0].mxu0
        %v3592 = vadd.f32 0.0, %v3591
        %v3593 = vpop.f32.mrb[0].mxu0
        %3594 = vmatprep.mubr.bf16.mxu0 0
        %3595 = vmatmul.mubr.bf16.gmra.mrb[0].mxu0 %v3485
        %v3596 = vpop.f32.mrb[0].mxu0
        %v3597 = vadd.f32 0.0, %v3596
        %v3598 = vpop.f32.mrb[0].mxu0
        %v3599 = vpop.f32.mrb[0].mxu0
        %v3600 = vadd.f32 0.0, %v3599
        %v3601 = vpop.f32.mrb[0].mxu0
        %3602 = vmatprep.mubr.bf16.mxu0 0
        %3603 = vmatmul.mubr.bf16.gmra.mrb[0].mxu0 %v3488
        %v3604 = vpop.f32.mrb[0].mxu0
        %v3605 = vadd.f32 0.0, %v3604
        %v3606 = vpop.f32.mrb[0].mxu0
        %v3607 = vpop.f32.mrb[0].mxu0
        %v3608 = vadd.f32 0.0, %v3607
        %v3609 = vpop.f32.mrb[0].mxu0
        %3610 = vmatprep.mubr.bf16.mxu0 0
        %3611 = vmatmul.mubr.bf16.gmra.mrb[0].mxu0 %v3491
        %v3612 = vpop.f32.mrb[0].mxu0
        %v3613 = vadd.f32 0.0, %v3612
        %v3614 = vpop.f32.mrb[0].mxu0
        %v3615 = vpop.f32.mrb[0].mxu0
        %v3616 = vadd.f32 0.0, %v3615
        %v3617 = vpop.f32.mrb[0].mxu0
        %3618 = vmatprep.mubr.bf16.mxu0 0
        %3619 = vmatmul.mubr.bf16.gmra.mrb[0].mxu0 %v3494
        %v3620 = vpop.f32.mrb[0].mxu0
        %v3621 = vadd.f32 0.0, %v3620
        %v3622 = vpop.f32.mrb[0].mxu0
        %v3623 = vpop.f32.mrb[0].mxu0
        %v3624 = vadd.f32 0.0, %v3623
        %v3625 = vpop.f32.mrb[0].mxu0
        %3626 = vmatprep.mubr.bf16.mxu0 0
        %3627 = vmatmul.mubr.bf16.gmra.mrb[0].mxu0 %v3497
        %v3628 = vpop.f32.mrb[0].mxu0
        %v3629 = vadd.f32 0.0, %v3628
        %v3630 = vpop.f32.mrb[0].mxu0
        %v3631 = vpop.f32.mrb[0].mxu0
        %v3632 = vadd.f32 0.0, %v3631
        %v3633 = vpop.f32.mrb[0].mxu0
        %3634 = vmatprep.mubr.bf16.mxu0 0
        %3635 = vmatmul.mubr.bf16.gmra.mrb[0].mxu0 %v3500
        %v3636 = vpop.f32.mrb[0].mxu0
        %v3637 = vadd.f32 0.0, %v3636
        %v3638 = vpop.f32.mrb[0].mxu0
        %v3639 = vpop.f32.mrb[0].mxu0
        %v3640 = vadd.f32 0.0, %v3639
        %v3641 = vpop.f32.mrb[0].mxu0
        %3642 = vmatprep.mubr.bf16.mxu0 0
        %3643 = vmatmul.mubr.bf16.gmra.mrb[0].mxu0 %v3503
        %v3644 = vpop.f32.mrb[0].mxu0
        %v3645 = vadd.f32 0.0, %v3644
        %v3646 = vpop.f32.mrb[0].mxu0
        %v3647 = vpop.f32.mrb[0].mxu0
        %v3648 = vadd.f32 0.0, %v3647
        %v3649 = vpop.f32.mrb[0].mxu0
        %3650 = vmatprep.mubr.bf16.mxu0 0
        %3651 = vmatmul.mubr.bf16.gmra.mrb[0].mxu0 %v3506
        %v3652 = vpop.f32.mrb[0].mxu0
        %v3653 = vadd.f32 0.0, %v3652
        %v3654 = vpop.f32.mrb[0].mxu0
        %v3655 = vpop.f32.mrb[0].mxu0
        %v3656 = vadd.f32 0.0, %v3655
        %v3657 = vpop.f32.mrb[0].mxu0
        %3658 = vmatprep.mubr.bf16.mxu0 0
        %3659 = vmatmul.mubr.bf16.gmra.mrb[0].mxu0 %v3509
        %v3660 = vpop.f32.mrb[0].mxu0
        %v3661 = vadd.f32 0.0, %v3660
        %v3662 = vpop.f32.mrb[0].mxu0
        %v3663 = vpop.f32.mrb[0].mxu0
        %v3664 = vadd.f32 0.0, %v3663
        %v3665 = vpop.f32.mrb[0].mxu0
        %3666 = vmatprep.mubr.bf16.mxu0 0
        %3667 = vmatmul.mubr.bf16.gmra.mrb[0].mxu0 %v3512
        %v3668 = vpop.f32.mrb[0].mxu0
        %v3669 = vadd.f32 0.0, %v3668
        %v3670 = vpop.f32.mrb[0].mxu0
        %v3671 = vpop.f32.mrb[0].mxu0
        %v3672 = vadd.f32 0.0, %v3671
        %v3673 = vpop.f32.mrb[0].mxu0
        %3674 = vdwg.mxu0
        %v3679 = vunpack.c.l.b16 %v3397
        %v3680 = vunpack.c.l.b16 %v3398
        %v3681 = vunpack.c.l.b16 %v3399
        %v3682 = vunpack.c.l.b16 %v3400
        %v3683 = vpack.c.b16 %v3680, %v3679
        %v3684 = vpack.c.b16 %v3682, %v3681
        %v3688 = vsel %vm3260, %v3381, 0
        %v3691 = vsel %vm3260, %v3382, 0
        %v3694 = vsel %vm3260, %v3383, 0
        %v3697 = vsel %vm3260, %v3384, 0
        %v3700 = vsel %vm3260, %v3385, 0
        %v3703 = vsel %vm3260, %v3386, 0
        %v3706 = vsel %vm3260, %v3387, 0
        %v3709 = vsel %vm3260, %v3388, 0
        %v3712 = vsel %vm3260, %v3389, 0
        %v3715 = vsel %vm3260, %v3390, 0
        %v3718 = vsel %vm3260, %v3391, 0
        %v3721 = vsel %vm3260, %v3392, 0
        %v3724 = vsel %vm3260, %v3393, 0
        %v3727 = vsel %vm3260, %v3394, 0
        %v3730 = vsel %vm3260, %v3395, 0
        %v3733 = vsel %vm3260, %v3396, 0
        %3735 = vmatprep.subr.bf16.mxu0 0
        %3736 = vmatpush1.bf16.msra.mxu0 %v3683
        %3737 = vmatprep.subr.bf16.mxu0 0
        %3738 = vmatpush1.bf16.msra.mxu0 %v3684
        %3739 = vmatprep.subr.bf16.mxu0 0
        %3740 = vmatpush1.bf16.msra.mxu0 0
        %3741 = vmatprep.subr.bf16.mxu0 0
        %3742 = vmatpush1.bf16.msra.mxu0 0
        %3743 = vmatprep.subr.bf16.mxu0 0
        %3744 = vmatpush1.bf16.msra.mxu0 0
        %3745 = vmatprep.subr.bf16.mxu0 0
        %3746 = vmatpush1.bf16.msra.mxu0 0
        %3747 = vmatprep.subr.bf16.mxu0 0
        %3748 = vmatpush1.bf16.msra.mxu0 0
        %3749 = vmatprep.subr.bf16.mxu0 0
        %3750 = vmatpush1.bf16.msra.mxu0 0
        %3751 = vmatprep.subr.bf16.mxu0 0
        %3752 = vmatpush1.bf16.msra.mxu0 0
        %3753 = vmatprep.subr.bf16.mxu0 0
        %3754 = vmatpush1.bf16.msra.mxu0 0
        %3755 = vmatprep.subr.bf16.mxu0 0
        %3756 = vmatpush1.bf16.msra.mxu0 0
        %3757 = vmatprep.subr.bf16.mxu0 0
        %3758 = vmatpush1.bf16.msra.mxu0 0
        %3759 = vmatprep.subr.bf16.mxu0 0
        %3760 = vmatpush1.bf16.msra.mxu0 0
        %3761 = vmatprep.subr.bf16.mxu0 0
        %3762 = vmatpush1.bf16.msra.mxu0 0
        %3763 = vmatprep.subr.bf16.mxu0 0
        %3764 = vmatpush1.bf16.msra.mxu0 0
        %3765 = vmatprep.subr.bf16.mxu0 0
        %3766 = vmatpush1.bf16.msra.mxu0 0
        %3767 = vmatprep.mubr.bf16.mxu0 0
        %3768 = vmatmul.mubr.bf16.gmra.mrb[0].mxu0 %v3688
        %v3769 = vpop.f32.mrb[0].mxu0
        %v3770 = vadd.f32 %v3549, %v3769
        %v3771 = vpop.f32.mrb[0].mxu0
        %v3772 = vpop.f32.mrb[0].mxu0
        %v3773 = vadd.f32 %v3552, %v3772
        %v3774 = vpop.f32.mrb[0].mxu0
        %3775 = vmatprep.mubr.bf16.mxu0 0
        %3776 = vmatmul.mubr.bf16.gmra.mrb[0].mxu0 %v3691
        %v3777 = vpop.f32.mrb[0].mxu0
        %v3778 = vadd.f32 %v3557, %v3777
        %v3779 = vpop.f32.mrb[0].mxu0
        %v3780 = vpop.f32.mrb[0].mxu0
        %v3781 = vadd.f32 %v3560, %v3780
        %v3782 = vpop.f32.mrb[0].mxu0
        %3783 = vmatprep.mubr.bf16.mxu0 0
        %3784 = vmatmul.mubr.bf16.gmra.mrb[0].mxu0 %v3694
        %v3785 = vpop.f32.mrb[0].mxu0
        %v3786 = vadd.f32 %v3565, %v3785
        %v3787 = vpop.f32.mrb[0].mxu0
        %v3788 = vpop.f32.mrb[0].mxu0
        %v3789 = vadd.f32 %v3568, %v3788
        %v3790 = vpop.f32.mrb[0].mxu0
        %3791 = vmatprep.mubr.bf16.mxu0 0
        %3792 = vmatmul.mubr.bf16.gmra.mrb[0].mxu0 %v3697
        %v3793 = vpop.f32.mrb[0].mxu0
        %v3794 = vadd.f32 %v3573, %v3793
        %v3795 = vpop.f32.mrb[0].mxu0
        %v3796 = vpop.f32.mrb[0].mxu0
        %v3797 = vadd.f32 %v3576, %v3796
        %v3798 = vpop.f32.mrb[0].mxu0
        %3799 = vmatprep.mubr.bf16.mxu0 0
        %3800 = vmatmul.mubr.bf16.gmra.mrb[0].mxu0 %v3700
        %v3801 = vpop.f32.mrb[0].mxu0
        %v3802 = vadd.f32 %v3581, %v3801
        %v3803 = vpop.f32.mrb[0].mxu0
        %v3804 = vpop.f32.mrb[0].mxu0
        %v3805 = vadd.f32 %v3584, %v3804
        %v3806 = vpop.f32.mrb[0].mxu0
        %3807 = vmatprep.mubr.bf16.mxu0 0
        %3808 = vmatmul.mubr.bf16.gmra.mrb[0].mxu0 %v3703
        %v3809 = vpop.f32.mrb[0].mxu0
        %v3810 = vadd.f32 %v3589, %v3809
        %v3811 = vpop.f32.mrb[0].mxu0
        %v3812 = vpop.f32.mrb[0].mxu0
        %v3813 = vadd.f32 %v3592, %v3812
        %v3814 = vpop.f32.mrb[0].mxu0
        %3815 = vmatprep.mubr.bf16.mxu0 0
        %3816 = vmatmul.mubr.bf16.gmra.mrb[0].mxu0 %v3706
        %v3817 = vpop.f32.mrb[0].mxu0
        %v3818 = vadd.f32 %v3597, %v3817
        %v3819 = vpop.f32.mrb[0].mxu0
        %v3820 = vpop.f32.mrb[0].mxu0
        %v3821 = vadd.f32 %v3600, %v3820
        %v3822 = vpop.f32.mrb[0].mxu0
        %3823 = vmatprep.mubr.bf16.mxu0 0
        %3824 = vmatmul.mubr.bf16.gmra.mrb[0].mxu0 %v3709
        %v3825 = vpop.f32.mrb[0].mxu0
        %v3826 = vadd.f32 %v3605, %v3825
        %v3827 = vpop.f32.mrb[0].mxu0
        %v3828 = vpop.f32.mrb[0].mxu0
        %v3829 = vadd.f32 %v3608, %v3828
        %v3830 = vpop.f32.mrb[0].mxu0
        %3831 = vmatprep.mubr.bf16.mxu0 0
        %3832 = vmatmul.mubr.bf16.gmra.mrb[0].mxu0 %v3712
        %v3833 = vpop.f32.mrb[0].mxu0
        %v3834 = vadd.f32 %v3613, %v3833
        %v3835 = vpop.f32.mrb[0].mxu0
        %v3836 = vpop.f32.mrb[0].mxu0
        %v3837 = vadd.f32 %v3616, %v3836
        %v3838 = vpop.f32.mrb[0].mxu0
        %3839 = vmatprep.mubr.bf16.mxu0 0
        %3840 = vmatmul.mubr.bf16.gmra.mrb[0].mxu0 %v3715
        %v3841 = vpop.f32.mrb[0].mxu0
        %v3842 = vadd.f32 %v3621, %v3841
        %v3843 = vpop.f32.mrb[0].mxu0
        %v3844 = vpop.f32.mrb[0].mxu0
        %v3845 = vadd.f32 %v3624, %v3844
        %v3846 = vpop.f32.mrb[0].mxu0
        %3847 = vmatprep.mubr.bf16.mxu0 0
        %3848 = vmatmul.mubr.bf16.gmra.mrb[0].mxu0 %v3718
        %v3849 = vpop.f32.mrb[0].mxu0
        %v3850 = vadd.f32 %v3629, %v3849
        %v3851 = vpop.f32.mrb[0].mxu0
        %v3852 = vpop.f32.mrb[0].mxu0
        %v3853 = vadd.f32 %v3632, %v3852
        %v3854 = vpop.f32.mrb[0].mxu0
        %3855 = vmatprep.mubr.bf16.mxu0 0
        %3856 = vmatmul.mubr.bf16.gmra.mrb[0].mxu0 %v3721
        %v3857 = vpop.f32.mrb[0].mxu0
        %v3858 = vadd.f32 %v3637, %v3857
        %v3859 = vpop.f32.mrb[0].mxu0
        %v3860 = vpop.f32.mrb[0].mxu0
        %v3861 = vadd.f32 %v3640, %v3860
        %v3862 = vpop.f32.mrb[0].mxu0
        %3863 = vmatprep.mubr.bf16.mxu0 0
        %3864 = vmatmul.mubr.bf16.gmra.mrb[0].mxu0 %v3724
        %v3865 = vpop.f32.mrb[0].mxu0
        %v3866 = vadd.f32 %v3645, %v3865
        %v3867 = vpop.f32.mrb[0].mxu0
        %v3868 = vpop.f32.mrb[0].mxu0
        %v3869 = vadd.f32 %v3648, %v3868
        %v3870 = vpop.f32.mrb[0].mxu0
        %3871 = vmatprep.mubr.bf16.mxu0 0
        %3872 = vmatmul.mubr.bf16.gmra.mrb[0].mxu0 %v3727
        %v3873 = vpop.f32.mrb[0].mxu0
        %v3874 = vadd.f32 %v3653, %v3873
        %v3875 = vpop.f32.mrb[0].mxu0
        %v3876 = vpop.f32.mrb[0].mxu0
        %v3877 = vadd.f32 %v3656, %v3876
        %v3878 = vpop.f32.mrb[0].mxu0
        %3879 = vmatprep.mubr.bf16.mxu0 0
        %3880 = vmatmul.mubr.bf16.gmra.mrb[0].mxu0 %v3730
        %v3881 = vpop.f32.mrb[0].mxu0
        %v3882 = vadd.f32 %v3661, %v3881
        %v3883 = vpop.f32.mrb[0].mxu0
        %v3884 = vpop.f32.mrb[0].mxu0
        %v3885 = vadd.f32 %v3664, %v3884
        %v3886 = vpop.f32.mrb[0].mxu0
        %3887 = vmatprep.mubr.bf16.mxu0 0
        %3888 = vmatmul.mubr.bf16.gmra.mrb[0].mxu0 %v3733
        %v3889 = vpop.f32.mrb[0].mxu0
        %v3890 = vadd.f32 %v3669, %v3889
        %v3891 = vpop.f32.mrb[0].mxu0
        %v3892 = vpop.f32.mrb[0].mxu0
        %v3893 = vadd.f32 %v3672, %v3892
        %v3894 = vpop.f32.mrb[0].mxu0
        %3895 = vdwg.mxu0
        %v3896 = vld [vmem:[#allocation2 + $0x2] sm:$0xff]
        %v3897 = vld [vmem:[#allocation2 + $0xa] sm:$0xff]
        %v3898 = vld [vmem:[#allocation2 + $0x1a] sm:$0xff]
        %v3899 = vld [vmem:[#allocation2 + $0x22] sm:$0xff]
        %v3900 = vld [vmem:[#allocation2 + $0x32] sm:$0xff]
        %v3901 = vld [vmem:[#allocation2 + $0x3a] sm:$0xff]
        %v3902 = vld [vmem:[#allocation2 + $0x4a] sm:$0xff]
        %v3903 = vld [vmem:[#allocation2 + $0x52] sm:$0xff]
        %v3904 = vld [vmem:[#allocation2 + $0x62] sm:$0xff]
        %v3905 = vld [vmem:[#allocation2 + $0x6a] sm:$0xff]
        %v3906 = vld [vmem:[#allocation2 + $0x7a] sm:$0xff]
        %v3907 = vld [vmem:[#allocation2 + $0x82] sm:$0xff]
        %v3908 = vld [vmem:[#allocation2 + $0x92] sm:$0xff]
        %v3909 = vld [vmem:[#allocation2 + $0x9a] sm:$0xff]
        %v3910 = vld [vmem:[#allocation2 + $0xaa] sm:$0xff]
        %v3911 = vld [vmem:[#allocation2 + $0xb2] sm:$0xff]
        %v3912 = vld [vmem:[#allocation2 + $0xc2] sm:$0xff]
        %v3913 = vld [vmem:[#allocation2 + $0xca] sm:$0xff]
        %v3914 = vld [vmem:[#allocation2 + $0xda] sm:$0xff]
        %v3915 = vld [vmem:[#allocation2 + $0xe2] sm:$0xff]
        %v3916 = vld [vmem:[#allocation2 + $0xf2] sm:$0xff]
        %v3917 = vld [vmem:[#allocation2 + $0xfa] sm:$0xff]
        %v3918 = vld [vmem:[#allocation2 + $0x10a] sm:$0xff]
        %v3919 = vld [vmem:[#allocation2 + $0x112] sm:$0xff]
        %v3920 = vld [vmem:[#allocation2 + $0x122] sm:$0xff]
        %v3921 = vld [vmem:[#allocation2 + $0x12a] sm:$0xff]
        %v3922 = vld [vmem:[#allocation2 + $0x13a] sm:$0xff]
        %v3923 = vld [vmem:[#allocation2 + $0x142] sm:$0xff]
        %v3924 = vld [vmem:[#allocation2 + $0x152] sm:$0xff]
        %v3925 = vld [vmem:[#allocation2 + $0x15a] sm:$0xff]
        %v3926 = vld [vmem:[#allocation2 + $0x16a] sm:$0xff]
        %v3927 = vld [vmem:[#allocation2 + $0x172] sm:$0xff]
        %v3928 = vpack.c.bf16 %v3897, %v3896
        %v3929 = vpack.c.bf16 %v3899, %v3898
        %v3930 = vpack.c.bf16 %v3901, %v3900
        %v3931 = vpack.c.bf16 %v3903, %v3902
        %v3932 = vpack.c.bf16 %v3905, %v3904
        %v3933 = vpack.c.bf16 %v3907, %v3906
        %v3934 = vpack.c.bf16 %v3909, %v3908
        %v3935 = vpack.c.bf16 %v3911, %v3910
        %v3936 = vpack.c.bf16 %v3913, %v3912
        %v3937 = vpack.c.bf16 %v3915, %v3914
        %v3938 = vpack.c.bf16 %v3917, %v3916
        %v3939 = vpack.c.bf16 %v3919, %v3918
        %v3940 = vpack.c.bf16 %v3921, %v3920
        %v3941 = vpack.c.bf16 %v3923, %v3922
        %v3942 = vpack.c.bf16 %v3925, %v3924
        %v3943 = vpack.c.bf16 %v3927, %v3926
        %s3944 = scalar_lea.vmem [#allocation12], 32
        %v3945 = vld [vmem:[%s3944] sm:$0xf]
        %v3946 = vld [vmem:[%s3944 + $0x4] sm:$0xf]
        %v3947 = vld [vmem:[%s3944 + $0x8] sm:$0xf]
        %v3948 = vld [vmem:[%s3944 + $0xc] sm:$0xf]
        %v3953 = vunpack.c.l.b16 %v3945
        %v3954 = vunpack.c.l.b16 %v3946
        %v3955 = vunpack.c.l.b16 %v3947
        %v3956 = vunpack.c.l.b16 %v3948
        %v3957 = vpack.c.b16 %v3954, %v3953
        %v3958 = vpack.c.b16 %v3956, %v3955
        %v3962 = vsel %vm3260, %v3928, 0
        %v3965 = vsel %vm3260, %v3929, 0
        %v3968 = vsel %vm3260, %v3930, 0
        %v3971 = vsel %vm3260, %v3931, 0
        %v3974 = vsel %vm3260, %v3932, 0
        %v3977 = vsel %vm3260, %v3933, 0
        %v3980 = vsel %vm3260, %v3934, 0
        %v3983 = vsel %vm3260, %v3935, 0
        %v3986 = vsel %vm3260, %v3936, 0
        %v3989 = vsel %vm3260, %v3937, 0
        %v3992 = vsel %vm3260, %v3938, 0
        %v3995 = vsel %vm3260, %v3939, 0
        %v3998 = vsel %vm3260, %v3940, 0
        %v4001 = vsel %vm3260, %v3941, 0
        %v4004 = vsel %vm3260, %v3942, 0
        %v4007 = vsel %vm3260, %v3943, 0
        %4009 = vmatprep.subr.bf16.mxu0 0
        %4010 = vmatpush1.bf16.msra.mxu0 %v3957
        %4011 = vmatprep.subr.bf16.mxu0 0
        %4012 = vmatpush1.bf16.msra.mxu0 %v3958
        %4013 = vmatprep.subr.bf16.mxu0 0
        %4014 = vmatpush1.bf16.msra.mxu0 0
        %4015 = vmatprep.subr.bf16.mxu0 0
        %4016 = vmatpush1.bf16.msra.mxu0 0
        %4017 = vmatprep.subr.bf16.mxu0 0
        %4018 = vmatpush1.bf16.msra.mxu0 0
        %4019 = vmatprep.subr.bf16.mxu0 0
        %4020 = vmatpush1.bf16.msra.mxu0 0
        %4021 = vmatprep.subr.bf16.mxu0 0
        %4022 = vmatpush1.bf16.msra.mxu0 0
        %4023 = vmatprep.subr.bf16.mxu0 0
        %4024 = vmatpush1.bf16.msra.mxu0 0
        %4025 = vmatprep.subr.bf16.mxu0 0
        %4026 = vmatpush1.bf16.msra.mxu0 0
        %4027 = vmatprep.subr.bf16.mxu0 0
        %4028 = vmatpush1.bf16.msra.mxu0 0
        %4029 = vmatprep.subr.bf16.mxu0 0
        %4030 = vmatpush1.bf16.msra.mxu0 0
        %4031 = vmatprep.subr.bf16.mxu0 0
        %4032 = vmatpush1.bf16.msra.mxu0 0
        %4033 = vmatprep.subr.bf16.mxu0 0
        %4034 = vmatpush1.bf16.msra.mxu0 0
        %4035 = vmatprep.subr.bf16.mxu0 0
        %4036 = vmatpush1.bf16.msra.mxu0 0
        %4037 = vmatprep.subr.bf16.mxu0 0
        %4038 = vmatpush1.bf16.msra.mxu0 0
        %4039 = vmatprep.subr.bf16.mxu0 0
        %4040 = vmatpush1.bf16.msra.mxu0 0
        %4041 = vmatprep.mubr.bf16.mxu0 0
        %4042 = vmatmul.mubr.bf16.gmra.mrb[0].mxu0 %v3962
        %v4043 = vpop.f32.mrb[0].mxu0
        %v4044 = vadd.f32 0.0, %v4043
        %v4045 = vpop.f32.mrb[0].mxu0
        %v4046 = vpop.f32.mrb[0].mxu0
        %v4047 = vadd.f32 0.0, %v4046
        %v4048 = vpop.f32.mrb[0].mxu0
        %4049 = vmatprep.mubr.bf16.mxu0 0
        %4050 = vmatmul.mubr.bf16.gmra.mrb[0].mxu0 %v3965
        %v4051 = vpop.f32.mrb[0].mxu0
        %v4052 = vadd.f32 0.0, %v4051
        %v4053 = vpop.f32.mrb[0].mxu0
        %v4054 = vpop.f32.mrb[0].mxu0
        %v4055 = vadd.f32 0.0, %v4054
        %v4056 = vpop.f32.mrb[0].mxu0
        %4057 = vmatprep.mubr.bf16.mxu0 0
        %4058 = vmatmul.mubr.bf16.gmra.mrb[0].mxu0 %v3968
        %v4059 = vpop.f32.mrb[0].mxu0
        %v4060 = vadd.f32 0.0, %v4059
        %v4061 = vpop.f32.mrb[0].mxu0
        %v4062 = vpop.f32.mrb[0].mxu0
        %v4063 = vadd.f32 0.0, %v4062
        %v4064 = vpop.f32.mrb[0].mxu0
        %4065 = vmatprep.mubr.bf16.mxu0 0
        %4066 = vmatmul.mubr.bf16.gmra.mrb[0].mxu0 %v3971
        %v4067 = vpop.f32.mrb[0].mxu0
        %v4068 = vadd.f32 0.0, %v4067
        %v4069 = vpop.f32.mrb[0].mxu0
        %v4070 = vpop.f32.mrb[0].mxu0
        %v4071 = vadd.f32 0.0, %v4070
        %v4072 = vpop.f32.mrb[0].mxu0
        %4073 = vmatprep.mubr.bf16.mxu0 0
        %4074 = vmatmul.mubr.bf16.gmra.mrb[0].mxu0 %v3974
        %v4075 = vpop.f32.mrb[0].mxu0
        %v4076 = vadd.f32 0.0, %v4075
        %v4077 = vpop.f32.mrb[0].mxu0
        %v4078 = vpop.f32.mrb[0].mxu0
        %v4079 = vadd.f32 0.0, %v4078
        %v4080 = vpop.f32.mrb[0].mxu0
        %4081 = vmatprep.mubr.bf16.mxu0 0
        %4082 = vmatmul.mubr.bf16.gmra.mrb[0].mxu0 %v3977
        %v4083 = vpop.f32.mrb[0].mxu0
        %v4084 = vadd.f32 0.0, %v4083
        %v4085 = vpop.f32.mrb[0].mxu0
        %v4086 = vpop.f32.mrb[0].mxu0
        %v4087 = vadd.f32 0.0, %v4086
        %v4088 = vpop.f32.mrb[0].mxu0
        %4089 = vmatprep.mubr.bf16.mxu0 0
        %4090 = vmatmul.mubr.bf16.gmra.mrb[0].mxu0 %v3980
        %v4091 = vpop.f32.mrb[0].mxu0
        %v4092 = vadd.f32 0.0, %v4091
        %v4093 = vpop.f32.mrb[0].mxu0
        %v4094 = vpop.f32.mrb[0].mxu0
        %v4095 = vadd.f32 0.0, %v4094
        %v4096 = vpop.f32.mrb[0].mxu0
        %4097 = vmatprep.mubr.bf16.mxu0 0
        %4098 = vmatmul.mubr.bf16.gmra.mrb[0].mxu0 %v3983
        %v4099 = vpop.f32.mrb[0].mxu0
        %v4100 = vadd.f32 0.0, %v4099
        %v4101 = vpop.f32.mrb[0].mxu0
        %v4102 = vpop.f32.mrb[0].mxu0
        %v4103 = vadd.f32 0.0, %v4102
        %v4104 = vpop.f32.mrb[0].mxu0
        %4105 = vmatprep.mubr.bf16.mxu0 0
        %4106 = vmatmul.mubr.bf16.gmra.mrb[0].mxu0 %v3986
        %v4107 = vpop.f32.mrb[0].mxu0
        %v4108 = vadd.f32 0.0, %v4107
        %v4109 = vpop.f32.mrb[0].mxu0
        %v4110 = vpop.f32.mrb[0].mxu0
        %v4111 = vadd.f32 0.0, %v4110
        %v4112 = vpop.f32.mrb[0].mxu0
        %4113 = vmatprep.mubr.bf16.mxu0 0
        %4114 = vmatmul.mubr.bf16.gmra.mrb[0].mxu0 %v3989
        %v4115 = vpop.f32.mrb[0].mxu0
        %v4116 = vadd.f32 0.0, %v4115
        %v4117 = vpop.f32.mrb[0].mxu0
        %v4118 = vpop.f32.mrb[0].mxu0
        %v4119 = vadd.f32 0.0, %v4118
        %v4120 = vpop.f32.mrb[0].mxu0
        %4121 = vmatprep.mubr.bf16.mxu0 0
        %4122 = vmatmul.mubr.bf16.gmra.mrb[0].mxu0 %v3992
        %v4123 = vpop.f32.mrb[0].mxu0
        %v4124 = vadd.f32 0.0, %v4123
        %v4125 = vpop.f32.mrb[0].mxu0
        %v4126 = vpop.f32.mrb[0].mxu0
        %v4127 = vadd.f32 0.0, %v4126
        %v4128 = vpop.f32.mrb[0].mxu0
        %4129 = vmatprep.mubr.bf16.mxu0 0
        %4130 = vmatmul.mubr.bf16.gmra.mrb[0].mxu0 %v3995
        %v4131 = vpop.f32.mrb[0].mxu0
        %v4132 = vadd.f32 0.0, %v4131
        %v4133 = vpop.f32.mrb[0].mxu0
        %v4134 = vpop.f32.mrb[0].mxu0
        %v4135 = vadd.f32 0.0, %v4134
        %v4136 = vpop.f32.mrb[0].mxu0
        %4137 = vmatprep.mubr.bf16.mxu0 0
        %4138 = vmatmul.mubr.bf16.gmra.mrb[0].mxu0 %v3998
        %v4139 = vpop.f32.mrb[0].mxu0
        %v4140 = vadd.f32 0.0, %v4139
        %v4141 = vpop.f32.mrb[0].mxu0
        %v4142 = vpop.f32.mrb[0].mxu0
        %v4143 = vadd.f32 0.0, %v4142
        %v4144 = vpop.f32.mrb[0].mxu0
        %4145 = vmatprep.mubr.bf16.mxu0 0
        %4146 = vmatmul.mubr.bf16.gmra.mrb[0].mxu0 %v4001
        %v4147 = vpop.f32.mrb[0].mxu0
        %v4148 = vadd.f32 0.0, %v4147
        %v4149 = vpop.f32.mrb[0].mxu0
        %v4150 = vpop.f32.mrb[0].mxu0
        %v4151 = vadd.f32 0.0, %v4150
        %v4152 = vpop.f32.mrb[0].mxu0
        %4153 = vmatprep.mubr.bf16.mxu0 0
        %4154 = vmatmul.mubr.bf16.gmra.mrb[0].mxu0 %v4004
        %v4155 = vpop.f32.mrb[0].mxu0
        %v4156 = vadd.f32 0.0, %v4155
        %v4157 = vpop.f32.mrb[0].mxu0
        %v4158 = vpop.f32.mrb[0].mxu0
        %v4159 = vadd.f32 0.0, %v4158
        %v4160 = vpop.f32.mrb[0].mxu0
        %4161 = vmatprep.mubr.bf16.mxu0 0
        %4162 = vmatmul.mubr.bf16.gmra.mrb[0].mxu0 %v4007
        %v4163 = vpop.f32.mrb[0].mxu0
        %v4164 = vadd.f32 0.0, %v4163
        %v4165 = vpop.f32.mrb[0].mxu0
        %v4166 = vpop.f32.mrb[0].mxu0
        %v4167 = vadd.f32 0.0, %v4166
        %v4168 = vpop.f32.mrb[0].mxu0
        %4169 = vdwg.mxu0
        %v4170 = vadd.f32 %v3770, %v4044
        %v4171 = vadd.f32 %v3773, %v4047
        %v4172 = vadd.f32 %v3778, %v4052
        %v4173 = vadd.f32 %v3781, %v4055
        %v4174 = vadd.f32 %v3786, %v4060
        %v4175 = vadd.f32 %v3789, %v4063
        %v4176 = vadd.f32 %v3794, %v4068
        %v4177 = vadd.f32 %v3797, %v4071
        %v4178 = vadd.f32 %v3802, %v4076
        %v4179 = vadd.f32 %v3805, %v4079
        %v4180 = vadd.f32 %v3810, %v4084
        %v4181 = vadd.f32 %v3813, %v4087
        %v4182 = vadd.f32 %v3818, %v4092
        %v4183 = vadd.f32 %v3821, %v4095
        %v4184 = vadd.f32 %v3826, %v4100
        %v4185 = vadd.f32 %v3829, %v4103
        %v4186 = vadd.f32 %v3834, %v4108
        %v4187 = vadd.f32 %v3837, %v4111
        %v4188 = vadd.f32 %v3842, %v4116
        %v4189 = vadd.f32 %v3845, %v4119
        %v4190 = vadd.f32 %v3850, %v4124
        %v4191 = vadd.f32 %v3853, %v4127
        %v4192 = vadd.f32 %v3858, %v4132
        %v4193 = vadd.f32 %v3861, %v4135
        %v4194 = vadd.f32 %v3866, %v4140
        %v4195 = vadd.f32 %v3869, %v4143
        %v4196 = vadd.f32 %v3874, %v4148
        %v4197 = vadd.f32 %v3877, %v4151
        %v4198 = vadd.f32 %v3882, %v4156
        %v4199 = vadd.f32 %v3885, %v4159
        %v4200 = vadd.f32 %v3890, %v4164
        %v4201 = vadd.f32 %v3893, %v4167
        %v4202 = vld [vmem:[%s3316] sm:$0xff]
        %v4203 = vld [vmem:[%s3316 + $0x8] sm:$0xff]
        %v4204 = vld [vmem:[%s3316 + $0x18] sm:$0xff]
        %v4205 = vld [vmem:[%s3316 + $0x20] sm:$0xff]
        %v4206 = vld [vmem:[%s3316 + $0x30] sm:$0xff]
        %v4207 = vld [vmem:[%s3316 + $0x38] sm:$0xff]
        %v4208 = vld [vmem:[%s3316 + $0x48] sm:$0xff]
        %v4209 = vld [vmem:[%s3316 + $0x50] sm:$0xff]
        %v4210 = vld [vmem:[%s3316 + $0x60] sm:$0xff]
        %v4211 = vld [vmem:[%s3316 + $0x68] sm:$0xff]
        %v4212 = vld [vmem:[%s3316 + $0x78] sm:$0xff]
        %v4213 = vld [vmem:[%s3316 + $0x80] sm:$0xff]
        %v4214 = vld [vmem:[%s3316 + $0x90] sm:$0xff]
        %v4215 = vld [vmem:[%s3316 + $0x98] sm:$0xff]
        %v4216 = vld [vmem:[%s3316 + $0xa8] sm:$0xff]
        %v4217 = vld [vmem:[%s3316 + $0xb0] sm:$0xff]
        %v4218 = vld [vmem:[%s3316 + $0xc0] sm:$0xff]
        %v4219 = vld [vmem:[%s3316 + $0xc8] sm:$0xff]
        %v4220 = vld [vmem:[%s3316 + $0xd8] sm:$0xff]
        %v4221 = vld [vmem:[%s3316 + $0xe0] sm:$0xff]
        %v4222 = vld [vmem:[%s3316 + $0xf0] sm:$0xff]
        %v4223 = vld [vmem:[%s3316 + $0xf8] sm:$0xff]
        %v4224 = vld [vmem:[%s3316 + $0x108] sm:$0xff]
        %v4225 = vld [vmem:[%s3316 + $0x110] sm:$0xff]
        %v4226 = vld [vmem:[%s3316 + $0x120] sm:$0xff]
        %v4227 = vld [vmem:[%s3316 + $0x128] sm:$0xff]
        %v4228 = vld [vmem:[%s3316 + $0x138] sm:$0xff]
        %v4229 = vld [vmem:[%s3316 + $0x140] sm:$0xff]
        %v4230 = vld [vmem:[%s3316 + $0x150] sm:$0xff]
        %v4231 = vld [vmem:[%s3316 + $0x158] sm:$0xff]
        %v4232 = vld [vmem:[%s3316 + $0x168] sm:$0xff]
        %v4233 = vld [vmem:[%s3316 + $0x170] sm:$0xff]
        %v4234 = vpack.c.bf16 %v4203, %v4202
        %v4235 = vpack.c.bf16 %v4205, %v4204
        %v4236 = vpack.c.bf16 %v4207, %v4206
        %v4237 = vpack.c.bf16 %v4209, %v4208
        %v4238 = vpack.c.bf16 %v4211, %v4210
        %v4239 = vpack.c.bf16 %v4213, %v4212
        %v4240 = vpack.c.bf16 %v4215, %v4214
        %v4241 = vpack.c.bf16 %v4217, %v4216
        %v4242 = vpack.c.bf16 %v4219, %v4218
        %v4243 = vpack.c.bf16 %v4221, %v4220
        %v4244 = vpack.c.bf16 %v4223, %v4222
        %v4245 = vpack.c.bf16 %v4225, %v4224
        %v4246 = vpack.c.bf16 %v4227, %v4226
        %v4247 = vpack.c.bf16 %v4229, %v4228
        %v4248 = vpack.c.bf16 %v4231, %v4230
        %v4249 = vpack.c.bf16 %v4233, %v4232
        %s4250 = scalar_lea.vmem [#allocation12], 48
        %v4251 = vld [vmem:[%s4250] sm:$0xf]
        %v4252 = vld [vmem:[%s4250 + $0x4] sm:$0xf]
        %v4253 = vld [vmem:[%s4250 + $0x8] sm:$0xf]
        %v4254 = vld [vmem:[%s4250 + $0xc] sm:$0xf]
        %v4259 = vunpack.c.l.b16 %v4251
        %v4260 = vunpack.c.l.b16 %v4252
        %v4261 = vunpack.c.l.b16 %v4253
        %v4262 = vunpack.c.l.b16 %v4254
        %v4263 = vpack.c.b16 %v4260, %v4259
        %v4264 = vpack.c.b16 %v4262, %v4261
        %v4268 = vsel %vm3260, %v4234, 0
        %v4271 = vsel %vm3260, %v4235, 0
        %v4274 = vsel %vm3260, %v4236, 0
        %v4277 = vsel %vm3260, %v4237, 0
        %v4280 = vsel %vm3260, %v4238, 0
        %v4283 = vsel %vm3260, %v4239, 0
        %v4286 = vsel %vm3260, %v4240, 0
        %v4289 = vsel %vm3260, %v4241, 0
        %v4292 = vsel %vm3260, %v4242, 0
        %v4295 = vsel %vm3260, %v4243, 0
        %v4298 = vsel %vm3260, %v4244, 0
        %v4301 = vsel %vm3260, %v4245, 0
        %v4304 = vsel %vm3260, %v4246, 0
        %v4307 = vsel %vm3260, %v4247, 0
        %v4310 = vsel %vm3260, %v4248, 0
        %v4313 = vsel %vm3260, %v4249, 0
        %4315 = vmatprep.subr.bf16.mxu0 0
        %4316 = vmatpush1.bf16.msra.mxu0 %v4263
        %4317 = vmatprep.subr.bf16.mxu0 0
        %4318 = vmatpush1.bf16.msra.mxu0 %v4264
        %4319 = vmatprep.subr.bf16.mxu0 0
        %4320 = vmatpush1.bf16.msra.mxu0 0
        %4321 = vmatprep.subr.bf16.mxu0 0
        %4322 = vmatpush1.bf16.msra.mxu0 0
        %4323 = vmatprep.subr.bf16.mxu0 0
        %4324 = vmatpush1.bf16.msra.mxu0 0
        %4325 = vmatprep.subr.bf16.mxu0 0
        %4326 = vmatpush1.bf16.msra.mxu0 0
        %4327 = vmatprep.subr.bf16.mxu0 0
        %4328 = vmatpush1.bf16.msra.mxu0 0
        %4329 = vmatprep.subr.bf16.mxu0 0
        %4330 = vmatpush1.bf16.msra.mxu0 0
        %4331 = vmatprep.subr.bf16.mxu0 0
        %4332 = vmatpush1.bf16.msra.mxu0 0
        %4333 = vmatprep.subr.bf16.mxu0 0
        %4334 = vmatpush1.bf16.msra.mxu0 0
        %4335 = vmatprep.subr.bf16.mxu0 0
        %4336 = vmatpush1.bf16.msra.mxu0 0
        %4337 = vmatprep.subr.bf16.mxu0 0
        %4338 = vmatpush1.bf16.msra.mxu0 0
        %4339 = vmatprep.subr.bf16.mxu0 0
        %4340 = vmatpush1.bf16.msra.mxu0 0
        %4341 = vmatprep.subr.bf16.mxu0 0
        %4342 = vmatpush1.bf16.msra.mxu0 0
        %4343 = vmatprep.subr.bf16.mxu0 0
        %4344 = vmatpush1.bf16.msra.mxu0 0
        %4345 = vmatprep.subr.bf16.mxu0 0
        %4346 = vmatpush1.bf16.msra.mxu0 0
        %4347 = vmatprep.mubr.bf16.mxu0 0
        %4348 = vmatmul.mubr.bf16.gmra.mrb[0].mxu0 %v4268
        %v4349 = vpop.f32.mrb[0].mxu0
        %v4350 = vadd.f32 0.0, %v4349
        %v4351 = vpop.f32.mrb[0].mxu0
        %v4352 = vpop.f32.mrb[0].mxu0
        %v4353 = vadd.f32 0.0, %v4352
        %v4354 = vpop.f32.mrb[0].mxu0
        %4355 = vmatprep.mubr.bf16.mxu0 0
        %4356 = vmatmul.mubr.bf16.gmra.mrb[0].mxu0 %v4271
        %v4357 = vpop.f32.mrb[0].mxu0
        %v4358 = vadd.f32 0.0, %v4357
        %v4359 = vpop.f32.mrb[0].mxu0
        %v4360 = vpop.f32.mrb[0].mxu0
        %v4361 = vadd.f32 0.0, %v4360
        %v4362 = vpop.f32.mrb[0].mxu0
        %4363 = vmatprep.mubr.bf16.mxu0 0
        %4364 = vmatmul.mubr.bf16.gmra.mrb[0].mxu0 %v4274
        %v4365 = vpop.f32.mrb[0].mxu0
        %v4366 = vadd.f32 0.0, %v4365
        %v4367 = vpop.f32.mrb[0].mxu0
        %v4368 = vpop.f32.mrb[0].mxu0
        %v4369 = vadd.f32 0.0, %v4368
        %v4370 = vpop.f32.mrb[0].mxu0
        %4371 = vmatprep.mubr.bf16.mxu0 0
        %4372 = vmatmul.mubr.bf16.gmra.mrb[0].mxu0 %v4277
        %v4373 = vpop.f32.mrb[0].mxu0
        %v4374 = vadd.f32 0.0, %v4373
        %v4375 = vpop.f32.mrb[0].mxu0
        %v4376 = vpop.f32.mrb[0].mxu0
        %v4377 = vadd.f32 0.0, %v4376
        %v4378 = vpop.f32.mrb[0].mxu0
        %4379 = vmatprep.mubr.bf16.mxu0 0
        %4380 = vmatmul.mubr.bf16.gmra.mrb[0].mxu0 %v4280
        %v4381 = vpop.f32.mrb[0].mxu0
        %v4382 = vadd.f32 0.0, %v4381
        %v4383 = vpop.f32.mrb[0].mxu0
        %v4384 = vpop.f32.mrb[0].mxu0
        %v4385 = vadd.f32 0.0, %v4384
        %v4386 = vpop.f32.mrb[0].mxu0
        %4387 = vmatprep.mubr.bf16.mxu0 0
        %4388 = vmatmul.mubr.bf16.gmra.mrb[0].mxu0 %v4283
        %v4389 = vpop.f32.mrb[0].mxu0
        %v4390 = vadd.f32 0.0, %v4389
        %v4391 = vpop.f32.mrb[0].mxu0
        %v4392 = vpop.f32.mrb[0].mxu0
        %v4393 = vadd.f32 0.0, %v4392
        %v4394 = vpop.f32.mrb[0].mxu0
        %4395 = vmatprep.mubr.bf16.mxu0 0
        %4396 = vmatmul.mubr.bf16.gmra.mrb[0].mxu0 %v4286
        %v4397 = vpop.f32.mrb[0].mxu0
        %v4398 = vadd.f32 0.0, %v4397
        %v4399 = vpop.f32.mrb[0].mxu0
        %v4400 = vpop.f32.mrb[0].mxu0
        %v4401 = vadd.f32 0.0, %v4400
        %v4402 = vpop.f32.mrb[0].mxu0
        %4403 = vmatprep.mubr.bf16.mxu0 0
        %4404 = vmatmul.mubr.bf16.gmra.mrb[0].mxu0 %v4289
        %v4405 = vpop.f32.mrb[0].mxu0
        %v4406 = vadd.f32 0.0, %v4405
        %v4407 = vpop.f32.mrb[0].mxu0
        %v4408 = vpop.f32.mrb[0].mxu0
        %v4409 = vadd.f32 0.0, %v4408
        %v4410 = vpop.f32.mrb[0].mxu0
        %4411 = vmatprep.mubr.bf16.mxu0 0
        %4412 = vmatmul.mubr.bf16.gmra.mrb[0].mxu0 %v4292
        %v4413 = vpop.f32.mrb[0].mxu0
        %v4414 = vadd.f32 0.0, %v4413
        %v4415 = vpop.f32.mrb[0].mxu0
        %v4416 = vpop.f32.mrb[0].mxu0
        %v4417 = vadd.f32 0.0, %v4416
        %v4418 = vpop.f32.mrb[0].mxu0
        %4419 = vmatprep.mubr.bf16.mxu0 0
        %4420 = vmatmul.mubr.bf16.gmra.mrb[0].mxu0 %v4295
        %v4421 = vpop.f32.mrb[0].mxu0
        %v4422 = vadd.f32 0.0, %v4421
        %v4423 = vpop.f32.mrb[0].mxu0
        %v4424 = vpop.f32.mrb[0].mxu0
        %v4425 = vadd.f32 0.0, %v4424
        %v4426 = vpop.f32.mrb[0].mxu0
        %4427 = vmatprep.mubr.bf16.mxu0 0
        %4428 = vmatmul.mubr.bf16.gmra.mrb[0].mxu0 %v4298
        %v4429 = vpop.f32.mrb[0].mxu0
        %v4430 = vadd.f32 0.0, %v4429
        %v4431 = vpop.f32.mrb[0].mxu0
        %v4432 = vpop.f32.mrb[0].mxu0
        %v4433 = vadd.f32 0.0, %v4432
        %v4434 = vpop.f32.mrb[0].mxu0
        %4435 = vmatprep.mubr.bf16.mxu0 0
        %4436 = vmatmul.mubr.bf16.gmra.mrb[0].mxu0 %v4301
        %v4437 = vpop.f32.mrb[0].mxu0
        %v4438 = vadd.f32 0.0, %v4437
        %v4439 = vpop.f32.mrb[0].mxu0
        %v4440 = vpop.f32.mrb[0].mxu0
        %v4441 = vadd.f32 0.0, %v4440
        %v4442 = vpop.f32.mrb[0].mxu0
        %4443 = vmatprep.mubr.bf16.mxu0 0
        %4444 = vmatmul.mubr.bf16.gmra.mrb[0].mxu0 %v4304
        %v4445 = vpop.f32.mrb[0].mxu0
        %v4446 = vadd.f32 0.0, %v4445
        %v4447 = vpop.f32.mrb[0].mxu0
        %v4448 = vpop.f32.mrb[0].mxu0
        %v4449 = vadd.f32 0.0, %v4448
        %v4450 = vpop.f32.mrb[0].mxu0
        %4451 = vmatprep.mubr.bf16.mxu0 0
        %4452 = vmatmul.mubr.bf16.gmra.mrb[0].mxu0 %v4307
        %v4453 = vpop.f32.mrb[0].mxu0
        %v4454 = vadd.f32 0.0, %v4453
        %v4455 = vpop.f32.mrb[0].mxu0
        %v4456 = vpop.f32.mrb[0].mxu0
        %v4457 = vadd.f32 0.0, %v4456
        %v4458 = vpop.f32.mrb[0].mxu0
        %4459 = vmatprep.mubr.bf16.mxu0 0
        %4460 = vmatmul.mubr.bf16.gmra.mrb[0].mxu0 %v4310
        %v4461 = vpop.f32.mrb[0].mxu0
        %v4462 = vadd.f32 0.0, %v4461
        %v4463 = vpop.f32.mrb[0].mxu0
        %v4464 = vpop.f32.mrb[0].mxu0
        %v4465 = vadd.f32 0.0, %v4464
        %v4466 = vpop.f32.mrb[0].mxu0
        %4467 = vmatprep.mubr.bf16.mxu0 0
        %4468 = vmatmul.mubr.bf16.gmra.mrb[0].mxu0 %v4313
        %v4469 = vpop.f32.mrb[0].mxu0
        %v4470 = vadd.f32 0.0, %v4469
        %v4471 = vpop.f32.mrb[0].mxu0
        %v4472 = vpop.f32.mrb[0].mxu0
        %v4473 = vadd.f32 0.0, %v4472
        %v4474 = vpop.f32.mrb[0].mxu0
        %4475 = vdwg.mxu0
        %v4476 = vadd.f32 %v4170, %v4350
        %v4477 = vadd.f32 %v4171, %v4353
        %v4478 = vadd.f32 %v4172, %v4358
        %v4479 = vadd.f32 %v4173, %v4361
        %v4480 = vadd.f32 %v4174, %v4366
        %v4481 = vadd.f32 %v4175, %v4369
        %v4482 = vadd.f32 %v4176, %v4374
        %v4483 = vadd.f32 %v4177, %v4377
        %v4484 = vadd.f32 %v4178, %v4382
        %v4485 = vadd.f32 %v4179, %v4385
        %v4486 = vadd.f32 %v4180, %v4390
        %v4487 = vadd.f32 %v4181, %v4393
        %v4488 = vadd.f32 %v4182, %v4398
        %v4489 = vadd.f32 %v4183, %v4401
        %v4490 = vadd.f32 %v4184, %v4406
        %v4491 = vadd.f32 %v4185, %v4409
        %v4492 = vadd.f32 %v4186, %v4414
        %v4493 = vadd.f32 %v4187, %v4417
        %v4494 = vadd.f32 %v4188, %v4422
        %v4495 = vadd.f32 %v4189, %v4425
        %v4496 = vadd.f32 %v4190, %v4430
        %v4497 = vadd.f32 %v4191, %v4433
        %v4498 = vadd.f32 %v4192, %v4438
        %v4499 = vadd.f32 %v4193, %v4441
        %v4500 = vadd.f32 %v4194, %v4446
        %v4501 = vadd.f32 %v4195, %v4449
        %v4502 = vadd.f32 %v4196, %v4454
        %v4503 = vadd.f32 %v4197, %v4457
        %v4504 = vadd.f32 %v4198, %v4462
        %v4505 = vadd.f32 %v4199, %v4465
        %v4506 = vadd.f32 %v4200, %v4470
        %v4507 = vadd.f32 %v4201, %v4473
        %v4508 = vld [vmem:[%s3316 + $0x1] sm:$0xff]
        %v4509 = vld [vmem:[%s3316 + $0x9] sm:$0xff]
        %v4510 = vld [vmem:[%s3316 + $0x19] sm:$0xff]
        %v4511 = vld [vmem:[%s3316 + $0x21] sm:$0xff]
        %v4512 = vld [vmem:[%s3316 + $0x31] sm:$0xff]
        %v4513 = vld [vmem:[%s3316 + $0x39] sm:$0xff]
        %v4514 = vld [vmem:[%s3316 + $0x49] sm:$0xff]
        %v4515 = vld [vmem:[%s3316 + $0x51] sm:$0xff]
        %v4516 = vld [vmem:[%s3316 + $0x61] sm:$0xff]
        %v4517 = vld [vmem:[%s3316 + $0x69] sm:$0xff]
        %v4518 = vld [vmem:[%s3316 + $0x79] sm:$0xff]
        %v4519 = vld [vmem:[%s3316 + $0x81] sm:$0xff]
        %v4520 = vld [vmem:[%s3316 + $0x91] sm:$0xff]
        %v4521 = vld [vmem:[%s3316 + $0x99] sm:$0xff]
        %v4522 = vld [vmem:[%s3316 + $0xa9] sm:$0xff]
        %v4523 = vld [vmem:[%s3316 + $0xb1] sm:$0xff]
        %v4524 = vld [vmem:[%s3316 + $0xc1] sm:$0xff]
        %v4525 = vld [vmem:[%s3316 + $0xc9] sm:$0xff]
        %v4526 = vld [vmem:[%s3316 + $0xd9] sm:$0xff]
        %v4527 = vld [vmem:[%s3316 + $0xe1] sm:$0xff]
        %v4528 = vld [vmem:[%s3316 + $0xf1] sm:$0xff]
        %v4529 = vld [vmem:[%s3316 + $0xf9] sm:$0xff]
        %v4530 = vld [vmem:[%s3316 + $0x109] sm:$0xff]
        %v4531 = vld [vmem:[%s3316 + $0x111] sm:$0xff]
        %v4532 = vld [vmem:[%s3316 + $0x121] sm:$0xff]
        %v4533 = vld [vmem:[%s3316 + $0x129] sm:$0xff]
        %v4534 = vld [vmem:[%s3316 + $0x139] sm:$0xff]
        %v4535 = vld [vmem:[%s3316 + $0x141] sm:$0xff]
        %v4536 = vld [vmem:[%s3316 + $0x151] sm:$0xff]
        %v4537 = vld [vmem:[%s3316 + $0x159] sm:$0xff]
        %v4538 = vld [vmem:[%s3316 + $0x169] sm:$0xff]
        %v4539 = vld [vmem:[%s3316 + $0x171] sm:$0xff]
        %v4540 = vpack.c.bf16 %v4509, %v4508
        %v4541 = vpack.c.bf16 %v4511, %v4510
        %v4542 = vpack.c.bf16 %v4513, %v4512
        %v4543 = vpack.c.bf16 %v4515, %v4514
        %v4544 = vpack.c.bf16 %v4517, %v4516
        %v4545 = vpack.c.bf16 %v4519, %v4518
        %v4546 = vpack.c.bf16 %v4521, %v4520
        %v4547 = vpack.c.bf16 %v4523, %v4522
        %v4548 = vpack.c.bf16 %v4525, %v4524
        %v4549 = vpack.c.bf16 %v4527, %v4526
        %v4550 = vpack.c.bf16 %v4529, %v4528
        %v4551 = vpack.c.bf16 %v4531, %v4530
        %v4552 = vpack.c.bf16 %v4533, %v4532
        %v4553 = vpack.c.bf16 %v4535, %v4534
        %v4554 = vpack.c.bf16 %v4537, %v4536
        %v4555 = vpack.c.bf16 %v4539, %v4538
        %s4556 = scalar_lea.vmem [#allocation12], 64
        %v4557 = vld [vmem:[%s4556] sm:$0xf]
        %v4558 = vld [vmem:[%s4556 + $0x4] sm:$0xf]
        %v4559 = vld [vmem:[%s4556 + $0x8] sm:$0xf]
        %v4560 = vld [vmem:[%s4556 + $0xc] sm:$0xf]
        %v4565 = vunpack.c.l.b16 %v4557
        %v4566 = vunpack.c.l.b16 %v4558
        %v4567 = vunpack.c.l.b16 %v4559
        %v4568 = vunpack.c.l.b16 %v4560
        %v4569 = vpack.c.b16 %v4566, %v4565
        %v4570 = vpack.c.b16 %v4568, %v4567
        %v4574 = vsel %vm3260, %v4540, 0
        %v4577 = vsel %vm3260, %v4541, 0
        %v4580 = vsel %vm3260, %v4542, 0
        %v4583 = vsel %vm3260, %v4543, 0
        %v4586 = vsel %vm3260, %v4544, 0
        %v4589 = vsel %vm3260, %v4545, 0
        %v4592 = vsel %vm3260, %v4546, 0
        %v4595 = vsel %vm3260, %v4547, 0
        %v4598 = vsel %vm3260, %v4548, 0
        %v4601 = vsel %vm3260, %v4549, 0
        %v4604 = vsel %vm3260, %v4550, 0
        %v4607 = vsel %vm3260, %v4551, 0
        %v4610 = vsel %vm3260, %v4552, 0
        %v4613 = vsel %vm3260, %v4553, 0
        %v4616 = vsel %vm3260, %v4554, 0
        %v4619 = vsel %vm3260, %v4555, 0
        %4621 = vmatprep.subr.bf16.mxu0 0
        %4622 = vmatpush1.bf16.msra.mxu0 %v4569
        %4623 = vmatprep.subr.bf16.mxu0 0
        %4624 = vmatpush1.bf16.msra.mxu0 %v4570
        %4625 = vmatprep.subr.bf16.mxu0 0
        %4626 = vmatpush1.bf16.msra.mxu0 0
        %4627 = vmatprep.subr.bf16.mxu0 0
        %4628 = vmatpush1.bf16.msra.mxu0 0
        %4629 = vmatprep.subr.bf16.mxu0 0
        %4630 = vmatpush1.bf16.msra.mxu0 0
        %4631 = vmatprep.subr.bf16.mxu0 0
        %4632 = vmatpush1.bf16.msra.mxu0 0
        %4633 = vmatprep.subr.bf16.mxu0 0
        %4634 = vmatpush1.bf16.msra.mxu0 0
        %4635 = vmatprep.subr.bf16.mxu0 0
        %4636 = vmatpush1.bf16.msra.mxu0 0
        %4637 = vmatprep.subr.bf16.mxu0 0
        %4638 = vmatpush1.bf16.msra.mxu0 0
        %4639 = vmatprep.subr.bf16.mxu0 0
        %4640 = vmatpush1.bf16.msra.mxu0 0
        %4641 = vmatprep.subr.bf16.mxu0 0
        %4642 = vmatpush1.bf16.msra.mxu0 0
        %4643 = vmatprep.subr.bf16.mxu0 0
        %4644 = vmatpush1.bf16.msra.mxu0 0
        %4645 = vmatprep.subr.bf16.mxu0 0
        %4646 = vmatpush1.bf16.msra.mxu0 0
        %4647 = vmatprep.subr.bf16.mxu0 0
        %4648 = vmatpush1.bf16.msra.mxu0 0
        %4649 = vmatprep.subr.bf16.mxu0 0
        %4650 = vmatpush1.bf16.msra.mxu0 0
        %4651 = vmatprep.subr.bf16.mxu0 0
        %4652 = vmatpush1.bf16.msra.mxu0 0
        %4653 = vmatprep.mubr.bf16.mxu0 0
        %4654 = vmatmul.mubr.bf16.gmra.mrb[0].mxu0 %v4574
        %v4655 = vpop.f32.mrb[0].mxu0
        %v4656 = vadd.f32 0.0, %v4655
        %v4657 = vpop.f32.mrb[0].mxu0
        %v4658 = vpop.f32.mrb[0].mxu0
        %v4659 = vadd.f32 0.0, %v4658
        %v4660 = vpop.f32.mrb[0].mxu0
        %4661 = vmatprep.mubr.bf16.mxu0 0
        %4662 = vmatmul.mubr.bf16.gmra.mrb[0].mxu0 %v4577
        %v4663 = vpop.f32.mrb[0].mxu0
        %v4664 = vadd.f32 0.0, %v4663
        %v4665 = vpop.f32.mrb[0].mxu0
        %v4666 = vpop.f32.mrb[0].mxu0
        %v4667 = vadd.f32 0.0, %v4666
        %v4668 = vpop.f32.mrb[0].mxu0
        %4669 = vmatprep.mubr.bf16.mxu0 0
        %4670 = vmatmul.mubr.bf16.gmra.mrb[0].mxu0 %v4580
        %v4671 = vpop.f32.mrb[0].mxu0
        %v4672 = vadd.f32 0.0, %v4671
        %v4673 = vpop.f32.mrb[0].mxu0
        %v4674 = vpop.f32.mrb[0].mxu0
        %v4675 = vadd.f32 0.0, %v4674
        %v4676 = vpop.f32.mrb[0].mxu0
        %4677 = vmatprep.mubr.bf16.mxu0 0
        %4678 = vmatmul.mubr.bf16.gmra.mrb[0].mxu0 %v4583
        %v4679 = vpop.f32.mrb[0].mxu0
        %v4680 = vadd.f32 0.0, %v4679
        %v4681 = vpop.f32.mrb[0].mxu0
        %v4682 = vpop.f32.mrb[0].mxu0
        %v4683 = vadd.f32 0.0, %v4682
        %v4684 = vpop.f32.mrb[0].mxu0
        %4685 = vmatprep.mubr.bf16.mxu0 0
        %4686 = vmatmul.mubr.bf16.gmra.mrb[0].mxu0 %v4586
        %v4687 = vpop.f32.mrb[0].mxu0
        %v4688 = vadd.f32 0.0, %v4687
        %v4689 = vpop.f32.mrb[0].mxu0
        %v4690 = vpop.f32.mrb[0].mxu0
        %v4691 = vadd.f32 0.0, %v4690
        %v4692 = vpop.f32.mrb[0].mxu0
        %4693 = vmatprep.mubr.bf16.mxu0 0
        %4694 = vmatmul.mubr.bf16.gmra.mrb[0].mxu0 %v4589
        %v4695 = vpop.f32.mrb[0].mxu0
        %v4696 = vadd.f32 0.0, %v4695
        %v4697 = vpop.f32.mrb[0].mxu0
        %v4698 = vpop.f32.mrb[0].mxu0
        %v4699 = vadd.f32 0.0, %v4698
        %v4700 = vpop.f32.mrb[0].mxu0
        %4701 = vmatprep.mubr.bf16.mxu0 0
        %4702 = vmatmul.mubr.bf16.gmra.mrb[0].mxu0 %v4592
        %v4703 = vpop.f32.mrb[0].mxu0
        %v4704 = vadd.f32 0.0, %v4703
        %v4705 = vpop.f32.mrb[0].mxu0
        %v4706 = vpop.f32.mrb[0].mxu0
        %v4707 = vadd.f32 0.0, %v4706
        %v4708 = vpop.f32.mrb[0].mxu0
        %4709 = vmatprep.mubr.bf16.mxu0 0
        %4710 = vmatmul.mubr.bf16.gmra.mrb[0].mxu0 %v4595
        %v4711 = vpop.f32.mrb[0].mxu0
        %v4712 = vadd.f32 0.0, %v4711
        %v4713 = vpop.f32.mrb[0].mxu0
        %v4714 = vpop.f32.mrb[0].mxu0
        %v4715 = vadd.f32 0.0, %v4714
        %v4716 = vpop.f32.mrb[0].mxu0
        %4717 = vmatprep.mubr.bf16.mxu0 0
        %4718 = vmatmul.mubr.bf16.gmra.mrb[0].mxu0 %v4598
        %v4719 = vpop.f32.mrb[0].mxu0
        %v4720 = vadd.f32 0.0, %v4719
        %v4721 = vpop.f32.mrb[0].mxu0
        %v4722 = vpop.f32.mrb[0].mxu0
        %v4723 = vadd.f32 0.0, %v4722
        %v4724 = vpop.f32.mrb[0].mxu0
        %4725 = vmatprep.mubr.bf16.mxu0 0
        %4726 = vmatmul.mubr.bf16.gmra.mrb[0].mxu0 %v4601
        %v4727 = vpop.f32.mrb[0].mxu0
        %v4728 = vadd.f32 0.0, %v4727
        %v4729 = vpop.f32.mrb[0].mxu0
        %v4730 = vpop.f32.mrb[0].mxu0
        %v4731 = vadd.f32 0.0, %v4730
        %v4732 = vpop.f32.mrb[0].mxu0
        %4733 = vmatprep.mubr.bf16.mxu0 0
        %4734 = vmatmul.mubr.bf16.gmra.mrb[0].mxu0 %v4604
        %v4735 = vpop.f32.mrb[0].mxu0
        %v4736 = vadd.f32 0.0, %v4735
        %v4737 = vpop.f32.mrb[0].mxu0
        %v4738 = vpop.f32.mrb[0].mxu0
        %v4739 = vadd.f32 0.0, %v4738
        %v4740 = vpop.f32.mrb[0].mxu0
        %4741 = vmatprep.mubr.bf16.mxu0 0
        %4742 = vmatmul.mubr.bf16.gmra.mrb[0].mxu0 %v4607
        %v4743 = vpop.f32.mrb[0].mxu0
        %v4744 = vadd.f32 0.0, %v4743
        %v4745 = vpop.f32.mrb[0].mxu0
        %v4746 = vpop.f32.mrb[0].mxu0
        %v4747 = vadd.f32 0.0, %v4746
        %v4748 = vpop.f32.mrb[0].mxu0
        %4749 = vmatprep.mubr.bf16.mxu0 0
        %4750 = vmatmul.mubr.bf16.gmra.mrb[0].mxu0 %v4610
        %v4751 = vpop.f32.mrb[0].mxu0
        %v4752 = vadd.f32 0.0, %v4751
        %v4753 = vpop.f32.mrb[0].mxu0
        %v4754 = vpop.f32.mrb[0].mxu0
        %v4755 = vadd.f32 0.0, %v4754
        %v4756 = vpop.f32.mrb[0].mxu0
        %4757 = vmatprep.mubr.bf16.mxu0 0
        %4758 = vmatmul.mubr.bf16.gmra.mrb[0].mxu0 %v4613
        %v4759 = vpop.f32.mrb[0].mxu0
        %v4760 = vadd.f32 0.0, %v4759
        %v4761 = vpop.f32.mrb[0].mxu0
        %v4762 = vpop.f32.mrb[0].mxu0
        %v4763 = vadd.f32 0.0, %v4762
        %v4764 = vpop.f32.mrb[0].mxu0
        %4765 = vmatprep.mubr.bf16.mxu0 0
        %4766 = vmatmul.mubr.bf16.gmra.mrb[0].mxu0 %v4616
        %v4767 = vpop.f32.mrb[0].mxu0
        %v4768 = vadd.f32 0.0, %v4767
        %v4769 = vpop.f32.mrb[0].mxu0
        %v4770 = vpop.f32.mrb[0].mxu0
        %v4771 = vadd.f32 0.0, %v4770
        %v4772 = vpop.f32.mrb[0].mxu0
        %4773 = vmatprep.mubr.bf16.mxu0 0
        %4774 = vmatmul.mubr.bf16.gmra.mrb[0].mxu0 %v4619
        %v4775 = vpop.f32.mrb[0].mxu0
        %v4776 = vadd.f32 0.0, %v4775
        %v4777 = vpop.f32.mrb[0].mxu0
        %v4778 = vpop.f32.mrb[0].mxu0
        %v4779 = vadd.f32 0.0, %v4778
        %v4780 = vpop.f32.mrb[0].mxu0
        %4781 = vdwg.mxu0
        %v4782 = vadd.f32 %v4476, %v4656
        %v4783 = vadd.f32 %v4477, %v4659
        %v4784 = vadd.f32 %v4478, %v4664
        %v4785 = vadd.f32 %v4479, %v4667
        %v4786 = vadd.f32 %v4480, %v4672
        %v4787 = vadd.f32 %v4481, %v4675
        %v4788 = vadd.f32 %v4482, %v4680
        %v4789 = vadd.f32 %v4483, %v4683
        %v4790 = vadd.f32 %v4484, %v4688
        %v4791 = vadd.f32 %v4485, %v4691
        %v4792 = vadd.f32 %v4486, %v4696
        %v4793 = vadd.f32 %v4487, %v4699
        %v4794 = vadd.f32 %v4488, %v4704
        %v4795 = vadd.f32 %v4489, %v4707
        %v4796 = vadd.f32 %v4490, %v4712
        %v4797 = vadd.f32 %v4491, %v4715
        %v4798 = vadd.f32 %v4492, %v4720
        %v4799 = vadd.f32 %v4493, %v4723
        %v4800 = vadd.f32 %v4494, %v4728
        %v4801 = vadd.f32 %v4495, %v4731
        %v4802 = vadd.f32 %v4496, %v4736
        %v4803 = vadd.f32 %v4497, %v4739
        %v4804 = vadd.f32 %v4498, %v4744
        %v4805 = vadd.f32 %v4499, %v4747
        %v4806 = vadd.f32 %v4500, %v4752
        %v4807 = vadd.f32 %v4501, %v4755
        %v4808 = vadd.f32 %v4502, %v4760
        %v4809 = vadd.f32 %v4503, %v4763
        %v4810 = vadd.f32 %v4504, %v4768
        %v4811 = vadd.f32 %v4505, %v4771
        %v4812 = vadd.f32 %v4506, %v4776
        %v4813 = vadd.f32 %v4507, %v4779
        %v4814 = vld [vmem:[%s3316 + $0x2] sm:$0xff]
        %v4815 = vld [vmem:[%s3316 + $0xa] sm:$0xff]
        %v4816 = vld [vmem:[%s3316 + $0x1a] sm:$0xff]
        %v4817 = vld [vmem:[%s3316 + $0x22] sm:$0xff]
        %v4818 = vld [vmem:[%s3316 + $0x32] sm:$0xff]
        %v4819 = vld [vmem:[%s3316 + $0x3a] sm:$0xff]
        %v4820 = vld [vmem:[%s3316 + $0x4a] sm:$0xff]
        %v4821 = vld [vmem:[%s3316 + $0x52] sm:$0xff]
        %v4822 = vld [vmem:[%s3316 + $0x62] sm:$0xff]
        %v4823 = vld [vmem:[%s3316 + $0x6a] sm:$0xff]
        %v4824 = vld [vmem:[%s3316 + $0x7a] sm:$0xff]
        %v4825 = vld [vmem:[%s3316 + $0x82] sm:$0xff]
        %v4826 = vld [vmem:[%s3316 + $0x92] sm:$0xff]
        %v4827 = vld [vmem:[%s3316 + $0x9a] sm:$0xff]
        %v4828 = vld [vmem:[%s3316 + $0xaa] sm:$0xff]
        %v4829 = vld [vmem:[%s3316 + $0xb2] sm:$0xff]
        %v4830 = vld [vmem:[%s3316 + $0xc2] sm:$0xff]
        %v4831 = vld [vmem:[%s3316 + $0xca] sm:$0xff]
        %v4832 = vld [vmem:[%s3316 + $0xda] sm:$0xff]
        %v4833 = vld [vmem:[%s3316 + $0xe2] sm:$0xff]
        %v4834 = vld [vmem:[%s3316 + $0xf2] sm:$0xff]
        %v4835 = vld [vmem:[%s3316 + $0xfa] sm:$0xff]
        %v4836 = vld [vmem:[%s3316 + $0x10a] sm:$0xff]
        %v4837 = vld [vmem:[%s3316 + $0x112] sm:$0xff]
        %v4838 = vld [vmem:[%s3316 + $0x122] sm:$0xff]
        %v4839 = vld [vmem:[%s3316 + $0x12a] sm:$0xff]
        %v4840 = vld [vmem:[%s3316 + $0x13a] sm:$0xff]
        %v4841 = vld [vmem:[%s3316 + $0x142] sm:$0xff]
        %v4842 = vld [vmem:[%s3316 + $0x152] sm:$0xff]
        %v4843 = vld [vmem:[%s3316 + $0x15a] sm:$0xff]
        %v4844 = vld [vmem:[%s3316 + $0x16a] sm:$0xff]
        %v4845 = vld [vmem:[%s3316 + $0x172] sm:$0xff]
        %v4846 = vpack.c.bf16 %v4815, %v4814
        %v4847 = vpack.c.bf16 %v4817, %v4816
        %v4848 = vpack.c.bf16 %v4819, %v4818
        %v4849 = vpack.c.bf16 %v4821, %v4820
        %v4850 = vpack.c.bf16 %v4823, %v4822
        %v4851 = vpack.c.bf16 %v4825, %v4824
        %v4852 = vpack.c.bf16 %v4827, %v4826
        %v4853 = vpack.c.bf16 %v4829, %v4828
        %v4854 = vpack.c.bf16 %v4831, %v4830
        %v4855 = vpack.c.bf16 %v4833, %v4832
        %v4856 = vpack.c.bf16 %v4835, %v4834
        %v4857 = vpack.c.bf16 %v4837, %v4836
        %v4858 = vpack.c.bf16 %v4839, %v4838
        %v4859 = vpack.c.bf16 %v4841, %v4840
        %v4860 = vpack.c.bf16 %v4843, %v4842
        %v4861 = vpack.c.bf16 %v4845, %v4844
        %s4862 = scalar_lea.vmem [#allocation12], 80
        %v4863 = vld [vmem:[%s4862] sm:$0xf]
        %v4864 = vld [vmem:[%s4862 + $0x4] sm:$0xf]
        %v4865 = vld [vmem:[%s4862 + $0x8] sm:$0xf]
        %v4866 = vld [vmem:[%s4862 + $0xc] sm:$0xf]
        %v4871 = vunpack.c.l.b16 %v4863
        %v4872 = vunpack.c.l.b16 %v4864
        %v4873 = vunpack.c.l.b16 %v4865
        %v4874 = vunpack.c.l.b16 %v4866
        %v4875 = vpack.c.b16 %v4872, %v4871
        %v4876 = vpack.c.b16 %v4874, %v4873
        %v4880 = vsel %vm3260, %v4846, 0
        %v4883 = vsel %vm3260, %v4847, 0
        %v4886 = vsel %vm3260, %v4848, 0
        %v4889 = vsel %vm3260, %v4849, 0
        %v4892 = vsel %vm3260, %v4850, 0
        %v4895 = vsel %vm3260, %v4851, 0
        %v4898 = vsel %vm3260, %v4852, 0
        %v4901 = vsel %vm3260, %v4853, 0
        %v4904 = vsel %vm3260, %v4854, 0
        %v4907 = vsel %vm3260, %v4855, 0
        %v4910 = vsel %vm3260, %v4856, 0
        %v4913 = vsel %vm3260, %v4857, 0
        %v4916 = vsel %vm3260, %v4858, 0
        %v4919 = vsel %vm3260, %v4859, 0
        %v4922 = vsel %vm3260, %v4860, 0
        %v4925 = vsel %vm3260, %v4861, 0
        %4927 = vmatprep.subr.bf16.mxu0 0
        %4928 = vmatpush1.bf16.msra.mxu0 %v4875
        %4929 = vmatprep.subr.bf16.mxu0 0
        %4930 = vmatpush1.bf16.msra.mxu0 %v4876
        %4931 = vmatprep.subr.bf16.mxu0 0
        %4932 = vmatpush1.bf16.msra.mxu0 0
        %4933 = vmatprep.subr.bf16.mxu0 0
        %4934 = vmatpush1.bf16.msra.mxu0 0
        %4935 = vmatprep.subr.bf16.mxu0 0
        %4936 = vmatpush1.bf16.msra.mxu0 0
        %4937 = vmatprep.subr.bf16.mxu0 0
        %4938 = vmatpush1.bf16.msra.mxu0 0
        %4939 = vmatprep.subr.bf16.mxu0 0
        %4940 = vmatpush1.bf16.msra.mxu0 0
        %4941 = vmatprep.subr.bf16.mxu0 0
        %4942 = vmatpush1.bf16.msra.mxu0 0
        %4943 = vmatprep.subr.bf16.mxu0 0
        %4944 = vmatpush1.bf16.msra.mxu0 0
        %4945 = vmatprep.subr.bf16.mxu0 0
        %4946 = vmatpush1.bf16.msra.mxu0 0
        %4947 = vmatprep.subr.bf16.mxu0 0
        %4948 = vmatpush1.bf16.msra.mxu0 0
        %4949 = vmatprep.subr.bf16.mxu0 0
        %4950 = vmatpush1.bf16.msra.mxu0 0
        %4951 = vmatprep.subr.bf16.mxu0 0
        %4952 = vmatpush1.bf16.msra.mxu0 0
        %4953 = vmatprep.subr.bf16.mxu0 0
        %4954 = vmatpush1.bf16.msra.mxu0 0
        %4955 = vmatprep.subr.bf16.mxu0 0
        %4956 = vmatpush1.bf16.msra.mxu0 0
        %4957 = vmatprep.subr.bf16.mxu0 0
        %4958 = vmatpush1.bf16.msra.mxu0 0
        %4959 = vmatprep.mubr.bf16.mxu0 0
        %4960 = vmatmul.mubr.bf16.gmra.mrb[0].mxu0 %v4880
        %v4961 = vpop.f32.mrb[0].mxu0
        %v4962 = vadd.f32 0.0, %v4961
        %v4963 = vpop.f32.mrb[0].mxu0
        %v4964 = vpop.f32.mrb[0].mxu0
        %v4965 = vadd.f32 0.0, %v4964
        %v4966 = vpop.f32.mrb[0].mxu0
        %4967 = vmatprep.mubr.bf16.mxu0 0
        %4968 = vmatmul.mubr.bf16.gmra.mrb[0].mxu0 %v4883
        %v4969 = vpop.f32.mrb[0].mxu0
        %v4970 = vadd.f32 0.0, %v4969
        %v4971 = vpop.f32.mrb[0].mxu0
        %v4972 = vpop.f32.mrb[0].mxu0
        %v4973 = vadd.f32 0.0, %v4972
        %v4974 = vpop.f32.mrb[0].mxu0
        %4975 = vmatprep.mubr.bf16.mxu0 0
        %4976 = vmatmul.mubr.bf16.gmra.mrb[0].mxu0 %v4886
        %v4977 = vpop.f32.mrb[0].mxu0
        %v4978 = vadd.f32 0.0, %v4977
        %v4979 = vpop.f32.mrb[0].mxu0
        %v4980 = vpop.f32.mrb[0].mxu0
        %v4981 = vadd.f32 0.0, %v4980
        %v4982 = vpop.f32.mrb[0].mxu0
        %4983 = vmatprep.mubr.bf16.mxu0 0
        %4984 = vmatmul.mubr.bf16.gmra.mrb[0].mxu0 %v4889
        %v4985 = vpop.f32.mrb[0].mxu0
        %v4986 = vadd.f32 0.0, %v4985
        %v4987 = vpop.f32.mrb[0].mxu0
        %v4988 = vpop.f32.mrb[0].mxu0
        %v4989 = vadd.f32 0.0, %v4988
        %v4990 = vpop.f32.mrb[0].mxu0
        %4991 = vmatprep.mubr.bf16.mxu0 0
        %4992 = vmatmul.mubr.bf16.gmra.mrb[0].mxu0 %v4892
        %v4993 = vpop.f32.mrb[0].mxu0
        %v4994 = vadd.f32 0.0, %v4993
        %v4995 = vpop.f32.mrb[0].mxu0
        %v4996 = vpop.f32.mrb[0].mxu0
        %v4997 = vadd.f32 0.0, %v4996
        %v4998 = vpop.f32.mrb[0].mxu0
        %4999 = vmatprep.mubr.bf16.mxu0 0
        %5000 = vmatmul.mubr.bf16.gmra.mrb[0].mxu0 %v4895
        %v5001 = vpop.f32.mrb[0].mxu0
        %v5002 = vadd.f32 0.0, %v5001
        %v5003 = vpop.f32.mrb[0].mxu0
        %v5004 = vpop.f32.mrb[0].mxu0
        %v5005 = vadd.f32 0.0, %v5004
        %v5006 = vpop.f32.mrb[0].mxu0
        %5007 = vmatprep.mubr.bf16.mxu0 0
        %5008 = vmatmul.mubr.bf16.gmra.mrb[0].mxu0 %v4898
        %v5009 = vpop.f32.mrb[0].mxu0
        %v5010 = vadd.f32 0.0, %v5009
        %v5011 = vpop.f32.mrb[0].mxu0
        %v5012 = vpop.f32.mrb[0].mxu0
        %v5013 = vadd.f32 0.0, %v5012
        %v5014 = vpop.f32.mrb[0].mxu0
        %5015 = vmatprep.mubr.bf16.mxu0 0
        %5016 = vmatmul.mubr.bf16.gmra.mrb[0].mxu0 %v4901
        %v5017 = vpop.f32.mrb[0].mxu0
        %v5018 = vadd.f32 0.0, %v5017
        %v5019 = vpop.f32.mrb[0].mxu0
        %v5020 = vpop.f32.mrb[0].mxu0
        %v5021 = vadd.f32 0.0, %v5020
        %v5022 = vpop.f32.mrb[0].mxu0
        %5023 = vmatprep.mubr.bf16.mxu0 0
        %5024 = vmatmul.mubr.bf16.gmra.mrb[0].mxu0 %v4904
        %v5025 = vpop.f32.mrb[0].mxu0
        %v5026 = vadd.f32 0.0, %v5025
        %v5027 = vpop.f32.mrb[0].mxu0
        %v5028 = vpop.f32.mrb[0].mxu0
        %v5029 = vadd.f32 0.0, %v5028
        %v5030 = vpop.f32.mrb[0].mxu0
        %5031 = vmatprep.mubr.bf16.mxu0 0
        %5032 = vmatmul.mubr.bf16.gmra.mrb[0].mxu0 %v4907
        %v5033 = vpop.f32.mrb[0].mxu0
        %v5034 = vadd.f32 0.0, %v5033
        %v5035 = vpop.f32.mrb[0].mxu0
        %v5036 = vpop.f32.mrb[0].mxu0
        %v5037 = vadd.f32 0.0, %v5036
        %v5038 = vpop.f32.mrb[0].mxu0
        %5039 = vmatprep.mubr.bf16.mxu0 0
        %5040 = vmatmul.mubr.bf16.gmra.mrb[0].mxu0 %v4910
        %v5041 = vpop.f32.mrb[0].mxu0
        %v5042 = vadd.f32 0.0, %v5041
        %v5043 = vpop.f32.mrb[0].mxu0
        %v5044 = vpop.f32.mrb[0].mxu0
        %v5045 = vadd.f32 0.0, %v5044
        %v5046 = vpop.f32.mrb[0].mxu0
        %5047 = vmatprep.mubr.bf16.mxu0 0
        %5048 = vmatmul.mubr.bf16.gmra.mrb[0].mxu0 %v4913
        %v5049 = vpop.f32.mrb[0].mxu0
        %v5050 = vadd.f32 0.0, %v5049
        %v5051 = vpop.f32.mrb[0].mxu0
        %v5052 = vpop.f32.mrb[0].mxu0
        %v5053 = vadd.f32 0.0, %v5052
        %v5054 = vpop.f32.mrb[0].mxu0
        %5055 = vmatprep.mubr.bf16.mxu0 0
        %5056 = vmatmul.mubr.bf16.gmra.mrb[0].mxu0 %v4916
        %v5057 = vpop.f32.mrb[0].mxu0
        %v5058 = vadd.f32 0.0, %v5057
        %v5059 = vpop.f32.mrb[0].mxu0
        %v5060 = vpop.f32.mrb[0].mxu0
        %v5061 = vadd.f32 0.0, %v5060
        %v5062 = vpop.f32.mrb[0].mxu0
        %5063 = vmatprep.mubr.bf16.mxu0 0
        %5064 = vmatmul.mubr.bf16.gmra.mrb[0].mxu0 %v4919
        %v5065 = vpop.f32.mrb[0].mxu0
        %v5066 = vadd.f32 0.0, %v5065
        %v5067 = vpop.f32.mrb[0].mxu0
        %v5068 = vpop.f32.mrb[0].mxu0
        %v5069 = vadd.f32 0.0, %v5068
        %v5070 = vpop.f32.mrb[0].mxu0
        %5071 = vmatprep.mubr.bf16.mxu0 0
        %5072 = vmatmul.mubr.bf16.gmra.mrb[0].mxu0 %v4922
        %v5073 = vpop.f32.mrb[0].mxu0
        %v5074 = vadd.f32 0.0, %v5073
        %v5075 = vpop.f32.mrb[0].mxu0
        %v5076 = vpop.f32.mrb[0].mxu0
        %v5077 = vadd.f32 0.0, %v5076
        %v5078 = vpop.f32.mrb[0].mxu0
        %5079 = vmatprep.mubr.bf16.mxu0 0
        %5080 = vmatmul.mubr.bf16.gmra.mrb[0].mxu0 %v4925
        %v5081 = vpop.f32.mrb[0].mxu0
        %v5082 = vadd.f32 0.0, %v5081
        %v5083 = vpop.f32.mrb[0].mxu0
        %v5084 = vpop.f32.mrb[0].mxu0
        %v5085 = vadd.f32 0.0, %v5084
        %v5086 = vpop.f32.mrb[0].mxu0
        %5087 = vdwg.mxu0
        %v5088 = vadd.f32 %v4782, %v4962
        %v5089 = vadd.f32 %v4783, %v4965
        %v5090 = vadd.f32 %v4784, %v4970
        %v5091 = vadd.f32 %v4785, %v4973
        %v5092 = vadd.f32 %v4786, %v4978
        %v5093 = vadd.f32 %v4787, %v4981
        %v5094 = vadd.f32 %v4788, %v4986
        %v5095 = vadd.f32 %v4789, %v4989
        %v5096 = vadd.f32 %v4790, %v4994
        %v5097 = vadd.f32 %v4791, %v4997
        %v5098 = vadd.f32 %v4792, %v5002
        %v5099 = vadd.f32 %v4793, %v5005
        %v5100 = vadd.f32 %v4794, %v5010
        %v5101 = vadd.f32 %v4795, %v5013
        %v5102 = vadd.f32 %v4796, %v5018
        %v5103 = vadd.f32 %v4797, %v5021
        %v5104 = vadd.f32 %v4798, %v5026
        %v5105 = vadd.f32 %v4799, %v5029
        %v5106 = vadd.f32 %v4800, %v5034
        %v5107 = vadd.f32 %v4801, %v5037
        %v5108 = vadd.f32 %v4802, %v5042
        %v5109 = vadd.f32 %v4803, %v5045
        %v5110 = vadd.f32 %v4804, %v5050
        %v5111 = vadd.f32 %v4805, %v5053
        %v5112 = vadd.f32 %v4806, %v5058
        %v5113 = vadd.f32 %v4807, %v5061
        %v5114 = vadd.f32 %v4808, %v5066
        %v5115 = vadd.f32 %v4809, %v5069
        %v5116 = vadd.f32 %v4810, %v5074
        %v5117 = vadd.f32 %v4811, %v5077
        %v5118 = vadd.f32 %v4812, %v5082
        %v5119 = vadd.f32 %v4813, %v5085
        %s5120 = scalar_lea.vmem [#allocation2], 48
        %v5121 = vld [vmem:[%s5120] sm:$0xff]
        %v5122 = vld [vmem:[%s5120 + $0x8] sm:$0xff]
        %v5123 = vld [vmem:[%s5120 + $0x18] sm:$0xff]
        %v5124 = vld [vmem:[%s5120 + $0x20] sm:$0xff]
        %v5125 = vld [vmem:[%s5120 + $0x30] sm:$0xff]
        %v5126 = vld [vmem:[%s5120 + $0x38] sm:$0xff]
        %v5127 = vld [vmem:[%s5120 + $0x48] sm:$0xff]
        %v5128 = vld [vmem:[%s5120 + $0x50] sm:$0xff]
        %v5129 = vld [vmem:[%s5120 + $0x60] sm:$0xff]
        %v5130 = vld [vmem:[%s5120 + $0x68] sm:$0xff]
        %v5131 = vld [vmem:[%s5120 + $0x78] sm:$0xff]
        %v5132 = vld [vmem:[%s5120 + $0x80] sm:$0xff]
        %v5133 = vld [vmem:[%s5120 + $0x90] sm:$0xff]
        %v5134 = vld [vmem:[%s5120 + $0x98] sm:$0xff]
        %v5135 = vld [vmem:[%s5120 + $0xa8] sm:$0xff]
        %v5136 = vld [vmem:[%s5120 + $0xb0] sm:$0xff]
        %v5137 = vld [vmem:[%s5120 + $0xc0] sm:$0xff]
        %v5138 = vld [vmem:[%s5120 + $0xc8] sm:$0xff]
        %v5139 = vld [vmem:[%s5120 + $0xd8] sm:$0xff]
        %v5140 = vld [vmem:[%s5120 + $0xe0] sm:$0xff]
        %v5141 = vld [vmem:[%s5120 + $0xf0] sm:$0xff]
        %v5142 = vld [vmem:[%s5120 + $0xf8] sm:$0xff]
        %v5143 = vld [vmem:[%s5120 + $0x108] sm:$0xff]
        %v5144 = vld [vmem:[%s5120 + $0x110] sm:$0xff]
        %v5145 = vld [vmem:[%s5120 + $0x120] sm:$0xff]
        %v5146 = vld [vmem:[%s5120 + $0x128] sm:$0xff]
        %v5147 = vld [vmem:[%s5120 + $0x138] sm:$0xff]
        %v5148 = vld [vmem:[%s5120 + $0x140] sm:$0xff]
        %v5149 = vld [vmem:[%s5120 + $0x150] sm:$0xff]
        %v5150 = vld [vmem:[%s5120 + $0x158] sm:$0xff]
        %v5151 = vld [vmem:[%s5120 + $0x168] sm:$0xff]
        %v5152 = vld [vmem:[%s5120 + $0x170] sm:$0xff]
        %v5153 = vpack.c.bf16 %v5122, %v5121
        %v5154 = vpack.c.bf16 %v5124, %v5123
        %v5155 = vpack.c.bf16 %v5126, %v5125
        %v5156 = vpack.c.bf16 %v5128, %v5127
        %v5157 = vpack.c.bf16 %v5130, %v5129
        %v5158 = vpack.c.bf16 %v5132, %v5131
        %v5159 = vpack.c.bf16 %v5134, %v5133
        %v5160 = vpack.c.bf16 %v5136, %v5135
        %v5161 = vpack.c.bf16 %v5138, %v5137
        %v5162 = vpack.c.bf16 %v5140, %v5139
        %v5163 = vpack.c.bf16 %v5142, %v5141
        %v5164 = vpack.c.bf16 %v5144, %v5143
        %v5165 = vpack.c.bf16 %v5146, %v5145
        %v5166 = vpack.c.bf16 %v5148, %v5147
        %v5167 = vpack.c.bf16 %v5150, %v5149
        %v5168 = vpack.c.bf16 %v5152, %v5151
        %s5169 = scalar_lea.vmem [#allocation12], 96
        %v5170 = vld [vmem:[%s5169] sm:$0xf]
        %v5171 = vld [vmem:[%s5169 + $0x4] sm:$0xf]
        %v5172 = vld [vmem:[%s5169 + $0x8] sm:$0xf]
        %v5173 = vld [vmem:[%s5169 + $0xc] sm:$0xf]
        %v5178 = vunpack.c.l.b16 %v5170
        %v5179 = vunpack.c.l.b16 %v5171
        %v5180 = vunpack.c.l.b16 %v5172
        %v5181 = vunpack.c.l.b16 %v5173
        %v5182 = vpack.c.b16 %v5179, %v5178
        %v5183 = vpack.c.b16 %v5181, %v5180
        %v5187 = vsel %vm3260, %v5153, 0
        %v5190 = vsel %vm3260, %v5154, 0
        %v5193 = vsel %vm3260, %v5155, 0
        %v5196 = vsel %vm3260, %v5156, 0
        %v5199 = vsel %vm3260, %v5157, 0
        %v5202 = vsel %vm3260, %v5158, 0
        %v5205 = vsel %vm3260, %v5159, 0
        %v5208 = vsel %vm3260, %v5160, 0
        %v5211 = vsel %vm3260, %v5161, 0
        %v5214 = vsel %vm3260, %v5162, 0
        %v5217 = vsel %vm3260, %v5163, 0
        %v5220 = vsel %vm3260, %v5164, 0
        %v5223 = vsel %vm3260, %v5165, 0
        %v5226 = vsel %vm3260, %v5166, 0
        %v5229 = vsel %vm3260, %v5167, 0
        %v5232 = vsel %vm3260, %v5168, 0
        %5234 = vmatprep.subr.bf16.mxu0 0
        %5235 = vmatpush1.bf16.msra.mxu0 %v5182
        %5236 = vmatprep.subr.bf16.mxu0 0
        %5237 = vmatpush1.bf16.msra.mxu0 %v5183
        %5238 = vmatprep.subr.bf16.mxu0 0
        %5239 = vmatpush1.bf16.msra.mxu0 0
        %5240 = vmatprep.subr.bf16.mxu0 0
        %5241 = vmatpush1.bf16.msra.mxu0 0
        %5242 = vmatprep.subr.bf16.mxu0 0
        %5243 = vmatpush1.bf16.msra.mxu0 0
        %5244 = vmatprep.subr.bf16.mxu0 0
        %5245 = vmatpush1.bf16.msra.mxu0 0
        %5246 = vmatprep.subr.bf16.mxu0 0
        %5247 = vmatpush1.bf16.msra.mxu0 0
        %5248 = vmatprep.subr.bf16.mxu0 0
        %5249 = vmatpush1.bf16.msra.mxu0 0
        %5250 = vmatprep.subr.bf16.mxu0 0
        %5251 = vmatpush1.bf16.msra.mxu0 0
        %5252 = vmatprep.subr.bf16.mxu0 0
        %5253 = vmatpush1.bf16.msra.mxu0 0
        %5254 = vmatprep.subr.bf16.mxu0 0
        %5255 = vmatpush1.bf16.msra.mxu0 0
        %5256 = vmatprep.subr.bf16.mxu0 0
        %5257 = vmatpush1.bf16.msra.mxu0 0
        %5258 = vmatprep.subr.bf16.mxu0 0
        %5259 = vmatpush1.bf16.msra.mxu0 0
        %5260 = vmatprep.subr.bf16.mxu0 0
        %5261 = vmatpush1.bf16.msra.mxu0 0
        %5262 = vmatprep.subr.bf16.mxu0 0
        %5263 = vmatpush1.bf16.msra.mxu0 0
        %5264 = vmatprep.subr.bf16.mxu0 0
        %5265 = vmatpush1.bf16.msra.mxu0 0
        %5266 = vmatprep.mubr.bf16.mxu0 0
        %5267 = vmatmul.mubr.bf16.gmra.mrb[0].mxu0 %v5187
        %v5268 = vpop.f32.mrb[0].mxu0
        %v5269 = vadd.f32 0.0, %v5268
        %v5270 = vpop.f32.mrb[0].mxu0
        %v5271 = vpop.f32.mrb[0].mxu0
        %v5272 = vadd.f32 0.0, %v5271
        %v5273 = vpop.f32.mrb[0].mxu0
        %5274 = vmatprep.mubr.bf16.mxu0 0
        %5275 = vmatmul.mubr.bf16.gmra.mrb[0].mxu0 %v5190
        %v5276 = vpop.f32.mrb[0].mxu0
        %v5277 = vadd.f32 0.0, %v5276
        %v5278 = vpop.f32.mrb[0].mxu0
        %v5279 = vpop.f32.mrb[0].mxu0
        %v5280 = vadd.f32 0.0, %v5279
        %v5281 = vpop.f32.mrb[0].mxu0
        %5282 = vmatprep.mubr.bf16.mxu0 0
        %5283 = vmatmul.mubr.bf16.gmra.mrb[0].mxu0 %v5193
        %v5284 = vpop.f32.mrb[0].mxu0
        %v5285 = vadd.f32 0.0, %v5284
        %v5286 = vpop.f32.mrb[0].mxu0
        %v5287 = vpop.f32.mrb[0].mxu0
        %v5288 = vadd.f32 0.0, %v5287
        %v5289 = vpop.f32.mrb[0].mxu0
        %5290 = vmatprep.mubr.bf16.mxu0 0
        %5291 = vmatmul.mubr.bf16.gmra.mrb[0].mxu0 %v5196
        %v5292 = vpop.f32.mrb[0].mxu0
        %v5293 = vadd.f32 0.0, %v5292
        %v5294 = vpop.f32.mrb[0].mxu0
        %v5295 = vpop.f32.mrb[0].mxu0
        %v5296 = vadd.f32 0.0, %v5295
        %v5297 = vpop.f32.mrb[0].mxu0
        %5298 = vmatprep.mubr.bf16.mxu0 0
        %5299 = vmatmul.mubr.bf16.gmra.mrb[0].mxu0 %v5199
        %v5300 = vpop.f32.mrb[0].mxu0
        %v5301 = vadd.f32 0.0, %v5300
        %v5302 = vpop.f32.mrb[0].mxu0
        %v5303 = vpop.f32.mrb[0].mxu0
        %v5304 = vadd.f32 0.0, %v5303
        %v5305 = vpop.f32.mrb[0].mxu0
        %5306 = vmatprep.mubr.bf16.mxu0 0
        %5307 = vmatmul.mubr.bf16.gmra.mrb[0].mxu0 %v5202
        %v5308 = vpop.f32.mrb[0].mxu0
        %v5309 = vadd.f32 0.0, %v5308
        %v5310 = vpop.f32.mrb[0].mxu0
        %v5311 = vpop.f32.mrb[0].mxu0
        %v5312 = vadd.f32 0.0, %v5311
        %v5313 = vpop.f32.mrb[0].mxu0
        %5314 = vmatprep.mubr.bf16.mxu0 0
        %5315 = vmatmul.mubr.bf16.gmra.mrb[0].mxu0 %v5205
        %v5316 = vpop.f32.mrb[0].mxu0
        %v5317 = vadd.f32 0.0, %v5316
        %v5318 = vpop.f32.mrb[0].mxu0
        %v5319 = vpop.f32.mrb[0].mxu0
        %v5320 = vadd.f32 0.0, %v5319
        %v5321 = vpop.f32.mrb[0].mxu0
        %5322 = vmatprep.mubr.bf16.mxu0 0
        %5323 = vmatmul.mubr.bf16.gmra.mrb[0].mxu0 %v5208
        %v5324 = vpop.f32.mrb[0].mxu0
        %v5325 = vadd.f32 0.0, %v5324
        %v5326 = vpop.f32.mrb[0].mxu0
        %v5327 = vpop.f32.mrb[0].mxu0
        %v5328 = vadd.f32 0.0, %v5327
        %v5329 = vpop.f32.mrb[0].mxu0
        %5330 = vmatprep.mubr.bf16.mxu0 0
        %5331 = vmatmul.mubr.bf16.gmra.mrb[0].mxu0 %v5211
        %v5332 = vpop.f32.mrb[0].mxu0
        %v5333 = vadd.f32 0.0, %v5332
        %v5334 = vpop.f32.mrb[0].mxu0
        %v5335 = vpop.f32.mrb[0].mxu0
        %v5336 = vadd.f32 0.0, %v5335
        %v5337 = vpop.f32.mrb[0].mxu0
        %5338 = vmatprep.mubr.bf16.mxu0 0
        %5339 = vmatmul.mubr.bf16.gmra.mrb[0].mxu0 %v5214
        %v5340 = vpop.f32.mrb[0].mxu0
        %v5341 = vadd.f32 0.0, %v5340
        %v5342 = vpop.f32.mrb[0].mxu0
        %v5343 = vpop.f32.mrb[0].mxu0
        %v5344 = vadd.f32 0.0, %v5343
        %v5345 = vpop.f32.mrb[0].mxu0
        %5346 = vmatprep.mubr.bf16.mxu0 0
        %5347 = vmatmul.mubr.bf16.gmra.mrb[0].mxu0 %v5217
        %v5348 = vpop.f32.mrb[0].mxu0
        %v5349 = vadd.f32 0.0, %v5348
        %v5350 = vpop.f32.mrb[0].mxu0
        %v5351 = vpop.f32.mrb[0].mxu0
        %v5352 = vadd.f32 0.0, %v5351
        %v5353 = vpop.f32.mrb[0].mxu0
        %5354 = vmatprep.mubr.bf16.mxu0 0
        %5355 = vmatmul.mubr.bf16.gmra.mrb[0].mxu0 %v5220
        %v5356 = vpop.f32.mrb[0].mxu0
        %v5357 = vadd.f32 0.0, %v5356
        %v5358 = vpop.f32.mrb[0].mxu0
        %v5359 = vpop.f32.mrb[0].mxu0
        %v5360 = vadd.f32 0.0, %v5359
        %v5361 = vpop.f32.mrb[0].mxu0
        %5362 = vmatprep.mubr.bf16.mxu0 0
        %5363 = vmatmul.mubr.bf16.gmra.mrb[0].mxu0 %v5223
        %v5364 = vpop.f32.mrb[0].mxu0
        %v5365 = vadd.f32 0.0, %v5364
        %v5366 = vpop.f32.mrb[0].mxu0
        %v5367 = vpop.f32.mrb[0].mxu0
        %v5368 = vadd.f32 0.0, %v5367
        %v5369 = vpop.f32.mrb[0].mxu0
        %5370 = vmatprep.mubr.bf16.mxu0 0
        %5371 = vmatmul.mubr.bf16.gmra.mrb[0].mxu0 %v5226
        %v5372 = vpop.f32.mrb[0].mxu0
        %v5373 = vadd.f32 0.0, %v5372
        %v5374 = vpop.f32.mrb[0].mxu0
        %v5375 = vpop.f32.mrb[0].mxu0
        %v5376 = vadd.f32 0.0, %v5375
        %v5377 = vpop.f32.mrb[0].mxu0
        %5378 = vmatprep.mubr.bf16.mxu0 0
        %5379 = vmatmul.mubr.bf16.gmra.mrb[0].mxu0 %v5229
        %v5380 = vpop.f32.mrb[0].mxu0
        %v5381 = vadd.f32 0.0, %v5380
        %v5382 = vpop.f32.mrb[0].mxu0
        %v5383 = vpop.f32.mrb[0].mxu0
        %v5384 = vadd.f32 0.0, %v5383
        %v5385 = vpop.f32.mrb[0].mxu0
        %5386 = vmatprep.mubr.bf16.mxu0 0
        %5387 = vmatmul.mubr.bf16.gmra.mrb[0].mxu0 %v5232
        %v5388 = vpop.f32.mrb[0].mxu0
        %v5389 = vadd.f32 0.0, %v5388
        %v5390 = vpop.f32.mrb[0].mxu0
        %v5391 = vpop.f32.mrb[0].mxu0
        %v5392 = vadd.f32 0.0, %v5391
        %v5393 = vpop.f32.mrb[0].mxu0
        %5394 = vdwg.mxu0
        %v5395 = vadd.f32 %v5088, %v5269
        %v5396 = vadd.f32 %v5089, %v5272
        %v5397 = vadd.f32 %v5090, %v5277
        %v5398 = vadd.f32 %v5091, %v5280
        %v5399 = vadd.f32 %v5092, %v5285
        %v5400 = vadd.f32 %v5093, %v5288
        %v5401 = vadd.f32 %v5094, %v5293
        %v5402 = vadd.f32 %v5095, %v5296
        %v5403 = vadd.f32 %v5096, %v5301
        %v5404 = vadd.f32 %v5097, %v5304
        %v5405 = vadd.f32 %v5098, %v5309
        %v5406 = vadd.f32 %v5099, %v5312
        %v5407 = vadd.f32 %v5100, %v5317
        %v5408 = vadd.f32 %v5101, %v5320
        %v5409 = vadd.f32 %v5102, %v5325
        %v5410 = vadd.f32 %v5103, %v5328
        %v5411 = vadd.f32 %v5104, %v5333
        %v5412 = vadd.f32 %v5105, %v5336
        %v5413 = vadd.f32 %v5106, %v5341
        %v5414 = vadd.f32 %v5107, %v5344
        %v5415 = vadd.f32 %v5108, %v5349
        %v5416 = vadd.f32 %v5109, %v5352
        %v5417 = vadd.f32 %v5110, %v5357
        %v5418 = vadd.f32 %v5111, %v5360
        %v5419 = vadd.f32 %v5112, %v5365
        %v5420 = vadd.f32 %v5113, %v5368
        %v5421 = vadd.f32 %v5114, %v5373
        %v5422 = vadd.f32 %v5115, %v5376
        %v5423 = vadd.f32 %v5116, %v5381
        %v5424 = vadd.f32 %v5117, %v5384
        %v5425 = vadd.f32 %v5118, %v5389
        %v5426 = vadd.f32 %v5119, %v5392
        %v5427 = vld [vmem:[%s5120 + $0x1] sm:$0xff]
        %v5428 = vld [vmem:[%s5120 + $0x9] sm:$0xff]
        %v5429 = vld [vmem:[%s5120 + $0x19] sm:$0xff]
        %v5430 = vld [vmem:[%s5120 + $0x21] sm:$0xff]
        %v5431 = vld [vmem:[%s5120 + $0x31] sm:$0xff]
        %v5432 = vld [vmem:[%s5120 + $0x39] sm:$0xff]
        %v5433 = vld [vmem:[%s5120 + $0x49] sm:$0xff]
        %v5434 = vld [vmem:[%s5120 + $0x51] sm:$0xff]
        %v5435 = vld [vmem:[%s5120 + $0x61] sm:$0xff]
        %v5436 = vld [vmem:[%s5120 + $0x69] sm:$0xff]
        %v5437 = vld [vmem:[%s5120 + $0x79] sm:$0xff]
        %v5438 = vld [vmem:[%s5120 + $0x81] sm:$0xff]
        %v5439 = vld [vmem:[%s5120 + $0x91] sm:$0xff]
        %v5440 = vld [vmem:[%s5120 + $0x99] sm:$0xff]
        %v5441 = vld [vmem:[%s5120 + $0xa9] sm:$0xff]
        %v5442 = vld [vmem:[%s5120 + $0xb1] sm:$0xff]
        %v5443 = vld [vmem:[%s5120 + $0xc1] sm:$0xff]
        %v5444 = vld [vmem:[%s5120 + $0xc9] sm:$0xff]
        %v5445 = vld [vmem:[%s5120 + $0xd9] sm:$0xff]
        %v5446 = vld [vmem:[%s5120 + $0xe1] sm:$0xff]
        %v5447 = vld [vmem:[%s5120 + $0xf1] sm:$0xff]
        %v5448 = vld [vmem:[%s5120 + $0xf9] sm:$0xff]
        %v5449 = vld [vmem:[%s5120 + $0x109] sm:$0xff]
        %v5450 = vld [vmem:[%s5120 + $0x111] sm:$0xff]
        %v5451 = vld [vmem:[%s5120 + $0x121] sm:$0xff]
        %v5452 = vld [vmem:[%s5120 + $0x129] sm:$0xff]
        %v5453 = vld [vmem:[%s5120 + $0x139] sm:$0xff]
        %v5454 = vld [vmem:[%s5120 + $0x141] sm:$0xff]
        %v5455 = vld [vmem:[%s5120 + $0x151] sm:$0xff]
        %v5456 = vld [vmem:[%s5120 + $0x159] sm:$0xff]
        %v5457 = vld [vmem:[%s5120 + $0x169] sm:$0xff]
        %v5458 = vld [vmem:[%s5120 + $0x171] sm:$0xff]
        %v5459 = vpack.c.bf16 %v5428, %v5427
        %v5460 = vpack.c.bf16 %v5430, %v5429
        %v5461 = vpack.c.bf16 %v5432, %v5431
        %v5462 = vpack.c.bf16 %v5434, %v5433
        %v5463 = vpack.c.bf16 %v5436, %v5435
        %v5464 = vpack.c.bf16 %v5438, %v5437
        %v5465 = vpack.c.bf16 %v5440, %v5439
        %v5466 = vpack.c.bf16 %v5442, %v5441
        %v5467 = vpack.c.bf16 %v5444, %v5443
        %v5468 = vpack.c.bf16 %v5446, %v5445
        %v5469 = vpack.c.bf16 %v5448, %v5447
        %v5470 = vpack.c.bf16 %v5450, %v5449
        %v5471 = vpack.c.bf16 %v5452, %v5451
        %v5472 = vpack.c.bf16 %v5454, %v5453
        %v5473 = vpack.c.bf16 %v5456, %v5455
        %v5474 = vpack.c.bf16 %v5458, %v5457
        %s5475 = scalar_lea.vmem [#allocation12], 112
        %v5476 = vld [vmem:[%s5475] sm:$0xf]
        %v5477 = vld [vmem:[%s5475 + $0x4] sm:$0xf]
        %v5478 = vld [vmem:[%s5475 + $0x8] sm:$0xf]
        %v5479 = vld [vmem:[%s5475 + $0xc] sm:$0xf]
        %v5484 = vunpack.c.l.b16 %v5476
        %v5485 = vunpack.c.l.b16 %v5477
        %v5486 = vunpack.c.l.b16 %v5478
        %v5487 = vunpack.c.l.b16 %v5479
        %v5488 = vpack.c.b16 %v5485, %v5484
        %v5489 = vpack.c.b16 %v5487, %v5486
        %v5493 = vsel %vm3260, %v5459, 0
        %v5496 = vsel %vm3260, %v5460, 0
        %v5499 = vsel %vm3260, %v5461, 0
        %v5502 = vsel %vm3260, %v5462, 0
        %v5505 = vsel %vm3260, %v5463, 0
        %v5508 = vsel %vm3260, %v5464, 0
        %v5511 = vsel %vm3260, %v5465, 0
        %v5514 = vsel %vm3260, %v5466, 0
        %v5517 = vsel %vm3260, %v5467, 0
        %v5520 = vsel %vm3260, %v5468, 0
        %v5523 = vsel %vm3260, %v5469, 0
        %v5526 = vsel %vm3260, %v5470, 0
        %v5529 = vsel %vm3260, %v5471, 0
        %v5532 = vsel %vm3260, %v5472, 0
        %v5535 = vsel %vm3260, %v5473, 0
        %v5538 = vsel %vm3260, %v5474, 0
        %5540 = vmatprep.subr.bf16.mxu0 0
        %5541 = vmatpush1.bf16.msra.mxu0 %v5488
        %5542 = vmatprep.subr.bf16.mxu0 0
        %5543 = vmatpush1.bf16.msra.mxu0 %v5489
        %5544 = vmatprep.subr.bf16.mxu0 0
        %5545 = vmatpush1.bf16.msra.mxu0 0
        %5546 = vmatprep.subr.bf16.mxu0 0
        %5547 = vmatpush1.bf16.msra.mxu0 0
        %5548 = vmatprep.subr.bf16.mxu0 0
        %5549 = vmatpush1.bf16.msra.mxu0 0
        %5550 = vmatprep.subr.bf16.mxu0 0
        %5551 = vmatpush1.bf16.msra.mxu0 0
        %5552 = vmatprep.subr.bf16.mxu0 0
        %5553 = vmatpush1.bf16.msra.mxu0 0
        %5554 = vmatprep.subr.bf16.mxu0 0
        %5555 = vmatpush1.bf16.msra.mxu0 0
        %5556 = vmatprep.subr.bf16.mxu0 0
        %5557 = vmatpush1.bf16.msra.mxu0 0
        %5558 = vmatprep.subr.bf16.mxu0 0
        %5559 = vmatpush1.bf16.msra.mxu0 0
        %5560 = vmatprep.subr.bf16.mxu0 0
        %5561 = vmatpush1.bf16.msra.mxu0 0
        %5562 = vmatprep.subr.bf16.mxu0 0
        %5563 = vmatpush1.bf16.msra.mxu0 0
        %5564 = vmatprep.subr.bf16.mxu0 0
        %5565 = vmatpush1.bf16.msra.mxu0 0
        %5566 = vmatprep.subr.bf16.mxu0 0
        %5567 = vmatpush1.bf16.msra.mxu0 0
        %5568 = vmatprep.subr.bf16.mxu0 0
        %5569 = vmatpush1.bf16.msra.mxu0 0
        %5570 = vmatprep.subr.bf16.mxu0 0
        %5571 = vmatpush1.bf16.msra.mxu0 0
        %5572 = vmatprep.mubr.bf16.mxu0 0
        %5573 = vmatmul.mubr.bf16.gmra.mrb[0].mxu0 %v5493
        %v5574 = vpop.f32.mrb[0].mxu0
        %v5575 = vadd.f32 0.0, %v5574
        %v5576 = vpop.f32.mrb[0].mxu0
        %v5577 = vpop.f32.mrb[0].mxu0
        %v5578 = vadd.f32 0.0, %v5577
        %v5579 = vpop.f32.mrb[0].mxu0
        %5580 = vmatprep.mubr.bf16.mxu0 0
        %5581 = vmatmul.mubr.bf16.gmra.mrb[0].mxu0 %v5496
        %v5582 = vpop.f32.mrb[0].mxu0
        %v5583 = vadd.f32 0.0, %v5582
        %v5584 = vpop.f32.mrb[0].mxu0
        %v5585 = vpop.f32.mrb[0].mxu0
        %v5586 = vadd.f32 0.0, %v5585
        %v5587 = vpop.f32.mrb[0].mxu0
        %5588 = vmatprep.mubr.bf16.mxu0 0
        %5589 = vmatmul.mubr.bf16.gmra.mrb[0].mxu0 %v5499
        %v5590 = vpop.f32.mrb[0].mxu0
        %v5591 = vadd.f32 0.0, %v5590
        %v5592 = vpop.f32.mrb[0].mxu0
        %v5593 = vpop.f32.mrb[0].mxu0
        %v5594 = vadd.f32 0.0, %v5593
        %v5595 = vpop.f32.mrb[0].mxu0
        %5596 = vmatprep.mubr.bf16.mxu0 0
        %5597 = vmatmul.mubr.bf16.gmra.mrb[0].mxu0 %v5502
        %v5598 = vpop.f32.mrb[0].mxu0
        %v5599 = vadd.f32 0.0, %v5598
        %v5600 = vpop.f32.mrb[0].mxu0
        %v5601 = vpop.f32.mrb[0].mxu0
        %v5602 = vadd.f32 0.0, %v5601
        %v5603 = vpop.f32.mrb[0].mxu0
        %5604 = vmatprep.mubr.bf16.mxu0 0
        %5605 = vmatmul.mubr.bf16.gmra.mrb[0].mxu0 %v5505
        %v5606 = vpop.f32.mrb[0].mxu0
        %v5607 = vadd.f32 0.0, %v5606
        %v5608 = vpop.f32.mrb[0].mxu0
        %v5609 = vpop.f32.mrb[0].mxu0
        %v5610 = vadd.f32 0.0, %v5609
        %v5611 = vpop.f32.mrb[0].mxu0
        %5612 = vmatprep.mubr.bf16.mxu0 0
        %5613 = vmatmul.mubr.bf16.gmra.mrb[0].mxu0 %v5508
        %v5614 = vpop.f32.mrb[0].mxu0
        %v5615 = vadd.f32 0.0, %v5614
        %v5616 = vpop.f32.mrb[0].mxu0
        %v5617 = vpop.f32.mrb[0].mxu0
        %v5618 = vadd.f32 0.0, %v5617
        %v5619 = vpop.f32.mrb[0].mxu0
        %5620 = vmatprep.mubr.bf16.mxu0 0
        %5621 = vmatmul.mubr.bf16.gmra.mrb[0].mxu0 %v5511
        %v5622 = vpop.f32.mrb[0].mxu0
        %v5623 = vadd.f32 0.0, %v5622
        %v5624 = vpop.f32.mrb[0].mxu0
        %v5625 = vpop.f32.mrb[0].mxu0
        %v5626 = vadd.f32 0.0, %v5625
        %v5627 = vpop.f32.mrb[0].mxu0
        %5628 = vmatprep.mubr.bf16.mxu0 0
        %5629 = vmatmul.mubr.bf16.gmra.mrb[0].mxu0 %v5514
        %v5630 = vpop.f32.mrb[0].mxu0
        %v5631 = vadd.f32 0.0, %v5630
        %v5632 = vpop.f32.mrb[0].mxu0
        %v5633 = vpop.f32.mrb[0].mxu0
        %v5634 = vadd.f32 0.0, %v5633
        %v5635 = vpop.f32.mrb[0].mxu0
        %5636 = vmatprep.mubr.bf16.mxu0 0
        %5637 = vmatmul.mubr.bf16.gmra.mrb[0].mxu0 %v5517
        %v5638 = vpop.f32.mrb[0].mxu0
        %v5639 = vadd.f32 0.0, %v5638
        %v5640 = vpop.f32.mrb[0].mxu0
        %v5641 = vpop.f32.mrb[0].mxu0
        %v5642 = vadd.f32 0.0, %v5641
        %v5643 = vpop.f32.mrb[0].mxu0
        %5644 = vmatprep.mubr.bf16.mxu0 0
        %5645 = vmatmul.mubr.bf16.gmra.mrb[0].mxu0 %v5520
        %v5646 = vpop.f32.mrb[0].mxu0
        %v5647 = vadd.f32 0.0, %v5646
        %v5648 = vpop.f32.mrb[0].mxu0
        %v5649 = vpop.f32.mrb[0].mxu0
        %v5650 = vadd.f32 0.0, %v5649
        %v5651 = vpop.f32.mrb[0].mxu0
        %5652 = vmatprep.mubr.bf16.mxu0 0
        %5653 = vmatmul.mubr.bf16.gmra.mrb[0].mxu0 %v5523
        %v5654 = vpop.f32.mrb[0].mxu0
        %v5655 = vadd.f32 0.0, %v5654
        %v5656 = vpop.f32.mrb[0].mxu0
        %v5657 = vpop.f32.mrb[0].mxu0
        %v5658 = vadd.f32 0.0, %v5657
        %v5659 = vpop.f32.mrb[0].mxu0
        %5660 = vmatprep.mubr.bf16.mxu0 0
        %5661 = vmatmul.mubr.bf16.gmra.mrb[0].mxu0 %v5526
        %v5662 = vpop.f32.mrb[0].mxu0
        %v5663 = vadd.f32 0.0, %v5662
        %v5664 = vpop.f32.mrb[0].mxu0
        %v5665 = vpop.f32.mrb[0].mxu0
        %v5666 = vadd.f32 0.0, %v5665
        %v5667 = vpop.f32.mrb[0].mxu0
        %5668 = vmatprep.mubr.bf16.mxu0 0
        %5669 = vmatmul.mubr.bf16.gmra.mrb[0].mxu0 %v5529
        %v5670 = vpop.f32.mrb[0].mxu0
        %v5671 = vadd.f32 0.0, %v5670
        %v5672 = vpop.f32.mrb[0].mxu0
        %v5673 = vpop.f32.mrb[0].mxu0
        %v5674 = vadd.f32 0.0, %v5673
        %v5675 = vpop.f32.mrb[0].mxu0
        %5676 = vmatprep.mubr.bf16.mxu0 0
        %5677 = vmatmul.mubr.bf16.gmra.mrb[0].mxu0 %v5532
        %v5678 = vpop.f32.mrb[0].mxu0
        %v5679 = vadd.f32 0.0, %v5678
        %v5680 = vpop.f32.mrb[0].mxu0
        %v5681 = vpop.f32.mrb[0].mxu0
        %v5682 = vadd.f32 0.0, %v5681
        %v5683 = vpop.f32.mrb[0].mxu0
        %5684 = vmatprep.mubr.bf16.mxu0 0
        %5685 = vmatmul.mubr.bf16.gmra.mrb[0].mxu0 %v5535
        %v5686 = vpop.f32.mrb[0].mxu0
        %v5687 = vadd.f32 0.0, %v5686
        %v5688 = vpop.f32.mrb[0].mxu0
        %v5689 = vpop.f32.mrb[0].mxu0
        %v5690 = vadd.f32 0.0, %v5689
        %v5691 = vpop.f32.mrb[0].mxu0
        %5692 = vmatprep.mubr.bf16.mxu0 0
        %5693 = vmatmul.mubr.bf16.gmra.mrb[0].mxu0 %v5538
        %v5694 = vpop.f32.mrb[0].mxu0
        %v5695 = vadd.f32 0.0, %v5694
        %v5696 = vpop.f32.mrb[0].mxu0
        %v5697 = vpop.f32.mrb[0].mxu0
        %v5698 = vadd.f32 0.0, %v5697
        %v5699 = vpop.f32.mrb[0].mxu0
        %5700 = vdwg.mxu0
        %v5701 = vadd.f32 %v5395, %v5575
        %v5702 = vadd.f32 %v5396, %v5578
        %v5703 = vadd.f32 %v5397, %v5583
        %v5704 = vadd.f32 %v5398, %v5586
        %v5705 = vadd.f32 %v5399, %v5591
        %v5706 = vadd.f32 %v5400, %v5594
        %v5707 = vadd.f32 %v5401, %v5599
        %v5708 = vadd.f32 %v5402, %v5602
        %v5709 = vadd.f32 %v5403, %v5607
        %v5710 = vadd.f32 %v5404, %v5610
        %v5711 = vadd.f32 %v5405, %v5615
        %v5712 = vadd.f32 %v5406, %v5618
        %v5713 = vadd.f32 %v5407, %v5623
        %v5714 = vadd.f32 %v5408, %v5626
        %v5715 = vadd.f32 %v5409, %v5631
        %v5716 = vadd.f32 %v5410, %v5634
        %v5717 = vadd.f32 %v5411, %v5639
        %v5718 = vadd.f32 %v5412, %v5642
        %v5719 = vadd.f32 %v5413, %v5647
        %v5720 = vadd.f32 %v5414, %v5650
        %v5721 = vadd.f32 %v5415, %v5655
        %v5722 = vadd.f32 %v5416, %v5658
        %v5723 = vadd.f32 %v5417, %v5663
        %v5724 = vadd.f32 %v5418, %v5666
        %v5725 = vadd.f32 %v5419, %v5671
        %v5726 = vadd.f32 %v5420, %v5674
        %v5727 = vadd.f32 %v5421, %v5679
        %v5728 = vadd.f32 %v5422, %v5682
        %v5729 = vadd.f32 %v5423, %v5687
        %v5730 = vadd.f32 %v5424, %v5690
        %v5731 = vadd.f32 %v5425, %v5695
        %v5732 = vadd.f32 %v5426, %v5698
        %v5733 = vld [vmem:[%s5120 + $0x2] sm:$0xff]
        %v5734 = vld [vmem:[%s5120 + $0xa] sm:$0xff]
        %v5735 = vld [vmem:[%s5120 + $0x1a] sm:$0xff]
        %v5736 = vld [vmem:[%s5120 + $0x22] sm:$0xff]
        %v5737 = vld [vmem:[%s5120 + $0x32] sm:$0xff]
        %v5738 = vld [vmem:[%s5120 + $0x3a] sm:$0xff]
        %v5739 = vld [vmem:[%s5120 + $0x4a] sm:$0xff]
        %v5740 = vld [vmem:[%s5120 + $0x52] sm:$0xff]
        %v5741 = vld [vmem:[%s5120 + $0x62] sm:$0xff]
        %v5742 = vld [vmem:[%s5120 + $0x6a] sm:$0xff]
        %v5743 = vld [vmem:[%s5120 + $0x7a] sm:$0xff]
        %v5744 = vld [vmem:[%s5120 + $0x82] sm:$0xff]
        %v5745 = vld [vmem:[%s5120 + $0x92] sm:$0xff]
        %v5746 = vld [vmem:[%s5120 + $0x9a] sm:$0xff]
        %v5747 = vld [vmem:[%s5120 + $0xaa] sm:$0xff]
        %v5748 = vld [vmem:[%s5120 + $0xb2] sm:$0xff]
        %v5749 = vld [vmem:[%s5120 + $0xc2] sm:$0xff]
        %v5750 = vld [vmem:[%s5120 + $0xca] sm:$0xff]
        %v5751 = vld [vmem:[%s5120 + $0xda] sm:$0xff]
        %v5752 = vld [vmem:[%s5120 + $0xe2] sm:$0xff]
        %v5753 = vld [vmem:[%s5120 + $0xf2] sm:$0xff]
        %v5754 = vld [vmem:[%s5120 + $0xfa] sm:$0xff]
        %v5755 = vld [vmem:[%s5120 + $0x10a] sm:$0xff]
        %v5756 = vld [vmem:[%s5120 + $0x112] sm:$0xff]
        %v5757 = vld [vmem:[%s5120 + $0x122] sm:$0xff]
        %v5758 = vld [vmem:[%s5120 + $0x12a] sm:$0xff]
        %v5759 = vld [vmem:[%s5120 + $0x13a] sm:$0xff]
        %v5760 = vld [vmem:[%s5120 + $0x142] sm:$0xff]
        %v5761 = vld [vmem:[%s5120 + $0x152] sm:$0xff]
        %v5762 = vld [vmem:[%s5120 + $0x15a] sm:$0xff]
        %v5763 = vld [vmem:[%s5120 + $0x16a] sm:$0xff]
        %v5764 = vld [vmem:[%s5120 + $0x172] sm:$0xff]
        %v5765 = vpack.c.bf16 %v5734, %v5733
        %v5766 = vpack.c.bf16 %v5736, %v5735
        %v5767 = vpack.c.bf16 %v5738, %v5737
        %v5768 = vpack.c.bf16 %v5740, %v5739
        %v5769 = vpack.c.bf16 %v5742, %v5741
        %v5770 = vpack.c.bf16 %v5744, %v5743
        %v5771 = vpack.c.bf16 %v5746, %v5745
        %v5772 = vpack.c.bf16 %v5748, %v5747
        %v5773 = vpack.c.bf16 %v5750, %v5749
        %v5774 = vpack.c.bf16 %v5752, %v5751
        %v5775 = vpack.c.bf16 %v5754, %v5753
        %v5776 = vpack.c.bf16 %v5756, %v5755
        %v5777 = vpack.c.bf16 %v5758, %v5757
        %v5778 = vpack.c.bf16 %v5760, %v5759
        %v5779 = vpack.c.bf16 %v5762, %v5761
        %v5780 = vpack.c.bf16 %v5764, %v5763
        %s5781 = scalar_lea.vmem [#allocation12], 128
        %v5782 = vld [vmem:[%s5781] sm:$0xf]
        %v5783 = vld [vmem:[%s5781 + $0x4] sm:$0xf]
        %v5784 = vld [vmem:[%s5781 + $0x8] sm:$0xf]
        %v5785 = vld [vmem:[%s5781 + $0xc] sm:$0xf]
        %v5790 = vunpack.c.l.b16 %v5782
        %v5791 = vunpack.c.l.b16 %v5783
        %v5792 = vunpack.c.l.b16 %v5784
        %v5793 = vunpack.c.l.b16 %v5785
        %v5794 = vpack.c.b16 %v5791, %v5790
        %v5795 = vpack.c.b16 %v5793, %v5792
        %v5799 = vsel %vm3260, %v5765, 0
        %v5802 = vsel %vm3260, %v5766, 0
        %v5805 = vsel %vm3260, %v5767, 0
        %v5808 = vsel %vm3260, %v5768, 0
        %v5811 = vsel %vm3260, %v5769, 0
        %v5814 = vsel %vm3260, %v5770, 0
        %v5817 = vsel %vm3260, %v5771, 0
        %v5820 = vsel %vm3260, %v5772, 0
        %v5823 = vsel %vm3260, %v5773, 0
        %v5826 = vsel %vm3260, %v5774, 0
        %v5829 = vsel %vm3260, %v5775, 0
        %v5832 = vsel %vm3260, %v5776, 0
        %v5835 = vsel %vm3260, %v5777, 0
        %v5838 = vsel %vm3260, %v5778, 0
        %v5841 = vsel %vm3260, %v5779, 0
        %v5844 = vsel %vm3260, %v5780, 0
        %5846 = vmatprep.subr.bf16.mxu0 0
        %5847 = vmatpush1.bf16.msra.mxu0 %v5794
        %5848 = vmatprep.subr.bf16.mxu0 0
        %5849 = vmatpush1.bf16.msra.mxu0 %v5795
        %5850 = vmatprep.subr.bf16.mxu0 0
        %5851 = vmatpush1.bf16.msra.mxu0 0
        %5852 = vmatprep.subr.bf16.mxu0 0
        %5853 = vmatpush1.bf16.msra.mxu0 0
        %5854 = vmatprep.subr.bf16.mxu0 0
        %5855 = vmatpush1.bf16.msra.mxu0 0
        %5856 = vmatprep.subr.bf16.mxu0 0
        %5857 = vmatpush1.bf16.msra.mxu0 0
        %5858 = vmatprep.subr.bf16.mxu0 0
        %5859 = vmatpush1.bf16.msra.mxu0 0
        %5860 = vmatprep.subr.bf16.mxu0 0
        %5861 = vmatpush1.bf16.msra.mxu0 0
        %5862 = vmatprep.subr.bf16.mxu0 0
        %5863 = vmatpush1.bf16.msra.mxu0 0
        %5864 = vmatprep.subr.bf16.mxu0 0
        %5865 = vmatpush1.bf16.msra.mxu0 0
        %5866 = vmatprep.subr.bf16.mxu0 0
        %5867 = vmatpush1.bf16.msra.mxu0 0
        %5868 = vmatprep.subr.bf16.mxu0 0
        %5869 = vmatpush1.bf16.msra.mxu0 0
        %5870 = vmatprep.subr.bf16.mxu0 0
        %5871 = vmatpush1.bf16.msra.mxu0 0
        %5872 = vmatprep.subr.bf16.mxu0 0
        %5873 = vmatpush1.bf16.msra.mxu0 0
        %5874 = vmatprep.subr.bf16.mxu0 0
        %5875 = vmatpush1.bf16.msra.mxu0 0
        %5876 = vmatprep.subr.bf16.mxu0 0
        %5877 = vmatpush1.bf16.msra.mxu0 0
        %5878 = vmatprep.mubr.bf16.mxu0 0
        %5879 = vmatmul.mubr.bf16.gmra.mrb[0].mxu0 %v5799
        %v5880 = vpop.f32.mrb[0].mxu0
        %v5881 = vadd.f32 0.0, %v5880
        %v5882 = vpop.f32.mrb[0].mxu0
        %v5883 = vpop.f32.mrb[0].mxu0
        %v5884 = vadd.f32 0.0, %v5883
        %v5885 = vpop.f32.mrb[0].mxu0
        %5886 = vmatprep.mubr.bf16.mxu0 0
        %5887 = vmatmul.mubr.bf16.gmra.mrb[0].mxu0 %v5802
        %v5888 = vpop.f32.mrb[0].mxu0
        %v5889 = vadd.f32 0.0, %v5888
        %v5890 = vpop.f32.mrb[0].mxu0
        %v5891 = vpop.f32.mrb[0].mxu0
        %v5892 = vadd.f32 0.0, %v5891
        %v5893 = vpop.f32.mrb[0].mxu0
        %5894 = vmatprep.mubr.bf16.mxu0 0
        %5895 = vmatmul.mubr.bf16.gmra.mrb[0].mxu0 %v5805
        %v5896 = vpop.f32.mrb[0].mxu0
        %v5897 = vadd.f32 0.0, %v5896
        %v5898 = vpop.f32.mrb[0].mxu0
        %v5899 = vpop.f32.mrb[0].mxu0
        %v5900 = vadd.f32 0.0, %v5899
        %v5901 = vpop.f32.mrb[0].mxu0
        %5902 = vmatprep.mubr.bf16.mxu0 0
        %5903 = vmatmul.mubr.bf16.gmra.mrb[0].mxu0 %v5808
        %v5904 = vpop.f32.mrb[0].mxu0
        %v5905 = vadd.f32 0.0, %v5904
        %v5906 = vpop.f32.mrb[0].mxu0
        %v5907 = vpop.f32.mrb[0].mxu0
        %v5908 = vadd.f32 0.0, %v5907
        %v5909 = vpop.f32.mrb[0].mxu0
        %5910 = vmatprep.mubr.bf16.mxu0 0
        %5911 = vmatmul.mubr.bf16.gmra.mrb[0].mxu0 %v5811
        %v5912 = vpop.f32.mrb[0].mxu0
        %v5913 = vadd.f32 0.0, %v5912
        %v5914 = vpop.f32.mrb[0].mxu0
        %v5915 = vpop.f32.mrb[0].mxu0
        %v5916 = vadd.f32 0.0, %v5915
        %v5917 = vpop.f32.mrb[0].mxu0
        %5918 = vmatprep.mubr.bf16.mxu0 0
        %5919 = vmatmul.mubr.bf16.gmra.mrb[0].mxu0 %v5814
        %v5920 = vpop.f32.mrb[0].mxu0
        %v5921 = vadd.f32 0.0, %v5920
        %v5922 = vpop.f32.mrb[0].mxu0
        %v5923 = vpop.f32.mrb[0].mxu0
        %v5924 = vadd.f32 0.0, %v5923
        %v5925 = vpop.f32.mrb[0].mxu0
        %5926 = vmatprep.mubr.bf16.mxu0 0
        %5927 = vmatmul.mubr.bf16.gmra.mrb[0].mxu0 %v5817
        %v5928 = vpop.f32.mrb[0].mxu0
        %v5929 = vadd.f32 0.0, %v5928
        %v5930 = vpop.f32.mrb[0].mxu0
        %v5931 = vpop.f32.mrb[0].mxu0
        %v5932 = vadd.f32 0.0, %v5931
        %v5933 = vpop.f32.mrb[0].mxu0
        %5934 = vmatprep.mubr.bf16.mxu0 0
        %5935 = vmatmul.mubr.bf16.gmra.mrb[0].mxu0 %v5820
        %v5936 = vpop.f32.mrb[0].mxu0
        %v5937 = vadd.f32 0.0, %v5936
        %v5938 = vpop.f32.mrb[0].mxu0
        %v5939 = vpop.f32.mrb[0].mxu0
        %v5940 = vadd.f32 0.0, %v5939
        %v5941 = vpop.f32.mrb[0].mxu0
        %5942 = vmatprep.mubr.bf16.mxu0 0
        %5943 = vmatmul.mubr.bf16.gmra.mrb[0].mxu0 %v5823
        %v5944 = vpop.f32.mrb[0].mxu0
        %v5945 = vadd.f32 0.0, %v5944
        %v5946 = vpop.f32.mrb[0].mxu0
        %v5947 = vpop.f32.mrb[0].mxu0
        %v5948 = vadd.f32 0.0, %v5947
        %v5949 = vpop.f32.mrb[0].mxu0
        %5950 = vmatprep.mubr.bf16.mxu0 0
        %5951 = vmatmul.mubr.bf16.gmra.mrb[0].mxu0 %v5826
        %v5952 = vpop.f32.mrb[0].mxu0
        %v5953 = vadd.f32 0.0, %v5952
        %v5954 = vpop.f32.mrb[0].mxu0
        %v5955 = vpop.f32.mrb[0].mxu0
        %v5956 = vadd.f32 0.0, %v5955
        %v5957 = vpop.f32.mrb[0].mxu0
        %5958 = vmatprep.mubr.bf16.mxu0 0
        %5959 = vmatmul.mubr.bf16.gmra.mrb[0].mxu0 %v5829
        %v5960 = vpop.f32.mrb[0].mxu0
        %v5961 = vadd.f32 0.0, %v5960
        %v5962 = vpop.f32.mrb[0].mxu0
        %v5963 = vpop.f32.mrb[0].mxu0
        %v5964 = vadd.f32 0.0, %v5963
        %v5965 = vpop.f32.mrb[0].mxu0
        %5966 = vmatprep.mubr.bf16.mxu0 0
        %5967 = vmatmul.mubr.bf16.gmra.mrb[0].mxu0 %v5832
        %v5968 = vpop.f32.mrb[0].mxu0
        %v5969 = vadd.f32 0.0, %v5968
        %v5970 = vpop.f32.mrb[0].mxu0
        %v5971 = vpop.f32.mrb[0].mxu0
        %v5972 = vadd.f32 0.0, %v5971
        %v5973 = vpop.f32.mrb[0].mxu0
        %5974 = vmatprep.mubr.bf16.mxu0 0
        %5975 = vmatmul.mubr.bf16.gmra.mrb[0].mxu0 %v5835
        %v5976 = vpop.f32.mrb[0].mxu0
        %v5977 = vadd.f32 0.0, %v5976
        %v5978 = vpop.f32.mrb[0].mxu0
        %v5979 = vpop.f32.mrb[0].mxu0
        %v5980 = vadd.f32 0.0, %v5979
        %v5981 = vpop.f32.mrb[0].mxu0
        %5982 = vmatprep.mubr.bf16.mxu0 0
        %5983 = vmatmul.mubr.bf16.gmra.mrb[0].mxu0 %v5838
        %v5984 = vpop.f32.mrb[0].mxu0
        %v5985 = vadd.f32 0.0, %v5984
        %v5986 = vpop.f32.mrb[0].mxu0
        %v5987 = vpop.f32.mrb[0].mxu0
        %v5988 = vadd.f32 0.0, %v5987
        %v5989 = vpop.f32.mrb[0].mxu0
        %5990 = vmatprep.mubr.bf16.mxu0 0
        %5991 = vmatmul.mubr.bf16.gmra.mrb[0].mxu0 %v5841
        %v5992 = vpop.f32.mrb[0].mxu0
        %v5993 = vadd.f32 0.0, %v5992
        %v5994 = vpop.f32.mrb[0].mxu0
        %v5995 = vpop.f32.mrb[0].mxu0
        %v5996 = vadd.f32 0.0, %v5995
        %v5997 = vpop.f32.mrb[0].mxu0
        %5998 = vmatprep.mubr.bf16.mxu0 0
        %5999 = vmatmul.mubr.bf16.gmra.mrb[0].mxu0 %v5844
        %v6000 = vpop.f32.mrb[0].mxu0
        %v6001 = vadd.f32 0.0, %v6000
        %v6002 = vpop.f32.mrb[0].mxu0
        %v6003 = vpop.f32.mrb[0].mxu0
        %v6004 = vadd.f32 0.0, %v6003
        %v6005 = vpop.f32.mrb[0].mxu0
        %6006 = vdwg.mxu0
        %v6007 = vadd.f32 %v5701, %v5881
        %v6008 = vadd.f32 %v5702, %v5884
        %v6009 = vadd.f32 %v5703, %v5889
        %v6010 = vadd.f32 %v5704, %v5892
        %v6011 = vadd.f32 %v5705, %v5897
        %v6012 = vadd.f32 %v5706, %v5900
        %v6013 = vadd.f32 %v5707, %v5905
        %v6014 = vadd.f32 %v5708, %v5908
        %v6015 = vadd.f32 %v5709, %v5913
        %v6016 = vadd.f32 %v5710, %v5916
        %v6017 = vadd.f32 %v5711, %v5921
        %v6018 = vadd.f32 %v5712, %v5924
        %v6019 = vadd.f32 %v5713, %v5929
        %v6020 = vadd.f32 %v5714, %v5932
        %v6021 = vadd.f32 %v5715, %v5937
        %v6022 = vadd.f32 %v5716, %v5940
        %v6023 = vadd.f32 %v5717, %v5945
        %v6024 = vadd.f32 %v5718, %v5948
        %v6025 = vadd.f32 %v5719, %v5953
        %v6026 = vadd.f32 %v5720, %v5956
        %v6027 = vadd.f32 %v5721, %v5961
        %v6028 = vadd.f32 %v5722, %v5964
        %v6029 = vadd.f32 %v5723, %v5969
        %v6030 = vadd.f32 %v5724, %v5972
        %v6031 = vadd.f32 %v5725, %v5977
        %v6032 = vadd.f32 %v5726, %v5980
        %v6033 = vadd.f32 %v5727, %v5985
        %v6034 = vadd.f32 %v5728, %v5988
        %v6035 = vadd.f32 %v5729, %v5993
        %v6036 = vadd.f32 %v5730, %v5996
        %v6037 = vadd.f32 %v5731, %v6001
        %v6038 = vadd.f32 %v5732, %v6004
        %v6039 = vld [vmem:[#allocation13] sm:$0x1]
        %v6041 = vlaneseq
        %v6042 = vshrl.u32 %v6041, 7
        %v6043 = vsub.s32 0, %v6042
        %v6044 = vrot.slane %v6039, %v6043
        %v6046 = vmul.f32 %v6007, %v6044
        %v6047 = vmul.f32 %v6008, %v6044
        %v6048 = vmul.f32 %v6009, %v6044
        %v6049 = vmul.f32 %v6010, %v6044
        %v6050 = vmul.f32 %v6011, %v6044
        %v6051 = vmul.f32 %v6012, %v6044
        %v6052 = vmul.f32 %v6013, %v6044
        %v6053 = vmul.f32 %v6014, %v6044
        %v6054 = vmul.f32 %v6015, %v6044
        %v6055 = vmul.f32 %v6016, %v6044
        %v6056 = vmul.f32 %v6017, %v6044
        %v6057 = vmul.f32 %v6018, %v6044
        %v6058 = vmul.f32 %v6019, %v6044
        %v6059 = vmul.f32 %v6020, %v6044
        %v6060 = vmul.f32 %v6021, %v6044
        %v6061 = vmul.f32 %v6022, %v6044
        %v6062 = vmul.f32 %v6023, %v6044
        %v6063 = vmul.f32 %v6024, %v6044
        %v6064 = vmul.f32 %v6025, %v6044
        %v6065 = vmul.f32 %v6026, %v6044
        %v6066 = vmul.f32 %v6027, %v6044
        %v6067 = vmul.f32 %v6028, %v6044
        %v6068 = vmul.f32 %v6029, %v6044
        %v6069 = vmul.f32 %v6030, %v6044
        %v6070 = vmul.f32 %v6031, %v6044
        %v6071 = vmul.f32 %v6032, %v6044
        %v6072 = vmul.f32 %v6033, %v6044
        %v6073 = vmul.f32 %v6034, %v6044
        %v6074 = vmul.f32 %v6035, %v6044
        %v6075 = vmul.f32 %v6036, %v6044
        %v6076 = vmul.f32 %v6037, %v6044
        %v6077 = vmul.f32 %v6038, %v6044
        %v6078 = vld [vmem:[#allocation15] sm:$0x1]
        %v6080 = vlaneseq
        %v6081 = vshrl.u32 %v6080, 7
        %v6082 = vsub.s32 0, %v6081
        %v6083 = vrot.slane %v6078, %v6082
        %v6085 = vadd.f32 %v6046, %v6083
        %v6086 = vadd.f32 %v6047, %v6083
        %v6087 = vadd.f32 %v6048, %v6083
        %v6088 = vadd.f32 %v6049, %v6083
        %v6089 = vadd.f32 %v6050, %v6083
        %v6090 = vadd.f32 %v6051, %v6083
        %v6091 = vadd.f32 %v6052, %v6083
        %v6092 = vadd.f32 %v6053, %v6083
        %v6093 = vadd.f32 %v6054, %v6083
        %v6094 = vadd.f32 %v6055, %v6083
        %v6095 = vadd.f32 %v6056, %v6083
        %v6096 = vadd.f32 %v6057, %v6083
        %v6097 = vadd.f32 %v6058, %v6083
        %v6098 = vadd.f32 %v6059, %v6083
        %v6099 = vadd.f32 %v6060, %v6083
        %v6100 = vadd.f32 %v6061, %v6083
        %v6101 = vadd.f32 %v6062, %v6083
        %v6102 = vadd.f32 %v6063, %v6083
        %v6103 = vadd.f32 %v6064, %v6083
        %v6104 = vadd.f32 %v6065, %v6083
        %v6105 = vadd.f32 %v6066, %v6083
        %v6106 = vadd.f32 %v6067, %v6083
        %v6107 = vadd.f32 %v6068, %v6083
        %v6108 = vadd.f32 %v6069, %v6083
        %v6109 = vadd.f32 %v6070, %v6083
        %v6110 = vadd.f32 %v6071, %v6083
        %v6111 = vadd.f32 %v6072, %v6083
        %v6112 = vadd.f32 %v6073, %v6083
        %v6113 = vadd.f32 %v6074, %v6083
        %v6114 = vadd.f32 %v6075, %v6083
        %v6115 = vadd.f32 %v6076, %v6083
        %v6116 = vadd.f32 %v6077, %v6083
        %v6117 = vmax.f32 %v6085, 0.0
        %v6118 = vmax.f32 %v6086, 0.0
        %v6119 = vmax.f32 %v6087, 0.0
        %v6120 = vmax.f32 %v6088, 0.0
        %v6121 = vmax.f32 %v6089, 0.0
        %v6122 = vmax.f32 %v6090, 0.0
        %v6123 = vmax.f32 %v6091, 0.0
        %v6124 = vmax.f32 %v6092, 0.0
        %v6125 = vmax.f32 %v6093, 0.0
        %v6126 = vmax.f32 %v6094, 0.0
        %v6127 = vmax.f32 %v6095, 0.0
        %v6128 = vmax.f32 %v6096, 0.0
        %v6129 = vmax.f32 %v6097, 0.0
        %v6130 = vmax.f32 %v6098, 0.0
        %v6131 = vmax.f32 %v6099, 0.0
        %v6132 = vmax.f32 %v6100, 0.0
        %v6133 = vmax.f32 %v6101, 0.0
        %v6134 = vmax.f32 %v6102, 0.0
        %v6135 = vmax.f32 %v6103, 0.0
        %v6136 = vmax.f32 %v6104, 0.0
        %v6137 = vmax.f32 %v6105, 0.0
        %v6138 = vmax.f32 %v6106, 0.0
        %v6139 = vmax.f32 %v6107, 0.0
        %v6140 = vmax.f32 %v6108, 0.0
        %v6141 = vmax.f32 %v6109, 0.0
        %v6142 = vmax.f32 %v6110, 0.0
        %v6143 = vmax.f32 %v6111, 0.0
        %v6144 = vmax.f32 %v6112, 0.0
        %v6145 = vmax.f32 %v6113, 0.0
        %v6146 = vmax.f32 %v6114, 0.0
        %v6147 = vmax.f32 %v6115, 0.0
        %v6148 = vmax.f32 %v6116, 0.0
        %6149 = vst.msk [vmem:[#allocation2] sm:$0xff] %vm3260, 0.0
        %6150 = vst.msk [vmem:[#allocation2 + $0x8] sm:$0xff] %vm3260, 0.0
        %6151 = vst.msk [vmem:[#allocation2 + $0x10] sm:$0x3] %vm3263, 0.0
        %6152 = vst.msk [vmem:[#allocation2 + $0x18] sm:$0xff] %vm3260, 0.0
        %6153 = vst.msk [vmem:[#allocation2 + $0x20] sm:$0xff] %vm3260, 0.0
        %6154 = vst.msk [vmem:[#allocation2 + $0x28] sm:$0x3] %vm3263, 0.0
        %6155 = vst.msk [vmem:[#allocation2 + $0x30] sm:$0xff] %vm3260, 0.0
        %6156 = vst.msk [vmem:[#allocation2 + $0x38] sm:$0xff] %vm3260, 0.0
        %6157 = vst.msk [vmem:[#allocation2 + $0x40] sm:$0x3] %vm3263, 0.0
        %6158 = vst.msk [vmem:[#allocation2 + $0x48] sm:$0xff] %vm3260, 0.0
        %6159 = vst.msk [vmem:[#allocation2 + $0x50] sm:$0xff] %vm3260, 0.0
        %6160 = vst.msk [vmem:[#allocation2 + $0x58] sm:$0x3] %vm3263, 0.0
        %6161 = vst.msk [vmem:[#allocation2 + $0x60] sm:$0xff] %vm3260, 0.0
        %6162 = vst.msk [vmem:[#allocation2 + $0x68] sm:$0xff] %vm3260, 0.0
        %6163 = vst.msk [vmem:[#allocation2 + $0x70] sm:$0x3] %vm3263, 0.0
        %6164 = vst.msk [vmem:[#allocation2 + $0x78] sm:$0xff] %vm3260, 0.0
        %6165 = vst.msk [vmem:[#allocation2 + $0x80] sm:$0xff] %vm3260, 0.0
        %6166 = vst.msk [vmem:[#allocation2 + $0x88] sm:$0x3] %vm3263, 0.0
        %6167 = vst.msk [vmem:[#allocation2 + $0x90] sm:$0xff] %vm3260, 0.0
        %6168 = vst.msk [vmem:[#allocation2 + $0x98] sm:$0xff] %vm3260, 0.0
        %6169 = vst.msk [vmem:[#allocation2 + $0xa0] sm:$0x3] %vm3263, 0.0
        %6170 = vst.msk [vmem:[#allocation2 + $0xa8] sm:$0xff] %vm3260, 0.0
        %6171 = vst.msk [vmem:[#allocation2 + $0xb0] sm:$0xff] %vm3260, 0.0
        %6172 = vst.msk [vmem:[#allocation2 + $0xb8] sm:$0x3] %vm3263, 0.0
        %6173 = vst.msk [vmem:[#allocation2 + $0xc0] sm:$0xff] %vm3260, 0.0
        %6174 = vst.msk [vmem:[#allocation2 + $0xc8] sm:$0xff] %vm3260, 0.0
        %6175 = vst.msk [vmem:[#allocation2 + $0xd0] sm:$0x3] %vm3263, 0.0
        %6176 = vst.msk [vmem:[#allocation2 + $0xd8] sm:$0xff] %vm3260, 0.0
        %6177 = vst.msk [vmem:[#allocation2 + $0xe0] sm:$0xff] %vm3260, 0.0
        %6178 = vst.msk [vmem:[#allocation2 + $0xe8] sm:$0x3] %vm3263, 0.0
        %6179 = vst.msk [vmem:[#allocation2 + $0xf0] sm:$0xff] %vm3260, 0.0
        %6180 = vst.msk [vmem:[#allocation2 + $0xf8] sm:$0xff] %vm3260, 0.0
        %6181 = vst.msk [vmem:[#allocation2 + $0x100] sm:$0x3] %vm3263, 0.0
        %6182 = vst.msk [vmem:[#allocation2 + $0x108] sm:$0xff] %vm3260, 0.0
        %6183 = vst.msk [vmem:[#allocation2 + $0x110] sm:$0xff] %vm3260, 0.0
        %6184 = vst.msk [vmem:[#allocation2 + $0x118] sm:$0x3] %vm3263, 0.0
        %6185 = vst.msk [vmem:[#allocation2 + $0x120] sm:$0xff] %vm3260, 0.0
        %6186 = vst.msk [vmem:[#allocation2 + $0x128] sm:$0xff] %vm3260, 0.0
        %6187 = vst.msk [vmem:[#allocation2 + $0x130] sm:$0x3] %vm3263, 0.0
        %6188 = vst.msk [vmem:[#allocation2 + $0x138] sm:$0xff] %vm3260, 0.0
        %6189 = vst.msk [vmem:[#allocation2 + $0x140] sm:$0xff] %vm3260, 0.0
        %6190 = vst.msk [vmem:[#allocation2 + $0x148] sm:$0x3] %vm3263, 0.0
        %6191 = vst.msk [vmem:[#allocation2 + $0x150] sm:$0xff] %vm3260, 0.0
        %6192 = vst.msk [vmem:[#allocation2 + $0x158] sm:$0xff] %vm3260, 0.0
        %6193 = vst.msk [vmem:[#allocation2 + $0x160] sm:$0x3] %vm3263, 0.0
        %6194 = vst.msk [vmem:[#allocation2 + $0x168] sm:$0xff] %vm3260, 0.0
        %6195 = vst.msk [vmem:[#allocation2 + $0x170] sm:$0xff] %vm3260, 0.0
        %6196 = vst.msk [vmem:[#allocation2 + $0x178] sm:$0x3] %vm3263, 0.0
        %6197 = vst.msk [vmem:[#allocation2 + $0x180] sm:$0xff] %vm3260, 0.0
        %6198 = vst.msk [vmem:[#allocation2 + $0x188] sm:$0xff] %vm3260, 0.0
        %6199 = vst.msk [vmem:[#allocation2 + $0x190] sm:$0x3] %vm3263, 0.0
        %6200 = vst.msk [vmem:[#allocation2 + $0x198] sm:$0xff] %vm3260, 0.0
        %6201 = vst.msk [vmem:[#allocation2 + $0x1a0] sm:$0xff] %vm3260, 0.0
        %6202 = vst.msk [vmem:[#allocation2 + $0x1a8] sm:$0x3] %vm3263, 0.0
        %6203 = vst.msk [vmem:[%s3316 + $0x1] sm:$0xff] %vm3260, %v6117
        %6204 = vst.msk [vmem:[%s3316 + $0x9] sm:$0xff] %vm3260, %v6118
        %6205 = vst.msk [vmem:[%s3316 + $0x19] sm:$0xff] %vm3260, %v6119
        %6206 = vst.msk [vmem:[%s3316 + $0x21] sm:$0xff] %vm3260, %v6120
        %6207 = vst.msk [vmem:[%s3316 + $0x31] sm:$0xff] %vm3260, %v6121
        %6208 = vst.msk [vmem:[%s3316 + $0x39] sm:$0xff] %vm3260, %v6122
        %6209 = vst.msk [vmem:[%s3316 + $0x49] sm:$0xff] %vm3260, %v6123
        %6210 = vst.msk [vmem:[%s3316 + $0x51] sm:$0xff] %vm3260, %v6124
        %6211 = vst.msk [vmem:[%s3316 + $0x61] sm:$0xff] %vm3260, %v6125
        %6212 = vst.msk [vmem:[%s3316 + $0x69] sm:$0xff] %vm3260, %v6126
        %6213 = vst.msk [vmem:[%s3316 + $0x79] sm:$0xff] %vm3260, %v6127
        %6214 = vst.msk [vmem:[%s3316 + $0x81] sm:$0xff] %vm3260, %v6128
        %6215 = vst.msk [vmem:[%s3316 + $0x91] sm:$0xff] %vm3260, %v6129
        %6216 = vst.msk [vmem:[%s3316 + $0x99] sm:$0xff] %vm3260, %v6130
        %6217 = vst.msk [vmem:[%s3316 + $0xa9] sm:$0xff] %vm3260, %v6131
        %6218 = vst.msk [vmem:[%s3316 + $0xb1] sm:$0xff] %vm3260, %v6132
        %6219 = vst.msk [vmem:[%s3316 + $0xc1] sm:$0xff] %vm3260, %v6133
        %6220 = vst.msk [vmem:[%s3316 + $0xc9] sm:$0xff] %vm3260, %v6134
        %6221 = vst.msk [vmem:[%s3316 + $0xd9] sm:$0xff] %vm3260, %v6135
        %6222 = vst.msk [vmem:[%s3316 + $0xe1] sm:$0xff] %vm3260, %v6136
        %6223 = vst.msk [vmem:[%s3316 + $0xf1] sm:$0xff] %vm3260, %v6137
        %6224 = vst.msk [vmem:[%s3316 + $0xf9] sm:$0xff] %vm3260, %v6138
        %6225 = vst.msk [vmem:[%s3316 + $0x109] sm:$0xff] %vm3260, %v6139
        %6226 = vst.msk [vmem:[%s3316 + $0x111] sm:$0xff] %vm3260, %v6140
        %6227 = vst.msk [vmem:[%s3316 + $0x121] sm:$0xff] %vm3260, %v6141
        %6228 = vst.msk [vmem:[%s3316 + $0x129] sm:$0xff] %vm3260, %v6142
        %6229 = vst.msk [vmem:[%s3316 + $0x139] sm:$0xff] %vm3260, %v6143
        %6230 = vst.msk [vmem:[%s3316 + $0x141] sm:$0xff] %vm3260, %v6144
        %6231 = vst.msk [vmem:[%s3316 + $0x151] sm:$0xff] %vm3260, %v6145
        %6232 = vst.msk [vmem:[%s3316 + $0x159] sm:$0xff] %vm3260, %v6146
        %6233 = vst.msk [vmem:[%s3316 + $0x169] sm:$0xff] %vm3260, %v6147
        %6234 = vst.msk [vmem:[%s3316 + $0x171] sm:$0xff] %vm3260, %v6148
        %v6235 = vld [vmem:[#allocation2] sm:$0xff]
        %v6236 = vld [vmem:[#allocation2 + $0x8] sm:$0xff]
        %v6237 = vld [vmem:[#allocation2 + $0x18] sm:$0xff]
        %v6238 = vld [vmem:[#allocation2 + $0x20] sm:$0xff]
        %v6239 = vld [vmem:[#allocation2 + $0x30] sm:$0xff]
        %v6240 = vld [vmem:[#allocation2 + $0x38] sm:$0xff]
        %v6241 = vld [vmem:[#allocation2 + $0x48] sm:$0xff]
        %v6242 = vld [vmem:[#allocation2 + $0x50] sm:$0xff]
        %v6243 = vld [vmem:[#allocation2 + $0x60] sm:$0xff]
        %v6244 = vld [vmem:[#allocation2 + $0x68] sm:$0xff]
        %v6245 = vld [vmem:[#allocation2 + $0x78] sm:$0xff]
        %v6246 = vld [vmem:[#allocation2 + $0x80] sm:$0xff]
        %v6247 = vld [vmem:[#allocation2 + $0x90] sm:$0xff]
        %v6248 = vld [vmem:[#allocation2 + $0x98] sm:$0xff]
        %v6249 = vld [vmem:[#allocation2 + $0xa8] sm:$0xff]
        %v6250 = vld [vmem:[#allocation2 + $0xb0] sm:$0xff]
        %v6251 = vld [vmem:[#allocation2 + $0xc0] sm:$0xff]
        %v6252 = vld [vmem:[#allocation2 + $0xc8] sm:$0xff]
        %v6253 = vld [vmem:[#allocation2 + $0xd8] sm:$0xff]
        %v6254 = vld [vmem:[#allocation2 + $0xe0] sm:$0xff]
        %v6255 = vld [vmem:[#allocation2 + $0xf0] sm:$0xff]
        %v6256 = vld [vmem:[#allocation2 + $0xf8] sm:$0xff]
        %v6257 = vld [vmem:[#allocation2 + $0x108] sm:$0xff]
        %v6258 = vld [vmem:[#allocation2 + $0x110] sm:$0xff]
        %v6259 = vld [vmem:[#allocation2 + $0x120] sm:$0xff]
        %v6260 = vld [vmem:[#allocation2 + $0x128] sm:$0xff]
        %v6261 = vld [vmem:[#allocation2 + $0x138] sm:$0xff]
        %v6262 = vld [vmem:[#allocation2 + $0x140] sm:$0xff]
        %v6263 = vld [vmem:[#allocation2 + $0x150] sm:$0xff]
        %v6264 = vld [vmem:[#allocation2 + $0x158] sm:$0xff]
        %v6265 = vld [vmem:[#allocation2 + $0x168] sm:$0xff]
        %v6266 = vld [vmem:[#allocation2 + $0x170] sm:$0xff]
        %v6267 = vpack.c.bf16 %v6236, %v6235
        %v6268 = vpack.c.bf16 %v6238, %v6237
        %v6269 = vpack.c.bf16 %v6240, %v6239
        %v6270 = vpack.c.bf16 %v6242, %v6241
        %v6271 = vpack.c.bf16 %v6244, %v6243
        %v6272 = vpack.c.bf16 %v6246, %v6245
        %v6273 = vpack.c.bf16 %v6248, %v6247
        %v6274 = vpack.c.bf16 %v6250, %v6249
        %v6275 = vpack.c.bf16 %v6252, %v6251
        %v6276 = vpack.c.bf16 %v6254, %v6253
        %v6277 = vpack.c.bf16 %v6256, %v6255
        %v6278 = vpack.c.bf16 %v6258, %v6257
        %v6279 = vpack.c.bf16 %v6260, %v6259
        %v6280 = vpack.c.bf16 %v6262, %v6261
        %v6281 = vpack.c.bf16 %v6264, %v6263
        %v6282 = vpack.c.bf16 %v6266, %v6265
        %v6283 = vld [vmem:[#allocation16] sm:$0xf]
        %v6284 = vld [vmem:[#allocation16 + $0x4] sm:$0xf]
        %v6285 = vld [vmem:[#allocation16 + $0x8] sm:$0xf]
        %v6286 = vld [vmem:[#allocation16 + $0xc] sm:$0xf]
        %v6287 = vld [vmem:[#allocation2 + $0x1] sm:$0xff]
        %v6288 = vld [vmem:[#allocation2 + $0x9] sm:$0xff]
        %v6289 = vld [vmem:[#allocation2 + $0x19] sm:$0xff]
        %v6290 = vld [vmem:[#allocation2 + $0x21] sm:$0xff]
        %v6291 = vld [vmem:[#allocation2 + $0x31] sm:$0xff]
        %v6292 = vld [vmem:[#allocation2 + $0x39] sm:$0xff]
        %v6293 = vld [vmem:[#allocation2 + $0x49] sm:$0xff]
        %v6294 = vld [vmem:[#allocation2 + $0x51] sm:$0xff]
        %v6295 = vld [vmem:[#allocation2 + $0x61] sm:$0xff]
        %v6296 = vld [vmem:[#allocation2 + $0x69] sm:$0xff]
        %v6297 = vld [vmem:[#allocation2 + $0x79] sm:$0xff]
        %v6298 = vld [vmem:[#allocation2 + $0x81] sm:$0xff]
        %v6299 = vld [vmem:[#allocation2 + $0x91] sm:$0xff]
        %v6300 = vld [vmem:[#allocation2 + $0x99] sm:$0xff]
        %v6301 = vld [vmem:[#allocation2 + $0xa9] sm:$0xff]
        %v6302 = vld [vmem:[#allocation2 + $0xb1] sm:$0xff]
        %v6303 = vld [vmem:[#allocation2 + $0xc1] sm:$0xff]
        %v6304 = vld [vmem:[#allocation2 + $0xc9] sm:$0xff]
        %v6305 = vld [vmem:[#allocation2 + $0xd9] sm:$0xff]
        %v6306 = vld [vmem:[#allocation2 + $0xe1] sm:$0xff]
        %v6307 = vld [vmem:[#allocation2 + $0xf1] sm:$0xff]
        %v6308 = vld [vmem:[#allocation2 + $0xf9] sm:$0xff]
        %v6309 = vld [vmem:[#allocation2 + $0x109] sm:$0xff]
        %v6310 = vld [vmem:[#allocation2 + $0x111] sm:$0xff]
        %v6311 = vld [vmem:[#allocation2 + $0x121] sm:$0xff]
        %v6312 = vld [vmem:[#allocation2 + $0x129] sm:$0xff]
        %v6313 = vld [vmem:[#allocation2 + $0x139] sm:$0xff]
        %v6314 = vld [vmem:[#allocation2 + $0x141] sm:$0xff]
        %v6315 = vld [vmem:[#allocation2 + $0x151] sm:$0xff]
        %v6316 = vld [vmem:[#allocation2 + $0x159] sm:$0xff]
        %v6317 = vld [vmem:[#allocation2 + $0x169] sm:$0xff]
        %v6318 = vld [vmem:[#allocation2 + $0x171] sm:$0xff]
        %v6319 = vpack.c.bf16 %v6288, %v6287
        %v6320 = vpack.c.bf16 %v6290, %v6289
        %v6321 = vpack.c.bf16 %v6292, %v6291
        %v6322 = vpack.c.bf16 %v6294, %v6293
        %v6323 = vpack.c.bf16 %v6296, %v6295
        %v6324 = vpack.c.bf16 %v6298, %v6297
        %v6325 = vpack.c.bf16 %v6300, %v6299
        %v6326 = vpack.c.bf16 %v6302, %v6301
        %v6327 = vpack.c.bf16 %v6304, %v6303
        %v6328 = vpack.c.bf16 %v6306, %v6305
        %v6329 = vpack.c.bf16 %v6308, %v6307
        %v6330 = vpack.c.bf16 %v6310, %v6309
        %v6331 = vpack.c.bf16 %v6312, %v6311
        %v6332 = vpack.c.bf16 %v6314, %v6313
        %v6333 = vpack.c.bf16 %v6316, %v6315
        %v6334 = vpack.c.bf16 %v6318, %v6317
        %s6335 = scalar_lea.vmem [#allocation16], 16
        %v6336 = vld [vmem:[%s6335] sm:$0xf]
        %v6337 = vld [vmem:[%s6335 + $0x4] sm:$0xf]
        %v6338 = vld [vmem:[%s6335 + $0x8] sm:$0xf]
        %v6339 = vld [vmem:[%s6335 + $0xc] sm:$0xf]
        %v6344 = vunpack.c.l.b16 %v6336
        %v6345 = vunpack.c.l.b16 %v6337
        %v6346 = vunpack.c.l.b16 %v6338
        %v6347 = vunpack.c.l.b16 %v6339
        %v6348 = vpack.c.b16 %v6345, %v6344
        %v6349 = vpack.c.b16 %v6347, %v6346
        %v6353 = vsel %vm3260, %v6319, 0
        %v6356 = vsel %vm3260, %v6320, 0
        %v6359 = vsel %vm3260, %v6321, 0
        %v6362 = vsel %vm3260, %v6322, 0
        %v6365 = vsel %vm3260, %v6323, 0
        %v6368 = vsel %vm3260, %v6324, 0
        %v6371 = vsel %vm3260, %v6325, 0
        %v6374 = vsel %vm3260, %v6326, 0
        %v6377 = vsel %vm3260, %v6327, 0
        %v6380 = vsel %vm3260, %v6328, 0
        %v6383 = vsel %vm3260, %v6329, 0
        %v6386 = vsel %vm3260, %v6330, 0
        %v6389 = vsel %vm3260, %v6331, 0
        %v6392 = vsel %vm3260, %v6332, 0
        %v6395 = vsel %vm3260, %v6333, 0
        %v6398 = vsel %vm3260, %v6334, 0
        %6400 = vmatprep.subr.bf16.mxu0 0
        %6401 = vmatpush1.bf16.msra.mxu0 %v6348
        %6402 = vmatprep.subr.bf16.mxu0 0
        %6403 = vmatpush1.bf16.msra.mxu0 %v6349
        %6404 = vmatprep.subr.bf16.mxu0 0
        %6405 = vmatpush1.bf16.msra.mxu0 0
        %6406 = vmatprep.subr.bf16.mxu0 0
        %6407 = vmatpush1.bf16.msra.mxu0 0
        %6408 = vmatprep.subr.bf16.mxu0 0
        %6409 = vmatpush1.bf16.msra.mxu0 0
        %6410 = vmatprep.subr.bf16.mxu0 0
        %6411 = vmatpush1.bf16.msra.mxu0 0
        %6412 = vmatprep.subr.bf16.mxu0 0
        %6413 = vmatpush1.bf16.msra.mxu0 0
        %6414 = vmatprep.subr.bf16.mxu0 0
        %6415 = vmatpush1.bf16.msra.mxu0 0
        %6416 = vmatprep.subr.bf16.mxu0 0
        %6417 = vmatpush1.bf16.msra.mxu0 0
        %6418 = vmatprep.subr.bf16.mxu0 0
        %6419 = vmatpush1.bf16.msra.mxu0 0
        %6420 = vmatprep.subr.bf16.mxu0 0
        %6421 = vmatpush1.bf16.msra.mxu0 0
        %6422 = vmatprep.subr.bf16.mxu0 0
        %6423 = vmatpush1.bf16.msra.mxu0 0
        %6424 = vmatprep.subr.bf16.mxu0 0
        %6425 = vmatpush1.bf16.msra.mxu0 0
        %6426 = vmatprep.subr.bf16.mxu0 0
        %6427 = vmatpush1.bf16.msra.mxu0 0
        %6428 = vmatprep.subr.bf16.mxu0 0
        %6429 = vmatpush1.bf16.msra.mxu0 0
        %6430 = vmatprep.subr.bf16.mxu0 0
        %6431 = vmatpush1.bf16.msra.mxu0 0
        %6432 = vmatprep.mubr.bf16.mxu0 0
        %6433 = vmatmul.mubr.bf16.gmra.mrb[0].mxu0 %v6353
        %v6434 = vpop.f32.mrb[0].mxu0
        %v6435 = vadd.f32 0.0, %v6434
        %v6436 = vpop.f32.mrb[0].mxu0
        %v6437 = vpop.f32.mrb[0].mxu0
        %v6438 = vadd.f32 0.0, %v6437
        %v6439 = vpop.f32.mrb[0].mxu0
        %6440 = vmatprep.mubr.bf16.mxu0 0
        %6441 = vmatmul.mubr.bf16.gmra.mrb[0].mxu0 %v6356
        %v6442 = vpop.f32.mrb[0].mxu0
        %v6443 = vadd.f32 0.0, %v6442
        %v6444 = vpop.f32.mrb[0].mxu0
        %v6445 = vpop.f32.mrb[0].mxu0
        %v6446 = vadd.f32 0.0, %v6445
        %v6447 = vpop.f32.mrb[0].mxu0
        %6448 = vmatprep.mubr.bf16.mxu0 0
        %6449 = vmatmul.mubr.bf16.gmra.mrb[0].mxu0 %v6359
        %v6450 = vpop.f32.mrb[0].mxu0
        %v6451 = vadd.f32 0.0, %v6450
        %v6452 = vpop.f32.mrb[0].mxu0
        %v6453 = vpop.f32.mrb[0].mxu0
        %v6454 = vadd.f32 0.0, %v6453
        %v6455 = vpop.f32.mrb[0].mxu0
        %6456 = vmatprep.mubr.bf16.mxu0 0
        %6457 = vmatmul.mubr.bf16.gmra.mrb[0].mxu0 %v6362
        %v6458 = vpop.f32.mrb[0].mxu0
        %v6459 = vadd.f32 0.0, %v6458
        %v6460 = vpop.f32.mrb[0].mxu0
        %v6461 = vpop.f32.mrb[0].mxu0
        %v6462 = vadd.f32 0.0, %v6461
        %v6463 = vpop.f32.mrb[0].mxu0
        %6464 = vmatprep.mubr.bf16.mxu0 0
        %6465 = vmatmul.mubr.bf16.gmra.mrb[0].mxu0 %v6365
        %v6466 = vpop.f32.mrb[0].mxu0
        %v6467 = vadd.f32 0.0, %v6466
        %v6468 = vpop.f32.mrb[0].mxu0
        %v6469 = vpop.f32.mrb[0].mxu0
        %v6470 = vadd.f32 0.0, %v6469
        %v6471 = vpop.f32.mrb[0].mxu0
        %6472 = vmatprep.mubr.bf16.mxu0 0
        %6473 = vmatmul.mubr.bf16.gmra.mrb[0].mxu0 %v6368
        %v6474 = vpop.f32.mrb[0].mxu0
        %v6475 = vadd.f32 0.0, %v6474
        %v6476 = vpop.f32.mrb[0].mxu0
        %v6477 = vpop.f32.mrb[0].mxu0
        %v6478 = vadd.f32 0.0, %v6477
        %v6479 = vpop.f32.mrb[0].mxu0
        %6480 = vmatprep.mubr.bf16.mxu0 0
        %6481 = vmatmul.mubr.bf16.gmra.mrb[0].mxu0 %v6371
        %v6482 = vpop.f32.mrb[0].mxu0
        %v6483 = vadd.f32 0.0, %v6482
        %v6484 = vpop.f32.mrb[0].mxu0
        %v6485 = vpop.f32.mrb[0].mxu0
        %v6486 = vadd.f32 0.0, %v6485
        %v6487 = vpop.f32.mrb[0].mxu0
        %6488 = vmatprep.mubr.bf16.mxu0 0
        %6489 = vmatmul.mubr.bf16.gmra.mrb[0].mxu0 %v6374
        %v6490 = vpop.f32.mrb[0].mxu0
        %v6491 = vadd.f32 0.0, %v6490
        %v6492 = vpop.f32.mrb[0].mxu0
        %v6493 = vpop.f32.mrb[0].mxu0
        %v6494 = vadd.f32 0.0, %v6493
        %v6495 = vpop.f32.mrb[0].mxu0
        %6496 = vmatprep.mubr.bf16.mxu0 0
        %6497 = vmatmul.mubr.bf16.gmra.mrb[0].mxu0 %v6377
        %v6498 = vpop.f32.mrb[0].mxu0
        %v6499 = vadd.f32 0.0, %v6498
        %v6500 = vpop.f32.mrb[0].mxu0
        %v6501 = vpop.f32.mrb[0].mxu0
        %v6502 = vadd.f32 0.0, %v6501
        %v6503 = vpop.f32.mrb[0].mxu0
        %6504 = vmatprep.mubr.bf16.mxu0 0
        %6505 = vmatmul.mubr.bf16.gmra.mrb[0].mxu0 %v6380
        %v6506 = vpop.f32.mrb[0].mxu0
        %v6507 = vadd.f32 0.0, %v6506
        %v6508 = vpop.f32.mrb[0].mxu0
        %v6509 = vpop.f32.mrb[0].mxu0
        %v6510 = vadd.f32 0.0, %v6509
        %v6511 = vpop.f32.mrb[0].mxu0
        %6512 = vmatprep.mubr.bf16.mxu0 0
        %6513 = vmatmul.mubr.bf16.gmra.mrb[0].mxu0 %v6383
        %v6514 = vpop.f32.mrb[0].mxu0
        %v6515 = vadd.f32 0.0, %v6514
        %v6516 = vpop.f32.mrb[0].mxu0
        %v6517 = vpop.f32.mrb[0].mxu0
        %v6518 = vadd.f32 0.0, %v6517
        %v6519 = vpop.f32.mrb[0].mxu0
        %6520 = vmatprep.mubr.bf16.mxu0 0
        %6521 = vmatmul.mubr.bf16.gmra.mrb[0].mxu0 %v6386
        %v6522 = vpop.f32.mrb[0].mxu0
        %v6523 = vadd.f32 0.0, %v6522
        %v6524 = vpop.f32.mrb[0].mxu0
        %v6525 = vpop.f32.mrb[0].mxu0
        %v6526 = vadd.f32 0.0, %v6525
        %v6527 = vpop.f32.mrb[0].mxu0
        %6528 = vmatprep.mubr.bf16.mxu0 0
        %6529 = vmatmul.mubr.bf16.gmra.mrb[0].mxu0 %v6389
        %v6530 = vpop.f32.mrb[0].mxu0
        %v6531 = vadd.f32 0.0, %v6530
        %v6532 = vpop.f32.mrb[0].mxu0
        %v6533 = vpop.f32.mrb[0].mxu0
        %v6534 = vadd.f32 0.0, %v6533
        %v6535 = vpop.f32.mrb[0].mxu0
        %6536 = vmatprep.mubr.bf16.mxu0 0
        %6537 = vmatmul.mubr.bf16.gmra.mrb[0].mxu0 %v6392
        %v6538 = vpop.f32.mrb[0].mxu0
        %v6539 = vadd.f32 0.0, %v6538
        %v6540 = vpop.f32.mrb[0].mxu0
        %v6541 = vpop.f32.mrb[0].mxu0
        %v6542 = vadd.f32 0.0, %v6541
        %v6543 = vpop.f32.mrb[0].mxu0
        %6544 = vmatprep.mubr.bf16.mxu0 0
        %6545 = vmatmul.mubr.bf16.gmra.mrb[0].mxu0 %v6395
        %v6546 = vpop.f32.mrb[0].mxu0
        %v6547 = vadd.f32 0.0, %v6546
        %v6548 = vpop.f32.mrb[0].mxu0
        %v6549 = vpop.f32.mrb[0].mxu0
        %v6550 = vadd.f32 0.0, %v6549
        %v6551 = vpop.f32.mrb[0].mxu0
        %6552 = vmatprep.mubr.bf16.mxu0 0
        %6553 = vmatmul.mubr.bf16.gmra.mrb[0].mxu0 %v6398
        %v6554 = vpop.f32.mrb[0].mxu0
        %v6555 = vadd.f32 0.0, %v6554
        %v6556 = vpop.f32.mrb[0].mxu0
        %v6557 = vpop.f32.mrb[0].mxu0
        %v6558 = vadd.f32 0.0, %v6557
        %v6559 = vpop.f32.mrb[0].mxu0
        %6560 = vdwg.mxu0
        %v6565 = vunpack.c.l.b16 %v6283
        %v6566 = vunpack.c.l.b16 %v6284
        %v6567 = vunpack.c.l.b16 %v6285
        %v6568 = vunpack.c.l.b16 %v6286
        %v6569 = vpack.c.b16 %v6566, %v6565
        %v6570 = vpack.c.b16 %v6568, %v6567
        %v6574 = vsel %vm3260, %v6267, 0
        %v6577 = vsel %vm3260, %v6268, 0
        %v6580 = vsel %vm3260, %v6269, 0
        %v6583 = vsel %vm3260, %v6270, 0
        %v6586 = vsel %vm3260, %v6271, 0
        %v6589 = vsel %vm3260, %v6272, 0
        %v6592 = vsel %vm3260, %v6273, 0
        %v6595 = vsel %vm3260, %v6274, 0
        %v6598 = vsel %vm3260, %v6275, 0
        %v6601 = vsel %vm3260, %v6276, 0
        %v6604 = vsel %vm3260, %v6277, 0
        %v6607 = vsel %vm3260, %v6278, 0
        %v6610 = vsel %vm3260, %v6279, 0
        %v6613 = vsel %vm3260, %v6280, 0
        %v6616 = vsel %vm3260, %v6281, 0
        %v6619 = vsel %vm3260, %v6282, 0
        %6621 = vmatprep.subr.bf16.mxu0 0
        %6622 = vmatpush1.bf16.msra.mxu0 %v6569
        %6623 = vmatprep.subr.bf16.mxu0 0
        %6624 = vmatpush1.bf16.msra.mxu0 %v6570
        %6625 = vmatprep.subr.bf16.mxu0 0
        %6626 = vmatpush1.bf16.msra.mxu0 0
        %6627 = vmatprep.subr.bf16.mxu0 0
        %6628 = vmatpush1.bf16.msra.mxu0 0
        %6629 = vmatprep.subr.bf16.mxu0 0
        %6630 = vmatpush1.bf16.msra.mxu0 0
        %6631 = vmatprep.subr.bf16.mxu0 0
        %6632 = vmatpush1.bf16.msra.mxu0 0
        %6633 = vmatprep.subr.bf16.mxu0 0
        %6634 = vmatpush1.bf16.msra.mxu0 0
        %6635 = vmatprep.subr.bf16.mxu0 0
        %6636 = vmatpush1.bf16.msra.mxu0 0
        %6637 = vmatprep.subr.bf16.mxu0 0
        %6638 = vmatpush1.bf16.msra.mxu0 0
        %6639 = vmatprep.subr.bf16.mxu0 0
        %6640 = vmatpush1.bf16.msra.mxu0 0
        %6641 = vmatprep.subr.bf16.mxu0 0
        %6642 = vmatpush1.bf16.msra.mxu0 0
        %6643 = vmatprep.subr.bf16.mxu0 0
        %6644 = vmatpush1.bf16.msra.mxu0 0
        %6645 = vmatprep.subr.bf16.mxu0 0
        %6646 = vmatpush1.bf16.msra.mxu0 0
        %6647 = vmatprep.subr.bf16.mxu0 0
        %6648 = vmatpush1.bf16.msra.mxu0 0
        %6649 = vmatprep.subr.bf16.mxu0 0
        %6650 = vmatpush1.bf16.msra.mxu0 0
        %6651 = vmatprep.subr.bf16.mxu0 0
        %6652 = vmatpush1.bf16.msra.mxu0 0
        %6653 = vmatprep.mubr.bf16.mxu0 0
        %6654 = vmatmul.mubr.bf16.gmra.mrb[0].mxu0 %v6574
        %v6655 = vpop.f32.mrb[0].mxu0
        %v6656 = vadd.f32 %v6435, %v6655
        %v6657 = vpop.f32.mrb[0].mxu0
        %v6658 = vpop.f32.mrb[0].mxu0
        %v6659 = vadd.f32 %v6438, %v6658
        %v6660 = vpop.f32.mrb[0].mxu0
        %6661 = vmatprep.mubr.bf16.mxu0 0
        %6662 = vmatmul.mubr.bf16.gmra.mrb[0].mxu0 %v6577
        %v6663 = vpop.f32.mrb[0].mxu0
        %v6664 = vadd.f32 %v6443, %v6663
        %v6665 = vpop.f32.mrb[0].mxu0
        %v6666 = vpop.f32.mrb[0].mxu0
        %v6667 = vadd.f32 %v6446, %v6666
        %v6668 = vpop.f32.mrb[0].mxu0
        %6669 = vmatprep.mubr.bf16.mxu0 0
        %6670 = vmatmul.mubr.bf16.gmra.mrb[0].mxu0 %v6580
        %v6671 = vpop.f32.mrb[0].mxu0
        %v6672 = vadd.f32 %v6451, %v6671
        %v6673 = vpop.f32.mrb[0].mxu0
        %v6674 = vpop.f32.mrb[0].mxu0
        %v6675 = vadd.f32 %v6454, %v6674
        %v6676 = vpop.f32.mrb[0].mxu0
        %6677 = vmatprep.mubr.bf16.mxu0 0
        %6678 = vmatmul.mubr.bf16.gmra.mrb[0].mxu0 %v6583
        %v6679 = vpop.f32.mrb[0].mxu0
        %v6680 = vadd.f32 %v6459, %v6679
        %v6681 = vpop.f32.mrb[0].mxu0
        %v6682 = vpop.f32.mrb[0].mxu0
        %v6683 = vadd.f32 %v6462, %v6682
        %v6684 = vpop.f32.mrb[0].mxu0
        %6685 = vmatprep.mubr.bf16.mxu0 0
        %6686 = vmatmul.mubr.bf16.gmra.mrb[0].mxu0 %v6586
        %v6687 = vpop.f32.mrb[0].mxu0
        %v6688 = vadd.f32 %v6467, %v6687
        %v6689 = vpop.f32.mrb[0].mxu0
        %v6690 = vpop.f32.mrb[0].mxu0
        %v6691 = vadd.f32 %v6470, %v6690
        %v6692 = vpop.f32.mrb[0].mxu0
        %6693 = vmatprep.mubr.bf16.mxu0 0
        %6694 = vmatmul.mubr.bf16.gmra.mrb[0].mxu0 %v6589
        %v6695 = vpop.f32.mrb[0].mxu0
        %v6696 = vadd.f32 %v6475, %v6695
        %v6697 = vpop.f32.mrb[0].mxu0
        %v6698 = vpop.f32.mrb[0].mxu0
        %v6699 = vadd.f32 %v6478, %v6698
        %v6700 = vpop.f32.mrb[0].mxu0
        %6701 = vmatprep.mubr.bf16.mxu0 0
        %6702 = vmatmul.mubr.bf16.gmra.mrb[0].mxu0 %v6592
        %v6703 = vpop.f32.mrb[0].mxu0
        %v6704 = vadd.f32 %v6483, %v6703
        %v6705 = vpop.f32.mrb[0].mxu0
        %v6706 = vpop.f32.mrb[0].mxu0
        %v6707 = vadd.f32 %v6486, %v6706
        %v6708 = vpop.f32.mrb[0].mxu0
        %6709 = vmatprep.mubr.bf16.mxu0 0
        %6710 = vmatmul.mubr.bf16.gmra.mrb[0].mxu0 %v6595
        %v6711 = vpop.f32.mrb[0].mxu0
        %v6712 = vadd.f32 %v6491, %v6711
        %v6713 = vpop.f32.mrb[0].mxu0
        %v6714 = vpop.f32.mrb[0].mxu0
        %v6715 = vadd.f32 %v6494, %v6714
        %v6716 = vpop.f32.mrb[0].mxu0
        %6717 = vmatprep.mubr.bf16.mxu0 0
        %6718 = vmatmul.mubr.bf16.gmra.mrb[0].mxu0 %v6598
        %v6719 = vpop.f32.mrb[0].mxu0
        %v6720 = vadd.f32 %v6499, %v6719
        %v6721 = vpop.f32.mrb[0].mxu0
        %v6722 = vpop.f32.mrb[0].mxu0
        %v6723 = vadd.f32 %v6502, %v6722
        %v6724 = vpop.f32.mrb[0].mxu0
        %6725 = vmatprep.mubr.bf16.mxu0 0
        %6726 = vmatmul.mubr.bf16.gmra.mrb[0].mxu0 %v6601
        %v6727 = vpop.f32.mrb[0].mxu0
        %v6728 = vadd.f32 %v6507, %v6727
        %v6729 = vpop.f32.mrb[0].mxu0
        %v6730 = vpop.f32.mrb[0].mxu0
        %v6731 = vadd.f32 %v6510, %v6730
        %v6732 = vpop.f32.mrb[0].mxu0
        %6733 = vmatprep.mubr.bf16.mxu0 0
        %6734 = vmatmul.mubr.bf16.gmra.mrb[0].mxu0 %v6604
        %v6735 = vpop.f32.mrb[0].mxu0
        %v6736 = vadd.f32 %v6515, %v6735
        %v6737 = vpop.f32.mrb[0].mxu0
        %v6738 = vpop.f32.mrb[0].mxu0
        %v6739 = vadd.f32 %v6518, %v6738
        %v6740 = vpop.f32.mrb[0].mxu0
        %6741 = vmatprep.mubr.bf16.mxu0 0
        %6742 = vmatmul.mubr.bf16.gmra.mrb[0].mxu0 %v6607
        %v6743 = vpop.f32.mrb[0].mxu0
        %v6744 = vadd.f32 %v6523, %v6743
        %v6745 = vpop.f32.mrb[0].mxu0
        %v6746 = vpop.f32.mrb[0].mxu0
        %v6747 = vadd.f32 %v6526, %v6746
        %v6748 = vpop.f32.mrb[0].mxu0
        %6749 = vmatprep.mubr.bf16.mxu0 0
        %6750 = vmatmul.mubr.bf16.gmra.mrb[0].mxu0 %v6610
        %v6751 = vpop.f32.mrb[0].mxu0
        %v6752 = vadd.f32 %v6531, %v6751
        %v6753 = vpop.f32.mrb[0].mxu0
        %v6754 = vpop.f32.mrb[0].mxu0
        %v6755 = vadd.f32 %v6534, %v6754
        %v6756 = vpop.f32.mrb[0].mxu0
        %6757 = vmatprep.mubr.bf16.mxu0 0
        %6758 = vmatmul.mubr.bf16.gmra.mrb[0].mxu0 %v6613
        %v6759 = vpop.f32.mrb[0].mxu0
        %v6760 = vadd.f32 %v6539, %v6759
        %v6761 = vpop.f32.mrb[0].mxu0
        %v6762 = vpop.f32.mrb[0].mxu0
        %v6763 = vadd.f32 %v6542, %v6762
        %v6764 = vpop.f32.mrb[0].mxu0
        %6765 = vmatprep.mubr.bf16.mxu0 0
        %6766 = vmatmul.mubr.bf16.gmra.mrb[0].mxu0 %v6616
        %v6767 = vpop.f32.mrb[0].mxu0
        %v6768 = vadd.f32 %v6547, %v6767
        %v6769 = vpop.f32.mrb[0].mxu0
        %v6770 = vpop.f32.mrb[0].mxu0
        %v6771 = vadd.f32 %v6550, %v6770
        %v6772 = vpop.f32.mrb[0].mxu0
        %6773 = vmatprep.mubr.bf16.mxu0 0
        %6774 = vmatmul.mubr.bf16.gmra.mrb[0].mxu0 %v6619
        %v6775 = vpop.f32.mrb[0].mxu0
        %v6776 = vadd.f32 %v6555, %v6775
        %v6777 = vpop.f32.mrb[0].mxu0
        %v6778 = vpop.f32.mrb[0].mxu0
        %v6779 = vadd.f32 %v6558, %v6778
        %v6780 = vpop.f32.mrb[0].mxu0
        %6781 = vdwg.mxu0
        %v6782 = vld [vmem:[#allocation2 + $0x2] sm:$0xff]
        %v6783 = vld [vmem:[#allocation2 + $0xa] sm:$0xff]
        %v6784 = vld [vmem:[#allocation2 + $0x1a] sm:$0xff]
        %v6785 = vld [vmem:[#allocation2 + $0x22] sm:$0xff]
        %v6786 = vld [vmem:[#allocation2 + $0x32] sm:$0xff]
        %v6787 = vld [vmem:[#allocation2 + $0x3a] sm:$0xff]
        %v6788 = vld [vmem:[#allocation2 + $0x4a] sm:$0xff]
        %v6789 = vld [vmem:[#allocation2 + $0x52] sm:$0xff]
        %v6790 = vld [vmem:[#allocation2 + $0x62] sm:$0xff]
        %v6791 = vld [vmem:[#allocation2 + $0x6a] sm:$0xff]
        %v6792 = vld [vmem:[#allocation2 + $0x7a] sm:$0xff]
        %v6793 = vld [vmem:[#allocation2 + $0x82] sm:$0xff]
        %v6794 = vld [vmem:[#allocation2 + $0x92] sm:$0xff]
        %v6795 = vld [vmem:[#allocation2 + $0x9a] sm:$0xff]
        %v6796 = vld [vmem:[#allocation2 + $0xaa] sm:$0xff]
        %v6797 = vld [vmem:[#allocation2 + $0xb2] sm:$0xff]
        %v6798 = vld [vmem:[#allocation2 + $0xc2] sm:$0xff]
        %v6799 = vld [vmem:[#allocation2 + $0xca] sm:$0xff]
        %v6800 = vld [vmem:[#allocation2 + $0xda] sm:$0xff]
        %v6801 = vld [vmem:[#allocation2 + $0xe2] sm:$0xff]
        %v6802 = vld [vmem:[#allocation2 + $0xf2] sm:$0xff]
        %v6803 = vld [vmem:[#allocation2 + $0xfa] sm:$0xff]
        %v6804 = vld [vmem:[#allocation2 + $0x10a] sm:$0xff]
        %v6805 = vld [vmem:[#allocation2 + $0x112] sm:$0xff]
        %v6806 = vld [vmem:[#allocation2 + $0x122] sm:$0xff]
        %v6807 = vld [vmem:[#allocation2 + $0x12a] sm:$0xff]
        %v6808 = vld [vmem:[#allocation2 + $0x13a] sm:$0xff]
        %v6809 = vld [vmem:[#allocation2 + $0x142] sm:$0xff]
        %v6810 = vld [vmem:[#allocation2 + $0x152] sm:$0xff]
        %v6811 = vld [vmem:[#allocation2 + $0x15a] sm:$0xff]
        %v6812 = vld [vmem:[#allocation2 + $0x16a] sm:$0xff]
        %v6813 = vld [vmem:[#allocation2 + $0x172] sm:$0xff]
        %v6814 = vpack.c.bf16 %v6783, %v6782
        %v6815 = vpack.c.bf16 %v6785, %v6784
        %v6816 = vpack.c.bf16 %v6787, %v6786
        %v6817 = vpack.c.bf16 %v6789, %v6788
        %v6818 = vpack.c.bf16 %v6791, %v6790
        %v6819 = vpack.c.bf16 %v6793, %v6792
        %v6820 = vpack.c.bf16 %v6795, %v6794
        %v6821 = vpack.c.bf16 %v6797, %v6796
        %v6822 = vpack.c.bf16 %v6799, %v6798
        %v6823 = vpack.c.bf16 %v6801, %v6800
        %v6824 = vpack.c.bf16 %v6803, %v6802
        %v6825 = vpack.c.bf16 %v6805, %v6804
        %v6826 = vpack.c.bf16 %v6807, %v6806
        %v6827 = vpack.c.bf16 %v6809, %v6808
        %v6828 = vpack.c.bf16 %v6811, %v6810
        %v6829 = vpack.c.bf16 %v6813, %v6812
        %s6830 = scalar_lea.vmem [#allocation16], 32
        %v6831 = vld [vmem:[%s6830] sm:$0xf]
        %v6832 = vld [vmem:[%s6830 + $0x4] sm:$0xf]
        %v6833 = vld [vmem:[%s6830 + $0x8] sm:$0xf]
        %v6834 = vld [vmem:[%s6830 + $0xc] sm:$0xf]
        %v6839 = vunpack.c.l.b16 %v6831
        %v6840 = vunpack.c.l.b16 %v6832
        %v6841 = vunpack.c.l.b16 %v6833
        %v6842 = vunpack.c.l.b16 %v6834
        %v6843 = vpack.c.b16 %v6840, %v6839
        %v6844 = vpack.c.b16 %v6842, %v6841
        %v6848 = vsel %vm3260, %v6814, 0
        %v6851 = vsel %vm3260, %v6815, 0
        %v6854 = vsel %vm3260, %v6816, 0
        %v6857 = vsel %vm3260, %v6817, 0
        %v6860 = vsel %vm3260, %v6818, 0
        %v6863 = vsel %vm3260, %v6819, 0
        %v6866 = vsel %vm3260, %v6820, 0
        %v6869 = vsel %vm3260, %v6821, 0
        %v6872 = vsel %vm3260, %v6822, 0
        %v6875 = vsel %vm3260, %v6823, 0
        %v6878 = vsel %vm3260, %v6824, 0
        %v6881 = vsel %vm3260, %v6825, 0
        %v6884 = vsel %vm3260, %v6826, 0
        %v6887 = vsel %vm3260, %v6827, 0
        %v6890 = vsel %vm3260, %v6828, 0
        %v6893 = vsel %vm3260, %v6829, 0
        %6895 = vmatprep.subr.bf16.mxu0 0
        %6896 = vmatpush1.bf16.msra.mxu0 %v6843
        %6897 = vmatprep.subr.bf16.mxu0 0
        %6898 = vmatpush1.bf16.msra.mxu0 %v6844
        %6899 = vmatprep.subr.bf16.mxu0 0
        %6900 = vmatpush1.bf16.msra.mxu0 0
        %6901 = vmatprep.subr.bf16.mxu0 0
        %6902 = vmatpush1.bf16.msra.mxu0 0
        %6903 = vmatprep.subr.bf16.mxu0 0
        %6904 = vmatpush1.bf16.msra.mxu0 0
        %6905 = vmatprep.subr.bf16.mxu0 0
        %6906 = vmatpush1.bf16.msra.mxu0 0
        %6907 = vmatprep.subr.bf16.mxu0 0
        %6908 = vmatpush1.bf16.msra.mxu0 0
        %6909 = vmatprep.subr.bf16.mxu0 0
        %6910 = vmatpush1.bf16.msra.mxu0 0
        %6911 = vmatprep.subr.bf16.mxu0 0
        %6912 = vmatpush1.bf16.msra.mxu0 0
        %6913 = vmatprep.subr.bf16.mxu0 0
        %6914 = vmatpush1.bf16.msra.mxu0 0
        %6915 = vmatprep.subr.bf16.mxu0 0
        %6916 = vmatpush1.bf16.msra.mxu0 0
        %6917 = vmatprep.subr.bf16.mxu0 0
        %6918 = vmatpush1.bf16.msra.mxu0 0
        %6919 = vmatprep.subr.bf16.mxu0 0
        %6920 = vmatpush1.bf16.msra.mxu0 0
        %6921 = vmatprep.subr.bf16.mxu0 0
        %6922 = vmatpush1.bf16.msra.mxu0 0
        %6923 = vmatprep.subr.bf16.mxu0 0
        %6924 = vmatpush1.bf16.msra.mxu0 0
        %6925 = vmatprep.subr.bf16.mxu0 0
        %6926 = vmatpush1.bf16.msra.mxu0 0
        %6927 = vmatprep.mubr.bf16.mxu0 0
        %6928 = vmatmul.mubr.bf16.gmra.mrb[0].mxu0 %v6848
        %v6929 = vpop.f32.mrb[0].mxu0
        %v6930 = vadd.f32 0.0, %v6929
        %v6931 = vpop.f32.mrb[0].mxu0
        %v6932 = vpop.f32.mrb[0].mxu0
        %v6933 = vadd.f32 0.0, %v6932
        %v6934 = vpop.f32.mrb[0].mxu0
        %6935 = vmatprep.mubr.bf16.mxu0 0
        %6936 = vmatmul.mubr.bf16.gmra.mrb[0].mxu0 %v6851
        %v6937 = vpop.f32.mrb[0].mxu0
        %v6938 = vadd.f32 0.0, %v6937
        %v6939 = vpop.f32.mrb[0].mxu0
        %v6940 = vpop.f32.mrb[0].mxu0
        %v6941 = vadd.f32 0.0, %v6940
        %v6942 = vpop.f32.mrb[0].mxu0
        %6943 = vmatprep.mubr.bf16.mxu0 0
        %6944 = vmatmul.mubr.bf16.gmra.mrb[0].mxu0 %v6854
        %v6945 = vpop.f32.mrb[0].mxu0
        %v6946 = vadd.f32 0.0, %v6945
        %v6947 = vpop.f32.mrb[0].mxu0
        %v6948 = vpop.f32.mrb[0].mxu0
        %v6949 = vadd.f32 0.0, %v6948
        %v6950 = vpop.f32.mrb[0].mxu0
        %6951 = vmatprep.mubr.bf16.mxu0 0
        %6952 = vmatmul.mubr.bf16.gmra.mrb[0].mxu0 %v6857
        %v6953 = vpop.f32.mrb[0].mxu0
        %v6954 = vadd.f32 0.0, %v6953
        %v6955 = vpop.f32.mrb[0].mxu0
        %v6956 = vpop.f32.mrb[0].mxu0
        %v6957 = vadd.f32 0.0, %v6956
        %v6958 = vpop.f32.mrb[0].mxu0
        %6959 = vmatprep.mubr.bf16.mxu0 0
        %6960 = vmatmul.mubr.bf16.gmra.mrb[0].mxu0 %v6860
        %v6961 = vpop.f32.mrb[0].mxu0
        %v6962 = vadd.f32 0.0, %v6961
        %v6963 = vpop.f32.mrb[0].mxu0
        %v6964 = vpop.f32.mrb[0].mxu0
        %v6965 = vadd.f32 0.0, %v6964
        %v6966 = vpop.f32.mrb[0].mxu0
        %6967 = vmatprep.mubr.bf16.mxu0 0
        %6968 = vmatmul.mubr.bf16.gmra.mrb[0].mxu0 %v6863
        %v6969 = vpop.f32.mrb[0].mxu0
        %v6970 = vadd.f32 0.0, %v6969
        %v6971 = vpop.f32.mrb[0].mxu0
        %v6972 = vpop.f32.mrb[0].mxu0
        %v6973 = vadd.f32 0.0, %v6972
        %v6974 = vpop.f32.mrb[0].mxu0
        %6975 = vmatprep.mubr.bf16.mxu0 0
        %6976 = vmatmul.mubr.bf16.gmra.mrb[0].mxu0 %v6866
        %v6977 = vpop.f32.mrb[0].mxu0
        %v6978 = vadd.f32 0.0, %v6977
        %v6979 = vpop.f32.mrb[0].mxu0
        %v6980 = vpop.f32.mrb[0].mxu0
        %v6981 = vadd.f32 0.0, %v6980
        %v6982 = vpop.f32.mrb[0].mxu0
        %6983 = vmatprep.mubr.bf16.mxu0 0
        %6984 = vmatmul.mubr.bf16.gmra.mrb[0].mxu0 %v6869
        %v6985 = vpop.f32.mrb[0].mxu0
        %v6986 = vadd.f32 0.0, %v6985
        %v6987 = vpop.f32.mrb[0].mxu0
        %v6988 = vpop.f32.mrb[0].mxu0
        %v6989 = vadd.f32 0.0, %v6988
        %v6990 = vpop.f32.mrb[0].mxu0
        %6991 = vmatprep.mubr.bf16.mxu0 0
        %6992 = vmatmul.mubr.bf16.gmra.mrb[0].mxu0 %v6872
        %v6993 = vpop.f32.mrb[0].mxu0
        %v6994 = vadd.f32 0.0, %v6993
        %v6995 = vpop.f32.mrb[0].mxu0
        %v6996 = vpop.f32.mrb[0].mxu0
        %v6997 = vadd.f32 0.0, %v6996
        %v6998 = vpop.f32.mrb[0].mxu0
        %6999 = vmatprep.mubr.bf16.mxu0 0
        %7000 = vmatmul.mubr.bf16.gmra.mrb[0].mxu0 %v6875
        %v7001 = vpop.f32.mrb[0].mxu0
        %v7002 = vadd.f32 0.0, %v7001
        %v7003 = vpop.f32.mrb[0].mxu0
        %v7004 = vpop.f32.mrb[0].mxu0
        %v7005 = vadd.f32 0.0, %v7004
        %v7006 = vpop.f32.mrb[0].mxu0
        %7007 = vmatprep.mubr.bf16.mxu0 0
        %7008 = vmatmul.mubr.bf16.gmra.mrb[0].mxu0 %v6878
        %v7009 = vpop.f32.mrb[0].mxu0
        %v7010 = vadd.f32 0.0, %v7009
        %v7011 = vpop.f32.mrb[0].mxu0
        %v7012 = vpop.f32.mrb[0].mxu0
        %v7013 = vadd.f32 0.0, %v7012
        %v7014 = vpop.f32.mrb[0].mxu0
        %7015 = vmatprep.mubr.bf16.mxu0 0
        %7016 = vmatmul.mubr.bf16.gmra.mrb[0].mxu0 %v6881
        %v7017 = vpop.f32.mrb[0].mxu0
        %v7018 = vadd.f32 0.0, %v7017
        %v7019 = vpop.f32.mrb[0].mxu0
        %v7020 = vpop.f32.mrb[0].mxu0
        %v7021 = vadd.f32 0.0, %v7020
        %v7022 = vpop.f32.mrb[0].mxu0
        %7023 = vmatprep.mubr.bf16.mxu0 0
        %7024 = vmatmul.mubr.bf16.gmra.mrb[0].mxu0 %v6884
        %v7025 = vpop.f32.mrb[0].mxu0
        %v7026 = vadd.f32 0.0, %v7025
        %v7027 = vpop.f32.mrb[0].mxu0
        %v7028 = vpop.f32.mrb[0].mxu0
        %v7029 = vadd.f32 0.0, %v7028
        %v7030 = vpop.f32.mrb[0].mxu0
        %7031 = vmatprep.mubr.bf16.mxu0 0
        %7032 = vmatmul.mubr.bf16.gmra.mrb[0].mxu0 %v6887
        %v7033 = vpop.f32.mrb[0].mxu0
        %v7034 = vadd.f32 0.0, %v7033
        %v7035 = vpop.f32.mrb[0].mxu0
        %v7036 = vpop.f32.mrb[0].mxu0
        %v7037 = vadd.f32 0.0, %v7036
        %v7038 = vpop.f32.mrb[0].mxu0
        %7039 = vmatprep.mubr.bf16.mxu0 0
        %7040 = vmatmul.mubr.bf16.gmra.mrb[0].mxu0 %v6890
        %v7041 = vpop.f32.mrb[0].mxu0
        %v7042 = vadd.f32 0.0, %v7041
        %v7043 = vpop.f32.mrb[0].mxu0
        %v7044 = vpop.f32.mrb[0].mxu0
        %v7045 = vadd.f32 0.0, %v7044
        %v7046 = vpop.f32.mrb[0].mxu0
        %7047 = vmatprep.mubr.bf16.mxu0 0
        %7048 = vmatmul.mubr.bf16.gmra.mrb[0].mxu0 %v6893
        %v7049 = vpop.f32.mrb[0].mxu0
        %v7050 = vadd.f32 0.0, %v7049
        %v7051 = vpop.f32.mrb[0].mxu0
        %v7052 = vpop.f32.mrb[0].mxu0
        %v7053 = vadd.f32 0.0, %v7052
        %v7054 = vpop.f32.mrb[0].mxu0
        %7055 = vdwg.mxu0
        %v7056 = vadd.f32 %v6656, %v6930
        %v7057 = vadd.f32 %v6659, %v6933
        %v7058 = vadd.f32 %v6664, %v6938
        %v7059 = vadd.f32 %v6667, %v6941
        %v7060 = vadd.f32 %v6672, %v6946
        %v7061 = vadd.f32 %v6675, %v6949
        %v7062 = vadd.f32 %v6680, %v6954
        %v7063 = vadd.f32 %v6683, %v6957
        %v7064 = vadd.f32 %v6688, %v6962
        %v7065 = vadd.f32 %v6691, %v6965
        %v7066 = vadd.f32 %v6696, %v6970
        %v7067 = vadd.f32 %v6699, %v6973
        %v7068 = vadd.f32 %v6704, %v6978
        %v7069 = vadd.f32 %v6707, %v6981
        %v7070 = vadd.f32 %v6712, %v6986
        %v7071 = vadd.f32 %v6715, %v6989
        %v7072 = vadd.f32 %v6720, %v6994
        %v7073 = vadd.f32 %v6723, %v6997
        %v7074 = vadd.f32 %v6728, %v7002
        %v7075 = vadd.f32 %v6731, %v7005
        %v7076 = vadd.f32 %v6736, %v7010
        %v7077 = vadd.f32 %v6739, %v7013
        %v7078 = vadd.f32 %v6744, %v7018
        %v7079 = vadd.f32 %v6747, %v7021
        %v7080 = vadd.f32 %v6752, %v7026
        %v7081 = vadd.f32 %v6755, %v7029
        %v7082 = vadd.f32 %v6760, %v7034
        %v7083 = vadd.f32 %v6763, %v7037
        %v7084 = vadd.f32 %v6768, %v7042
        %v7085 = vadd.f32 %v6771, %v7045
        %v7086 = vadd.f32 %v6776, %v7050
        %v7087 = vadd.f32 %v6779, %v7053
        %v7088 = vld [vmem:[%s3316] sm:$0xff]
        %v7089 = vld [vmem:[%s3316 + $0x8] sm:$0xff]
        %v7090 = vld [vmem:[%s3316 + $0x18] sm:$0xff]
        %v7091 = vld [vmem:[%s3316 + $0x20] sm:$0xff]
        %v7092 = vld [vmem:[%s3316 + $0x30] sm:$0xff]
        %v7093 = vld [vmem:[%s3316 + $0x38] sm:$0xff]
        %v7094 = vld [vmem:[%s3316 + $0x48] sm:$0xff]
        %v7095 = vld [vmem:[%s3316 + $0x50] sm:$0xff]
        %v7096 = vld [vmem:[%s3316 + $0x60] sm:$0xff]
        %v7097 = vld [vmem:[%s3316 + $0x68] sm:$0xff]
        %v7098 = vld [vmem:[%s3316 + $0x78] sm:$0xff]
        %v7099 = vld [vmem:[%s3316 + $0x80] sm:$0xff]
        %v7100 = vld [vmem:[%s3316 + $0x90] sm:$0xff]
        %v7101 = vld [vmem:[%s3316 + $0x98] sm:$0xff]
        %v7102 = vld [vmem:[%s3316 + $0xa8] sm:$0xff]
        %v7103 = vld [vmem:[%s3316 + $0xb0] sm:$0xff]
        %v7104 = vld [vmem:[%s3316 + $0xc0] sm:$0xff]
        %v7105 = vld [vmem:[%s3316 + $0xc8] sm:$0xff]
        %v7106 = vld [vmem:[%s3316 + $0xd8] sm:$0xff]
        %v7107 = vld [vmem:[%s3316 + $0xe0] sm:$0xff]
        %v7108 = vld [vmem:[%s3316 + $0xf0] sm:$0xff]
        %v7109 = vld [vmem:[%s3316 + $0xf8] sm:$0xff]
        %v7110 = vld [vmem:[%s3316 + $0x108] sm:$0xff]
        %v7111 = vld [vmem:[%s3316 + $0x110] sm:$0xff]
        %v7112 = vld [vmem:[%s3316 + $0x120] sm:$0xff]
        %v7113 = vld [vmem:[%s3316 + $0x128] sm:$0xff]
        %v7114 = vld [vmem:[%s3316 + $0x138] sm:$0xff]
        %v7115 = vld [vmem:[%s3316 + $0x140] sm:$0xff]
        %v7116 = vld [vmem:[%s3316 + $0x150] sm:$0xff]
        %v7117 = vld [vmem:[%s3316 + $0x158] sm:$0xff]
        %v7118 = vld [vmem:[%s3316 + $0x168] sm:$0xff]
        %v7119 = vld [vmem:[%s3316 + $0x170] sm:$0xff]
        %v7120 = vpack.c.bf16 %v7089, %v7088
        %v7121 = vpack.c.bf16 %v7091, %v7090
        %v7122 = vpack.c.bf16 %v7093, %v7092
        %v7123 = vpack.c.bf16 %v7095, %v7094
        %v7124 = vpack.c.bf16 %v7097, %v7096
        %v7125 = vpack.c.bf16 %v7099, %v7098
        %v7126 = vpack.c.bf16 %v7101, %v7100
        %v7127 = vpack.c.bf16 %v7103, %v7102
        %v7128 = vpack.c.bf16 %v7105, %v7104
        %v7129 = vpack.c.bf16 %v7107, %v7106
        %v7130 = vpack.c.bf16 %v7109, %v7108
        %v7131 = vpack.c.bf16 %v7111, %v7110
        %v7132 = vpack.c.bf16 %v7113, %v7112
        %v7133 = vpack.c.bf16 %v7115, %v7114
        %v7134 = vpack.c.bf16 %v7117, %v7116
        %v7135 = vpack.c.bf16 %v7119, %v7118
        %s7136 = scalar_lea.vmem [#allocation16], 48
        %v7137 = vld [vmem:[%s7136] sm:$0xf]
        %v7138 = vld [vmem:[%s7136 + $0x4] sm:$0xf]
        %v7139 = vld [vmem:[%s7136 + $0x8] sm:$0xf]
        %v7140 = vld [vmem:[%s7136 + $0xc] sm:$0xf]
        %v7145 = vunpack.c.l.b16 %v7137
        %v7146 = vunpack.c.l.b16 %v7138
        %v7147 = vunpack.c.l.b16 %v7139
        %v7148 = vunpack.c.l.b16 %v7140
        %v7149 = vpack.c.b16 %v7146, %v7145
        %v7150 = vpack.c.b16 %v7148, %v7147
        %v7154 = vsel %vm3260, %v7120, 0
        %v7157 = vsel %vm3260, %v7121, 0
        %v7160 = vsel %vm3260, %v7122, 0
        %v7163 = vsel %vm3260, %v7123, 0
        %v7166 = vsel %vm3260, %v7124, 0
        %v7169 = vsel %vm3260, %v7125, 0
        %v7172 = vsel %vm3260, %v7126, 0
        %v7175 = vsel %vm3260, %v7127, 0
        %v7178 = vsel %vm3260, %v7128, 0
        %v7181 = vsel %vm3260, %v7129, 0
        %v7184 = vsel %vm3260, %v7130, 0
        %v7187 = vsel %vm3260, %v7131, 0
        %v7190 = vsel %vm3260, %v7132, 0
        %v7193 = vsel %vm3260, %v7133, 0
        %v7196 = vsel %vm3260, %v7134, 0
        %v7199 = vsel %vm3260, %v7135, 0
        %7201 = vmatprep.subr.bf16.mxu0 0
        %7202 = vmatpush1.bf16.msra.mxu0 %v7149
        %7203 = vmatprep.subr.bf16.mxu0 0
        %7204 = vmatpush1.bf16.msra.mxu0 %v7150
        %7205 = vmatprep.subr.bf16.mxu0 0
        %7206 = vmatpush1.bf16.msra.mxu0 0
        %7207 = vmatprep.subr.bf16.mxu0 0
        %7208 = vmatpush1.bf16.msra.mxu0 0
        %7209 = vmatprep.subr.bf16.mxu0 0
        %7210 = vmatpush1.bf16.msra.mxu0 0
        %7211 = vmatprep.subr.bf16.mxu0 0
        %7212 = vmatpush1.bf16.msra.mxu0 0
        %7213 = vmatprep.subr.bf16.mxu0 0
        %7214 = vmatpush1.bf16.msra.mxu0 0
        %7215 = vmatprep.subr.bf16.mxu0 0
        %7216 = vmatpush1.bf16.msra.mxu0 0
        %7217 = vmatprep.subr.bf16.mxu0 0
        %7218 = vmatpush1.bf16.msra.mxu0 0
        %7219 = vmatprep.subr.bf16.mxu0 0
        %7220 = vmatpush1.bf16.msra.mxu0 0
        %7221 = vmatprep.subr.bf16.mxu0 0
        %7222 = vmatpush1.bf16.msra.mxu0 0
        %7223 = vmatprep.subr.bf16.mxu0 0
        %7224 = vmatpush1.bf16.msra.mxu0 0
        %7225 = vmatprep.subr.bf16.mxu0 0
        %7226 = vmatpush1.bf16.msra.mxu0 0
        %7227 = vmatprep.subr.bf16.mxu0 0
        %7228 = vmatpush1.bf16.msra.mxu0 0
        %7229 = vmatprep.subr.bf16.mxu0 0
        %7230 = vmatpush1.bf16.msra.mxu0 0
        %7231 = vmatprep.subr.bf16.mxu0 0
        %7232 = vmatpush1.bf16.msra.mxu0 0
        %7233 = vmatprep.mubr.bf16.mxu0 0
        %7234 = vmatmul.mubr.bf16.gmra.mrb[0].mxu0 %v7154
        %v7235 = vpop.f32.mrb[0].mxu0
        %v7236 = vadd.f32 0.0, %v7235
        %v7237 = vpop.f32.mrb[0].mxu0
        %v7238 = vpop.f32.mrb[0].mxu0
        %v7239 = vadd.f32 0.0, %v7238
        %v7240 = vpop.f32.mrb[0].mxu0
        %7241 = vmatprep.mubr.bf16.mxu0 0
        %7242 = vmatmul.mubr.bf16.gmra.mrb[0].mxu0 %v7157
        %v7243 = vpop.f32.mrb[0].mxu0
        %v7244 = vadd.f32 0.0, %v7243
        %v7245 = vpop.f32.mrb[0].mxu0
        %v7246 = vpop.f32.mrb[0].mxu0
        %v7247 = vadd.f32 0.0, %v7246
        %v7248 = vpop.f32.mrb[0].mxu0
        %7249 = vmatprep.mubr.bf16.mxu0 0
        %7250 = vmatmul.mubr.bf16.gmra.mrb[0].mxu0 %v7160
        %v7251 = vpop.f32.mrb[0].mxu0
        %v7252 = vadd.f32 0.0, %v7251
        %v7253 = vpop.f32.mrb[0].mxu0
        %v7254 = vpop.f32.mrb[0].mxu0
        %v7255 = vadd.f32 0.0, %v7254
        %v7256 = vpop.f32.mrb[0].mxu0
        %7257 = vmatprep.mubr.bf16.mxu0 0
        %7258 = vmatmul.mubr.bf16.gmra.mrb[0].mxu0 %v7163
        %v7259 = vpop.f32.mrb[0].mxu0
        %v7260 = vadd.f32 0.0, %v7259
        %v7261 = vpop.f32.mrb[0].mxu0
        %v7262 = vpop.f32.mrb[0].mxu0
        %v7263 = vadd.f32 0.0, %v7262
        %v7264 = vpop.f32.mrb[0].mxu0
        %7265 = vmatprep.mubr.bf16.mxu0 0
        %7266 = vmatmul.mubr.bf16.gmra.mrb[0].mxu0 %v7166
        %v7267 = vpop.f32.mrb[0].mxu0
        %v7268 = vadd.f32 0.0, %v7267
        %v7269 = vpop.f32.mrb[0].mxu0
        %v7270 = vpop.f32.mrb[0].mxu0
        %v7271 = vadd.f32 0.0, %v7270
        %v7272 = vpop.f32.mrb[0].mxu0
        %7273 = vmatprep.mubr.bf16.mxu0 0
        %7274 = vmatmul.mubr.bf16.gmra.mrb[0].mxu0 %v7169
        %v7275 = vpop.f32.mrb[0].mxu0
        %v7276 = vadd.f32 0.0, %v7275
        %v7277 = vpop.f32.mrb[0].mxu0
        %v7278 = vpop.f32.mrb[0].mxu0
        %v7279 = vadd.f32 0.0, %v7278
        %v7280 = vpop.f32.mrb[0].mxu0
        %7281 = vmatprep.mubr.bf16.mxu0 0
        %7282 = vmatmul.mubr.bf16.gmra.mrb[0].mxu0 %v7172
        %v7283 = vpop.f32.mrb[0].mxu0
        %v7284 = vadd.f32 0.0, %v7283
        %v7285 = vpop.f32.mrb[0].mxu0
        %v7286 = vpop.f32.mrb[0].mxu0
        %v7287 = vadd.f32 0.0, %v7286
        %v7288 = vpop.f32.mrb[0].mxu0
        %7289 = vmatprep.mubr.bf16.mxu0 0
        %7290 = vmatmul.mubr.bf16.gmra.mrb[0].mxu0 %v7175
        %v7291 = vpop.f32.mrb[0].mxu0
        %v7292 = vadd.f32 0.0, %v7291
        %v7293 = vpop.f32.mrb[0].mxu0
        %v7294 = vpop.f32.mrb[0].mxu0
        %v7295 = vadd.f32 0.0, %v7294
        %v7296 = vpop.f32.mrb[0].mxu0
        %7297 = vmatprep.mubr.bf16.mxu0 0
        %7298 = vmatmul.mubr.bf16.gmra.mrb[0].mxu0 %v7178
        %v7299 = vpop.f32.mrb[0].mxu0
        %v7300 = vadd.f32 0.0, %v7299
        %v7301 = vpop.f32.mrb[0].mxu0
        %v7302 = vpop.f32.mrb[0].mxu0
        %v7303 = vadd.f32 0.0, %v7302
        %v7304 = vpop.f32.mrb[0].mxu0
        %7305 = vmatprep.mubr.bf16.mxu0 0
        %7306 = vmatmul.mubr.bf16.gmra.mrb[0].mxu0 %v7181
        %v7307 = vpop.f32.mrb[0].mxu0
        %v7308 = vadd.f32 0.0, %v7307
        %v7309 = vpop.f32.mrb[0].mxu0
        %v7310 = vpop.f32.mrb[0].mxu0
        %v7311 = vadd.f32 0.0, %v7310
        %v7312 = vpop.f32.mrb[0].mxu0
        %7313 = vmatprep.mubr.bf16.mxu0 0
        %7314 = vmatmul.mubr.bf16.gmra.mrb[0].mxu0 %v7184
        %v7315 = vpop.f32.mrb[0].mxu0
        %v7316 = vadd.f32 0.0, %v7315
        %v7317 = vpop.f32.mrb[0].mxu0
        %v7318 = vpop.f32.mrb[0].mxu0
        %v7319 = vadd.f32 0.0, %v7318
        %v7320 = vpop.f32.mrb[0].mxu0
        %7321 = vmatprep.mubr.bf16.mxu0 0
        %7322 = vmatmul.mubr.bf16.gmra.mrb[0].mxu0 %v7187
        %v7323 = vpop.f32.mrb[0].mxu0
        %v7324 = vadd.f32 0.0, %v7323
        %v7325 = vpop.f32.mrb[0].mxu0
        %v7326 = vpop.f32.mrb[0].mxu0
        %v7327 = vadd.f32 0.0, %v7326
        %v7328 = vpop.f32.mrb[0].mxu0
        %7329 = vmatprep.mubr.bf16.mxu0 0
        %7330 = vmatmul.mubr.bf16.gmra.mrb[0].mxu0 %v7190
        %v7331 = vpop.f32.mrb[0].mxu0
        %v7332 = vadd.f32 0.0, %v7331
        %v7333 = vpop.f32.mrb[0].mxu0
        %v7334 = vpop.f32.mrb[0].mxu0
        %v7335 = vadd.f32 0.0, %v7334
        %v7336 = vpop.f32.mrb[0].mxu0
        %7337 = vmatprep.mubr.bf16.mxu0 0
        %7338 = vmatmul.mubr.bf16.gmra.mrb[0].mxu0 %v7193
        %v7339 = vpop.f32.mrb[0].mxu0
        %v7340 = vadd.f32 0.0, %v7339
        %v7341 = vpop.f32.mrb[0].mxu0
        %v7342 = vpop.f32.mrb[0].mxu0
        %v7343 = vadd.f32 0.0, %v7342
        %v7344 = vpop.f32.mrb[0].mxu0
        %7345 = vmatprep.mubr.bf16.mxu0 0
        %7346 = vmatmul.mubr.bf16.gmra.mrb[0].mxu0 %v7196
        %v7347 = vpop.f32.mrb[0].mxu0
        %v7348 = vadd.f32 0.0, %v7347
        %v7349 = vpop.f32.mrb[0].mxu0
        %v7350 = vpop.f32.mrb[0].mxu0
        %v7351 = vadd.f32 0.0, %v7350
        %v7352 = vpop.f32.mrb[0].mxu0
        %7353 = vmatprep.mubr.bf16.mxu0 0
        %7354 = vmatmul.mubr.bf16.gmra.mrb[0].mxu0 %v7199
        %v7355 = vpop.f32.mrb[0].mxu0
        %v7356 = vadd.f32 0.0, %v7355
        %v7357 = vpop.f32.mrb[0].mxu0
        %v7358 = vpop.f32.mrb[0].mxu0
        %v7359 = vadd.f32 0.0, %v7358
        %v7360 = vpop.f32.mrb[0].mxu0
        %7361 = vdwg.mxu0
        %v7362 = vadd.f32 %v7056, %v7236
        %v7363 = vadd.f32 %v7057, %v7239
        %v7364 = vadd.f32 %v7058, %v7244
        %v7365 = vadd.f32 %v7059, %v7247
        %v7366 = vadd.f32 %v7060, %v7252
        %v7367 = vadd.f32 %v7061, %v7255
        %v7368 = vadd.f32 %v7062, %v7260
        %v7369 = vadd.f32 %v7063, %v7263
        %v7370 = vadd.f32 %v7064, %v7268
        %v7371 = vadd.f32 %v7065, %v7271
        %v7372 = vadd.f32 %v7066, %v7276
        %v7373 = vadd.f32 %v7067, %v7279
        %v7374 = vadd.f32 %v7068, %v7284
        %v7375 = vadd.f32 %v7069, %v7287
        %v7376 = vadd.f32 %v7070, %v7292
        %v7377 = vadd.f32 %v7071, %v7295
        %v7378 = vadd.f32 %v7072, %v7300
        %v7379 = vadd.f32 %v7073, %v7303
        %v7380 = vadd.f32 %v7074, %v7308
        %v7381 = vadd.f32 %v7075, %v7311
        %v7382 = vadd.f32 %v7076, %v7316
        %v7383 = vadd.f32 %v7077, %v7319
        %v7384 = vadd.f32 %v7078, %v7324
        %v7385 = vadd.f32 %v7079, %v7327
        %v7386 = vadd.f32 %v7080, %v7332
        %v7387 = vadd.f32 %v7081, %v7335
        %v7388 = vadd.f32 %v7082, %v7340
        %v7389 = vadd.f32 %v7083, %v7343
        %v7390 = vadd.f32 %v7084, %v7348
        %v7391 = vadd.f32 %v7085, %v7351
        %v7392 = vadd.f32 %v7086, %v7356
        %v7393 = vadd.f32 %v7087, %v7359
        %v7394 = vld [vmem:[%s3316 + $0x1] sm:$0xff]
        %v7395 = vld [vmem:[%s3316 + $0x9] sm:$0xff]
        %v7396 = vld [vmem:[%s3316 + $0x19] sm:$0xff]
        %v7397 = vld [vmem:[%s3316 + $0x21] sm:$0xff]
        %v7398 = vld [vmem:[%s3316 + $0x31] sm:$0xff]
        %v7399 = vld [vmem:[%s3316 + $0x39] sm:$0xff]
        %v7400 = vld [vmem:[%s3316 + $0x49] sm:$0xff]
        %v7401 = vld [vmem:[%s3316 + $0x51] sm:$0xff]
        %v7402 = vld [vmem:[%s3316 + $0x61] sm:$0xff]
        %v7403 = vld [vmem:[%s3316 + $0x69] sm:$0xff]
        %v7404 = vld [vmem:[%s3316 + $0x79] sm:$0xff]
        %v7405 = vld [vmem:[%s3316 + $0x81] sm:$0xff]
        %v7406 = vld [vmem:[%s3316 + $0x91] sm:$0xff]
        %v7407 = vld [vmem:[%s3316 + $0x99] sm:$0xff]
        %v7408 = vld [vmem:[%s3316 + $0xa9] sm:$0xff]
        %v7409 = vld [vmem:[%s3316 + $0xb1] sm:$0xff]
        %v7410 = vld [vmem:[%s3316 + $0xc1] sm:$0xff]
        %v7411 = vld [vmem:[%s3316 + $0xc9] sm:$0xff]
        %v7412 = vld [vmem:[%s3316 + $0xd9] sm:$0xff]
        %v7413 = vld [vmem:[%s3316 + $0xe1] sm:$0xff]
        %v7414 = vld [vmem:[%s3316 + $0xf1] sm:$0xff]
        %v7415 = vld [vmem:[%s3316 + $0xf9] sm:$0xff]
        %v7416 = vld [vmem:[%s3316 + $0x109] sm:$0xff]
        %v7417 = vld [vmem:[%s3316 + $0x111] sm:$0xff]
        %v7418 = vld [vmem:[%s3316 + $0x121] sm:$0xff]
        %v7419 = vld [vmem:[%s3316 + $0x129] sm:$0xff]
        %v7420 = vld [vmem:[%s3316 + $0x139] sm:$0xff]
        %v7421 = vld [vmem:[%s3316 + $0x141] sm:$0xff]
        %v7422 = vld [vmem:[%s3316 + $0x151] sm:$0xff]
        %v7423 = vld [vmem:[%s3316 + $0x159] sm:$0xff]
        %v7424 = vld [vmem:[%s3316 + $0x169] sm:$0xff]
        %v7425 = vld [vmem:[%s3316 + $0x171] sm:$0xff]
        %v7426 = vpack.c.bf16 %v7395, %v7394
        %v7427 = vpack.c.bf16 %v7397, %v7396
        %v7428 = vpack.c.bf16 %v7399, %v7398
        %v7429 = vpack.c.bf16 %v7401, %v7400
        %v7430 = vpack.c.bf16 %v7403, %v7402
        %v7431 = vpack.c.bf16 %v7405, %v7404
        %v7432 = vpack.c.bf16 %v7407, %v7406
        %v7433 = vpack.c.bf16 %v7409, %v7408
        %v7434 = vpack.c.bf16 %v7411, %v7410
        %v7435 = vpack.c.bf16 %v7413, %v7412
        %v7436 = vpack.c.bf16 %v7415, %v7414
        %v7437 = vpack.c.bf16 %v7417, %v7416
        %v7438 = vpack.c.bf16 %v7419, %v7418
        %v7439 = vpack.c.bf16 %v7421, %v7420
        %v7440 = vpack.c.bf16 %v7423, %v7422
        %v7441 = vpack.c.bf16 %v7425, %v7424
        %s7442 = scalar_lea.vmem [#allocation16], 64
        %v7443 = vld [vmem:[%s7442] sm:$0xf]
        %v7444 = vld [vmem:[%s7442 + $0x4] sm:$0xf]
        %v7445 = vld [vmem:[%s7442 + $0x8] sm:$0xf]
        %v7446 = vld [vmem:[%s7442 + $0xc] sm:$0xf]
        %v7451 = vunpack.c.l.b16 %v7443
        %v7452 = vunpack.c.l.b16 %v7444
        %v7453 = vunpack.c.l.b16 %v7445
        %v7454 = vunpack.c.l.b16 %v7446
        %v7455 = vpack.c.b16 %v7452, %v7451
        %v7456 = vpack.c.b16 %v7454, %v7453
        %v7460 = vsel %vm3260, %v7426, 0
        %v7463 = vsel %vm3260, %v7427, 0
        %v7466 = vsel %vm3260, %v7428, 0
        %v7469 = vsel %vm3260, %v7429, 0
        %v7472 = vsel %vm3260, %v7430, 0
        %v7475 = vsel %vm3260, %v7431, 0
        %v7478 = vsel %vm3260, %v7432, 0
        %v7481 = vsel %vm3260, %v7433, 0
        %v7484 = vsel %vm3260, %v7434, 0
        %v7487 = vsel %vm3260, %v7435, 0
        %v7490 = vsel %vm3260, %v7436, 0
        %v7493 = vsel %vm3260, %v7437, 0
        %v7496 = vsel %vm3260, %v7438, 0
        %v7499 = vsel %vm3260, %v7439, 0
        %v7502 = vsel %vm3260, %v7440, 0
        %v7505 = vsel %vm3260, %v7441, 0
        %7507 = vmatprep.subr.bf16.mxu0 0
        %7508 = vmatpush1.bf16.msra.mxu0 %v7455
        %7509 = vmatprep.subr.bf16.mxu0 0
        %7510 = vmatpush1.bf16.msra.mxu0 %v7456
        %7511 = vmatprep.subr.bf16.mxu0 0
        %7512 = vmatpush1.bf16.msra.mxu0 0
        %7513 = vmatprep.subr.bf16.mxu0 0
        %7514 = vmatpush1.bf16.msra.mxu0 0
        %7515 = vmatprep.subr.bf16.mxu0 0
        %7516 = vmatpush1.bf16.msra.mxu0 0
        %7517 = vmatprep.subr.bf16.mxu0 0
        %7518 = vmatpush1.bf16.msra.mxu0 0
        %7519 = vmatprep.subr.bf16.mxu0 0
        %7520 = vmatpush1.bf16.msra.mxu0 0
        %7521 = vmatprep.subr.bf16.mxu0 0
        %7522 = vmatpush1.bf16.msra.mxu0 0
        %7523 = vmatprep.subr.bf16.mxu0 0
        %7524 = vmatpush1.bf16.msra.mxu0 0
        %7525 = vmatprep.subr.bf16.mxu0 0
        %7526 = vmatpush1.bf16.msra.mxu0 0
        %7527 = vmatprep.subr.bf16.mxu0 0
        %7528 = vmatpush1.bf16.msra.mxu0 0
        %7529 = vmatprep.subr.bf16.mxu0 0
        %7530 = vmatpush1.bf16.msra.mxu0 0
        %7531 = vmatprep.subr.bf16.mxu0 0
        %7532 = vmatpush1.bf16.msra.mxu0 0
        %7533 = vmatprep.subr.bf16.mxu0 0
        %7534 = vmatpush1.bf16.msra.mxu0 0
        %7535 = vmatprep.subr.bf16.mxu0 0
        %7536 = vmatpush1.bf16.msra.mxu0 0
        %7537 = vmatprep.subr.bf16.mxu0 0
        %7538 = vmatpush1.bf16.msra.mxu0 0
        %7539 = vmatprep.mubr.bf16.mxu0 0
        %7540 = vmatmul.mubr.bf16.gmra.mrb[0].mxu0 %v7460
        %v7541 = vpop.f32.mrb[0].mxu0
        %v7542 = vadd.f32 0.0, %v7541
        %v7543 = vpop.f32.mrb[0].mxu0
        %v7544 = vpop.f32.mrb[0].mxu0
        %v7545 = vadd.f32 0.0, %v7544
        %v7546 = vpop.f32.mrb[0].mxu0
        %7547 = vmatprep.mubr.bf16.mxu0 0
        %7548 = vmatmul.mubr.bf16.gmra.mrb[0].mxu0 %v7463
        %v7549 = vpop.f32.mrb[0].mxu0
        %v7550 = vadd.f32 0.0, %v7549
        %v7551 = vpop.f32.mrb[0].mxu0
        %v7552 = vpop.f32.mrb[0].mxu0
        %v7553 = vadd.f32 0.0, %v7552
        %v7554 = vpop.f32.mrb[0].mxu0
        %7555 = vmatprep.mubr.bf16.mxu0 0
        %7556 = vmatmul.mubr.bf16.gmra.mrb[0].mxu0 %v7466
        %v7557 = vpop.f32.mrb[0].mxu0
        %v7558 = vadd.f32 0.0, %v7557
        %v7559 = vpop.f32.mrb[0].mxu0
        %v7560 = vpop.f32.mrb[0].mxu0
        %v7561 = vadd.f32 0.0, %v7560
        %v7562 = vpop.f32.mrb[0].mxu0
        %7563 = vmatprep.mubr.bf16.mxu0 0
        %7564 = vmatmul.mubr.bf16.gmra.mrb[0].mxu0 %v7469
        %v7565 = vpop.f32.mrb[0].mxu0
        %v7566 = vadd.f32 0.0, %v7565
        %v7567 = vpop.f32.mrb[0].mxu0
        %v7568 = vpop.f32.mrb[0].mxu0
        %v7569 = vadd.f32 0.0, %v7568
        %v7570 = vpop.f32.mrb[0].mxu0
        %7571 = vmatprep.mubr.bf16.mxu0 0
        %7572 = vmatmul.mubr.bf16.gmra.mrb[0].mxu0 %v7472
        %v7573 = vpop.f32.mrb[0].mxu0
        %v7574 = vadd.f32 0.0, %v7573
        %v7575 = vpop.f32.mrb[0].mxu0
        %v7576 = vpop.f32.mrb[0].mxu0
        %v7577 = vadd.f32 0.0, %v7576
        %v7578 = vpop.f32.mrb[0].mxu0
        %7579 = vmatprep.mubr.bf16.mxu0 0
        %7580 = vmatmul.mubr.bf16.gmra.mrb[0].mxu0 %v7475
        %v7581 = vpop.f32.mrb[0].mxu0
        %v7582 = vadd.f32 0.0, %v7581
        %v7583 = vpop.f32.mrb[0].mxu0
        %v7584 = vpop.f32.mrb[0].mxu0
        %v7585 = vadd.f32 0.0, %v7584
        %v7586 = vpop.f32.mrb[0].mxu0
        %7587 = vmatprep.mubr.bf16.mxu0 0
        %7588 = vmatmul.mubr.bf16.gmra.mrb[0].mxu0 %v7478
        %v7589 = vpop.f32.mrb[0].mxu0
        %v7590 = vadd.f32 0.0, %v7589
        %v7591 = vpop.f32.mrb[0].mxu0
        %v7592 = vpop.f32.mrb[0].mxu0
        %v7593 = vadd.f32 0.0, %v7592
        %v7594 = vpop.f32.mrb[0].mxu0
        %7595 = vmatprep.mubr.bf16.mxu0 0
        %7596 = vmatmul.mubr.bf16.gmra.mrb[0].mxu0 %v7481
        %v7597 = vpop.f32.mrb[0].mxu0
        %v7598 = vadd.f32 0.0, %v7597
        %v7599 = vpop.f32.mrb[0].mxu0
        %v7600 = vpop.f32.mrb[0].mxu0
        %v7601 = vadd.f32 0.0, %v7600
        %v7602 = vpop.f32.mrb[0].mxu0
        %7603 = vmatprep.mubr.bf16.mxu0 0
        %7604 = vmatmul.mubr.bf16.gmra.mrb[0].mxu0 %v7484
        %v7605 = vpop.f32.mrb[0].mxu0
        %v7606 = vadd.f32 0.0, %v7605
        %v7607 = vpop.f32.mrb[0].mxu0
        %v7608 = vpop.f32.mrb[0].mxu0
        %v7609 = vadd.f32 0.0, %v7608
        %v7610 = vpop.f32.mrb[0].mxu0
        %7611 = vmatprep.mubr.bf16.mxu0 0
        %7612 = vmatmul.mubr.bf16.gmra.mrb[0].mxu0 %v7487
        %v7613 = vpop.f32.mrb[0].mxu0
        %v7614 = vadd.f32 0.0, %v7613
        %v7615 = vpop.f32.mrb[0].mxu0
        %v7616 = vpop.f32.mrb[0].mxu0
        %v7617 = vadd.f32 0.0, %v7616
        %v7618 = vpop.f32.mrb[0].mxu0
        %7619 = vmatprep.mubr.bf16.mxu0 0
        %7620 = vmatmul.mubr.bf16.gmra.mrb[0].mxu0 %v7490
        %v7621 = vpop.f32.mrb[0].mxu0
        %v7622 = vadd.f32 0.0, %v7621
        %v7623 = vpop.f32.mrb[0].mxu0
        %v7624 = vpop.f32.mrb[0].mxu0
        %v7625 = vadd.f32 0.0, %v7624
        %v7626 = vpop.f32.mrb[0].mxu0
        %7627 = vmatprep.mubr.bf16.mxu0 0
        %7628 = vmatmul.mubr.bf16.gmra.mrb[0].mxu0 %v7493
        %v7629 = vpop.f32.mrb[0].mxu0
        %v7630 = vadd.f32 0.0, %v7629
        %v7631 = vpop.f32.mrb[0].mxu0
        %v7632 = vpop.f32.mrb[0].mxu0
        %v7633 = vadd.f32 0.0, %v7632
        %v7634 = vpop.f32.mrb[0].mxu0
        %7635 = vmatprep.mubr.bf16.mxu0 0
        %7636 = vmatmul.mubr.bf16.gmra.mrb[0].mxu0 %v7496
        %v7637 = vpop.f32.mrb[0].mxu0
        %v7638 = vadd.f32 0.0, %v7637
        %v7639 = vpop.f32.mrb[0].mxu0
        %v7640 = vpop.f32.mrb[0].mxu0
        %v7641 = vadd.f32 0.0, %v7640
        %v7642 = vpop.f32.mrb[0].mxu0
        %7643 = vmatprep.mubr.bf16.mxu0 0
        %7644 = vmatmul.mubr.bf16.gmra.mrb[0].mxu0 %v7499
        %v7645 = vpop.f32.mrb[0].mxu0
        %v7646 = vadd.f32 0.0, %v7645
        %v7647 = vpop.f32.mrb[0].mxu0
        %v7648 = vpop.f32.mrb[0].mxu0
        %v7649 = vadd.f32 0.0, %v7648
        %v7650 = vpop.f32.mrb[0].mxu0
        %7651 = vmatprep.mubr.bf16.mxu0 0
        %7652 = vmatmul.mubr.bf16.gmra.mrb[0].mxu0 %v7502
        %v7653 = vpop.f32.mrb[0].mxu0
        %v7654 = vadd.f32 0.0, %v7653
        %v7655 = vpop.f32.mrb[0].mxu0
        %v7656 = vpop.f32.mrb[0].mxu0
        %v7657 = vadd.f32 0.0, %v7656
        %v7658 = vpop.f32.mrb[0].mxu0
        %7659 = vmatprep.mubr.bf16.mxu0 0
        %7660 = vmatmul.mubr.bf16.gmra.mrb[0].mxu0 %v7505
        %v7661 = vpop.f32.mrb[0].mxu0
        %v7662 = vadd.f32 0.0, %v7661
        %v7663 = vpop.f32.mrb[0].mxu0
        %v7664 = vpop.f32.mrb[0].mxu0
        %v7665 = vadd.f32 0.0, %v7664
        %v7666 = vpop.f32.mrb[0].mxu0
        %7667 = vdwg.mxu0
        %v7668 = vadd.f32 %v7362, %v7542
        %v7669 = vadd.f32 %v7363, %v7545
        %v7670 = vadd.f32 %v7364, %v7550
        %v7671 = vadd.f32 %v7365, %v7553
        %v7672 = vadd.f32 %v7366, %v7558
        %v7673 = vadd.f32 %v7367, %v7561
        %v7674 = vadd.f32 %v7368, %v7566
        %v7675 = vadd.f32 %v7369, %v7569
        %v7676 = vadd.f32 %v7370, %v7574
        %v7677 = vadd.f32 %v7371, %v7577
        %v7678 = vadd.f32 %v7372, %v7582
        %v7679 = vadd.f32 %v7373, %v7585
        %v7680 = vadd.f32 %v7374, %v7590
        %v7681 = vadd.f32 %v7375, %v7593
        %v7682 = vadd.f32 %v7376, %v7598
        %v7683 = vadd.f32 %v7377, %v7601
        %v7684 = vadd.f32 %v7378, %v7606
        %v7685 = vadd.f32 %v7379, %v7609
        %v7686 = vadd.f32 %v7380, %v7614
        %v7687 = vadd.f32 %v7381, %v7617
        %v7688 = vadd.f32 %v7382, %v7622
        %v7689 = vadd.f32 %v7383, %v7625
        %v7690 = vadd.f32 %v7384, %v7630
        %v7691 = vadd.f32 %v7385, %v7633
        %v7692 = vadd.f32 %v7386, %v7638
        %v7693 = vadd.f32 %v7387, %v7641
        %v7694 = vadd.f32 %v7388, %v7646
        %v7695 = vadd.f32 %v7389, %v7649
        %v7696 = vadd.f32 %v7390, %v7654
        %v7697 = vadd.f32 %v7391, %v7657
        %v7698 = vadd.f32 %v7392, %v7662
        %v7699 = vadd.f32 %v7393, %v7665
        %v7700 = vld [vmem:[%s3316 + $0x2] sm:$0xff]
        %v7701 = vld [vmem:[%s3316 + $0xa] sm:$0xff]
        %v7702 = vld [vmem:[%s3316 + $0x1a] sm:$0xff]
        %v7703 = vld [vmem:[%s3316 + $0x22] sm:$0xff]
        %v7704 = vld [vmem:[%s3316 + $0x32] sm:$0xff]
        %v7705 = vld [vmem:[%s3316 + $0x3a] sm:$0xff]
        %v7706 = vld [vmem:[%s3316 + $0x4a] sm:$0xff]
        %v7707 = vld [vmem:[%s3316 + $0x52] sm:$0xff]
        %v7708 = vld [vmem:[%s3316 + $0x62] sm:$0xff]
        %v7709 = vld [vmem:[%s3316 + $0x6a] sm:$0xff]
        %v7710 = vld [vmem:[%s3316 + $0x7a] sm:$0xff]
        %v7711 = vld [vmem:[%s3316 + $0x82] sm:$0xff]
        %v7712 = vld [vmem:[%s3316 + $0x92] sm:$0xff]
        %v7713 = vld [vmem:[%s3316 + $0x9a] sm:$0xff]
        %v7714 = vld [vmem:[%s3316 + $0xaa] sm:$0xff]
        %v7715 = vld [vmem:[%s3316 + $0xb2] sm:$0xff]
        %v7716 = vld [vmem:[%s3316 + $0xc2] sm:$0xff]
        %v7717 = vld [vmem:[%s3316 + $0xca] sm:$0xff]
        %v7718 = vld [vmem:[%s3316 + $0xda] sm:$0xff]
        %v7719 = vld [vmem:[%s3316 + $0xe2] sm:$0xff]
        %v7720 = vld [vmem:[%s3316 + $0xf2] sm:$0xff]
        %v7721 = vld [vmem:[%s3316 + $0xfa] sm:$0xff]
        %v7722 = vld [vmem:[%s3316 + $0x10a] sm:$0xff]
        %v7723 = vld [vmem:[%s3316 + $0x112] sm:$0xff]
        %v7724 = vld [vmem:[%s3316 + $0x122] sm:$0xff]
        %v7725 = vld [vmem:[%s3316 + $0x12a] sm:$0xff]
        %v7726 = vld [vmem:[%s3316 + $0x13a] sm:$0xff]
        %v7727 = vld [vmem:[%s3316 + $0x142] sm:$0xff]
        %v7728 = vld [vmem:[%s3316 + $0x152] sm:$0xff]
        %v7729 = vld [vmem:[%s3316 + $0x15a] sm:$0xff]
        %v7730 = vld [vmem:[%s3316 + $0x16a] sm:$0xff]
        %v7731 = vld [vmem:[%s3316 + $0x172] sm:$0xff]
        %v7732 = vpack.c.bf16 %v7701, %v7700
        %v7733 = vpack.c.bf16 %v7703, %v7702
        %v7734 = vpack.c.bf16 %v7705, %v7704
        %v7735 = vpack.c.bf16 %v7707, %v7706
        %v7736 = vpack.c.bf16 %v7709, %v7708
        %v7737 = vpack.c.bf16 %v7711, %v7710
        %v7738 = vpack.c.bf16 %v7713, %v7712
        %v7739 = vpack.c.bf16 %v7715, %v7714
        %v7740 = vpack.c.bf16 %v7717, %v7716
        %v7741 = vpack.c.bf16 %v7719, %v7718
        %v7742 = vpack.c.bf16 %v7721, %v7720
        %v7743 = vpack.c.bf16 %v7723, %v7722
        %v7744 = vpack.c.bf16 %v7725, %v7724
        %v7745 = vpack.c.bf16 %v7727, %v7726
        %v7746 = vpack.c.bf16 %v7729, %v7728
        %v7747 = vpack.c.bf16 %v7731, %v7730
        %s7748 = scalar_lea.vmem [#allocation16], 80
        %v7749 = vld [vmem:[%s7748] sm:$0xf]
        %v7750 = vld [vmem:[%s7748 + $0x4] sm:$0xf]
        %v7751 = vld [vmem:[%s7748 + $0x8] sm:$0xf]
        %v7752 = vld [vmem:[%s7748 + $0xc] sm:$0xf]
        %v7757 = vunpack.c.l.b16 %v7749
        %v7758 = vunpack.c.l.b16 %v7750
        %v7759 = vunpack.c.l.b16 %v7751
        %v7760 = vunpack.c.l.b16 %v7752
        %v7761 = vpack.c.b16 %v7758, %v7757
        %v7762 = vpack.c.b16 %v7760, %v7759
        %v7766 = vsel %vm3260, %v7732, 0
        %v7769 = vsel %vm3260, %v7733, 0
        %v7772 = vsel %vm3260, %v7734, 0
        %v7775 = vsel %vm3260, %v7735, 0
        %v7778 = vsel %vm3260, %v7736, 0
        %v7781 = vsel %vm3260, %v7737, 0
        %v7784 = vsel %vm3260, %v7738, 0
        %v7787 = vsel %vm3260, %v7739, 0
        %v7790 = vsel %vm3260, %v7740, 0
        %v7793 = vsel %vm3260, %v7741, 0
        %v7796 = vsel %vm3260, %v7742, 0
        %v7799 = vsel %vm3260, %v7743, 0
        %v7802 = vsel %vm3260, %v7744, 0
        %v7805 = vsel %vm3260, %v7745, 0
        %v7808 = vsel %vm3260, %v7746, 0
        %v7811 = vsel %vm3260, %v7747, 0
        %7813 = vmatprep.subr.bf16.mxu0 0
        %7814 = vmatpush1.bf16.msra.mxu0 %v7761
        %7815 = vmatprep.subr.bf16.mxu0 0
        %7816 = vmatpush1.bf16.msra.mxu0 %v7762
        %7817 = vmatprep.subr.bf16.mxu0 0
        %7818 = vmatpush1.bf16.msra.mxu0 0
        %7819 = vmatprep.subr.bf16.mxu0 0
        %7820 = vmatpush1.bf16.msra.mxu0 0
        %7821 = vmatprep.subr.bf16.mxu0 0
        %7822 = vmatpush1.bf16.msra.mxu0 0
        %7823 = vmatprep.subr.bf16.mxu0 0
        %7824 = vmatpush1.bf16.msra.mxu0 0
        %7825 = vmatprep.subr.bf16.mxu0 0
        %7826 = vmatpush1.bf16.msra.mxu0 0
        %7827 = vmatprep.subr.bf16.mxu0 0
        %7828 = vmatpush1.bf16.msra.mxu0 0
        %7829 = vmatprep.subr.bf16.mxu0 0
        %7830 = vmatpush1.bf16.msra.mxu0 0
        %7831 = vmatprep.subr.bf16.mxu0 0
        %7832 = vmatpush1.bf16.msra.mxu0 0
        %7833 = vmatprep.subr.bf16.mxu0 0
        %7834 = vmatpush1.bf16.msra.mxu0 0
        %7835 = vmatprep.subr.bf16.mxu0 0
        %7836 = vmatpush1.bf16.msra.mxu0 0
        %7837 = vmatprep.subr.bf16.mxu0 0
        %7838 = vmatpush1.bf16.msra.mxu0 0
        %7839 = vmatprep.subr.bf16.mxu0 0
        %7840 = vmatpush1.bf16.msra.mxu0 0
        %7841 = vmatprep.subr.bf16.mxu0 0
        %7842 = vmatpush1.bf16.msra.mxu0 0
        %7843 = vmatprep.subr.bf16.mxu0 0
        %7844 = vmatpush1.bf16.msra.mxu0 0
        %7845 = vmatprep.mubr.bf16.mxu0 0
        %7846 = vmatmul.mubr.bf16.gmra.mrb[0].mxu0 %v7766
        %v7847 = vpop.f32.mrb[0].mxu0
        %v7848 = vadd.f32 0.0, %v7847
        %v7849 = vpop.f32.mrb[0].mxu0
        %v7850 = vpop.f32.mrb[0].mxu0
        %v7851 = vadd.f32 0.0, %v7850
        %v7852 = vpop.f32.mrb[0].mxu0
        %7853 = vmatprep.mubr.bf16.mxu0 0
        %7854 = vmatmul.mubr.bf16.gmra.mrb[0].mxu0 %v7769
        %v7855 = vpop.f32.mrb[0].mxu0
        %v7856 = vadd.f32 0.0, %v7855
        %v7857 = vpop.f32.mrb[0].mxu0
        %v7858 = vpop.f32.mrb[0].mxu0
        %v7859 = vadd.f32 0.0, %v7858
        %v7860 = vpop.f32.mrb[0].mxu0
        %7861 = vmatprep.mubr.bf16.mxu0 0
        %7862 = vmatmul.mubr.bf16.gmra.mrb[0].mxu0 %v7772
        %v7863 = vpop.f32.mrb[0].mxu0
        %v7864 = vadd.f32 0.0, %v7863
        %v7865 = vpop.f32.mrb[0].mxu0
        %v7866 = vpop.f32.mrb[0].mxu0
        %v7867 = vadd.f32 0.0, %v7866
        %v7868 = vpop.f32.mrb[0].mxu0
        %7869 = vmatprep.mubr.bf16.mxu0 0
        %7870 = vmatmul.mubr.bf16.gmra.mrb[0].mxu0 %v7775
        %v7871 = vpop.f32.mrb[0].mxu0
        %v7872 = vadd.f32 0.0, %v7871
        %v7873 = vpop.f32.mrb[0].mxu0
        %v7874 = vpop.f32.mrb[0].mxu0
        %v7875 = vadd.f32 0.0, %v7874
        %v7876 = vpop.f32.mrb[0].mxu0
        %7877 = vmatprep.mubr.bf16.mxu0 0
        %7878 = vmatmul.mubr.bf16.gmra.mrb[0].mxu0 %v7778
        %v7879 = vpop.f32.mrb[0].mxu0
        %v7880 = vadd.f32 0.0, %v7879
        %v7881 = vpop.f32.mrb[0].mxu0
        %v7882 = vpop.f32.mrb[0].mxu0
        %v7883 = vadd.f32 0.0, %v7882
        %v7884 = vpop.f32.mrb[0].mxu0
        %7885 = vmatprep.mubr.bf16.mxu0 0
        %7886 = vmatmul.mubr.bf16.gmra.mrb[0].mxu0 %v7781
        %v7887 = vpop.f32.mrb[0].mxu0
        %v7888 = vadd.f32 0.0, %v7887
        %v7889 = vpop.f32.mrb[0].mxu0
        %v7890 = vpop.f32.mrb[0].mxu0
        %v7891 = vadd.f32 0.0, %v7890
        %v7892 = vpop.f32.mrb[0].mxu0
        %7893 = vmatprep.mubr.bf16.mxu0 0
        %7894 = vmatmul.mubr.bf16.gmra.mrb[0].mxu0 %v7784
        %v7895 = vpop.f32.mrb[0].mxu0
        %v7896 = vadd.f32 0.0, %v7895
        %v7897 = vpop.f32.mrb[0].mxu0
        %v7898 = vpop.f32.mrb[0].mxu0
        %v7899 = vadd.f32 0.0, %v7898
        %v7900 = vpop.f32.mrb[0].mxu0
        %7901 = vmatprep.mubr.bf16.mxu0 0
        %7902 = vmatmul.mubr.bf16.gmra.mrb[0].mxu0 %v7787
        %v7903 = vpop.f32.mrb[0].mxu0
        %v7904 = vadd.f32 0.0, %v7903
        %v7905 = vpop.f32.mrb[0].mxu0
        %v7906 = vpop.f32.mrb[0].mxu0
        %v7907 = vadd.f32 0.0, %v7906
        %v7908 = vpop.f32.mrb[0].mxu0
        %7909 = vmatprep.mubr.bf16.mxu0 0
        %7910 = vmatmul.mubr.bf16.gmra.mrb[0].mxu0 %v7790
        %v7911 = vpop.f32.mrb[0].mxu0
        %v7912 = vadd.f32 0.0, %v7911
        %v7913 = vpop.f32.mrb[0].mxu0
        %v7914 = vpop.f32.mrb[0].mxu0
        %v7915 = vadd.f32 0.0, %v7914
        %v7916 = vpop.f32.mrb[0].mxu0
        %7917 = vmatprep.mubr.bf16.mxu0 0
        %7918 = vmatmul.mubr.bf16.gmra.mrb[0].mxu0 %v7793
        %v7919 = vpop.f32.mrb[0].mxu0
        %v7920 = vadd.f32 0.0, %v7919
        %v7921 = vpop.f32.mrb[0].mxu0
        %v7922 = vpop.f32.mrb[0].mxu0
        %v7923 = vadd.f32 0.0, %v7922
        %v7924 = vpop.f32.mrb[0].mxu0
        %7925 = vmatprep.mubr.bf16.mxu0 0
        %7926 = vmatmul.mubr.bf16.gmra.mrb[0].mxu0 %v7796
        %v7927 = vpop.f32.mrb[0].mxu0
        %v7928 = vadd.f32 0.0, %v7927
        %v7929 = vpop.f32.mrb[0].mxu0
        %v7930 = vpop.f32.mrb[0].mxu0
        %v7931 = vadd.f32 0.0, %v7930
        %v7932 = vpop.f32.mrb[0].mxu0
        %7933 = vmatprep.mubr.bf16.mxu0 0
        %7934 = vmatmul.mubr.bf16.gmra.mrb[0].mxu0 %v7799
        %v7935 = vpop.f32.mrb[0].mxu0
        %v7936 = vadd.f32 0.0, %v7935
        %v7937 = vpop.f32.mrb[0].mxu0
        %v7938 = vpop.f32.mrb[0].mxu0
        %v7939 = vadd.f32 0.0, %v7938
        %v7940 = vpop.f32.mrb[0].mxu0
        %7941 = vmatprep.mubr.bf16.mxu0 0
        %7942 = vmatmul.mubr.bf16.gmra.mrb[0].mxu0 %v7802
        %v7943 = vpop.f32.mrb[0].mxu0
        %v7944 = vadd.f32 0.0, %v7943
        %v7945 = vpop.f32.mrb[0].mxu0
        %v7946 = vpop.f32.mrb[0].mxu0
        %v7947 = vadd.f32 0.0, %v7946
        %v7948 = vpop.f32.mrb[0].mxu0
        %7949 = vmatprep.mubr.bf16.mxu0 0
        %7950 = vmatmul.mubr.bf16.gmra.mrb[0].mxu0 %v7805
        %v7951 = vpop.f32.mrb[0].mxu0
        %v7952 = vadd.f32 0.0, %v7951
        %v7953 = vpop.f32.mrb[0].mxu0
        %v7954 = vpop.f32.mrb[0].mxu0
        %v7955 = vadd.f32 0.0, %v7954
        %v7956 = vpop.f32.mrb[0].mxu0
        %7957 = vmatprep.mubr.bf16.mxu0 0
        %7958 = vmatmul.mubr.bf16.gmra.mrb[0].mxu0 %v7808
        %v7959 = vpop.f32.mrb[0].mxu0
        %v7960 = vadd.f32 0.0, %v7959
        %v7961 = vpop.f32.mrb[0].mxu0
        %v7962 = vpop.f32.mrb[0].mxu0
        %v7963 = vadd.f32 0.0, %v7962
        %v7964 = vpop.f32.mrb[0].mxu0
        %7965 = vmatprep.mubr.bf16.mxu0 0
        %7966 = vmatmul.mubr.bf16.gmra.mrb[0].mxu0 %v7811
        %v7967 = vpop.f32.mrb[0].mxu0
        %v7968 = vadd.f32 0.0, %v7967
        %v7969 = vpop.f32.mrb[0].mxu0
        %v7970 = vpop.f32.mrb[0].mxu0
        %v7971 = vadd.f32 0.0, %v7970
        %v7972 = vpop.f32.mrb[0].mxu0
        %7973 = vdwg.mxu0
        %v7974 = vadd.f32 %v7668, %v7848
        %v7975 = vadd.f32 %v7669, %v7851
        %v7976 = vadd.f32 %v7670, %v7856
        %v7977 = vadd.f32 %v7671, %v7859
        %v7978 = vadd.f32 %v7672, %v7864
        %v7979 = vadd.f32 %v7673, %v7867
        %v7980 = vadd.f32 %v7674, %v7872
        %v7981 = vadd.f32 %v7675, %v7875
        %v7982 = vadd.f32 %v7676, %v7880
        %v7983 = vadd.f32 %v7677, %v7883
        %v7984 = vadd.f32 %v7678, %v7888
        %v7985 = vadd.f32 %v7679, %v7891
        %v7986 = vadd.f32 %v7680, %v7896
        %v7987 = vadd.f32 %v7681, %v7899
        %v7988 = vadd.f32 %v7682, %v7904
        %v7989 = vadd.f32 %v7683, %v7907
        %v7990 = vadd.f32 %v7684, %v7912
        %v7991 = vadd.f32 %v7685, %v7915
        %v7992 = vadd.f32 %v7686, %v7920
        %v7993 = vadd.f32 %v7687, %v7923
        %v7994 = vadd.f32 %v7688, %v7928
        %v7995 = vadd.f32 %v7689, %v7931
        %v7996 = vadd.f32 %v7690, %v7936
        %v7997 = vadd.f32 %v7691, %v7939
        %v7998 = vadd.f32 %v7692, %v7944
        %v7999 = vadd.f32 %v7693, %v7947
        %v8000 = vadd.f32 %v7694, %v7952
        %v8001 = vadd.f32 %v7695, %v7955
        %v8002 = vadd.f32 %v7696, %v7960
        %v8003 = vadd.f32 %v7697, %v7963
        %v8004 = vadd.f32 %v7698, %v7968
        %v8005 = vadd.f32 %v7699, %v7971
        %v8006 = vld [vmem:[%s5120] sm:$0xff]
        %v8007 = vld [vmem:[%s5120 + $0x8] sm:$0xff]
        %v8008 = vld [vmem:[%s5120 + $0x18] sm:$0xff]
        %v8009 = vld [vmem:[%s5120 + $0x20] sm:$0xff]
        %v8010 = vld [vmem:[%s5120 + $0x30] sm:$0xff]
        %v8011 = vld [vmem:[%s5120 + $0x38] sm:$0xff]
        %v8012 = vld [vmem:[%s5120 + $0x48] sm:$0xff]
        %v8013 = vld [vmem:[%s5120 + $0x50] sm:$0xff]
        %v8014 = vld [vmem:[%s5120 + $0x60] sm:$0xff]
        %v8015 = vld [vmem:[%s5120 + $0x68] sm:$0xff]
        %v8016 = vld [vmem:[%s5120 + $0x78] sm:$0xff]
        %v8017 = vld [vmem:[%s5120 + $0x80] sm:$0xff]
        %v8018 = vld [vmem:[%s5120 + $0x90] sm:$0xff]
        %v8019 = vld [vmem:[%s5120 + $0x98] sm:$0xff]
        %v8020 = vld [vmem:[%s5120 + $0xa8] sm:$0xff]
        %v8021 = vld [vmem:[%s5120 + $0xb0] sm:$0xff]
        %v8022 = vld [vmem:[%s5120 + $0xc0] sm:$0xff]
        %v8023 = vld [vmem:[%s5120 + $0xc8] sm:$0xff]
        %v8024 = vld [vmem:[%s5120 + $0xd8] sm:$0xff]
        %v8025 = vld [vmem:[%s5120 + $0xe0] sm:$0xff]
        %v8026 = vld [vmem:[%s5120 + $0xf0] sm:$0xff]
        %v8027 = vld [vmem:[%s5120 + $0xf8] sm:$0xff]
        %v8028 = vld [vmem:[%s5120 + $0x108] sm:$0xff]
        %v8029 = vld [vmem:[%s5120 + $0x110] sm:$0xff]
        %v8030 = vld [vmem:[%s5120 + $0x120] sm:$0xff]
        %v8031 = vld [vmem:[%s5120 + $0x128] sm:$0xff]
        %v8032 = vld [vmem:[%s5120 + $0x138] sm:$0xff]
        %v8033 = vld [vmem:[%s5120 + $0x140] sm:$0xff]
        %v8034 = vld [vmem:[%s5120 + $0x150] sm:$0xff]
        %v8035 = vld [vmem:[%s5120 + $0x158] sm:$0xff]
        %v8036 = vld [vmem:[%s5120 + $0x168] sm:$0xff]
        %v8037 = vld [vmem:[%s5120 + $0x170] sm:$0xff]
        %v8038 = vpack.c.bf16 %v8007, %v8006
        %v8039 = vpack.c.bf16 %v8009, %v8008
        %v8040 = vpack.c.bf16 %v8011, %v8010
        %v8041 = vpack.c.bf16 %v8013, %v8012
        %v8042 = vpack.c.bf16 %v8015, %v8014
        %v8043 = vpack.c.bf16 %v8017, %v8016
        %v8044 = vpack.c.bf16 %v8019, %v8018
        %v8045 = vpack.c.bf16 %v8021, %v8020
        %v8046 = vpack.c.bf16 %v8023, %v8022
        %v8047 = vpack.c.bf16 %v8025, %v8024
        %v8048 = vpack.c.bf16 %v8027, %v8026
        %v8049 = vpack.c.bf16 %v8029, %v8028
        %v8050 = vpack.c.bf16 %v8031, %v8030
        %v8051 = vpack.c.bf16 %v8033, %v8032
        %v8052 = vpack.c.bf16 %v8035, %v8034
        %v8053 = vpack.c.bf16 %v8037, %v8036
        %s8054 = scalar_lea.vmem [#allocation16], 96
        %v8055 = vld [vmem:[%s8054] sm:$0xf]
        %v8056 = vld [vmem:[%s8054 + $0x4] sm:$0xf]
        %v8057 = vld [vmem:[%s8054 + $0x8] sm:$0xf]
        %v8058 = vld [vmem:[%s8054 + $0xc] sm:$0xf]
        %v8063 = vunpack.c.l.b16 %v8055
        %v8064 = vunpack.c.l.b16 %v8056
        %v8065 = vunpack.c.l.b16 %v8057
        %v8066 = vunpack.c.l.b16 %v8058
        %v8067 = vpack.c.b16 %v8064, %v8063
        %v8068 = vpack.c.b16 %v8066, %v8065
        %v8072 = vsel %vm3260, %v8038, 0
        %v8075 = vsel %vm3260, %v8039, 0
        %v8078 = vsel %vm3260, %v8040, 0
        %v8081 = vsel %vm3260, %v8041, 0
        %v8084 = vsel %vm3260, %v8042, 0
        %v8087 = vsel %vm3260, %v8043, 0
        %v8090 = vsel %vm3260, %v8044, 0
        %v8093 = vsel %vm3260, %v8045, 0
        %v8096 = vsel %vm3260, %v8046, 0
        %v8099 = vsel %vm3260, %v8047, 0
        %v8102 = vsel %vm3260, %v8048, 0
        %v8105 = vsel %vm3260, %v8049, 0
        %v8108 = vsel %vm3260, %v8050, 0
        %v8111 = vsel %vm3260, %v8051, 0
        %v8114 = vsel %vm3260, %v8052, 0
        %v8117 = vsel %vm3260, %v8053, 0
        %8119 = vmatprep.subr.bf16.mxu0 0
        %8120 = vmatpush1.bf16.msra.mxu0 %v8067
        %8121 = vmatprep.subr.bf16.mxu0 0
        %8122 = vmatpush1.bf16.msra.mxu0 %v8068
        %8123 = vmatprep.subr.bf16.mxu0 0
        %8124 = vmatpush1.bf16.msra.mxu0 0
        %8125 = vmatprep.subr.bf16.mxu0 0
        %8126 = vmatpush1.bf16.msra.mxu0 0
        %8127 = vmatprep.subr.bf16.mxu0 0
        %8128 = vmatpush1.bf16.msra.mxu0 0
        %8129 = vmatprep.subr.bf16.mxu0 0
        %8130 = vmatpush1.bf16.msra.mxu0 0
        %8131 = vmatprep.subr.bf16.mxu0 0
        %8132 = vmatpush1.bf16.msra.mxu0 0
        %8133 = vmatprep.subr.bf16.mxu0 0
        %8134 = vmatpush1.bf16.msra.mxu0 0
        %8135 = vmatprep.subr.bf16.mxu0 0
        %8136 = vmatpush1.bf16.msra.mxu0 0
        %8137 = vmatprep.subr.bf16.mxu0 0
        %8138 = vmatpush1.bf16.msra.mxu0 0
        %8139 = vmatprep.subr.bf16.mxu0 0
        %8140 = vmatpush1.bf16.msra.mxu0 0
        %8141 = vmatprep.subr.bf16.mxu0 0
        %8142 = vmatpush1.bf16.msra.mxu0 0
        %8143 = vmatprep.subr.bf16.mxu0 0
        %8144 = vmatpush1.bf16.msra.mxu0 0
        %8145 = vmatprep.subr.bf16.mxu0 0
        %8146 = vmatpush1.bf16.msra.mxu0 0
        %8147 = vmatprep.subr.bf16.mxu0 0
        %8148 = vmatpush1.bf16.msra.mxu0 0
        %8149 = vmatprep.subr.bf16.mxu0 0
        %8150 = vmatpush1.bf16.msra.mxu0 0
        %8151 = vmatprep.mubr.bf16.mxu0 0
        %8152 = vmatmul.mubr.bf16.gmra.mrb[0].mxu0 %v8072
        %v8153 = vpop.f32.mrb[0].mxu0
        %v8154 = vadd.f32 0.0, %v8153
        %v8155 = vpop.f32.mrb[0].mxu0
        %v8156 = vpop.f32.mrb[0].mxu0
        %v8157 = vadd.f32 0.0, %v8156
        %v8158 = vpop.f32.mrb[0].mxu0
        %8159 = vmatprep.mubr.bf16.mxu0 0
        %8160 = vmatmul.mubr.bf16.gmra.mrb[0].mxu0 %v8075
        %v8161 = vpop.f32.mrb[0].mxu0
        %v8162 = vadd.f32 0.0, %v8161
        %v8163 = vpop.f32.mrb[0].mxu0
        %v8164 = vpop.f32.mrb[0].mxu0
        %v8165 = vadd.f32 0.0, %v8164
        %v8166 = vpop.f32.mrb[0].mxu0
        %8167 = vmatprep.mubr.bf16.mxu0 0
        %8168 = vmatmul.mubr.bf16.gmra.mrb[0].mxu0 %v8078
        %v8169 = vpop.f32.mrb[0].mxu0
        %v8170 = vadd.f32 0.0, %v8169
        %v8171 = vpop.f32.mrb[0].mxu0
        %v8172 = vpop.f32.mrb[0].mxu0
        %v8173 = vadd.f32 0.0, %v8172
        %v8174 = vpop.f32.mrb[0].mxu0
        %8175 = vmatprep.mubr.bf16.mxu0 0
        %8176 = vmatmul.mubr.bf16.gmra.mrb[0].mxu0 %v8081
        %v8177 = vpop.f32.mrb[0].mxu0
        %v8178 = vadd.f32 0.0, %v8177
        %v8179 = vpop.f32.mrb[0].mxu0
        %v8180 = vpop.f32.mrb[0].mxu0
        %v8181 = vadd.f32 0.0, %v8180
        %v8182 = vpop.f32.mrb[0].mxu0
        %8183 = vmatprep.mubr.bf16.mxu0 0
        %8184 = vmatmul.mubr.bf16.gmra.mrb[0].mxu0 %v8084
        %v8185 = vpop.f32.mrb[0].mxu0
        %v8186 = vadd.f32 0.0, %v8185
        %v8187 = vpop.f32.mrb[0].mxu0
        %v8188 = vpop.f32.mrb[0].mxu0
        %v8189 = vadd.f32 0.0, %v8188
        %v8190 = vpop.f32.mrb[0].mxu0
        %8191 = vmatprep.mubr.bf16.mxu0 0
        %8192 = vmatmul.mubr.bf16.gmra.mrb[0].mxu0 %v8087
        %v8193 = vpop.f32.mrb[0].mxu0
        %v8194 = vadd.f32 0.0, %v8193
        %v8195 = vpop.f32.mrb[0].mxu0
        %v8196 = vpop.f32.mrb[0].mxu0
        %v8197 = vadd.f32 0.0, %v8196
        %v8198 = vpop.f32.mrb[0].mxu0
        %8199 = vmatprep.mubr.bf16.mxu0 0
        %8200 = vmatmul.mubr.bf16.gmra.mrb[0].mxu0 %v8090
        %v8201 = vpop.f32.mrb[0].mxu0
        %v8202 = vadd.f32 0.0, %v8201
        %v8203 = vpop.f32.mrb[0].mxu0
        %v8204 = vpop.f32.mrb[0].mxu0
        %v8205 = vadd.f32 0.0, %v8204
        %v8206 = vpop.f32.mrb[0].mxu0
        %8207 = vmatprep.mubr.bf16.mxu0 0
        %8208 = vmatmul.mubr.bf16.gmra.mrb[0].mxu0 %v8093
        %v8209 = vpop.f32.mrb[0].mxu0
        %v8210 = vadd.f32 0.0, %v8209
        %v8211 = vpop.f32.mrb[0].mxu0
        %v8212 = vpop.f32.mrb[0].mxu0
        %v8213 = vadd.f32 0.0, %v8212
        %v8214 = vpop.f32.mrb[0].mxu0
        %8215 = vmatprep.mubr.bf16.mxu0 0
        %8216 = vmatmul.mubr.bf16.gmra.mrb[0].mxu0 %v8096
        %v8217 = vpop.f32.mrb[0].mxu0
        %v8218 = vadd.f32 0.0, %v8217
        %v8219 = vpop.f32.mrb[0].mxu0
        %v8220 = vpop.f32.mrb[0].mxu0
        %v8221 = vadd.f32 0.0, %v8220
        %v8222 = vpop.f32.mrb[0].mxu0
        %8223 = vmatprep.mubr.bf16.mxu0 0
        %8224 = vmatmul.mubr.bf16.gmra.mrb[0].mxu0 %v8099
        %v8225 = vpop.f32.mrb[0].mxu0
        %v8226 = vadd.f32 0.0, %v8225
        %v8227 = vpop.f32.mrb[0].mxu0
        %v8228 = vpop.f32.mrb[0].mxu0
        %v8229 = vadd.f32 0.0, %v8228
        %v8230 = vpop.f32.mrb[0].mxu0
        %8231 = vmatprep.mubr.bf16.mxu0 0
        %8232 = vmatmul.mubr.bf16.gmra.mrb[0].mxu0 %v8102
        %v8233 = vpop.f32.mrb[0].mxu0
        %v8234 = vadd.f32 0.0, %v8233
        %v8235 = vpop.f32.mrb[0].mxu0
        %v8236 = vpop.f32.mrb[0].mxu0
        %v8237 = vadd.f32 0.0, %v8236
        %v8238 = vpop.f32.mrb[0].mxu0
        %8239 = vmatprep.mubr.bf16.mxu0 0
        %8240 = vmatmul.mubr.bf16.gmra.mrb[0].mxu0 %v8105
        %v8241 = vpop.f32.mrb[0].mxu0
        %v8242 = vadd.f32 0.0, %v8241
        %v8243 = vpop.f32.mrb[0].mxu0
        %v8244 = vpop.f32.mrb[0].mxu0
        %v8245 = vadd.f32 0.0, %v8244
        %v8246 = vpop.f32.mrb[0].mxu0
        %8247 = vmatprep.mubr.bf16.mxu0 0
        %8248 = vmatmul.mubr.bf16.gmra.mrb[0].mxu0 %v8108
        %v8249 = vpop.f32.mrb[0].mxu0
        %v8250 = vadd.f32 0.0, %v8249
        %v8251 = vpop.f32.mrb[0].mxu0
        %v8252 = vpop.f32.mrb[0].mxu0
        %v8253 = vadd.f32 0.0, %v8252
        %v8254 = vpop.f32.mrb[0].mxu0
        %8255 = vmatprep.mubr.bf16.mxu0 0
        %8256 = vmatmul.mubr.bf16.gmra.mrb[0].mxu0 %v8111
        %v8257 = vpop.f32.mrb[0].mxu0
        %v8258 = vadd.f32 0.0, %v8257
        %v8259 = vpop.f32.mrb[0].mxu0
        %v8260 = vpop.f32.mrb[0].mxu0
        %v8261 = vadd.f32 0.0, %v8260
        %v8262 = vpop.f32.mrb[0].mxu0
        %8263 = vmatprep.mubr.bf16.mxu0 0
        %8264 = vmatmul.mubr.bf16.gmra.mrb[0].mxu0 %v8114
        %v8265 = vpop.f32.mrb[0].mxu0
        %v8266 = vadd.f32 0.0, %v8265
        %v8267 = vpop.f32.mrb[0].mxu0
        %v8268 = vpop.f32.mrb[0].mxu0
        %v8269 = vadd.f32 0.0, %v8268
        %v8270 = vpop.f32.mrb[0].mxu0
        %8271 = vmatprep.mubr.bf16.mxu0 0
        %8272 = vmatmul.mubr.bf16.gmra.mrb[0].mxu0 %v8117
        %v8273 = vpop.f32.mrb[0].mxu0
        %v8274 = vadd.f32 0.0, %v8273
        %v8275 = vpop.f32.mrb[0].mxu0
        %v8276 = vpop.f32.mrb[0].mxu0
        %v8277 = vadd.f32 0.0, %v8276
        %v8278 = vpop.f32.mrb[0].mxu0
        %8279 = vdwg.mxu0
        %v8280 = vadd.f32 %v7974, %v8154
        %v8281 = vadd.f32 %v7975, %v8157
        %v8282 = vadd.f32 %v7976, %v8162
        %v8283 = vadd.f32 %v7977, %v8165
        %v8284 = vadd.f32 %v7978, %v8170
        %v8285 = vadd.f32 %v7979, %v8173
        %v8286 = vadd.f32 %v7980, %v8178
        %v8287 = vadd.f32 %v7981, %v8181
        %v8288 = vadd.f32 %v7982, %v8186
        %v8289 = vadd.f32 %v7983, %v8189
        %v8290 = vadd.f32 %v7984, %v8194
        %v8291 = vadd.f32 %v7985, %v8197
        %v8292 = vadd.f32 %v7986, %v8202
        %v8293 = vadd.f32 %v7987, %v8205
        %v8294 = vadd.f32 %v7988, %v8210
        %v8295 = vadd.f32 %v7989, %v8213
        %v8296 = vadd.f32 %v7990, %v8218
        %v8297 = vadd.f32 %v7991, %v8221
        %v8298 = vadd.f32 %v7992, %v8226
        %v8299 = vadd.f32 %v7993, %v8229
        %v8300 = vadd.f32 %v7994, %v8234
        %v8301 = vadd.f32 %v7995, %v8237
        %v8302 = vadd.f32 %v7996, %v8242
        %v8303 = vadd.f32 %v7997, %v8245
        %v8304 = vadd.f32 %v7998, %v8250
        %v8305 = vadd.f32 %v7999, %v8253
        %v8306 = vadd.f32 %v8000, %v8258
        %v8307 = vadd.f32 %v8001, %v8261
        %v8308 = vadd.f32 %v8002, %v8266
        %v8309 = vadd.f32 %v8003, %v8269
        %v8310 = vadd.f32 %v8004, %v8274
        %v8311 = vadd.f32 %v8005, %v8277
        %v8312 = vld [vmem:[%s5120 + $0x1] sm:$0xff]
        %v8313 = vld [vmem:[%s5120 + $0x9] sm:$0xff]
        %v8314 = vld [vmem:[%s5120 + $0x19] sm:$0xff]
        %v8315 = vld [vmem:[%s5120 + $0x21] sm:$0xff]
        %v8316 = vld [vmem:[%s5120 + $0x31] sm:$0xff]
        %v8317 = vld [vmem:[%s5120 + $0x39] sm:$0xff]
        %v8318 = vld [vmem:[%s5120 + $0x49] sm:$0xff]
        %v8319 = vld [vmem:[%s5120 + $0x51] sm:$0xff]
        %v8320 = vld [vmem:[%s5120 + $0x61] sm:$0xff]
        %v8321 = vld [vmem:[%s5120 + $0x69] sm:$0xff]
        %v8322 = vld [vmem:[%s5120 + $0x79] sm:$0xff]
        %v8323 = vld [vmem:[%s5120 + $0x81] sm:$0xff]
        %v8324 = vld [vmem:[%s5120 + $0x91] sm:$0xff]
        %v8325 = vld [vmem:[%s5120 + $0x99] sm:$0xff]
        %v8326 = vld [vmem:[%s5120 + $0xa9] sm:$0xff]
        %v8327 = vld [vmem:[%s5120 + $0xb1] sm:$0xff]
        %v8328 = vld [vmem:[%s5120 + $0xc1] sm:$0xff]
        %v8329 = vld [vmem:[%s5120 + $0xc9] sm:$0xff]
        %v8330 = vld [vmem:[%s5120 + $0xd9] sm:$0xff]
        %v8331 = vld [vmem:[%s5120 + $0xe1] sm:$0xff]
        %v8332 = vld [vmem:[%s5120 + $0xf1] sm:$0xff]
        %v8333 = vld [vmem:[%s5120 + $0xf9] sm:$0xff]
        %v8334 = vld [vmem:[%s5120 + $0x109] sm:$0xff]
        %v8335 = vld [vmem:[%s5120 + $0x111] sm:$0xff]
        %v8336 = vld [vmem:[%s5120 + $0x121] sm:$0xff]
        %v8337 = vld [vmem:[%s5120 + $0x129] sm:$0xff]
        %v8338 = vld [vmem:[%s5120 + $0x139] sm:$0xff]
        %v8339 = vld [vmem:[%s5120 + $0x141] sm:$0xff]
        %v8340 = vld [vmem:[%s5120 + $0x151] sm:$0xff]
        %v8341 = vld [vmem:[%s5120 + $0x159] sm:$0xff]
        %v8342 = vld [vmem:[%s5120 + $0x169] sm:$0xff]
        %v8343 = vld [vmem:[%s5120 + $0x171] sm:$0xff]
        %v8344 = vpack.c.bf16 %v8313, %v8312
        %v8345 = vpack.c.bf16 %v8315, %v8314
        %v8346 = vpack.c.bf16 %v8317, %v8316
        %v8347 = vpack.c.bf16 %v8319, %v8318
        %v8348 = vpack.c.bf16 %v8321, %v8320
        %v8349 = vpack.c.bf16 %v8323, %v8322
        %v8350 = vpack.c.bf16 %v8325, %v8324
        %v8351 = vpack.c.bf16 %v8327, %v8326
        %v8352 = vpack.c.bf16 %v8329, %v8328
        %v8353 = vpack.c.bf16 %v8331, %v8330
        %v8354 = vpack.c.bf16 %v8333, %v8332
        %v8355 = vpack.c.bf16 %v8335, %v8334
        %v8356 = vpack.c.bf16 %v8337, %v8336
        %v8357 = vpack.c.bf16 %v8339, %v8338
        %v8358 = vpack.c.bf16 %v8341, %v8340
        %v8359 = vpack.c.bf16 %v8343, %v8342
        %s8360 = scalar_lea.vmem [#allocation16], 112
        %v8361 = vld [vmem:[%s8360] sm:$0xf]
        %v8362 = vld [vmem:[%s8360 + $0x4] sm:$0xf]
        %v8363 = vld [vmem:[%s8360 + $0x8] sm:$0xf]
        %v8364 = vld [vmem:[%s8360 + $0xc] sm:$0xf]
        %v8369 = vunpack.c.l.b16 %v8361
        %v8370 = vunpack.c.l.b16 %v8362
        %v8371 = vunpack.c.l.b16 %v8363
        %v8372 = vunpack.c.l.b16 %v8364
        %v8373 = vpack.c.b16 %v8370, %v8369
        %v8374 = vpack.c.b16 %v8372, %v8371
        %v8378 = vsel %vm3260, %v8344, 0
        %v8381 = vsel %vm3260, %v8345, 0
        %v8384 = vsel %vm3260, %v8346, 0
        %v8387 = vsel %vm3260, %v8347, 0
        %v8390 = vsel %vm3260, %v8348, 0
        %v8393 = vsel %vm3260, %v8349, 0
        %v8396 = vsel %vm3260, %v8350, 0
        %v8399 = vsel %vm3260, %v8351, 0
        %v8402 = vsel %vm3260, %v8352, 0
        %v8405 = vsel %vm3260, %v8353, 0
        %v8408 = vsel %vm3260, %v8354, 0
        %v8411 = vsel %vm3260, %v8355, 0
        %v8414 = vsel %vm3260, %v8356, 0
        %v8417 = vsel %vm3260, %v8357, 0
        %v8420 = vsel %vm3260, %v8358, 0
        %v8423 = vsel %vm3260, %v8359, 0
        %8425 = vmatprep.subr.bf16.mxu0 0
        %8426 = vmatpush1.bf16.msra.mxu0 %v8373
        %8427 = vmatprep.subr.bf16.mxu0 0
        %8428 = vmatpush1.bf16.msra.mxu0 %v8374
        %8429 = vmatprep.subr.bf16.mxu0 0
        %8430 = vmatpush1.bf16.msra.mxu0 0
        %8431 = vmatprep.subr.bf16.mxu0 0
        %8432 = vmatpush1.bf16.msra.mxu0 0
        %8433 = vmatprep.subr.bf16.mxu0 0
        %8434 = vmatpush1.bf16.msra.mxu0 0
        %8435 = vmatprep.subr.bf16.mxu0 0
        %8436 = vmatpush1.bf16.msra.mxu0 0
        %8437 = vmatprep.subr.bf16.mxu0 0
        %8438 = vmatpush1.bf16.msra.mxu0 0
        %8439 = vmatprep.subr.bf16.mxu0 0
        %8440 = vmatpush1.bf16.msra.mxu0 0
        %8441 = vmatprep.subr.bf16.mxu0 0
        %8442 = vmatpush1.bf16.msra.mxu0 0
        %8443 = vmatprep.subr.bf16.mxu0 0
        %8444 = vmatpush1.bf16.msra.mxu0 0
        %8445 = vmatprep.subr.bf16.mxu0 0
        %8446 = vmatpush1.bf16.msra.mxu0 0
        %8447 = vmatprep.subr.bf16.mxu0 0
        %8448 = vmatpush1.bf16.msra.mxu0 0
        %8449 = vmatprep.subr.bf16.mxu0 0
        %8450 = vmatpush1.bf16.msra.mxu0 0
        %8451 = vmatprep.subr.bf16.mxu0 0
        %8452 = vmatpush1.bf16.msra.mxu0 0
        %8453 = vmatprep.subr.bf16.mxu0 0
        %8454 = vmatpush1.bf16.msra.mxu0 0
        %8455 = vmatprep.subr.bf16.mxu0 0
        %8456 = vmatpush1.bf16.msra.mxu0 0
        %8457 = vmatprep.mubr.bf16.mxu0 0
        %8458 = vmatmul.mubr.bf16.gmra.mrb[0].mxu0 %v8378
        %v8459 = vpop.f32.mrb[0].mxu0
        %v8460 = vadd.f32 0.0, %v8459
        %v8461 = vpop.f32.mrb[0].mxu0
        %v8462 = vpop.f32.mrb[0].mxu0
        %v8463 = vadd.f32 0.0, %v8462
        %v8464 = vpop.f32.mrb[0].mxu0
        %8465 = vmatprep.mubr.bf16.mxu0 0
        %8466 = vmatmul.mubr.bf16.gmra.mrb[0].mxu0 %v8381
        %v8467 = vpop.f32.mrb[0].mxu0
        %v8468 = vadd.f32 0.0, %v8467
        %v8469 = vpop.f32.mrb[0].mxu0
        %v8470 = vpop.f32.mrb[0].mxu0
        %v8471 = vadd.f32 0.0, %v8470
        %v8472 = vpop.f32.mrb[0].mxu0
        %8473 = vmatprep.mubr.bf16.mxu0 0
        %8474 = vmatmul.mubr.bf16.gmra.mrb[0].mxu0 %v8384
        %v8475 = vpop.f32.mrb[0].mxu0
        %v8476 = vadd.f32 0.0, %v8475
        %v8477 = vpop.f32.mrb[0].mxu0
        %v8478 = vpop.f32.mrb[0].mxu0
        %v8479 = vadd.f32 0.0, %v8478
        %v8480 = vpop.f32.mrb[0].mxu0
        %8481 = vmatprep.mubr.bf16.mxu0 0
        %8482 = vmatmul.mubr.bf16.gmra.mrb[0].mxu0 %v8387
        %v8483 = vpop.f32.mrb[0].mxu0
        %v8484 = vadd.f32 0.0, %v8483
        %v8485 = vpop.f32.mrb[0].mxu0
        %v8486 = vpop.f32.mrb[0].mxu0
        %v8487 = vadd.f32 0.0, %v8486
        %v8488 = vpop.f32.mrb[0].mxu0
        %8489 = vmatprep.mubr.bf16.mxu0 0
        %8490 = vmatmul.mubr.bf16.gmra.mrb[0].mxu0 %v8390
        %v8491 = vpop.f32.mrb[0].mxu0
        %v8492 = vadd.f32 0.0, %v8491
        %v8493 = vpop.f32.mrb[0].mxu0
        %v8494 = vpop.f32.mrb[0].mxu0
        %v8495 = vadd.f32 0.0, %v8494
        %v8496 = vpop.f32.mrb[0].mxu0
        %8497 = vmatprep.mubr.bf16.mxu0 0
        %8498 = vmatmul.mubr.bf16.gmra.mrb[0].mxu0 %v8393
        %v8499 = vpop.f32.mrb[0].mxu0
        %v8500 = vadd.f32 0.0, %v8499
        %v8501 = vpop.f32.mrb[0].mxu0
        %v8502 = vpop.f32.mrb[0].mxu0
        %v8503 = vadd.f32 0.0, %v8502
        %v8504 = vpop.f32.mrb[0].mxu0
        %8505 = vmatprep.mubr.bf16.mxu0 0
        %8506 = vmatmul.mubr.bf16.gmra.mrb[0].mxu0 %v8396
        %v8507 = vpop.f32.mrb[0].mxu0
        %v8508 = vadd.f32 0.0, %v8507
        %v8509 = vpop.f32.mrb[0].mxu0
        %v8510 = vpop.f32.mrb[0].mxu0
        %v8511 = vadd.f32 0.0, %v8510
        %v8512 = vpop.f32.mrb[0].mxu0
        %8513 = vmatprep.mubr.bf16.mxu0 0
        %8514 = vmatmul.mubr.bf16.gmra.mrb[0].mxu0 %v8399
        %v8515 = vpop.f32.mrb[0].mxu0
        %v8516 = vadd.f32 0.0, %v8515
        %v8517 = vpop.f32.mrb[0].mxu0
        %v8518 = vpop.f32.mrb[0].mxu0
        %v8519 = vadd.f32 0.0, %v8518
        %v8520 = vpop.f32.mrb[0].mxu0
        %8521 = vmatprep.mubr.bf16.mxu0 0
        %8522 = vmatmul.mubr.bf16.gmra.mrb[0].mxu0 %v8402
        %v8523 = vpop.f32.mrb[0].mxu0
        %v8524 = vadd.f32 0.0, %v8523
        %v8525 = vpop.f32.mrb[0].mxu0
        %v8526 = vpop.f32.mrb[0].mxu0
        %v8527 = vadd.f32 0.0, %v8526
        %v8528 = vpop.f32.mrb[0].mxu0
        %8529 = vmatprep.mubr.bf16.mxu0 0
        %8530 = vmatmul.mubr.bf16.gmra.mrb[0].mxu0 %v8405
        %v8531 = vpop.f32.mrb[0].mxu0
        %v8532 = vadd.f32 0.0, %v8531
        %v8533 = vpop.f32.mrb[0].mxu0
        %v8534 = vpop.f32.mrb[0].mxu0
        %v8535 = vadd.f32 0.0, %v8534
        %v8536 = vpop.f32.mrb[0].mxu0
        %8537 = vmatprep.mubr.bf16.mxu0 0
        %8538 = vmatmul.mubr.bf16.gmra.mrb[0].mxu0 %v8408
        %v8539 = vpop.f32.mrb[0].mxu0
        %v8540 = vadd.f32 0.0, %v8539
        %v8541 = vpop.f32.mrb[0].mxu0
        %v8542 = vpop.f32.mrb[0].mxu0
        %v8543 = vadd.f32 0.0, %v8542
        %v8544 = vpop.f32.mrb[0].mxu0
        %8545 = vmatprep.mubr.bf16.mxu0 0
        %8546 = vmatmul.mubr.bf16.gmra.mrb[0].mxu0 %v8411
        %v8547 = vpop.f32.mrb[0].mxu0
        %v8548 = vadd.f32 0.0, %v8547
        %v8549 = vpop.f32.mrb[0].mxu0
        %v8550 = vpop.f32.mrb[0].mxu0
        %v8551 = vadd.f32 0.0, %v8550
        %v8552 = vpop.f32.mrb[0].mxu0
        %8553 = vmatprep.mubr.bf16.mxu0 0
        %8554 = vmatmul.mubr.bf16.gmra.mrb[0].mxu0 %v8414
        %v8555 = vpop.f32.mrb[0].mxu0
        %v8556 = vadd.f32 0.0, %v8555
        %v8557 = vpop.f32.mrb[0].mxu0
        %v8558 = vpop.f32.mrb[0].mxu0
        %v8559 = vadd.f32 0.0, %v8558
        %v8560 = vpop.f32.mrb[0].mxu0
        %8561 = vmatprep.mubr.bf16.mxu0 0
        %8562 = vmatmul.mubr.bf16.gmra.mrb[0].mxu0 %v8417
        %v8563 = vpop.f32.mrb[0].mxu0
        %v8564 = vadd.f32 0.0, %v8563
        %v8565 = vpop.f32.mrb[0].mxu0
        %v8566 = vpop.f32.mrb[0].mxu0
        %v8567 = vadd.f32 0.0, %v8566
        %v8568 = vpop.f32.mrb[0].mxu0
        %8569 = vmatprep.mubr.bf16.mxu0 0
        %8570 = vmatmul.mubr.bf16.gmra.mrb[0].mxu0 %v8420
        %v8571 = vpop.f32.mrb[0].mxu0
        %v8572 = vadd.f32 0.0, %v8571
        %v8573 = vpop.f32.mrb[0].mxu0
        %v8574 = vpop.f32.mrb[0].mxu0
        %v8575 = vadd.f32 0.0, %v8574
        %v8576 = vpop.f32.mrb[0].mxu0
        %8577 = vmatprep.mubr.bf16.mxu0 0
        %8578 = vmatmul.mubr.bf16.gmra.mrb[0].mxu0 %v8423
        %v8579 = vpop.f32.mrb[0].mxu0
        %v8580 = vadd.f32 0.0, %v8579
        %v8581 = vpop.f32.mrb[0].mxu0
        %v8582 = vpop.f32.mrb[0].mxu0
        %v8583 = vadd.f32 0.0, %v8582
        %v8584 = vpop.f32.mrb[0].mxu0
        %8585 = vdwg.mxu0
        %v8586 = vadd.f32 %v8280, %v8460
        %v8587 = vadd.f32 %v8281, %v8463
        %v8588 = vadd.f32 %v8282, %v8468
        %v8589 = vadd.f32 %v8283, %v8471
        %v8590 = vadd.f32 %v8284, %v8476
        %v8591 = vadd.f32 %v8285, %v8479
        %v8592 = vadd.f32 %v8286, %v8484
        %v8593 = vadd.f32 %v8287, %v8487
        %v8594 = vadd.f32 %v8288, %v8492
        %v8595 = vadd.f32 %v8289, %v8495
        %v8596 = vadd.f32 %v8290, %v8500
        %v8597 = vadd.f32 %v8291, %v8503
        %v8598 = vadd.f32 %v8292, %v8508
        %v8599 = vadd.f32 %v8293, %v8511
        %v8600 = vadd.f32 %v8294, %v8516
        %v8601 = vadd.f32 %v8295, %v8519
        %v8602 = vadd.f32 %v8296, %v8524
        %v8603 = vadd.f32 %v8297, %v8527
        %v8604 = vadd.f32 %v8298, %v8532
        %v8605 = vadd.f32 %v8299, %v8535
        %v8606 = vadd.f32 %v8300, %v8540
        %v8607 = vadd.f32 %v8301, %v8543
        %v8608 = vadd.f32 %v8302, %v8548
        %v8609 = vadd.f32 %v8303, %v8551
        %v8610 = vadd.f32 %v8304, %v8556
        %v8611 = vadd.f32 %v8305, %v8559
        %v8612 = vadd.f32 %v8306, %v8564
        %v8613 = vadd.f32 %v8307, %v8567
        %v8614 = vadd.f32 %v8308, %v8572
        %v8615 = vadd.f32 %v8309, %v8575
        %v8616 = vadd.f32 %v8310, %v8580
        %v8617 = vadd.f32 %v8311, %v8583
        %v8618 = vld [vmem:[%s5120 + $0x2] sm:$0xff]
        %v8619 = vld [vmem:[%s5120 + $0xa] sm:$0xff]
        %v8620 = vld [vmem:[%s5120 + $0x1a] sm:$0xff]
        %v8621 = vld [vmem:[%s5120 + $0x22] sm:$0xff]
        %v8622 = vld [vmem:[%s5120 + $0x32] sm:$0xff]
        %v8623 = vld [vmem:[%s5120 + $0x3a] sm:$0xff]
        %v8624 = vld [vmem:[%s5120 + $0x4a] sm:$0xff]
        %v8625 = vld [vmem:[%s5120 + $0x52] sm:$0xff]
        %v8626 = vld [vmem:[%s5120 + $0x62] sm:$0xff]
        %v8627 = vld [vmem:[%s5120 + $0x6a] sm:$0xff]
        %v8628 = vld [vmem:[%s5120 + $0x7a] sm:$0xff]
        %v8629 = vld [vmem:[%s5120 + $0x82] sm:$0xff]
        %v8630 = vld [vmem:[%s5120 + $0x92] sm:$0xff]
        %v8631 = vld [vmem:[%s5120 + $0x9a] sm:$0xff]
        %v8632 = vld [vmem:[%s5120 + $0xaa] sm:$0xff]
        %v8633 = vld [vmem:[%s5120 + $0xb2] sm:$0xff]
        %v8634 = vld [vmem:[%s5120 + $0xc2] sm:$0xff]
        %v8635 = vld [vmem:[%s5120 + $0xca] sm:$0xff]
        %v8636 = vld [vmem:[%s5120 + $0xda] sm:$0xff]
        %v8637 = vld [vmem:[%s5120 + $0xe2] sm:$0xff]
        %v8638 = vld [vmem:[%s5120 + $0xf2] sm:$0xff]
        %v8639 = vld [vmem:[%s5120 + $0xfa] sm:$0xff]
        %v8640 = vld [vmem:[%s5120 + $0x10a] sm:$0xff]
        %v8641 = vld [vmem:[%s5120 + $0x112] sm:$0xff]
        %v8642 = vld [vmem:[%s5120 + $0x122] sm:$0xff]
        %v8643 = vld [vmem:[%s5120 + $0x12a] sm:$0xff]
        %v8644 = vld [vmem:[%s5120 + $0x13a] sm:$0xff]
        %v8645 = vld [vmem:[%s5120 + $0x142] sm:$0xff]
        %v8646 = vld [vmem:[%s5120 + $0x152] sm:$0xff]
        %v8647 = vld [vmem:[%s5120 + $0x15a] sm:$0xff]
        %v8648 = vld [vmem:[%s5120 + $0x16a] sm:$0xff]
        %v8649 = vld [vmem:[%s5120 + $0x172] sm:$0xff]
        %v8650 = vpack.c.bf16 %v8619, %v8618
        %v8651 = vpack.c.bf16 %v8621, %v8620
        %v8652 = vpack.c.bf16 %v8623, %v8622
        %v8653 = vpack.c.bf16 %v8625, %v8624
        %v8654 = vpack.c.bf16 %v8627, %v8626
        %v8655 = vpack.c.bf16 %v8629, %v8628
        %v8656 = vpack.c.bf16 %v8631, %v8630
        %v8657 = vpack.c.bf16 %v8633, %v8632
        %v8658 = vpack.c.bf16 %v8635, %v8634
        %v8659 = vpack.c.bf16 %v8637, %v8636
        %v8660 = vpack.c.bf16 %v8639, %v8638
        %v8661 = vpack.c.bf16 %v8641, %v8640
        %v8662 = vpack.c.bf16 %v8643, %v8642
        %v8663 = vpack.c.bf16 %v8645, %v8644
        %v8664 = vpack.c.bf16 %v8647, %v8646
        %v8665 = vpack.c.bf16 %v8649, %v8648
        %s8666 = scalar_lea.vmem [#allocation16], 128
        %v8667 = vld [vmem:[%s8666] sm:$0xf]
        %v8668 = vld [vmem:[%s8666 + $0x4] sm:$0xf]
        %v8669 = vld [vmem:[%s8666 + $0x8] sm:$0xf]
        %v8670 = vld [vmem:[%s8666 + $0xc] sm:$0xf]
        %v8675 = vunpack.c.l.b16 %v8667
        %v8676 = vunpack.c.l.b16 %v8668
        %v8677 = vunpack.c.l.b16 %v8669
        %v8678 = vunpack.c.l.b16 %v8670
        %v8679 = vpack.c.b16 %v8676, %v8675
        %v8680 = vpack.c.b16 %v8678, %v8677
        %v8684 = vsel %vm3260, %v8650, 0
        %v8687 = vsel %vm3260, %v8651, 0
        %v8690 = vsel %vm3260, %v8652, 0
        %v8693 = vsel %vm3260, %v8653, 0
        %v8696 = vsel %vm3260, %v8654, 0
        %v8699 = vsel %vm3260, %v8655, 0
        %v8702 = vsel %vm3260, %v8656, 0
        %v8705 = vsel %vm3260, %v8657, 0
        %v8708 = vsel %vm3260, %v8658, 0
        %v8711 = vsel %vm3260, %v8659, 0
        %v8714 = vsel %vm3260, %v8660, 0
        %v8717 = vsel %vm3260, %v8661, 0
        %v8720 = vsel %vm3260, %v8662, 0
        %v8723 = vsel %vm3260, %v8663, 0
        %v8726 = vsel %vm3260, %v8664, 0
        %v8729 = vsel %vm3260, %v8665, 0
        %8731 = vmatprep.subr.bf16.mxu0 0
        %8732 = vmatpush1.bf16.msra.mxu0 %v8679
        %8733 = vmatprep.subr.bf16.mxu0 0
        %8734 = vmatpush1.bf16.msra.mxu0 %v8680
        %8735 = vmatprep.subr.bf16.mxu0 0
        %8736 = vmatpush1.bf16.msra.mxu0 0
        %8737 = vmatprep.subr.bf16.mxu0 0
        %8738 = vmatpush1.bf16.msra.mxu0 0
        %8739 = vmatprep.subr.bf16.mxu0 0
        %8740 = vmatpush1.bf16.msra.mxu0 0
        %8741 = vmatprep.subr.bf16.mxu0 0
        %8742 = vmatpush1.bf16.msra.mxu0 0
        %8743 = vmatprep.subr.bf16.mxu0 0
        %8744 = vmatpush1.bf16.msra.mxu0 0
        %8745 = vmatprep.subr.bf16.mxu0 0
        %8746 = vmatpush1.bf16.msra.mxu0 0
        %8747 = vmatprep.subr.bf16.mxu0 0
        %8748 = vmatpush1.bf16.msra.mxu0 0
        %8749 = vmatprep.subr.bf16.mxu0 0
        %8750 = vmatpush1.bf16.msra.mxu0 0
        %8751 = vmatprep.subr.bf16.mxu0 0
        %8752 = vmatpush1.bf16.msra.mxu0 0
        %8753 = vmatprep.subr.bf16.mxu0 0
        %8754 = vmatpush1.bf16.msra.mxu0 0
        %8755 = vmatprep.subr.bf16.mxu0 0
        %8756 = vmatpush1.bf16.msra.mxu0 0
        %8757 = vmatprep.subr.bf16.mxu0 0
        %8758 = vmatpush1.bf16.msra.mxu0 0
        %8759 = vmatprep.subr.bf16.mxu0 0
        %8760 = vmatpush1.bf16.msra.mxu0 0
        %8761 = vmatprep.subr.bf16.mxu0 0
        %8762 = vmatpush1.bf16.msra.mxu0 0
        %8763 = vmatprep.mubr.bf16.mxu0 0
        %8764 = vmatmul.mubr.bf16.gmra.mrb[0].mxu0 %v8684
        %v8765 = vpop.f32.mrb[0].mxu0
        %v8766 = vadd.f32 0.0, %v8765
        %v8767 = vpop.f32.mrb[0].mxu0
        %v8768 = vpop.f32.mrb[0].mxu0
        %v8769 = vadd.f32 0.0, %v8768
        %v8770 = vpop.f32.mrb[0].mxu0
        %8771 = vmatprep.mubr.bf16.mxu0 0
        %8772 = vmatmul.mubr.bf16.gmra.mrb[0].mxu0 %v8687
        %v8773 = vpop.f32.mrb[0].mxu0
        %v8774 = vadd.f32 0.0, %v8773
        %v8775 = vpop.f32.mrb[0].mxu0
        %v8776 = vpop.f32.mrb[0].mxu0
        %v8777 = vadd.f32 0.0, %v8776
        %v8778 = vpop.f32.mrb[0].mxu0
        %8779 = vmatprep.mubr.bf16.mxu0 0
        %8780 = vmatmul.mubr.bf16.gmra.mrb[0].mxu0 %v8690
        %v8781 = vpop.f32.mrb[0].mxu0
        %v8782 = vadd.f32 0.0, %v8781
        %v8783 = vpop.f32.mrb[0].mxu0
        %v8784 = vpop.f32.mrb[0].mxu0
        %v8785 = vadd.f32 0.0, %v8784
        %v8786 = vpop.f32.mrb[0].mxu0
        %8787 = vmatprep.mubr.bf16.mxu0 0
        %8788 = vmatmul.mubr.bf16.gmra.mrb[0].mxu0 %v8693
        %v8789 = vpop.f32.mrb[0].mxu0
        %v8790 = vadd.f32 0.0, %v8789
        %v8791 = vpop.f32.mrb[0].mxu0
        %v8792 = vpop.f32.mrb[0].mxu0
        %v8793 = vadd.f32 0.0, %v8792
        %v8794 = vpop.f32.mrb[0].mxu0
        %8795 = vmatprep.mubr.bf16.mxu0 0
        %8796 = vmatmul.mubr.bf16.gmra.mrb[0].mxu0 %v8696
        %v8797 = vpop.f32.mrb[0].mxu0
        %v8798 = vadd.f32 0.0, %v8797
        %v8799 = vpop.f32.mrb[0].mxu0
        %v8800 = vpop.f32.mrb[0].mxu0
        %v8801 = vadd.f32 0.0, %v8800
        %v8802 = vpop.f32.mrb[0].mxu0
        %8803 = vmatprep.mubr.bf16.mxu0 0
        %8804 = vmatmul.mubr.bf16.gmra.mrb[0].mxu0 %v8699
        %v8805 = vpop.f32.mrb[0].mxu0
        %v8806 = vadd.f32 0.0, %v8805
        %v8807 = vpop.f32.mrb[0].mxu0
        %v8808 = vpop.f32.mrb[0].mxu0
        %v8809 = vadd.f32 0.0, %v8808
        %v8810 = vpop.f32.mrb[0].mxu0
        %8811 = vmatprep.mubr.bf16.mxu0 0
        %8812 = vmatmul.mubr.bf16.gmra.mrb[0].mxu0 %v8702
        %v8813 = vpop.f32.mrb[0].mxu0
        %v8814 = vadd.f32 0.0, %v8813
        %v8815 = vpop.f32.mrb[0].mxu0
        %v8816 = vpop.f32.mrb[0].mxu0
        %v8817 = vadd.f32 0.0, %v8816
        %v8818 = vpop.f32.mrb[0].mxu0
        %8819 = vmatprep.mubr.bf16.mxu0 0
        %8820 = vmatmul.mubr.bf16.gmra.mrb[0].mxu0 %v8705
        %v8821 = vpop.f32.mrb[0].mxu0
        %v8822 = vadd.f32 0.0, %v8821
        %v8823 = vpop.f32.mrb[0].mxu0
        %v8824 = vpop.f32.mrb[0].mxu0
        %v8825 = vadd.f32 0.0, %v8824
        %v8826 = vpop.f32.mrb[0].mxu0
        %8827 = vmatprep.mubr.bf16.mxu0 0
        %8828 = vmatmul.mubr.bf16.gmra.mrb[0].mxu0 %v8708
        %v8829 = vpop.f32.mrb[0].mxu0
        %v8830 = vadd.f32 0.0, %v8829
        %v8831 = vpop.f32.mrb[0].mxu0
        %v8832 = vpop.f32.mrb[0].mxu0
        %v8833 = vadd.f32 0.0, %v8832
        %v8834 = vpop.f32.mrb[0].mxu0
        %8835 = vmatprep.mubr.bf16.mxu0 0
        %8836 = vmatmul.mubr.bf16.gmra.mrb[0].mxu0 %v8711
        %v8837 = vpop.f32.mrb[0].mxu0
        %v8838 = vadd.f32 0.0, %v8837
        %v8839 = vpop.f32.mrb[0].mxu0
        %v8840 = vpop.f32.mrb[0].mxu0
        %v8841 = vadd.f32 0.0, %v8840
        %v8842 = vpop.f32.mrb[0].mxu0
        %8843 = vmatprep.mubr.bf16.mxu0 0
        %8844 = vmatmul.mubr.bf16.gmra.mrb[0].mxu0 %v8714
        %v8845 = vpop.f32.mrb[0].mxu0
        %v8846 = vadd.f32 0.0, %v8845
        %v8847 = vpop.f32.mrb[0].mxu0
        %v8848 = vpop.f32.mrb[0].mxu0
        %v8849 = vadd.f32 0.0, %v8848
        %v8850 = vpop.f32.mrb[0].mxu0
        %8851 = vmatprep.mubr.bf16.mxu0 0
        %8852 = vmatmul.mubr.bf16.gmra.mrb[0].mxu0 %v8717
        %v8853 = vpop.f32.mrb[0].mxu0
        %v8854 = vadd.f32 0.0, %v8853
        %v8855 = vpop.f32.mrb[0].mxu0
        %v8856 = vpop.f32.mrb[0].mxu0
        %v8857 = vadd.f32 0.0, %v8856
        %v8858 = vpop.f32.mrb[0].mxu0
        %8859 = vmatprep.mubr.bf16.mxu0 0
        %8860 = vmatmul.mubr.bf16.gmra.mrb[0].mxu0 %v8720
        %v8861 = vpop.f32.mrb[0].mxu0
        %v8862 = vadd.f32 0.0, %v8861
        %v8863 = vpop.f32.mrb[0].mxu0
        %v8864 = vpop.f32.mrb[0].mxu0
        %v8865 = vadd.f32 0.0, %v8864
        %v8866 = vpop.f32.mrb[0].mxu0
        %8867 = vmatprep.mubr.bf16.mxu0 0
        %8868 = vmatmul.mubr.bf16.gmra.mrb[0].mxu0 %v8723
        %v8869 = vpop.f32.mrb[0].mxu0
        %v8870 = vadd.f32 0.0, %v8869
        %v8871 = vpop.f32.mrb[0].mxu0
        %v8872 = vpop.f32.mrb[0].mxu0
        %v8873 = vadd.f32 0.0, %v8872
        %v8874 = vpop.f32.mrb[0].mxu0
        %8875 = vmatprep.mubr.bf16.mxu0 0
        %8876 = vmatmul.mubr.bf16.gmra.mrb[0].mxu0 %v8726
        %v8877 = vpop.f32.mrb[0].mxu0
        %v8878 = vadd.f32 0.0, %v8877
        %v8879 = vpop.f32.mrb[0].mxu0
        %v8880 = vpop.f32.mrb[0].mxu0
        %v8881 = vadd.f32 0.0, %v8880
        %v8882 = vpop.f32.mrb[0].mxu0
        %8883 = vmatprep.mubr.bf16.mxu0 0
        %8884 = vmatmul.mubr.bf16.gmra.mrb[0].mxu0 %v8729
        %v8885 = vpop.f32.mrb[0].mxu0
        %v8886 = vadd.f32 0.0, %v8885
        %v8887 = vpop.f32.mrb[0].mxu0
        %v8888 = vpop.f32.mrb[0].mxu0
        %v8889 = vadd.f32 0.0, %v8888
        %v8890 = vpop.f32.mrb[0].mxu0
        %8891 = vdwg.mxu0
        %v8892 = vadd.f32 %v8586, %v8766
        %v8893 = vadd.f32 %v8587, %v8769
        %v8894 = vadd.f32 %v8588, %v8774
        %v8895 = vadd.f32 %v8589, %v8777
        %v8896 = vadd.f32 %v8590, %v8782
        %v8897 = vadd.f32 %v8591, %v8785
        %v8898 = vadd.f32 %v8592, %v8790
        %v8899 = vadd.f32 %v8593, %v8793
        %v8900 = vadd.f32 %v8594, %v8798
        %v8901 = vadd.f32 %v8595, %v8801
        %v8902 = vadd.f32 %v8596, %v8806
        %v8903 = vadd.f32 %v8597, %v8809
        %v8904 = vadd.f32 %v8598, %v8814
        %v8905 = vadd.f32 %v8599, %v8817
        %v8906 = vadd.f32 %v8600, %v8822
        %v8907 = vadd.f32 %v8601, %v8825
        %v8908 = vadd.f32 %v8602, %v8830
        %v8909 = vadd.f32 %v8603, %v8833
        %v8910 = vadd.f32 %v8604, %v8838
        %v8911 = vadd.f32 %v8605, %v8841
        %v8912 = vadd.f32 %v8606, %v8846
        %v8913 = vadd.f32 %v8607, %v8849
        %v8914 = vadd.f32 %v8608, %v8854
        %v8915 = vadd.f32 %v8609, %v8857
        %v8916 = vadd.f32 %v8610, %v8862
        %v8917 = vadd.f32 %v8611, %v8865
        %v8918 = vadd.f32 %v8612, %v8870
        %v8919 = vadd.f32 %v8613, %v8873
        %v8920 = vadd.f32 %v8614, %v8878
        %v8921 = vadd.f32 %v8615, %v8881
        %v8922 = vadd.f32 %v8616, %v8886
        %v8923 = vadd.f32 %v8617, %v8889
        %v8924 = vld [vmem:[#allocation18] sm:$0x1]
        %v8926 = vlaneseq
        %v8927 = vshrl.u32 %v8926, 7
        %v8928 = vsub.s32 0, %v8927
        %v8929 = vrot.slane %v8924, %v8928
        %v8931 = vmul.f32 %v8892, %v8929
        %v8932 = vmul.f32 %v8893, %v8929
        %v8933 = vmul.f32 %v8894, %v8929
        %v8934 = vmul.f32 %v8895, %v8929
        %v8935 = vmul.f32 %v8896, %v8929
        %v8936 = vmul.f32 %v8897, %v8929
        %v8937 = vmul.f32 %v8898, %v8929
        %v8938 = vmul.f32 %v8899, %v8929
        %v8939 = vmul.f32 %v8900, %v8929
        %v8940 = vmul.f32 %v8901, %v8929
        %v8941 = vmul.f32 %v8902, %v8929
        %v8942 = vmul.f32 %v8903, %v8929
        %v8943 = vmul.f32 %v8904, %v8929
        %v8944 = vmul.f32 %v8905, %v8929
        %v8945 = vmul.f32 %v8906, %v8929
        %v8946 = vmul.f32 %v8907, %v8929
        %v8947 = vmul.f32 %v8908, %v8929
        %v8948 = vmul.f32 %v8909, %v8929
        %v8949 = vmul.f32 %v8910, %v8929
        %v8950 = vmul.f32 %v8911, %v8929
        %v8951 = vmul.f32 %v8912, %v8929
        %v8952 = vmul.f32 %v8913, %v8929
        %v8953 = vmul.f32 %v8914, %v8929
        %v8954 = vmul.f32 %v8915, %v8929
        %v8955 = vmul.f32 %v8916, %v8929
        %v8956 = vmul.f32 %v8917, %v8929
        %v8957 = vmul.f32 %v8918, %v8929
        %v8958 = vmul.f32 %v8919, %v8929
        %v8959 = vmul.f32 %v8920, %v8929
        %v8960 = vmul.f32 %v8921, %v8929
        %v8961 = vmul.f32 %v8922, %v8929
        %v8962 = vmul.f32 %v8923, %v8929
        %v8963 = vld [vmem:[#allocation19] sm:$0x1]
        %v8965 = vlaneseq
        %v8966 = vshrl.u32 %v8965, 7
        %v8967 = vsub.s32 0, %v8966
        %v8968 = vrot.slane %v8963, %v8967
        %v8970 = vadd.f32 %v8931, %v8968
        %v8971 = vadd.f32 %v8932, %v8968
        %v8972 = vadd.f32 %v8933, %v8968
        %v8973 = vadd.f32 %v8934, %v8968
        %v8974 = vadd.f32 %v8935, %v8968
        %v8975 = vadd.f32 %v8936, %v8968
        %v8976 = vadd.f32 %v8937, %v8968
        %v8977 = vadd.f32 %v8938, %v8968
        %v8978 = vadd.f32 %v8939, %v8968
        %v8979 = vadd.f32 %v8940, %v8968
        %v8980 = vadd.f32 %v8941, %v8968
        %v8981 = vadd.f32 %v8942, %v8968
        %v8982 = vadd.f32 %v8943, %v8968
        %v8983 = vadd.f32 %v8944, %v8968
        %v8984 = vadd.f32 %v8945, %v8968
        %v8985 = vadd.f32 %v8946, %v8968
        %v8986 = vadd.f32 %v8947, %v8968
        %v8987 = vadd.f32 %v8948, %v8968
        %v8988 = vadd.f32 %v8949, %v8968
        %v8989 = vadd.f32 %v8950, %v8968
        %v8990 = vadd.f32 %v8951, %v8968
        %v8991 = vadd.f32 %v8952, %v8968
        %v8992 = vadd.f32 %v8953, %v8968
        %v8993 = vadd.f32 %v8954, %v8968
        %v8994 = vadd.f32 %v8955, %v8968
        %v8995 = vadd.f32 %v8956, %v8968
        %v8996 = vadd.f32 %v8957, %v8968
        %v8997 = vadd.f32 %v8958, %v8968
        %v8998 = vadd.f32 %v8959, %v8968
        %v8999 = vadd.f32 %v8960, %v8968
        %v9000 = vadd.f32 %v8961, %v8968
        %v9001 = vadd.f32 %v8962, %v8968
        %v9002 = vadd.f32 %v8970, %v3228
        %v9003 = vadd.f32 %v8971, %v3229
        %v9004 = vadd.f32 %v8972, %v3230
        %v9005 = vadd.f32 %v8973, %v3231
        %v9006 = vadd.f32 %v8974, %v3232
        %v9007 = vadd.f32 %v8975, %v3233
        %v9008 = vadd.f32 %v8976, %v3234
        %v9009 = vadd.f32 %v8977, %v3235
        %v9010 = vadd.f32 %v8978, %v3236
        %v9011 = vadd.f32 %v8979, %v3237
        %v9012 = vadd.f32 %v8980, %v3238
        %v9013 = vadd.f32 %v8981, %v3239
        %v9014 = vadd.f32 %v8982, %v3240
        %v9015 = vadd.f32 %v8983, %v3241
        %v9016 = vadd.f32 %v8984, %v3242
        %v9017 = vadd.f32 %v8985, %v3243
        %v9018 = vadd.f32 %v8986, %v3244
        %v9019 = vadd.f32 %v8987, %v3245
        %v9020 = vadd.f32 %v8988, %v3246
        %v9021 = vadd.f32 %v8989, %v3247
        %v9022 = vadd.f32 %v8990, %v3248
        %v9023 = vadd.f32 %v8991, %v3249
        %v9024 = vadd.f32 %v8992, %v3250
        %v9025 = vadd.f32 %v8993, %v3251
        %v9026 = vadd.f32 %v8994, %v3252
        %v9027 = vadd.f32 %v8995, %v3253
        %v9028 = vadd.f32 %v8996, %v3254
        %v9029 = vadd.f32 %v8997, %v3255
        %v9030 = vadd.f32 %v8998, %v3256
        %v9031 = vadd.f32 %v8999, %v3257
        %v9032 = vadd.f32 %v9000, %v3258
        %v9033 = vadd.f32 %v9001, %v3259
        %v9034 = vmax.f32 %v9002, 0.0
        %v9035 = vmax.f32 %v9003, 0.0
        %v9036 = vmax.f32 %v9004, 0.0
        %v9037 = vmax.f32 %v9005, 0.0
        %v9038 = vmax.f32 %v9006, 0.0
        %v9039 = vmax.f32 %v9007, 0.0
        %v9040 = vmax.f32 %v9008, 0.0
        %v9041 = vmax.f32 %v9009, 0.0
        %v9042 = vmax.f32 %v9010, 0.0
        %v9043 = vmax.f32 %v9011, 0.0
        %v9044 = vmax.f32 %v9012, 0.0
        %v9045 = vmax.f32 %v9013, 0.0
        %v9046 = vmax.f32 %v9014, 0.0
        %v9047 = vmax.f32 %v9015, 0.0
        %v9048 = vmax.f32 %v9016, 0.0
        %v9049 = vmax.f32 %v9017, 0.0
        %v9050 = vmax.f32 %v9018, 0.0
        %v9051 = vmax.f32 %v9019, 0.0
        %v9052 = vmax.f32 %v9020, 0.0
        %v9053 = vmax.f32 %v9021, 0.0
        %v9054 = vmax.f32 %v9022, 0.0
        %v9055 = vmax.f32 %v9023, 0.0
        %v9056 = vmax.f32 %v9024, 0.0
        %v9057 = vmax.f32 %v9025, 0.0
        %v9058 = vmax.f32 %v9026, 0.0
        %v9059 = vmax.f32 %v9027, 0.0
        %v9060 = vmax.f32 %v9028, 0.0
        %v9061 = vmax.f32 %v9029, 0.0
        %v9062 = vmax.f32 %v9030, 0.0
        %v9063 = vmax.f32 %v9031, 0.0
        %v9064 = vmax.f32 %v9032, 0.0
        %v9065 = vmax.f32 %v9033, 0.0
        %v9066 = vsel %vm3260, %v9034, 0.0
        %v9067 = vsel %vm3260, %v9035, 0.0
        %v9068 = vadd.f32 %v9066, %v9067
        %v9069 = vsel %vm3260, %v9036, 0.0
        %v9070 = vadd.f32 %v9068, %v9069
        %v9071 = vsel %vm3260, %v9037, 0.0
        %v9072 = vadd.f32 %v9070, %v9071
        %v9073 = vsel %vm3260, %v9038, 0.0
        %v9074 = vadd.f32 %v9072, %v9073
        %v9075 = vsel %vm3260, %v9039, 0.0
        %v9076 = vadd.f32 %v9074, %v9075
        %v9077 = vsel %vm3260, %v9040, 0.0
        %v9078 = vadd.f32 %v9076, %v9077
        %v9079 = vsel %vm3260, %v9041, 0.0
        %v9080 = vadd.f32 %v9078, %v9079
        %v9081 = vsel %vm3260, %v9042, 0.0
        %v9082 = vadd.f32 %v9080, %v9081
        %v9083 = vsel %vm3260, %v9043, 0.0
        %v9084 = vadd.f32 %v9082, %v9083
        %v9085 = vsel %vm3260, %v9044, 0.0
        %v9086 = vadd.f32 %v9084, %v9085
        %v9087 = vsel %vm3260, %v9045, 0.0
        %v9088 = vadd.f32 %v9086, %v9087
        %v9089 = vsel %vm3260, %v9046, 0.0
        %v9090 = vadd.f32 %v9088, %v9089
        %v9091 = vsel %vm3260, %v9047, 0.0
        %v9092 = vadd.f32 %v9090, %v9091
        %v9093 = vsel %vm3260, %v9048, 0.0
        %v9094 = vadd.f32 %v9092, %v9093
        %v9095 = vsel %vm3260, %v9049, 0.0
        %v9096 = vadd.f32 %v9094, %v9095
        %v9097 = vsel %vm3260, %v9050, 0.0
        %v9098 = vadd.f32 %v9096, %v9097
        %v9099 = vsel %vm3260, %v9051, 0.0
        %v9100 = vadd.f32 %v9098, %v9099
        %v9101 = vsel %vm3260, %v9052, 0.0
        %v9102 = vadd.f32 %v9100, %v9101
        %v9103 = vsel %vm3260, %v9053, 0.0
        %v9104 = vadd.f32 %v9102, %v9103
        %v9105 = vsel %vm3260, %v9054, 0.0
        %v9106 = vadd.f32 %v9104, %v9105
        %v9107 = vsel %vm3260, %v9055, 0.0
        %v9108 = vadd.f32 %v9106, %v9107
        %v9109 = vsel %vm3260, %v9056, 0.0
        %v9110 = vadd.f32 %v9108, %v9109
        %v9111 = vsel %vm3260, %v9057, 0.0
        %v9112 = vadd.f32 %v9110, %v9111
        %v9113 = vsel %vm3260, %v9058, 0.0
        %v9114 = vadd.f32 %v9112, %v9113
        %v9115 = vsel %vm3260, %v9059, 0.0
        %v9116 = vadd.f32 %v9114, %v9115
        %v9117 = vsel %vm3260, %v9060, 0.0
        %v9118 = vadd.f32 %v9116, %v9117
        %v9119 = vsel %vm3260, %v9061, 0.0
        %v9120 = vadd.f32 %v9118, %v9119
        %v9121 = vsel %vm3260, %v9062, 0.0
        %v9122 = vadd.f32 %v9120, %v9121
        %v9123 = vsel %vm3260, %v9063, 0.0
        %v9124 = vadd.f32 %v9122, %v9123
        %v9125 = vsel %vm3260, %v9064, 0.0
        %v9126 = vadd.f32 %v9124, %v9125
        %v9127 = vsel %vm3260, %v9065, 0.0
        %v9128 = vadd.f32 %v9126, %v9127
        %v9129 = vrot.slane %v9128, 4
        %v9130 = vadd.f32 %v9128, %v9129
        %v9131 = vrot.slane %v9130, 2
        %v9132 = vadd.f32 %v9130, %v9131
        %v9133 = vrot.slane %v9132, 1
        %v9134 = vadd.f32 %v9132, %v9133
        %v9135 = vrcp.pop 256.0
        %v9136 = vmul.f32 %v9134, %v9135
        %v9137 = vld [vmem:[#allocation21] sm:$0x1]
        %v9138 = vmul.f32 %v9136, %v9137
        %vm9139 = vcmask 253952
        %v9140 = vsel %vm9139, %v9138, 0.0
        %9141 = vadd.xlane.f32.xlu0 %v9140
        %v9142 = vpop.xlane.xlu0 %9141
        %v9143 = vld [vmem:[#allocation3] sm:$0x1]
        %v9144 = vadd.f32 %v9142, %v9143
        %9146 = vset.pattern.permute.xlu0 0
        %9147 = vperm.xlu0 %9146, %v9144
        %v9148 = vpop.permute.xlu0 %9147
        %9150 = vst [vmem:[%s563] sm:$0x1] %v9148
        %s9151 = sand.u32 %s301, 1
        %s9152 = scalar_lea.sflag [#allocation6], %s9151
        %s9153 = sand.u32 %s301, 1
        %s9154 = scalar_lea.vmem [#allocation22], %s9153
        // Predicated region
        $region113: #{resnet_regression_head_forward.1} parent=67 // pred_check
          %p9155 = pneg %p311
        $region114: #{resnet_regression_head_forward.1} parent=67 // pred_check_branch
          %9157 = sbr.rel (%p9155) target = $region116
        $region115: #{resnet_regression_head_forward.1} parent=67 // pred_region
          %s9159 = ssub.s32 16, 16
          %9160 = vsyncadd %s9152, %s9159
          %s9161 = smul.addr %s36, 16
          %s9162 = scalar_lea.hbm %s12, %s9161
          %s9164 = sshll.u32 %s9154, 4
          %s9165 = int_to_ptr.vmem [resolvable:$true] %s9164
          %9167 = dma.vmem_to_hbm [thread:$0]  %s9165, 16, %s9162, %s9152
        $region116: #{resnet_regression_head_forward.1} parent=67 // pred_fallthru
          _
      $region68: #{resnet_regression_head_forward.1} parent=5 // pred_fallthru
        _
      %p9168 = scmp.le.s32.totalorder 2, %s31
      // Predicated region
      $region117: #{resnet_regression_head_forward.1} parent=5 // pred_check
        %p9169 = pneg %p9168
      $region118: #{resnet_regression_head_forward.1} parent=5 // pred_check_branch
        %9171 = sbr.rel (%p9169) target = $region120
      $region119: #{resnet_regression_head_forward.1} parent=5 // pred_region
        %s9172 = ssub.s32 %s31, 2
        // Predicated region
        $region121: #{resnet_regression_head_forward.1} parent=119 // pred_check
          %p9173 = pneg %p317
        $region122: #{resnet_regression_head_forward.1} parent=119 // pred_check_branch
          %9175 = sbr.rel (%p9173) target = $region124
        $region123: #{resnet_regression_head_forward.1} parent=119 // pred_region
          %s9176 = sand.u32 %s302, 1
          %s9177 = scalar_lea.sflag [#allocation6], %s9176
          %s9178 = sand.u32 %s302, 1
          %s9179 = scalar_lea.vmem [#allocation22], %s9178
          %9180 = dma.done %s9177, 16
        $region124: #{resnet_regression_head_forward.1} parent=119 // pred_fallthru
          _
      $region120: #{resnet_regression_head_forward.1} parent=5 // pred_fallthru
        _
    $region6: #{resnet_regression_head_forward.1} parent=1 // loop_footer
      %s35 = sadd.s32 1, %s31
    $region7: #{resnet_regression_head_forward.1} parent=1 // loop_footer_branch
      %30 = sbr.rel target = $region3
    $region8: #{resnet_regression_head_forward.1} parent=1 // loop_exit
      _
    %9181 = vsyncpa [#allocation5], 1
    %s9182 = scalar_lea.sflag [#allocation5], 1
    %9183 = vsyncpa %s9182, 1
    %9184 = vsyncpa [#allocation8], 1
    %9185 = vsyncpa [#allocation11], 1
    %9186 = vsyncpa [#allocation14], 1
    %9187 = vsyncpa [#allocation17], 1
    %9188 = vsyncpa [#allocation20], 1
    %9189 = vsyncpa [#allocation6], 1
    %s9190 = scalar_lea.sflag [#allocation6], 1
    %9191 = vsyncpa %s9190, 1

</llo_original>
